<compile_context>
chip_gen: v5e
topology: v5e:2x2
jax: 0.10.0
libtpu: 0.0.40
codegen_flags: <defaults>
</compile_context>

<pallas_src>
import functools
from collections import defaultdict
from types import SimpleNamespace

import jax
import jax.numpy as jnp
from jax.experimental import pallas as pl
from jax.experimental.pallas import tpu as pltpu


def _trunc(x):
    # torch .long() truncates toward zero
    return jnp.where(x >= 0, jnp.floor(x), jnp.ceil(x))


def _round_up(x, m):
    return ((x + m - 1) // m) * m


# ---------------------------------------------------------------------------
# Pallas kernel: per (instance, pixel-tile) grid step, build the 3-row voting
# RHS in VMEM from uv/mask, run the (K,3)@(3,CH) vote matmul in CH-lane chunks,
# and accumulate per-hypothesis vote counts into a lane-wide (K, CH) scratch.
# Finalize (weights + weighted mean) on the last pixel tile.
# ---------------------------------------------------------------------------
def _make_vote_kernel(P, W, TP, CH):
    n_chunks = TP // CH
    w_f = float(W)

    def kernel(uv_ref, m_ref, lhs_ref, aux_ref, xy_ref, cnt_ref):
        """
        uv_ref  : (2, TP)  raw uv field tile (u row 0, v row 1)
        m_ref   : (1, TP)  instance mask tile (f32 0/1)
        lhs_ref : (K, 3)   [pr_y_c, pr_x_c, 1] (centroid-centered pruned hyps)
        aux_ref : (K, 5)   [wfac, pr_y_raw, pr_x_raw, cy, cx]
        xy_ref  : (1, 2)   output pixel_xy = (x, y), written on the last tile
        cnt_ref : (K, CH)  f32 scratch: lane-wide per-hypothesis vote counters
        """
        p = pl.program_id(1)

        @pl.when(p == 0)
        def _init():
            cnt_ref[...] = jnp.zeros_like(cnt_ref)

        lhs = lhs_ref[...]                          # (K, 3)
        cy = aux_ref[0:1, 3:4]                      # (1, 1) per-instance centroid
        cx = aux_ref[0:1, 4:5]
        base = p * TP

        # Sub-tile the (K, TP) vote matmul over CH-lane chunks so the live
        # (K, CH) intermediate stays small while the DMA tile stays large.
        for c in range(n_chunks):
            c0 = c * CH
            u = uv_ref[0:1, c0:c0 + CH]             # (1, CH)
            v = uv_ref[1:2, c0:c0 + CH]
            m = m_ref[:, c0:c0 + CH]                # (1, CH)

            lane = jax.lax.broadcasted_iota(jnp.int32, (1, CH), 1)
            gidx = base + c0 + lane                 # global flat pixel index
            valid = gidx < P                        # masks ragged last tile (no wrapper pad)
            keep = jnp.logical_and(valid, m > 0.5)
            um = jnp.where(keep, u, 0.0)
            vm = jnp.where(keep, v, 0.0)

            # pixel (row, col) from the flat index; f32-exact for P < 2^24 and the
            # +0.5 keeps floor() robust against f32 division rounding.
            gf = gidx.astype(jnp.float32)
            py = jnp.floor((gf + 0.5) / w_f)
            px = gf - py * w_f

            cc = -((py - cy) * um + (px - cx) * vm)
            rhs = jnp.concatenate([um, vm, cc], axis=0)            # (3, CH)

            # dot[k, pix] = (pr_y - py)*u + (pr_x - px)*v  (mask/ragged lanes -> 0)
            dotc = jnp.dot(lhs, rhs,
                           preferred_element_type=jnp.float32,
                           precision=jax.lax.Precision.HIGHEST)    # (K, CH)
            # strict > 0 excludes zeroed lanes and the "hypothesis == pixel" case,
            # matching the torch NaN-normalized-direction behavior.
            cnt_ref[...] += (dotc > 0.0).astype(jnp.float32)

        @pl.when(p == pl.num_programs(1) - 1)
        def _finalize():
            counts = jnp.sum(cnt_ref[...], axis=1, keepdims=True)  # (K, 1) single XLU reduce
            wfac = aux_ref[:, 0:1]
            pr_y = aux_ref[:, 1:2]
            pr_x = aux_ref[:, 2:3]
            w = wfac * counts                                      # factor * vote count
            w_sum = jnp.sum(w, axis=0, keepdims=True)
            wn = w / jnp.maximum(w_sum, 1.0)                       # / max(sum(w), 1)
            wx = jnp.sum(pr_x * wn, axis=0, keepdims=True)
            wy = jnp.sum(pr_y * wn, axis=0, keepdims=True)
            xy_ref[...] = jnp.concatenate([wx, wy], axis=1)        # pixel_xy = (x, y)

    return kernel


# ---------------------------------------------------------------------------
# JAX wrapper: sampling, Cramer solve, z-score prune, in-mask factor (O(N*K)),
# then the Pallas call for the O(N*K*P) voting loop.
# ---------------------------------------------------------------------------
@functools.partial(jax.jit,
                   static_argnames=("num_hyp", "zscore_thresh", "mask_mult", "tile_p"))
def _hough_voting_impl(uv_img, mask, key, *, num_hyp, zscore_thresh, mask_mult, tile_p):
    N, _, H, W = uv_img.shape
    K = num_hyp
    P = H * W

    uv = uv_img.reshape(N, 2, P).astype(jnp.float32)
    mask_flat = mask.reshape(N, P)
    mf = mask_flat.astype(jnp.float32)
    u, v = uv[:, 0, :], uv[:, 1, :]

    pix = jnp.arange(P, dtype=jnp.int32)
    rows = (pix // W).astype(jnp.float32)          # pixel y
    cols = (pix % W).astype(jnp.float32)           # pixel x

    # ---- point-pair sampling: cumsum + binary search (O(P + K log P), no argsort) ----
    cum = jnp.cumsum(mask_flat.astype(jnp.int32), axis=1)          # (N, P)
    cnt = cum[:, -1]
    # TODO(synk): instances with < 2 mask pixels (single_pt_hypothesis path) not handled.
    cnt2 = jnp.maximum(cnt, 2)[:, None]
    ka, kb = jax.random.split(key)
    a = jax.random.randint(ka, (N, K), 0, cnt2)
    b = jax.random.randint(kb, (N, K), 0, cnt2 - 1)
    b = b + (b >= a).astype(b.dtype)                               # distinct, uniform pair
    nth = jax.vmap(lambda c, q: jnp.searchsorted(c, q, side='left'))
    idx0 = jnp.clip(nth(cum, a + 1), 0, P - 1).astype(jnp.int32)
    idx1 = jnp.clip(nth(cum, b + 1), 0, P - 1).astype(jnp.int32)

    p0y, p0x = rows[idx0], cols[idx0]
    p1y, p1x = rows[idx1], cols[idx1]
    u0 = jnp.take_along_axis(u, idx0, axis=1)
    v0 = jnp.take_along_axis(v, idx0, axis=1)
    u1 = jnp.take_along_axis(u, idx1, axis=1)
    v1 = jnp.take_along_axis(v, idx1, axis=1)

    # ---- batched 2x2 solve (Cramer): A=[[u0,-u1],[v0,-v1]], B=p1-p0, hyp = p0 + t*uv0 ----
    det = u1 * v0 - u0 * v1
    dy, dx = p1y - p0y, p1x - p0x
    num = u1 * dx - v1 * dy
    # TODO(synk): torch.pinverse gives the min-norm LSQ solution for singular A;
    # near-singular pairs here get t = 0 (hypothesis collapses onto p0).
    t = jnp.where(jnp.abs(det) > 1e-12, num / det, 0.0)
    hy = p0y + t * u0
    hx = p0x + t * v0
    hypothesis = jnp.stack([hy, hx], axis=-1)                      # (N, K, 2), (y, x)

    # ---- z-score prune (one-sided z > thresh, matching the torch code) ----
    mean = jnp.mean(hypothesis, axis=1, keepdims=True)
    std = jnp.std(hypothesis, axis=1, keepdims=True, ddof=1)
    z = (hypothesis - mean) / std
    outlier = jnp.logical_or(z[..., 0] > zscore_thresh, z[..., 1] > zscore_thresh)
    nan_y, nan_x = jnp.isnan(hy), jnp.isnan(hx)
    bad = outlier | nan_y | nan_x                                  # torch's is_outlier
    pr_y0 = jnp.where(outlier | nan_y, 0.0, hy)                    # torch: pruned[is_nan]=0
    pr_x0 = jnp.where(outlier | nan_x, 0.0, hx)
    pruned = jnp.stack([pr_y0, pr_x0], axis=-1)

    # ---- hypothesis-in-mask factor, hoisted out of the K x P loop (one gather) ----
    ty, tx = _trunc(pr_y0), _trunc(pr_x0)
    in_bounds = (ty >= 0) & (ty < H) & (tx >= 0) & (tx < W)
    iy = jnp.clip(ty, 0, H - 1).astype(jnp.int32)
    ix = jnp.clip(tx, 0, W - 1).astype(jnp.int32)
    at_mask = jnp.take_along_axis(mask_flat, iy * W + ix, axis=1)
    factor = jnp.where(in_bounds & at_mask, jnp.float32(mask_mult), jnp.float32(1.0))
    wfac = jnp.where(bad, 0.0, factor)                             # torch: weights[is_outlier]=0

    # ---- mask centroid for re-centering (keeps dot-sign decisions accurate) ----
    cntf = jnp.maximum(jnp.sum(mf, axis=1, keepdims=True), 1.0)
    cy = jnp.sum(mf * rows[None, :], axis=1, keepdims=True) / cntf  # (N, 1)
    cx = jnp.sum(mf * cols[None, :], axis=1, keepdims=True) / cntf

    # ---- small per-hypothesis operands (the big per-pixel RHS is built in-kernel) ----
    onesk = jnp.ones((N, K), jnp.float32)
    lhs = jnp.stack([pr_y0 - cy, pr_x0 - cx, onesk], axis=-1)       # (N, K, 3)
    aux = jnp.stack([wfac, pr_y0, pr_x0,
                     jnp.broadcast_to(cy, (N, K)),
                     jnp.broadcast_to(cx, (N, K))], axis=-1)        # (N, K, 5)
    maskf = mf.reshape(N, 1, P)

    # ---- pixel tiling: big DMA tile TP, small in-kernel compute chunk CH ----
    CH = min(512, _round_up(P, 128))
    TP = max(CH, (int(tile_p) // CH) * CH)
    TP = min(TP, _round_up(P, CH))
    n_tiles = pl.cdiv(P, TP)

    kernel = _make_vote_kernel(P, W, TP, CH)
    xy3 = pl.pallas_call(
        kernel,
        out_shape=jax.ShapeDtypeStruct((N, 1, 2), jnp.float32),
        grid_spec=pltpu.PrefetchScalarGridSpec(
            num_scalar_prefetch=0,
            grid=(N, n_tiles),
            in_specs=[
                pl.BlockSpec((None, 2, TP), lambda n, p: (n, 0, p)),
                pl.BlockSpec((None, 1, TP), lambda n, p: (n, 0, p)),
                pl.BlockSpec((None, K, 3), lambda n, p: (n, 0, 0)),
                pl.BlockSpec((None, K, 5), lambda n, p: (n, 0, 0)),
            ],
            out_specs=pl.BlockSpec((None, 1, 2), lambda n, p: (n, 0, 0)),
            scratch_shapes=[pltpu.VMEM((K, CH), jnp.float32)],
        ),
        compiler_params=pltpu.CompilerParams(
            dimension_semantics=("parallel", "arbitrary"),
            vmem_limit_bytes=32 * 1024 * 1024,
        ),
    )(uv, maskf, lhs, aux)

    return xy3.reshape(N, 2), hypothesis, pruned


def batchwise_hough_voting(uv_img, mask, key, hparam):
    """uv_img: (N, 2, H, W) float32 (NCHW), mask: (N, H, W) bool."""
    K = int(hparam.HV_NUM_OF_HYPOTHESES)
    if uv_img.shape[0] == 0:
        z = jnp.zeros((0, K, 2), jnp.float32)
        return {'xy': jnp.zeros((0, 2), jnp.float32), 'xy_mask': uv_img,
                'hypothesis': z, 'pruned_hypothesis': z}
    # TODO(synk): only PRUN_METHOD='z-score' with PRUN_OUTLIER_DROP=True is implemented
    # (iqr / mean/median replacement modes not ported).
    xy, hyp, pruned = _hough_voting_impl(
        uv_img, mask, key,
        num_hyp=K,
        zscore_thresh=float(hparam.PRUN_ZSCORE_THRESHOLD),
        mask_mult=float(hparam.HV_HYPOTHESIS_IN_MASK_MULTIPLIER),
        tile_p=int(getattr(hparam, 'HV_PIXEL_TILE', 8192)),
    )
    return {'xy': xy, 'xy_mask': uv_img, 'hypothesis': hyp, 'pruned_hypothesis': pruned}


def hough_voting_forward(agg_data, key, hparam):
    """Mirrors HoughVotingLayer.forward over the per-class list of dicts.

    Instances of all classes that share a spatial resolution are batched into a
    single pallas_call so the 'parallel' instance axis has >= 2 entries (keeps
    v7x's second TensorCore busy) and only one kernel is compiled per resolution.
    """
    K = int(hparam.HV_NUM_OF_HYPOTHESES)
    out = [dict(d) for d in agg_data]

    groups = defaultdict(list)
    for ci, d in enumerate(agg_data):
        uv_img = d['xy']
        if uv_img.shape[0] == 0:
            z = jnp.zeros((0, K, 2), jnp.float32)
            out[ci].update({'xy': jnp.zeros((0, 2), jnp.float32), 'xy_mask': uv_img,
                            'hypothesis': z, 'pruned_hypothesis': z})
        else:
            groups[uv_img.shape[1:]].append(ci)

    for _, cls_ids in groups.items():
        key, sub = jax.random.split(key)
        uv_all = jnp.concatenate([agg_data[ci]['xy'] for ci in cls_ids], axis=0)
        m_all = jnp.concatenate([agg_data[ci]['instance_masks'] for ci in cls_ids], axis=0)
        res = batchwise_hough_voting(uv_all, m_all, sub, hparam)
        off = 0
        for ci in cls_ids:
            n = agg_data[ci]['xy'].shape[0]
            out[ci].update({'xy': res['xy'][off:off + n],
                            'xy_mask': agg_data[ci]['xy'],
                            'hypothesis': res['hypothesis'][off:off + n],
                            'pruned_hypothesis': res['pruned_hypothesis'][off:off + n]})
            off += n
    return out


if __name__ == "__main__":
    hparam = SimpleNamespace(
        HV_NUM_OF_HYPOTHESES=128,
        HV_HYPOTHESIS_IN_MASK_MULTIPLIER=10.0,
        PRUN_METHOD='z-score',
        PRUN_ZSCORE_THRESHOLD=1.5,
        PRUN_OUTLIER_DROP=True,
        # small tile so the demo exercises the multi-tile accumulation, ragged
        # last-tile masking, and multi-chunk inner-loop paths
        HV_PIXEL_TILE=1024,
    )

    key = jax.random.PRNGKey(0)
    k_uv, k_run = jax.random.split(key)

    N, H, W = 2, 40, 40
    uv = jax.random.normal(k_uv, (N, 2, H, W), dtype=jnp.float32)

    # deterministic circular instance masks (each has plenty of points >= 2)
    yy, xx = jnp.meshgrid(jnp.arange(H), jnp.arange(W), indexing='ij')
    cy = jnp.array([12, 26])[:, None, None]
    cx = jnp.array([14, 24])[:, None, None]
    mask = ((yy[None] - cy) ** 2 + (xx[None] - cx) ** 2) <= 36   # (N, H, W) bool

    agg_data = [{'xy': uv, 'instance_masks': mask}]
    out = hough_voting_forward(agg_data, k_run, hparam)

    jax.block_until_ready(out[0]['xy'])
    jax.block_until_ready(out[0]['hypothesis'])
    jax.block_until_ready(out[0]['pruned_hypothesis'])
    assert out[0]['xy'].shape == (N, 2)
    assert out[0]['hypothesis'].shape == (N, hparam.HV_NUM_OF_HYPOTHESES, 2)
    assert out[0]['pruned_hypothesis'].shape == (N, hparam.HV_NUM_OF_HYPOTHESES, 2)
    assert bool(jnp.all(jnp.isfinite(out[0]['xy'])))
    print("KERNEL_OK")
</pallas_src>

<mosaic_0001>
module attributes {stable_mosaic.version = 11 : i64} {
  func.func @kernel(%arg0: i32, %arg1: i32, %arg2: memref<1x2x1024xf32, #tpu.memory_space<vmem>>, %arg3: memref<1x1x1024xf32, #tpu.memory_space<vmem>>, %arg4: memref<1x128x3xf32, #tpu.memory_space<vmem>>, %arg5: memref<1x128x5xf32, #tpu.memory_space<vmem>>, %arg6: memref<1x1x2xf32, #tpu.memory_space<vmem>>, %arg7: memref<128x512xf32, #tpu.memory_space<vmem>>) attributes {dimension_semantics = [#tpu.dimension_semantics<parallel>, #tpu.dimension_semantics<arbitrary>], iteration_bounds = array<i64: 2, 2>, scalar_prefetch = 0 : i64, scratch_operands = 1 : i64, tpu.core_type = #tpu.core_type<tc>, window_params = [{transform_indices = @transform_0, window_bounds = array<i64: 1, 2, 1024>}, {transform_indices = @transform_1, window_bounds = array<i64: 1, 1, 1024>}, {transform_indices = @transform_2, window_bounds = array<i64: 1, 128, 3>}, {transform_indices = @transform_3, window_bounds = array<i64: 1, 128, 5>}, {transform_indices = @transform_4, window_bounds = array<i64: 1, 1, 2>}]} {
    %c0_i32 = arith.constant 0 : i32
    %0 = arith.cmpi eq, %arg1, %c0_i32 : i32
    %1 = arith.extui %0 : i1 to i32
    %c0_i32_0 = arith.constant 0 : i32
    %2 = arith.cmpi ne, %1, %c0_i32_0 : i32
    scf.if %2 {
      %cst_51 = arith.constant 0.000000e+00 : f32
      %105 = vector.broadcast %cst_51 : f32 to vector<128x512xf32>
      %c0_52 = arith.constant 0 : index
      %c0_53 = arith.constant 0 : index
      %106 = vector.load %arg7[%c0_52, %c0_53] : memref<128x512xf32, #tpu.memory_space<vmem>>, vector<128x512xf32>
      tpu.vector_store %arg7[%c0_52, %c0_53], %105 {strides = array<i32>} : memref<128x512xf32, #tpu.memory_space<vmem>>, vector<128x512xf32>,
    } else {
    }
    %c0 = arith.constant 0 : index
    %c0_1 = arith.constant 0 : index
    %c0_2 = arith.constant 0 : index
    %3 = vector.load %arg4[%c0, %c0_1, %c0_2] : memref<1x128x3xf32, #tpu.memory_space<vmem>>, vector<1x128x3xf32>
    %4 = vector.shape_cast %3 : vector<1x128x3xf32> to vector<128x3xf32>
    %c0_3 = arith.constant 0 : index
    %c0_4 = arith.constant 0 : index
    %c3 = arith.constant 3 : index
    %5 = vector.load %arg5[%c0_3, %c0_4, %c3] : memref<1x128x5xf32, #tpu.memory_space<vmem>>, vector<1x1x1xf32>
    %6 = vector.shape_cast %5 : vector<1x1x1xf32> to vector<1x1xf32>
    %c0_5 = arith.constant 0 : index
    %c0_6 = arith.constant 0 : index
    %c4 = arith.constant 4 : index
    %7 = vector.load %arg5[%c0_5, %c0_6, %c4] : memref<1x128x5xf32, #tpu.memory_space<vmem>>, vector<1x1x1xf32>
    %8 = vector.shape_cast %7 : vector<1x1x1xf32> to vector<1x1xf32>
    %c1024_i32 = arith.constant 1024 : i32
    %9 = arith.muli %arg1, %c1024_i32 : i32
    %c0_7 = arith.constant 0 : index
    %c0_8 = arith.constant 0 : index
    %c0_9 = arith.constant 0 : index
    %10 = vector.load %arg2[%c0_7, %c0_8, %c0_9] : memref<1x2x1024xf32, #tpu.memory_space<vmem>>, vector<1x1x512xf32>
    %11 = vector.shape_cast %10 : vector<1x1x512xf32> to vector<1x512xf32>
    %c0_10 = arith.constant 0 : index
    %c1 = arith.constant 1 : index
    %c0_11 = arith.constant 0 : index
    %12 = vector.load %arg2[%c0_10, %c1, %c0_11] : memref<1x2x1024xf32, #tpu.memory_space<vmem>>, vector<1x1x512xf32>
    %13 = vector.shape_cast %12 : vector<1x1x512xf32> to vector<1x512xf32>
    %c0_12 = arith.constant 0 : index
    %c0_13 = arith.constant 0 : index
    %c0_14 = arith.constant 0 : index
    %14 = vector.load %arg3[%c0_12, %c0_13, %c0_14] : memref<1x1x1024xf32, #tpu.memory_space<vmem>>, vector<1x1x512xf32>
    %15 = vector.shape_cast %14 : vector<1x1x512xf32> to vector<1x512xf32>
    %16 = tpu.iota {dimensions = array<i32: 1>} : vector<1x512xi32>
    %c0_i32_15 = arith.constant 0 : i32
    %17 = arith.addi %9, %c0_i32_15 : i32
    %18 = vector.broadcast %17 : i32 to vector<1x512xi32>
    %19 = arith.addi %18, %16 : vector<1x512xi32>
    %c1600_i32 = arith.constant 1600 : i32
    %20 = vector.broadcast %c1600_i32 : i32 to vector<1x512xi32>
    %21 = arith.cmpi slt, %19, %20 : vector<1x512xi32>
    %cst = arith.constant 5.000000e-01 : f32
    %22 = vector.broadcast %cst : f32 to vector<1x512xf32>
    %23 = arith.cmpf ogt, %15, %22 : vector<1x512xf32>
    %24 = arith.andi %21, %23 : vector<1x512xi1>
    %cst_16 = arith.constant 0.000000e+00 : f32
    %25 = vector.broadcast %cst_16 : f32 to vector<1x512xf32>
    %26 = arith.select %24, %11, %25 : vector<1x512xi1>, vector<1x512xf32>
    %cst_17 = arith.constant 0.000000e+00 : f32
    %27 = vector.broadcast %cst_17 : f32 to vector<1x512xf32>
    %28 = arith.select %24, %13, %27 : vector<1x512xi1>, vector<1x512xf32>
    %29 = arith.sitofp %19 : vector<1x512xi32> to vector<1x512xf32>
    %cst_18 = arith.constant 5.000000e-01 : f32
    %30 = vector.broadcast %cst_18 : f32 to vector<1x512xf32>
    %31 = arith.addf %29, %30 : vector<1x512xf32>
    %cst_19 = arith.constant 4.000000e+01 : f32
    %32 = vector.broadcast %cst_19 : f32 to vector<1x512xf32>
    %33 = arith.divf %31, %32 : vector<1x512xf32>
    %34 = math.floor %33 : vector<1x512xf32>
    %cst_20 = arith.constant 4.000000e+01 : f32
    %35 = vector.broadcast %cst_20 : f32 to vector<1x512xf32>
    %36 = arith.mulf %34, %35 : vector<1x512xf32>
    %37 = arith.subf %29, %36 : vector<1x512xf32>
    %38 = vector.broadcast %6 : vector<1x1xf32> to vector<1x512xf32>
    %39 = arith.subf %34, %38 : vector<1x512xf32>
    %40 = arith.mulf %39, %26 : vector<1x512xf32>
    %41 = vector.broadcast %8 : vector<1x1xf32> to vector<1x512xf32>
    %42 = arith.subf %37, %41 : vector<1x512xf32>
    %43 = arith.mulf %42, %28 : vector<1x512xf32>
    %44 = arith.addf %40, %43 : vector<1x512xf32>
    %cst_21 = arith.constant 0.000000e+00 : f32
    %45 = vector.broadcast %cst_21 : f32 to vector<1x512xf32>
    %46 = arith.subf %45, %44 : vector<1x512xf32>
    %47 = tpu.concatenate %26, %28, %46 in 0 : vector<1x512xf32>, vector<1x512xf32>, vector<1x512xf32> -> vector<3x512xf32>
    %cst_22 = arith.constant dense<0.000000e+00> : vector<128x512xf32>
    %48 = tpu.matmul %4, %47, %cst_22 {dimension_numbers = #tpu.dot_dimension_numbers<[1], [0], [0], [1], [0, 0, 1, 1], [], []>, precision = #tpu.contract_precision<fp32>} : vector<128x3xf32>, vector<3x512xf32>, vector<128x512xf32> -> vector<128x512xf32>
    %c0_23 = arith.constant 0 : index
    %c0_24 = arith.constant 0 : index
    %49 = vector.load %arg7[%c0_23, %c0_24] : memref<128x512xf32, #tpu.memory_space<vmem>>, vector<128x512xf32>
    %cst_25 = arith.constant 0.000000e+00 : f32
    %50 = vector.broadcast %cst_25 : f32 to vector<128x512xf32>
    %51 = arith.cmpf ogt, %48, %50 : vector<128x512xf32>
    %52 = arith.extui %51 : vector<128x512xi1> to vector<128x512xi32>
    %53 = arith.sitofp %52 : vector<128x512xi32> to vector<128x512xf32>
    %54 = arith.addf %49, %53 : vector<128x512xf32>
    %c0_26 = arith.constant 0 : index
    %c0_27 = arith.constant 0 : index
    %55 = vector.load %arg7[%c0_26, %c0_27] : memref<128x512xf32, #tpu.memory_space<vmem>>, vector<128x512xf32>
    tpu.vector_store %arg7[%c0_26, %c0_27], %54 {strides = array<i32>} : memref<128x512xf32, #tpu.memory_space<vmem>>, vector<128x512xf32>,
    %c0_28 = arith.constant 0 : index
    %c0_29 = arith.constant 0 : index
    %c512 = arith.constant 512 : index
    %56 = vector.load %arg2[%c0_28, %c0_29, %c512] : memref<1x2x1024xf32, #tpu.memory_space<vmem>>, vector<1x1x512xf32>
    %57 = vector.shape_cast %56 : vector<1x1x512xf32> to vector<1x512xf32>
    %c0_30 = arith.constant 0 : index
    %c1_31 = arith.constant 1 : index
    %c512_32 = arith.constant 512 : index
    %58 = vector.load %arg2[%c0_30, %c1_31, %c512_32] : memref<1x2x1024xf32, #tpu.memory_space<vmem>>, vector<1x1x512xf32>
    %59 = vector.shape_cast %58 : vector<1x1x512xf32> to vector<1x512xf32>
    %c0_33 = arith.constant 0 : index
    %c0_34 = arith.constant 0 : index
    %c512_35 = arith.constant 512 : index
    %60 = vector.load %arg3[%c0_33, %c0_34, %c512_35] : memref<1x1x1024xf32, #tpu.memory_space<vmem>>, vector<1x1x512xf32>
    %61 = vector.shape_cast %60 : vector<1x1x512xf32> to vector<1x512xf32>
    %62 = tpu.iota {dimensions = array<i32: 1>} : vector<1x512xi32>
    %c512_i32 = arith.constant 512 : i32
    %63 = arith.addi %9, %c512_i32 : i32
    %64 = vector.broadcast %63 : i32 to vector<1x512xi32>
    %65 = arith.addi %64, %62 : vector<1x512xi32>
    %c1600_i32_36 = arith.constant 1600 : i32
    %66 = vector.broadcast %c1600_i32_36 : i32 to vector<1x512xi32>
    %67 = arith.cmpi slt, %65, %66 : vector<1x512xi32>
    %cst_37 = arith.constant 5.000000e-01 : f32
    %68 = vector.broadcast %cst_37 : f32 to vector<1x512xf32>
    %69 = arith.cmpf ogt, %61, %68 : vector<1x512xf32>
    %70 = arith.andi %67, %69 : vector<1x512xi1>
    %cst_38 = arith.constant 0.000000e+00 : f32
    %71 = vector.broadcast %cst_38 : f32 to vector<1x512xf32>
    %72 = arith.select %70, %57, %71 : vector<1x512xi1>, vector<1x512xf32>
    %cst_39 = arith.constant 0.000000e+00 : f32
    %73 = vector.broadcast %cst_39 : f32 to vector<1x512xf32>
    %74 = arith.select %70, %59, %73 : vector<1x512xi1>, vector<1x512xf32>
    %75 = arith.sitofp %65 : vector<1x512xi32> to vector<1x512xf32>
    %cst_40 = arith.constant 5.000000e-01 : f32
    %76 = vector.broadcast %cst_40 : f32 to vector<1x512xf32>
    %77 = arith.addf %75, %76 : vector<1x512xf32>
    %cst_41 = arith.constant 4.000000e+01 : f32
    %78 = vector.broadcast %cst_41 : f32 to vector<1x512xf32>
    %79 = arith.divf %77, %78 : vector<1x512xf32>
    %80 = math.floor %79 : vector<1x512xf32>
    %cst_42 = arith.constant 4.000000e+01 : f32
    %81 = vector.broadcast %cst_42 : f32 to vector<1x512xf32>
    %82 = arith.mulf %80, %81 : vector<1x512xf32>
    %83 = arith.subf %75, %82 : vector<1x512xf32>
    %84 = vector.broadcast %6 : vector<1x1xf32> to vector<1x512xf32>
    %85 = arith.subf %80, %84 : vector<1x512xf32>
    %86 = arith.mulf %85, %72 : vector<1x512xf32>
    %87 = vector.broadcast %8 : vector<1x1xf32> to vector<1x512xf32>
    %88 = arith.subf %83, %87 : vector<1x512xf32>
    %89 = arith.mulf %88, %74 : vector<1x512xf32>
    %90 = arith.addf %86, %89 : vector<1x512xf32>
    %cst_43 = arith.constant 0.000000e+00 : f32
    %91 = vector.broadcast %cst_43 : f32 to vector<1x512xf32>
    %92 = arith.subf %91, %90 : vector<1x512xf32>
    %93 = tpu.concatenate %72, %74, %92 in 0 : vector<1x512xf32>, vector<1x512xf32>, vector<1x512xf32> -> vector<3x512xf32>
    %cst_44 = arith.constant dense<0.000000e+00> : vector<128x512xf32>
    %94 = tpu.matmul %4, %93, %cst_44 {dimension_numbers = #tpu.dot_dimension_numbers<[1], [0], [0], [1], [0, 0, 1, 1], [], []>, precision = #tpu.contract_precision<fp32>} : vector<128x3xf32>, vector<3x512xf32>, vector<128x512xf32> -> vector<128x512xf32>
    %c0_45 = arith.constant 0 : index
    %c0_46 = arith.constant 0 : index
    %95 = vector.load %arg7[%c0_45, %c0_46] : memref<128x512xf32, #tpu.memory_space<vmem>>, vector<128x512xf32>
    %cst_47 = arith.constant 0.000000e+00 : f32
    %96 = vector.broadcast %cst_47 : f32 to vector<128x512xf32>
    %97 = arith.cmpf ogt, %94, %96 : vector<128x512xf32>
    %98 = arith.extui %97 : vector<128x512xi1> to vector<128x512xi32>
    %99 = arith.sitofp %98 : vector<128x512xi32> to vector<128x512xf32>
    %100 = arith.addf %95, %99 : vector<128x512xf32>
    %c0_48 = arith.constant 0 : index
    %c0_49 = arith.constant 0 : index
    %101 = vector.load %arg7[%c0_48, %c0_49] : memref<128x512xf32, #tpu.memory_space<vmem>>, vector<128x512xf32>
    tpu.vector_store %arg7[%c0_48, %c0_49], %100 {strides = array<i32>} : memref<128x512xf32, #tpu.memory_space<vmem>>, vector<128x512xf32>,
    %c1_i32 = arith.constant 1 : i32
    %102 = arith.cmpi eq, %arg1, %c1_i32 : i32
    %103 = arith.extui %102 : i1 to i32
    %c0_i32_50 = arith.constant 0 : i32
    %104 = arith.cmpi ne, %103, %c0_i32_50 : i32
    scf.if %104 {
      %c0_51 = arith.constant 0 : index
      %c0_52 = arith.constant 0 : index
      %105 = vector.load %arg7[%c0_51, %c0_52] : memref<128x512xf32, #tpu.memory_space<vmem>>, vector<128x512xf32>
      %cst_53 = arith.constant dense<0.000000e+00> : vector<128xf32>
      %106 = vector.multi_reduction <add>, %105, %cst_53 [1] : vector<128x512xf32> to vector<128xf32>
      %107 = vector.shape_cast %106 : vector<128xf32> to vector<128x1xf32>
      %c0_54 = arith.constant 0 : index
      %c0_55 = arith.constant 0 : index
      %c0_56 = arith.constant 0 : index
      %108 = vector.load %arg5[%c0_54, %c0_55, %c0_56] : memref<1x128x5xf32, #tpu.memory_space<vmem>>, vector<1x128x1xf32>
      %109 = vector.shape_cast %108 : vector<1x128x1xf32> to vector<128x1xf32>
      %c0_57 = arith.constant 0 : index
      %c0_58 = arith.constant 0 : index
      %c1_59 = arith.constant 1 : index
      %110 = vector.load %arg5[%c0_57, %c0_58, %c1_59] : memref<1x128x5xf32, #tpu.memory_space<vmem>>, vector<1x128x1xf32>
      %111 = vector.shape_cast %110 : vector<1x128x1xf32> to vector<128x1xf32>
      %c0_60 = arith.constant 0 : index
      %c0_61 = arith.constant 0 : index
      %c2 = arith.constant 2 : index
      %112 = vector.load %arg5[%c0_60, %c0_61, %c2] : memref<1x128x5xf32, #tpu.memory_space<vmem>>, vector<1x128x1xf32>
      %113 = vector.shape_cast %112 : vector<1x128x1xf32> to vector<128x1xf32>
      %114 = arith.mulf %109, %107 : vector<128x1xf32>
      %cst_62 = arith.constant dense<0.000000e+00> : vector<1xf32>
      %115 = vector.multi_reduction <add>, %114, %cst_62 [0] : vector<128x1xf32> to vector<1xf32>
      %116 = vector.shape_cast %115 : vector<1xf32> to vector<1x1xf32>
      %cst_63 = arith.constant 1.000000e+00 : f32
      %117 = vector.broadcast %cst_63 : f32 to vector<1x1xf32>
      %118 = arith.maximumf %116, %117 : vector<1x1xf32>
      %119 = vector.broadcast %118 : vector<1x1xf32> to vector<128x1xf32>
      %120 = arith.divf %114, %119 : vector<128x1xf32>
      %121 = arith.mulf %113, %120 : vector<128x1xf32>
      %cst_64 = arith.constant dense<0.000000e+00> : vector<1xf32>
      %122 = vector.multi_reduction <add>, %121, %cst_64 [0] : vector<128x1xf32> to vector<1xf32>
      %123 = vector.shape_cast %122 : vector<1xf32> to vector<1x1xf32>
      %124 = arith.mulf %111, %120 : vector<128x1xf32>
      %cst_65 = arith.constant dense<0.000000e+00> : vector<1xf32>
      %125 = vector.multi_reduction <add>, %124, %cst_65 [0] : vector<128x1xf32> to vector<1xf32>
      %126 = vector.shape_cast %125 : vector<1xf32> to vector<1x1xf32>
      %127 = tpu.concatenate %123, %126 in 1 : vector<1x1xf32>, vector<1x1xf32> -> vector<1x2xf32>
      %c0_66 = arith.constant 0 : index
      %c0_67 = arith.constant 0 : index
      %c0_68 = arith.constant 0 : index
      %128 = vector.load %arg6[%c0_66, %c0_67, %c0_68] : memref<1x1x2xf32, #tpu.memory_space<vmem>>, vector<1x1x2xf32>
      %129 = vector.shape_cast %128 : vector<1x1x2xf32> to vector<1x2xf32>
      %130 = vector.shape_cast %127 : vector<1x2xf32> to vector<1x1x2xf32>
      tpu.vector_store %arg6[%c0_66, %c0_67, %c0_68], %130 {strides = array<i32>} : memref<1x1x2xf32, #tpu.memory_space<vmem>>, vector<1x1x2xf32>,
    } else {
    }
    return
  }
  func.func @transform_0(%arg0: i32, %arg1: i32) -> (i32, i32, i32) {
    %c0_i32 = arith.constant 0 : i32
    %c0_i32_0 = arith.constant 0 : i32
    return %arg0, %c0_i32, %arg1 : i32, i32, i32
  }
  func.func @transform_1(%arg0: i32, %arg1: i32) -> (i32, i32, i32) {
    %c0_i32 = arith.constant 0 : i32
    %c0_i32_0 = arith.constant 0 : i32
    return %arg0, %c0_i32, %arg1 : i32, i32, i32
  }
  func.func @transform_2(%arg0: i32, %arg1: i32) -> (i32, i32, i32) {
    %c0_i32 = arith.constant 0 : i32
    %c0_i32_0 = arith.constant 0 : i32
    %c0_i32_1 = arith.constant 0 : i32
    return %arg0, %c0_i32, %c0_i32_0 : i32, i32, i32
  }
  func.func @transform_3(%arg0: i32, %arg1: i32) -> (i32, i32, i32) {
    %c0_i32 = arith.constant 0 : i32
    %c0_i32_0 = arith.constant 0 : i32
    %c0_i32_1 = arith.constant 0 : i32
    return %arg0, %c0_i32, %c0_i32_0 : i32, i32, i32
  }
  func.func @transform_4(%arg0: i32, %arg1: i32) -> (i32, i32, i32) {
    %c0_i32 = arith.constant 0 : i32
    %c0_i32_0 = arith.constant 0 : i32
    %c0_i32_1 = arith.constant 0 : i32
    return %arg0, %c0_i32, %c0_i32_0 : i32, i32, i32
  }
}

</mosaic_0001>

<llo_original>
// kernel: custom-call.17
$region0: #{custom-call.17}
  %s0 = inlined_call_operand.vmem [shape: u32[2,128], index: 0, kind: output, shape index: {}]

// kernel: _hough_voting_impl.1
$region0: #{_hough_voting_impl.1}
  #allocation0 [shape = 'u32[]', space=smem, size = 0x4, offset = 0x4, fixed_abs, tag = 'smem constant byte address 0x4 - core index']
  #allocation1 [shape = 'u32[72,128]{1,0:T(1,128)}', space=vmem, size = 0x9000, scoped, tag = 'internal scratch']
  #allocation2 [shape = 'f32[128,512]{1,0:T(8,128)}', space=vmem, size = 0x40000, scoped, tag = 'scratch operand']
  %s0 = inlined_call_operand.vmem [shape: f32[2,2,1600], index: 0, kind: input, shape index: {}]
  %s1 = inlined_call_operand.vmem [shape: f32[2,1,1600], index: 1, kind: input, shape index: {}]
  %s2 = inlined_call_operand.vmem [shape: f32[2,128,3], index: 2, kind: input, shape index: {}]
  %s3 = inlined_call_operand.vmem [shape: f32[2,128,5], index: 3, kind: input, shape index: {}]
  %s4 = inlined_call_operand.hbm [shape: f32[2,1,2], index: 4, kind: output, shape index: {}]
  %s5 = sld [smem:[#allocation0]]
  $region57: #{_hough_voting_impl.1} parent=0
    _
  %s7 = ssub.s32 1, %s5
  %s8 = scalar_select 0, %s7, %s5
  $region1: #{_hough_voting_impl.1} parent=0
    #allocation3 [shape = 'u8[1024]{0}', space=vmem, size = 0x400, scoped, tag = 'output window, operand 0']
    #allocation4 [shape = 's32[2]{0}', space=sflag, size = 0x8, scoped, tag = 'scoped memory for _hough_voting_impl.1']
    %9 = vsyncpa [#allocation4], 0
    %s10 = scalar_lea.sflag [#allocation4], 1
    %11 = vsyncpa %s10, 0
    loop: start=0, step=1, limit=6
    $region2: #{_hough_voting_impl.1} parent=1 // loop_pre_header
      _
    $region3: #{_hough_voting_impl.1} parent=1 // loop_header
      %s13 = sphi 0, %s17
      %p14 = scmp.ge.s32.totalorder %s13, 6
      %s20 = sphi 0, %s32
      %s21 = sphi 0, %s28
      %s22 = sphi 0, %s20
      %s23 = sphi 0, %s21
      %s24 = sphi 0, %s22
      %s25 = sphi 0, %s23
      %s37 = sphi 0, %s39
      %s40 = sphi 0, %s37
      %s41 = sphi 0, %s40
      %s57 = sphi 0, %s41
      %s65 = sphi 0, %s67
      %s68 = sphi 0, %s65
      %s69 = sphi 0, %s68
      %s85 = sphi 0, %s69
      %s91 = sphi 0, %s93
      %s94 = sphi 0, %s91
      %s95 = sphi 0, %s94
      %s111 = sphi 0, %s95
      %s117 = sphi 0, %s119
      %s120 = sphi 0, %s117
      %s121 = sphi 0, %s120
      %s137 = sphi 0, %s121
      %s143 = sphi 0, %s145
      %s146 = sphi 0, %s143
      %s147 = sphi 0, %s146
      %s163 = sphi 0, %s147
    $region4: #{_hough_voting_impl.1} parent=1 // loop_header_branch
      %16 = sbr.rel (%p14) target = $region8
    $region5: #{_hough_voting_impl.1} parent=1 // loop_body
      %s18 = ssub.s32 %s13, 1
      %s19 = ssub.s32 %s13, 2
      %s26 = sadd.s32 1, %s21
      %p27 = scmp.ge.s32.totalorder %s26, 2
      %s28 = scalar_select %p27, 0, %s26
      %s29 = sadd.s32 1, %s20
      %s30 = scalar_select %p27, %s29, %s20
      %p31 = scmp.ge.s32.totalorder %s30, 2
      %s32 = scalar_select %p31, 0, %s30
      %s33 = ssub.s32 %s20, %s32
      %s34 = ssub.s32 %s21, %s28
      %s35 = sor.u32 %s33, %s34
      %p36 = scmp.eq.s32.totalorder %s35, 0
      %s38 = sadd.s32 %s37, 1
      %s39 = scalar_select %p36, %s37, %s38
      %p42 = pneg %p36
      %p43 = scmp.eq.s32.totalorder %s13, 3
      %p44 = por %p42, %p43
      %p45 = scmp.ne.s32.totalorder %s37, %s40
      %p46 = scmp.eq.s32.totalorder %s13, 0
      %p47 = por %p45, %p46
      %p48 = scmp.ne.s32.totalorder %s37, %s40
      %p49 = scmp.eq.s32.totalorder %s18, 3
      %p50 = por %p48, %p49
      %p51 = scmp.ne.s32.totalorder %s40, %s41
      %p52 = scmp.eq.s32.totalorder %s18, 0
      %p53 = por %p51, %p52
      %p54 = scmp.ne.s32.totalorder %s40, %s41
      %p55 = scmp.eq.s32.totalorder %s19, 3
      %p56 = por %p54, %p55
      %p58 = scmp.ne.s32.totalorder %s41, %s57
      %p59 = scmp.eq.s32.totalorder %s19, 0
      %p60 = por %p58, %p59
      %s61 = ssub.s32 %s20, %s32
      %s62 = ssub.s32 %s21, %s28
      %s63 = sor.u32 %s61, %s62
      %p64 = scmp.eq.s32.totalorder %s63, 0
      %s66 = sadd.s32 %s65, 1
      %s67 = scalar_select %p64, %s65, %s66
      %p70 = pneg %p64
      %p71 = scmp.eq.s32.totalorder %s13, 3
      %p72 = por %p70, %p71
      %p73 = scmp.ne.s32.totalorder %s65, %s68
      %p74 = scmp.eq.s32.totalorder %s13, 0
      %p75 = por %p73, %p74
      %p76 = scmp.ne.s32.totalorder %s65, %s68
      %p77 = scmp.eq.s32.totalorder %s18, 3
      %p78 = por %p76, %p77
      %p79 = scmp.ne.s32.totalorder %s68, %s69
      %p80 = scmp.eq.s32.totalorder %s18, 0
      %p81 = por %p79, %p80
      %p82 = scmp.ne.s32.totalorder %s68, %s69
      %p83 = scmp.eq.s32.totalorder %s19, 3
      %p84 = por %p82, %p83
      %p86 = scmp.ne.s32.totalorder %s69, %s85
      %p87 = scmp.eq.s32.totalorder %s19, 0
      %p88 = por %p86, %p87
      %s89 = ssub.s32 %s20, %s32
      %p90 = scmp.eq.s32.totalorder %s89, 0
      %s92 = sadd.s32 %s91, 1
      %s93 = scalar_select %p90, %s91, %s92
      %p96 = pneg %p90
      %p97 = scmp.eq.s32.totalorder %s13, 3
      %p98 = por %p96, %p97
      %p99 = scmp.ne.s32.totalorder %s91, %s94
      %p100 = scmp.eq.s32.totalorder %s13, 0
      %p101 = por %p99, %p100
      %p102 = scmp.ne.s32.totalorder %s91, %s94
      %p103 = scmp.eq.s32.totalorder %s18, 3
      %p104 = por %p102, %p103
      %p105 = scmp.ne.s32.totalorder %s94, %s95
      %p106 = scmp.eq.s32.totalorder %s18, 0
      %p107 = por %p105, %p106
      %p108 = scmp.ne.s32.totalorder %s94, %s95
      %p109 = scmp.eq.s32.totalorder %s19, 3
      %p110 = por %p108, %p109
      %p112 = scmp.ne.s32.totalorder %s95, %s111
      %p113 = scmp.eq.s32.totalorder %s19, 0
      %p114 = por %p112, %p113
      %s115 = ssub.s32 %s20, %s32
      %p116 = scmp.eq.s32.totalorder %s115, 0
      %s118 = sadd.s32 %s117, 1
      %s119 = scalar_select %p116, %s117, %s118
      %p122 = pneg %p116
      %p123 = scmp.eq.s32.totalorder %s13, 3
      %p124 = por %p122, %p123
      %p125 = scmp.ne.s32.totalorder %s117, %s120
      %p126 = scmp.eq.s32.totalorder %s13, 0
      %p127 = por %p125, %p126
      %p128 = scmp.ne.s32.totalorder %s117, %s120
      %p129 = scmp.eq.s32.totalorder %s18, 3
      %p130 = por %p128, %p129
      %p131 = scmp.ne.s32.totalorder %s120, %s121
      %p132 = scmp.eq.s32.totalorder %s18, 0
      %p133 = por %p131, %p132
      %p134 = scmp.ne.s32.totalorder %s120, %s121
      %p135 = scmp.eq.s32.totalorder %s19, 3
      %p136 = por %p134, %p135
      %p138 = scmp.ne.s32.totalorder %s121, %s137
      %p139 = scmp.eq.s32.totalorder %s19, 0
      %p140 = por %p138, %p139
      %s141 = ssub.s32 %s20, %s32
      %p142 = scmp.eq.s32.totalorder %s141, 0
      %s144 = sadd.s32 %s143, 1
      %s145 = scalar_select %p142, %s143, %s144
      %p148 = pneg %p142
      %p149 = scmp.eq.s32.totalorder %s13, 3
      %p150 = por %p148, %p149
      %p151 = scmp.ne.s32.totalorder %s143, %s146
      %p152 = scmp.eq.s32.totalorder %s13, 0
      %p153 = por %p151, %p152
      %p154 = scmp.ne.s32.totalorder %s143, %s146
      %p155 = scmp.eq.s32.totalorder %s18, 3
      %p156 = por %p154, %p155
      %p157 = scmp.ne.s32.totalorder %s146, %s147
      %p158 = scmp.eq.s32.totalorder %s18, 0
      %p159 = por %p157, %p158
      %p160 = scmp.ne.s32.totalorder %s146, %s147
      %p161 = scmp.eq.s32.totalorder %s19, 3
      %p162 = por %p160, %p161
      %p164 = scmp.ne.s32.totalorder %s147, %s163
      %p165 = scmp.eq.s32.totalorder %s19, 0
      %p166 = por %p164, %p165
      %p167 = scmp.le.s32.totalorder 1, %s13
      %p168 = scmp.lt.s32.totalorder %s13, 5
      %p169 = pnand %p167, %p168
      %p170 = pneg %p169
      // Predicated region
      $region9: #{_hough_voting_impl.1} parent=5 // pred_check
        _
      $region10: #{_hough_voting_impl.1} parent=5 // pred_check_branch
        %172 = sbr.rel (%p169) target = $region12
      $region11: #{_hough_voting_impl.1} parent=5 // pred_region
        %s173 = ssub.s32 %s13, 1
      $region12: #{_hough_voting_impl.1} parent=5 // pred_fallthru
        _
      %p174 = scmp.lt.s32.totalorder %s13, 4
      // Predicated region
      $region13: #{_hough_voting_impl.1} parent=5 // pred_check
        %p175 = pneg %p174
      $region14: #{_hough_voting_impl.1} parent=5 // pred_check_branch
        %177 = sbr.rel (%p175) target = $region16
      $region15: #{_hough_voting_impl.1} parent=5 // pred_region
        // Predicated region
        $region17: #{_hough_voting_impl.1} parent=15 // pred_check
          %p178 = pneg %p47
        $region18: #{_hough_voting_impl.1} parent=15 // pred_check_branch
          %180 = sbr.rel (%p178) target = $region20
        $region19: #{_hough_voting_impl.1} parent=15 // pred_region
          %s181 = smul.u32 8, %s21
          %s182 = ssub.s32 13, %s181
          %p183 = scmp.lt.s32.totalorder %s182, 8
          %s184 = scalar_select %p183, %s182, 8
          %s185 = smul.u32 2, %s184
          %p186 = scmp.lt.s32.totalorder %s20, 1
          %s187 = scalar_select %p186, %s20, 1
          %p188 = scmp.lt.s32.totalorder %s181, 12
          %s189 = scalar_select %p188, %s181, 12
          %s190 = smul.addr %s187, 13
          %s191 = sadd.s32 %s189, %s190
          %s192 = smul.addr %s191, 2
          %s193 = scalar_lea.vmem %s0, %s192
          %s194 = smul.u32 8, %s21
          %s195 = ssub.s32 13, %s194
          %p196 = scmp.lt.s32.totalorder %s195, 8
          %s197 = scalar_select %p196, %s195, 8
          %s198 = smul.u32 2, %s197
        $region20: #{_hough_voting_impl.1} parent=15 // pred_fallthru
          _
        // Predicated region
        $region21: #{_hough_voting_impl.1} parent=15 // pred_check
          %p199 = pneg %p75
        $region22: #{_hough_voting_impl.1} parent=15 // pred_check_branch
          %201 = sbr.rel (%p199) target = $region24
        $region23: #{_hough_voting_impl.1} parent=15 // pred_region
          %s202 = smul.u32 8, %s21
          %s203 = ssub.s32 13, %s202
          %p204 = scmp.lt.s32.totalorder %s203, 8
          %s205 = scalar_select %p204, %s203, 8
          %p206 = scmp.lt.s32.totalorder %s20, 1
          %s207 = scalar_select %p206, %s20, 1
          %p208 = scmp.lt.s32.totalorder %s202, 12
          %s209 = scalar_select %p208, %s202, 12
          %s210 = smul.addr %s207, 13
          %s211 = sadd.s32 %s209, %s210
          %s212 = scalar_lea.vmem %s1, %s211
          %s213 = smul.u32 8, %s21
          %s214 = ssub.s32 13, %s213
          %p215 = scmp.lt.s32.totalorder %s214, 8
          %s216 = scalar_select %p215, %s214, 8
        $region24: #{_hough_voting_impl.1} parent=15 // pred_fallthru
          _
        // Predicated region
        $region25: #{_hough_voting_impl.1} parent=15 // pred_check
          %p217 = pneg %p101
        $region26: #{_hough_voting_impl.1} parent=15 // pred_check_branch
          %219 = sbr.rel (%p217) target = $region28
        $region27: #{_hough_voting_impl.1} parent=15 // pred_region
          %p220 = scmp.lt.s32.totalorder %s20, 1
          %s221 = scalar_select %p220, %s20, 1
          %s222 = smul.addr %s221, 16
          %s223 = smul.addr %s222, 8
          %s224 = scalar_lea.vmem %s2, %s223
        $region28: #{_hough_voting_impl.1} parent=15 // pred_fallthru
          _
        // Predicated region
        $region29: #{_hough_voting_impl.1} parent=15 // pred_check
          %p225 = pneg %p127
        $region30: #{_hough_voting_impl.1} parent=15 // pred_check_branch
          %227 = sbr.rel (%p225) target = $region32
        $region31: #{_hough_voting_impl.1} parent=15 // pred_region
          %p228 = scmp.lt.s32.totalorder %s20, 1
          %s229 = scalar_select %p228, %s20, 1
          %s230 = smul.addr %s229, 16
          %s231 = smul.addr %s230, 8
          %s232 = scalar_lea.vmem %s3, %s231
        $region32: #{_hough_voting_impl.1} parent=15 // pred_fallthru
          _
      $region16: #{_hough_voting_impl.1} parent=5 // pred_fallthru
        _
      %p233 = scmp.le.s32.totalorder 1, %s13
      %p234 = scmp.lt.s32.totalorder %s13, 5
      %p235 = pnand %p233, %p234
      %p236 = pneg %p235
      // Predicated region
      $region33: #{_hough_voting_impl.1} parent=5 // pred_check
        _
      $region34: #{_hough_voting_impl.1} parent=5 // pred_check_branch
        %238 = sbr.rel (%p235) target = $region36
      $region35: #{_hough_voting_impl.1} parent=5 // pred_region
        %s239 = ssub.s32 %s13, 1
        %s240 = smul.u32 8, %s23
        %s241 = ssub.s32 13, %s240
        %p242 = scmp.lt.s32.totalorder %s241, 8
        %s243 = scalar_select %p242, %s241, 8
        %s244 = smul.u32 2, %s243
        %p245 = scmp.lt.s32.totalorder %s22, 1
        %s246 = scalar_select %p245, %s22, 1
        %p247 = scmp.lt.s32.totalorder %s240, 12
        %s248 = scalar_select %p247, %s240, 12
        %s249 = smul.addr %s246, 13
        %s250 = sadd.s32 %s248, %s249
        %s251 = smul.addr %s250, 2
        %s252 = scalar_lea.vmem %s0, %s251
        %p253 = pneg %p53
        %p254 = pneg %p50
        %s255 = smul.u32 8, %s23
        %s256 = ssub.s32 13, %s255
        %p257 = scmp.lt.s32.totalorder %s256, 8
        %s258 = scalar_select %p257, %s256, 8
        %p259 = scmp.lt.s32.totalorder %s22, 1
        %s260 = scalar_select %p259, %s22, 1
        %p261 = scmp.lt.s32.totalorder %s255, 12
        %s262 = scalar_select %p261, %s255, 12
        %s263 = smul.addr %s260, 13
        %s264 = sadd.s32 %s262, %s263
        %s265 = scalar_lea.vmem %s1, %s264
        %p266 = pneg %p81
        %p267 = pneg %p78
        %p268 = scmp.lt.s32.totalorder %s22, 1
        %s269 = scalar_select %p268, %s22, 1
        %s270 = smul.addr %s269, 16
        %s271 = smul.addr %s270, 8
        %s272 = scalar_lea.vmem %s2, %s271
        %p273 = pneg %p107
        %p274 = pneg %p104
        %p275 = scmp.lt.s32.totalorder %s22, 1
        %s276 = scalar_select %p275, %s22, 1
        %s277 = smul.addr %s276, 16
        %s278 = smul.addr %s277, 8
        %s279 = scalar_lea.vmem %s3, %s278
        %p280 = pneg %p133
        %p281 = pneg %p130
        %p282 = pneg %p159
        %p283 = pneg %p156
        %s284 = sand.u32 %s146, 1
        %s285 = scalar_lea.sflag [#allocation4], %s284
        %s286 = sand.u32 %s146, 1
        %s287 = scalar_lea.vmem [#allocation3], %s286
        %s288 = smul.u32 8, %s23
        %s289 = ssub.s32 13, %s288
        %p290 = scmp.lt.s32.totalorder %s289, 8
        %s291 = scalar_select %p290, %s289, 8
        %s292 = smul.u32 2, %s291
        %p293 = scmp.lt.s32.totalorder %s22, 1
        %s294 = scalar_select %p293, %s22, 1
        %p295 = scmp.lt.s32.totalorder %s288, 12
        %s296 = scalar_select %p295, %s288, 12
        %s297 = smul.addr %s294, 13
        %s298 = sadd.s32 %s296, %s297
        %s299 = smul.addr %s298, 2
        %s300 = scalar_lea.vmem %s0, %s299
        %s301 = smul.u32 8, %s23
        %s302 = ssub.s32 13, %s301
        %p303 = scmp.lt.s32.totalorder %s302, 8
        %s304 = scalar_select %p303, %s302, 8
        %s305 = smul.u32 2, %s304
        %s306 = smul.u32 8, %s23
        %s307 = ssub.s32 13, %s306
        %p308 = scmp.lt.s32.totalorder %s307, 8
        %s309 = scalar_select %p308, %s307, 8
        %p310 = scmp.lt.s32.totalorder %s22, 1
        %s311 = scalar_select %p310, %s22, 1
        %p312 = scmp.lt.s32.totalorder %s306, 12
        %s313 = scalar_select %p312, %s306, 12
        %s314 = smul.addr %s311, 13
        %s315 = sadd.s32 %s313, %s314
        %s316 = scalar_lea.vmem %s1, %s315
        %s317 = smul.u32 8, %s23
        %s318 = ssub.s32 13, %s317
        %p319 = scmp.lt.s32.totalorder %s318, 8
        %s320 = scalar_select %p319, %s318, 8
        %p321 = scmp.lt.s32.totalorder %s22, 1
        %s322 = scalar_select %p321, %s22, 1
        %s323 = smul.addr %s322, 16
        %s324 = smul.addr %s323, 8
        %s325 = scalar_lea.vmem %s2, %s324
        %p326 = scmp.lt.s32.totalorder %s22, 1
        %s327 = scalar_select %p326, %s22, 1
        %s328 = smul.addr %s327, 16
        %s329 = smul.addr %s328, 8
        %s330 = scalar_lea.vmem %s3, %s329
        %p331 = scmp.eq.s32.totalorder %s23, 0
        // Predicated region
        $region37: #{_hough_voting_impl.1} parent=35 // pred_check
          %p332 = pneg %p331
        $region38: #{_hough_voting_impl.1} parent=35 // pred_check_branch
          %334 = sbr.rel (%p332) target = $region40
        $region39: #{_hough_voting_impl.1} parent=35 // pred_region
          %335 = vst [vmem:[#allocation2] sm:$0xff] 0.0
          %336 = vst [vmem:[#allocation2 + $0x8] sm:$0xff] 0.0
          %337 = vst [vmem:[#allocation2 + $0x10] sm:$0xff] 0.0
          %338 = vst [vmem:[#allocation2 + $0x18] sm:$0xff] 0.0
          %339 = vst [vmem:[#allocation2 + $0x20] sm:$0xff] 0.0
          %340 = vst [vmem:[#allocation2 + $0x28] sm:$0xff] 0.0
          %341 = vst [vmem:[#allocation2 + $0x30] sm:$0xff] 0.0
          %342 = vst [vmem:[#allocation2 + $0x38] sm:$0xff] 0.0
          %343 = vst [vmem:[#allocation2 + $0x40] sm:$0xff] 0.0
          %344 = vst [vmem:[#allocation2 + $0x48] sm:$0xff] 0.0
          %345 = vst [vmem:[#allocation2 + $0x50] sm:$0xff] 0.0
          %346 = vst [vmem:[#allocation2 + $0x58] sm:$0xff] 0.0
          %347 = vst [vmem:[#allocation2 + $0x60] sm:$0xff] 0.0
          %348 = vst [vmem:[#allocation2 + $0x68] sm:$0xff] 0.0
          %349 = vst [vmem:[#allocation2 + $0x70] sm:$0xff] 0.0
          %350 = vst [vmem:[#allocation2 + $0x78] sm:$0xff] 0.0
          %351 = vst [vmem:[#allocation2 + $0x80] sm:$0xff] 0.0
          %352 = vst [vmem:[#allocation2 + $0x88] sm:$0xff] 0.0
          %353 = vst [vmem:[#allocation2 + $0x90] sm:$0xff] 0.0
          %354 = vst [vmem:[#allocation2 + $0x98] sm:$0xff] 0.0
          %355 = vst [vmem:[#allocation2 + $0xa0] sm:$0xff] 0.0
          %356 = vst [vmem:[#allocation2 + $0xa8] sm:$0xff] 0.0
          %357 = vst [vmem:[#allocation2 + $0xb0] sm:$0xff] 0.0
          %358 = vst [vmem:[#allocation2 + $0xb8] sm:$0xff] 0.0
          %359 = vst [vmem:[#allocation2 + $0xc0] sm:$0xff] 0.0
          %360 = vst [vmem:[#allocation2 + $0xc8] sm:$0xff] 0.0
          %361 = vst [vmem:[#allocation2 + $0xd0] sm:$0xff] 0.0
          %362 = vst [vmem:[#allocation2 + $0xd8] sm:$0xff] 0.0
          %363 = vst [vmem:[#allocation2 + $0xe0] sm:$0xff] 0.0
          %364 = vst [vmem:[#allocation2 + $0xe8] sm:$0xff] 0.0
          %365 = vst [vmem:[#allocation2 + $0xf0] sm:$0xff] 0.0
          %366 = vst [vmem:[#allocation2 + $0xf8] sm:$0xff] 0.0
          %367 = vst [vmem:[#allocation2 + $0x100] sm:$0xff] 0.0
          %368 = vst [vmem:[#allocation2 + $0x108] sm:$0xff] 0.0
          %369 = vst [vmem:[#allocation2 + $0x110] sm:$0xff] 0.0
          %370 = vst [vmem:[#allocation2 + $0x118] sm:$0xff] 0.0
          %371 = vst [vmem:[#allocation2 + $0x120] sm:$0xff] 0.0
          %372 = vst [vmem:[#allocation2 + $0x128] sm:$0xff] 0.0
          %373 = vst [vmem:[#allocation2 + $0x130] sm:$0xff] 0.0
          %374 = vst [vmem:[#allocation2 + $0x138] sm:$0xff] 0.0
          %375 = vst [vmem:[#allocation2 + $0x140] sm:$0xff] 0.0
          %376 = vst [vmem:[#allocation2 + $0x148] sm:$0xff] 0.0
          %377 = vst [vmem:[#allocation2 + $0x150] sm:$0xff] 0.0
          %378 = vst [vmem:[#allocation2 + $0x158] sm:$0xff] 0.0
          %379 = vst [vmem:[#allocation2 + $0x160] sm:$0xff] 0.0
          %380 = vst [vmem:[#allocation2 + $0x168] sm:$0xff] 0.0
          %381 = vst [vmem:[#allocation2 + $0x170] sm:$0xff] 0.0
          %382 = vst [vmem:[#allocation2 + $0x178] sm:$0xff] 0.0
          %383 = vst [vmem:[#allocation2 + $0x180] sm:$0xff] 0.0
          %384 = vst [vmem:[#allocation2 + $0x188] sm:$0xff] 0.0
          %385 = vst [vmem:[#allocation2 + $0x190] sm:$0xff] 0.0
          %386 = vst [vmem:[#allocation2 + $0x198] sm:$0xff] 0.0
          %387 = vst [vmem:[#allocation2 + $0x1a0] sm:$0xff] 0.0
          %388 = vst [vmem:[#allocation2 + $0x1a8] sm:$0xff] 0.0
          %389 = vst [vmem:[#allocation2 + $0x1b0] sm:$0xff] 0.0
          %390 = vst [vmem:[#allocation2 + $0x1b8] sm:$0xff] 0.0
          %391 = vst [vmem:[#allocation2 + $0x1c0] sm:$0xff] 0.0
          %392 = vst [vmem:[#allocation2 + $0x1c8] sm:$0xff] 0.0
          %393 = vst [vmem:[#allocation2 + $0x1d0] sm:$0xff] 0.0
          %394 = vst [vmem:[#allocation2 + $0x1d8] sm:$0xff] 0.0
          %395 = vst [vmem:[#allocation2 + $0x1e0] sm:$0xff] 0.0
          %396 = vst [vmem:[#allocation2 + $0x1e8] sm:$0xff] 0.0
          %397 = vst [vmem:[#allocation2 + $0x1f0] sm:$0xff] 0.0
          %398 = vst [vmem:[#allocation2 + $0x1f8] sm:$0xff] 0.0
        $region40: #{_hough_voting_impl.1} parent=35 // pred_fallthru
          _
        %v399 = vld [vmem:[%s325] sm:$0xff]
        %v400 = vld [vmem:[%s325 + $0x8] sm:$0xff]
        %v401 = vld [vmem:[%s325 + $0x10] sm:$0xff]
        %v402 = vld [vmem:[%s325 + $0x18] sm:$0xff]
        %v403 = vld [vmem:[%s325 + $0x20] sm:$0xff]
        %v404 = vld [vmem:[%s325 + $0x28] sm:$0xff]
        %v405 = vld [vmem:[%s325 + $0x30] sm:$0xff]
        %v406 = vld [vmem:[%s325 + $0x38] sm:$0xff]
        %v407 = vld [vmem:[%s325 + $0x40] sm:$0xff]
        %v408 = vld [vmem:[%s325 + $0x48] sm:$0xff]
        %v409 = vld [vmem:[%s325 + $0x50] sm:$0xff]
        %v410 = vld [vmem:[%s325 + $0x58] sm:$0xff]
        %v411 = vld [vmem:[%s325 + $0x60] sm:$0xff]
        %v412 = vld [vmem:[%s325 + $0x68] sm:$0xff]
        %v413 = vld [vmem:[%s325 + $0x70] sm:$0xff]
        %v414 = vld [vmem:[%s325 + $0x78] sm:$0xff]
        %v415 = vld [vmem:[%s330] sm:$0x1]
        %s416 = smul.u32 %s23, 1024
        %v417 = vld [vmem:[%s300] ss:$2 sm:$0xf]
        %s418 = scalar_lea.vmem %s300, 1
        %v419 = vld [vmem:[%s418] ss:$2 sm:$0xf]
        %v420 = vld [vmem:[%s316] sm:$0xf]
        %v421 = vlaneseq
        %v422 = vand.u32 %v421, 127
        %v423 = vadd.s32 %v422, 128
        %v424 = vadd.s32 %v422, 256
        %v425 = vadd.s32 %v422, 384
        %v426 = vstv %s416
        %v427 = vadd.s32 %v426, %v422
        %v428 = vadd.s32 %v426, %v423
        %v429 = vadd.s32 %v426, %v424
        %v430 = vadd.s32 %v426, %v425
        %vm431 = vcmp.lt.s32.totalorder %v427, 1600
        %vm432 = vcmp.lt.s32.totalorder %v428, 1600
        %vm433 = vcmp.lt.s32.totalorder %v429, 1600
        %vm434 = vcmp.lt.s32.totalorder %v430, 1600
        %vm435 = vcmp.gt.f32.partialorder %v420, 0.5
        %v436 = vsel %vm435, 1, 0
        %v437 = vperm.slane %v436, 0
        %v438 = vperm.slane %v436, 1
        %v439 = vperm.slane %v436, 2
        %v440 = vperm.slane %v436, 3
        %vm441 = vcmp.ne.s32.totalorder %v437, 0
        %vm442 = vcmp.ne.s32.totalorder %v438, 0
        %vm443 = vcmp.ne.s32.totalorder %v439, 0
        %vm444 = vcmp.ne.s32.totalorder %v440, 0
        %vm445 = vmand %vm431, %vm441
        %vm446 = vmand %vm432, %vm442
        %vm447 = vmand %vm433, %vm443
        %vm448 = vmand %vm434, %vm444
        %v450 = vperm.slane %v417, 0
        %v451 = vperm.slane %v417, 1
        %v452 = vperm.slane %v417, 2
        %v453 = vperm.slane %v417, 3
        %v458 = vsel %vm445, %v450, 0.0
        %v459 = vsel %vm446, %v451, 0.0
        %v460 = vsel %vm447, %v452, 0.0
        %v461 = vsel %vm448, %v453, 0.0
        %v463 = vperm.slane %v419, 0
        %v464 = vperm.slane %v419, 1
        %v465 = vperm.slane %v419, 2
        %v466 = vperm.slane %v419, 3
        %v471 = vsel %vm445, %v463, 0.0
        %v472 = vsel %vm446, %v464, 0.0
        %v473 = vsel %vm447, %v465, 0.0
        %v474 = vsel %vm448, %v466, 0.0
        %v475 = vcvt.s32.f32 %v427
        %v476 = vcvt.s32.f32 %v428
        %v477 = vcvt.s32.f32 %v429
        %v478 = vcvt.s32.f32 %v430
        %v479 = vadd.f32 %v475, 0.5
        %v480 = vadd.f32 %v476, 0.5
        %v481 = vadd.f32 %v477, 0.5
        %v482 = vadd.f32 %v478, 0.5
        %v483 = vrcp.pop 40.0
        %v484 = vmul.f32 40.0, %v483
        %v485 = vsub.f32 1.0, %v484
        %v486 = vmul.f32 %v483, %v485
        %v487 = vadd.f32 %v483, %v486
        %vm488 = vweird.f32 %v483
        %v489 = vsel %vm488, %v483, %v487
        %v490 = vmul.f32 %v479, %v489
        %v491 = vmul.f32 %v480, %v489
        %v492 = vmul.f32 %v481, %v489
        %v493 = vmul.f32 %v482, %v489
        %v494 = vfloor.f32 %v490
        %v495 = vfloor.f32 %v491
        %v496 = vfloor.f32 %v492
        %v497 = vfloor.f32 %v493
        %v498 = vmul.f32 %v494, 40.0
        %v499 = vmul.f32 %v495, 40.0
        %v500 = vmul.f32 %v496, 40.0
        %v501 = vmul.f32 %v497, 40.0
        %v502 = vsub.f32 %v475, %v498
        %v503 = vsub.f32 %v476, %v499
        %v504 = vsub.f32 %v477, %v500
        %v505 = vsub.f32 %v478, %v501
        %507 = vset.pattern.permute.xlu0 3
        %508 = vperm.xlu0 %507, %v415
        %v509 = vpop.permute.xlu0 %508
        %v511 = vsub.f32 %v494, %v509
        %v512 = vsub.f32 %v495, %v509
        %v513 = vsub.f32 %v496, %v509
        %v514 = vsub.f32 %v497, %v509
        %v515 = vmul.f32 %v511, %v458
        %v516 = vmul.f32 %v512, %v459
        %v517 = vmul.f32 %v513, %v460
        %v518 = vmul.f32 %v514, %v461
        %519 = vset.pattern.permute.xlu0 4
        %520 = vperm.xlu0 %519, %v415
        %v521 = vpop.permute.xlu0 %520
        %v523 = vsub.f32 %v502, %v521
        %v524 = vsub.f32 %v503, %v521
        %v525 = vsub.f32 %v504, %v521
        %v526 = vsub.f32 %v505, %v521
        %v527 = vmul.f32 %v523, %v471
        %v528 = vmul.f32 %v524, %v472
        %v529 = vmul.f32 %v525, %v473
        %v530 = vmul.f32 %v526, %v474
        %v531 = vadd.f32 %v515, %v527
        %v532 = vadd.f32 %v516, %v528
        %v533 = vadd.f32 %v517, %v529
        %v534 = vadd.f32 %v518, %v530
        %v535 = vsub.f32 0.0, %v531
        %v536 = vsub.f32 0.0, %v532
        %v537 = vsub.f32 0.0, %v533
        %v538 = vsub.f32 0.0, %v534
        %v543 = vrot.slane %v471, 7
        %v544 = vrot.slane %v472, 7
        %v545 = vrot.slane %v473, 7
        %v546 = vrot.slane %v474, 7
        %v555 = vrot.slane %v535, 6
        %v556 = vrot.slane %v536, 6
        %v557 = vrot.slane %v537, 6
        %v558 = vrot.slane %v538, 6
        %vm563 = vcmask 1040384
        %v564 = vsel %vm563, %v458, %v543
        %v565 = vsel %vm563, %v459, %v544
        %v566 = vsel %vm563, %v460, %v545
        %v567 = vsel %vm563, %v461, %v546
        %vm568 = vcmask 1041408
        %v569 = vsel %vm568, %v564, %v555
        %v570 = vsel %vm568, %v565, %v556
        %v571 = vsel %vm568, %v566, %v557
        %v572 = vsel %vm568, %v567, %v558
        %vm573 = vcmask 23552
        %v575 = vsel %vm573, %v399, 0
        %v578 = vsel %vm573, %v400, 0
        %v581 = vsel %vm573, %v401, 0
        %v584 = vsel %vm573, %v402, 0
        %v587 = vsel %vm573, %v403, 0
        %v590 = vsel %vm573, %v404, 0
        %v593 = vsel %vm573, %v405, 0
        %v596 = vsel %vm573, %v406, 0
        %v599 = vsel %vm573, %v407, 0
        %v602 = vsel %vm573, %v408, 0
        %v605 = vsel %vm573, %v409, 0
        %v608 = vsel %vm573, %v410, 0
        %v611 = vsel %vm573, %v411, 0
        %v614 = vsel %vm573, %v412, 0
        %v617 = vsel %vm573, %v413, 0
        %v620 = vsel %vm573, %v414, 0
        %vm622 = vcmask 1042432
        %v624 = vsel %vm622, %v569, 0
        %v627 = vsel %vm622, %v570, 0
        %v630 = vsel %vm622, %v571, 0
        %v633 = vsel %vm622, %v572, 0
        %635 = vmatpush.msra.mxu0 0.0
        %636 = vmatpush.msra.mxu0 0.0
        %637 = vmatpush.msra.mxu0 0.0
        %638 = vmatpush.msra.mxu0 0.0
        %639 = vmatpush.msra.mxu0 0.0
        %640 = vmatpush.msra.mxu0 0.0
        %641 = vmatpush.msra.mxu0 0.0
        %642 = vmatpush.msra.mxu0 0.0
        %643 = vmatpush.msra.mxu0 0.0
        %644 = vmatpush.msra.mxu0 0.0
        %645 = vmatpush.msra.mxu0 0.0
        %646 = vmatpush.msra.mxu0 0.0
        %647 = vmatpush.msra.mxu0 0.0
        %648 = vmatpush.msra.mxu0 0.0
        %649 = vmatpush.msra.mxu0 0.0
        %v650 = vand.u32 %v624, 4294901760
        %651 = vmatpush.msra.mxu0 %v650
        %v652 = vand.u32 %v575, 4294901760
        %v653 = vsub.f32 %v575, %v652
        %v654 = vand.u32 %v653, 4294901760
        %v655 = vsub.f32 %v653, %v654
        %v656 = vand.u32 %v655, 4294901760
        %657 = vmatmul.f32.gmra.mxu0 %v656
        %v658 = vpop.f32.mrf.mxu0
        %v659 = vadd.f32 0.0, %v658
        %v660 = vand.u32 %v578, 4294901760
        %v661 = vsub.f32 %v578, %v660
        %v662 = vand.u32 %v661, 4294901760
        %v663 = vsub.f32 %v661, %v662
        %v664 = vand.u32 %v663, 4294901760
        %665 = vmatmul.f32.gmra.mxu0 %v664
        %v666 = vpop.f32.mrf.mxu0
        %v667 = vadd.f32 0.0, %v666
        %v668 = vand.u32 %v581, 4294901760
        %v669 = vsub.f32 %v581, %v668
        %v670 = vand.u32 %v669, 4294901760
        %v671 = vsub.f32 %v669, %v670
        %v672 = vand.u32 %v671, 4294901760
        %673 = vmatmul.f32.gmra.mxu0 %v672
        %v674 = vpop.f32.mrf.mxu0
        %v675 = vadd.f32 0.0, %v674
        %v676 = vand.u32 %v584, 4294901760
        %v677 = vsub.f32 %v584, %v676
        %v678 = vand.u32 %v677, 4294901760
        %v679 = vsub.f32 %v677, %v678
        %v680 = vand.u32 %v679, 4294901760
        %681 = vmatmul.f32.gmra.mxu0 %v680
        %v682 = vpop.f32.mrf.mxu0
        %v683 = vadd.f32 0.0, %v682
        %v684 = vand.u32 %v587, 4294901760
        %v685 = vsub.f32 %v587, %v684
        %v686 = vand.u32 %v685, 4294901760
        %v687 = vsub.f32 %v685, %v686
        %v688 = vand.u32 %v687, 4294901760
        %689 = vmatmul.f32.gmra.mxu0 %v688
        %v690 = vpop.f32.mrf.mxu0
        %v691 = vadd.f32 0.0, %v690
        %v692 = vand.u32 %v590, 4294901760
        %v693 = vsub.f32 %v590, %v692
        %v694 = vand.u32 %v693, 4294901760
        %v695 = vsub.f32 %v693, %v694
        %v696 = vand.u32 %v695, 4294901760
        %697 = vmatmul.f32.gmra.mxu0 %v696
        %v698 = vpop.f32.mrf.mxu0
        %v699 = vadd.f32 0.0, %v698
        %v700 = vand.u32 %v593, 4294901760
        %v701 = vsub.f32 %v593, %v700
        %v702 = vand.u32 %v701, 4294901760
        %v703 = vsub.f32 %v701, %v702
        %v704 = vand.u32 %v703, 4294901760
        %705 = vmatmul.f32.gmra.mxu0 %v704
        %v706 = vpop.f32.mrf.mxu0
        %v707 = vadd.f32 0.0, %v706
        %v708 = vand.u32 %v596, 4294901760
        %v709 = vsub.f32 %v596, %v708
        %v710 = vand.u32 %v709, 4294901760
        %v711 = vsub.f32 %v709, %v710
        %v712 = vand.u32 %v711, 4294901760
        %713 = vmatmul.f32.gmra.mxu0 %v712
        %v714 = vpop.f32.mrf.mxu0
        %v715 = vadd.f32 0.0, %v714
        %v716 = vand.u32 %v599, 4294901760
        %v717 = vsub.f32 %v599, %v716
        %v718 = vand.u32 %v717, 4294901760
        %v719 = vsub.f32 %v717, %v718
        %v720 = vand.u32 %v719, 4294901760
        %721 = vmatmul.f32.gmra.mxu0 %v720
        %v722 = vpop.f32.mrf.mxu0
        %v723 = vadd.f32 0.0, %v722
        %v724 = vand.u32 %v602, 4294901760
        %v725 = vsub.f32 %v602, %v724
        %v726 = vand.u32 %v725, 4294901760
        %v727 = vsub.f32 %v725, %v726
        %v728 = vand.u32 %v727, 4294901760
        %729 = vmatmul.f32.gmra.mxu0 %v728
        %v730 = vpop.f32.mrf.mxu0
        %v731 = vadd.f32 0.0, %v730
        %v732 = vand.u32 %v605, 4294901760
        %v733 = vsub.f32 %v605, %v732
        %v734 = vand.u32 %v733, 4294901760
        %v735 = vsub.f32 %v733, %v734
        %v736 = vand.u32 %v735, 4294901760
        %737 = vmatmul.f32.gmra.mxu0 %v736
        %v738 = vpop.f32.mrf.mxu0
        %v739 = vadd.f32 0.0, %v738
        %v740 = vand.u32 %v608, 4294901760
        %v741 = vsub.f32 %v608, %v740
        %v742 = vand.u32 %v741, 4294901760
        %v743 = vsub.f32 %v741, %v742
        %v744 = vand.u32 %v743, 4294901760
        %745 = vmatmul.f32.gmra.mxu0 %v744
        %v746 = vpop.f32.mrf.mxu0
        %v747 = vadd.f32 0.0, %v746
        %v748 = vand.u32 %v611, 4294901760
        %v749 = vsub.f32 %v611, %v748
        %v750 = vand.u32 %v749, 4294901760
        %v751 = vsub.f32 %v749, %v750
        %v752 = vand.u32 %v751, 4294901760
        %753 = vmatmul.f32.gmra.mxu0 %v752
        %v754 = vpop.f32.mrf.mxu0
        %v755 = vadd.f32 0.0, %v754
        %v756 = vand.u32 %v614, 4294901760
        %v757 = vsub.f32 %v614, %v756
        %v758 = vand.u32 %v757, 4294901760
        %v759 = vsub.f32 %v757, %v758
        %v760 = vand.u32 %v759, 4294901760
        %761 = vmatmul.f32.gmra.mxu0 %v760
        %v762 = vpop.f32.mrf.mxu0
        %v763 = vadd.f32 0.0, %v762
        %v764 = vand.u32 %v617, 4294901760
        %v765 = vsub.f32 %v617, %v764
        %v766 = vand.u32 %v765, 4294901760
        %v767 = vsub.f32 %v765, %v766
        %v768 = vand.u32 %v767, 4294901760
        %769 = vmatmul.f32.gmra.mxu0 %v768
        %v770 = vpop.f32.mrf.mxu0
        %v771 = vadd.f32 0.0, %v770
        %v772 = vand.u32 %v620, 4294901760
        %v773 = vsub.f32 %v620, %v772
        %v774 = vand.u32 %v773, 4294901760
        %v775 = vsub.f32 %v773, %v774
        %v776 = vand.u32 %v775, 4294901760
        %777 = vmatmul.f32.gmra.mxu0 %v776
        %v778 = vpop.f32.mrf.mxu0
        %v779 = vadd.f32 0.0, %v778
        %780 = vdwg.mxu0
        %781 = vmatpush.msra.mxu0 0.0
        %782 = vmatpush.msra.mxu0 0.0
        %783 = vmatpush.msra.mxu0 0.0
        %784 = vmatpush.msra.mxu0 0.0
        %785 = vmatpush.msra.mxu0 0.0
        %786 = vmatpush.msra.mxu0 0.0
        %787 = vmatpush.msra.mxu0 0.0
        %788 = vmatpush.msra.mxu0 0.0
        %789 = vmatpush.msra.mxu0 0.0
        %790 = vmatpush.msra.mxu0 0.0
        %791 = vmatpush.msra.mxu0 0.0
        %792 = vmatpush.msra.mxu0 0.0
        %793 = vmatpush.msra.mxu0 0.0
        %794 = vmatpush.msra.mxu0 0.0
        %795 = vmatpush.msra.mxu0 0.0
        %v796 = vand.u32 %v624, 4294901760
        %v797 = vsub.f32 %v624, %v796
        %v798 = vand.u32 %v797, 4294901760
        %v799 = vsub.f32 %v797, %v798
        %v800 = vand.u32 %v799, 4294901760
        %801 = vmatpush.msra.mxu0 %v800
        %v802 = vand.u32 %v575, 4294901760
        %803 = vmatmul.f32.gmra.mxu0 %v802
        %v804 = vpop.f32.mrf.mxu0
        %v805 = vadd.f32 %v659, %v804
        %v806 = vand.u32 %v578, 4294901760
        %807 = vmatmul.f32.gmra.mxu0 %v806
        %v808 = vpop.f32.mrf.mxu0
        %v809 = vadd.f32 %v667, %v808
        %v810 = vand.u32 %v581, 4294901760
        %811 = vmatmul.f32.gmra.mxu0 %v810
        %v812 = vpop.f32.mrf.mxu0
        %v813 = vadd.f32 %v675, %v812
        %v814 = vand.u32 %v584, 4294901760
        %815 = vmatmul.f32.gmra.mxu0 %v814
        %v816 = vpop.f32.mrf.mxu0
        %v817 = vadd.f32 %v683, %v816
        %v818 = vand.u32 %v587, 4294901760
        %819 = vmatmul.f32.gmra.mxu0 %v818
        %v820 = vpop.f32.mrf.mxu0
        %v821 = vadd.f32 %v691, %v820
        %v822 = vand.u32 %v590, 4294901760
        %823 = vmatmul.f32.gmra.mxu0 %v822
        %v824 = vpop.f32.mrf.mxu0
        %v825 = vadd.f32 %v699, %v824
        %v826 = vand.u32 %v593, 4294901760
        %827 = vmatmul.f32.gmra.mxu0 %v826
        %v828 = vpop.f32.mrf.mxu0
        %v829 = vadd.f32 %v707, %v828
        %v830 = vand.u32 %v596, 4294901760
        %831 = vmatmul.f32.gmra.mxu0 %v830
        %v832 = vpop.f32.mrf.mxu0
        %v833 = vadd.f32 %v715, %v832
        %v834 = vand.u32 %v599, 4294901760
        %835 = vmatmul.f32.gmra.mxu0 %v834
        %v836 = vpop.f32.mrf.mxu0
        %v837 = vadd.f32 %v723, %v836
        %v838 = vand.u32 %v602, 4294901760
        %839 = vmatmul.f32.gmra.mxu0 %v838
        %v840 = vpop.f32.mrf.mxu0
        %v841 = vadd.f32 %v731, %v840
        %v842 = vand.u32 %v605, 4294901760
        %843 = vmatmul.f32.gmra.mxu0 %v842
        %v844 = vpop.f32.mrf.mxu0
        %v845 = vadd.f32 %v739, %v844
        %v846 = vand.u32 %v608, 4294901760
        %847 = vmatmul.f32.gmra.mxu0 %v846
        %v848 = vpop.f32.mrf.mxu0
        %v849 = vadd.f32 %v747, %v848
        %v850 = vand.u32 %v611, 4294901760
        %851 = vmatmul.f32.gmra.mxu0 %v850
        %v852 = vpop.f32.mrf.mxu0
        %v853 = vadd.f32 %v755, %v852
        %v854 = vand.u32 %v614, 4294901760
        %855 = vmatmul.f32.gmra.mxu0 %v854
        %v856 = vpop.f32.mrf.mxu0
        %v857 = vadd.f32 %v763, %v856
        %v858 = vand.u32 %v617, 4294901760
        %859 = vmatmul.f32.gmra.mxu0 %v858
        %v860 = vpop.f32.mrf.mxu0
        %v861 = vadd.f32 %v771, %v860
        %v862 = vand.u32 %v620, 4294901760
        %863 = vmatmul.f32.gmra.mxu0 %v862
        %v864 = vpop.f32.mrf.mxu0
        %v865 = vadd.f32 %v779, %v864
        %866 = vdwg.mxu0
        %867 = vmatpush.msra.mxu0 0.0
        %868 = vmatpush.msra.mxu0 0.0
        %869 = vmatpush.msra.mxu0 0.0
        %870 = vmatpush.msra.mxu0 0.0
        %871 = vmatpush.msra.mxu0 0.0
        %872 = vmatpush.msra.mxu0 0.0
        %873 = vmatpush.msra.mxu0 0.0
        %874 = vmatpush.msra.mxu0 0.0
        %875 = vmatpush.msra.mxu0 0.0
        %876 = vmatpush.msra.mxu0 0.0
        %877 = vmatpush.msra.mxu0 0.0
        %878 = vmatpush.msra.mxu0 0.0
        %879 = vmatpush.msra.mxu0 0.0
        %880 = vmatpush.msra.mxu0 0.0
        %881 = vmatpush.msra.mxu0 0.0
        %v882 = vand.u32 %v624, 4294901760
        %v883 = vsub.f32 %v624, %v882
        %884 = vmatpush.msra.mxu0 %v883
        %v885 = vand.u32 %v575, 4294901760
        %v886 = vsub.f32 %v575, %v885
        %887 = vmatmul.f32.gmra.mxu0 %v886
        %v888 = vpop.f32.mrf.mxu0
        %v889 = vadd.f32 %v805, %v888
        %v890 = vand.u32 %v578, 4294901760
        %v891 = vsub.f32 %v578, %v890
        %892 = vmatmul.f32.gmra.mxu0 %v891
        %v893 = vpop.f32.mrf.mxu0
        %v894 = vadd.f32 %v809, %v893
        %v895 = vand.u32 %v581, 4294901760
        %v896 = vsub.f32 %v581, %v895
        %897 = vmatmul.f32.gmra.mxu0 %v896
        %v898 = vpop.f32.mrf.mxu0
        %v899 = vadd.f32 %v813, %v898
        %v900 = vand.u32 %v584, 4294901760
        %v901 = vsub.f32 %v584, %v900
        %902 = vmatmul.f32.gmra.mxu0 %v901
        %v903 = vpop.f32.mrf.mxu0
        %v904 = vadd.f32 %v817, %v903
        %v905 = vand.u32 %v587, 4294901760
        %v906 = vsub.f32 %v587, %v905
        %907 = vmatmul.f32.gmra.mxu0 %v906
        %v908 = vpop.f32.mrf.mxu0
        %v909 = vadd.f32 %v821, %v908
        %v910 = vand.u32 %v590, 4294901760
        %v911 = vsub.f32 %v590, %v910
        %912 = vmatmul.f32.gmra.mxu0 %v911
        %v913 = vpop.f32.mrf.mxu0
        %v914 = vadd.f32 %v825, %v913
        %v915 = vand.u32 %v593, 4294901760
        %v916 = vsub.f32 %v593, %v915
        %917 = vmatmul.f32.gmra.mxu0 %v916
        %v918 = vpop.f32.mrf.mxu0
        %v919 = vadd.f32 %v829, %v918
        %v920 = vand.u32 %v596, 4294901760
        %v921 = vsub.f32 %v596, %v920
        %922 = vmatmul.f32.gmra.mxu0 %v921
        %v923 = vpop.f32.mrf.mxu0
        %v924 = vadd.f32 %v833, %v923
        %v925 = vand.u32 %v599, 4294901760
        %v926 = vsub.f32 %v599, %v925
        %927 = vmatmul.f32.gmra.mxu0 %v926
        %v928 = vpop.f32.mrf.mxu0
        %v929 = vadd.f32 %v837, %v928
        %v930 = vand.u32 %v602, 4294901760
        %v931 = vsub.f32 %v602, %v930
        %932 = vmatmul.f32.gmra.mxu0 %v931
        %v933 = vpop.f32.mrf.mxu0
        %v934 = vadd.f32 %v841, %v933
        %v935 = vand.u32 %v605, 4294901760
        %v936 = vsub.f32 %v605, %v935
        %937 = vmatmul.f32.gmra.mxu0 %v936
        %v938 = vpop.f32.mrf.mxu0
        %v939 = vadd.f32 %v845, %v938
        %v940 = vand.u32 %v608, 4294901760
        %v941 = vsub.f32 %v608, %v940
        %942 = vmatmul.f32.gmra.mxu0 %v941
        %v943 = vpop.f32.mrf.mxu0
        %v944 = vadd.f32 %v849, %v943
        %v945 = vand.u32 %v611, 4294901760
        %v946 = vsub.f32 %v611, %v945
        %947 = vmatmul.f32.gmra.mxu0 %v946
        %v948 = vpop.f32.mrf.mxu0
        %v949 = vadd.f32 %v853, %v948
        %v950 = vand.u32 %v614, 4294901760
        %v951 = vsub.f32 %v614, %v950
        %952 = vmatmul.f32.gmra.mxu0 %v951
        %v953 = vpop.f32.mrf.mxu0
        %v954 = vadd.f32 %v857, %v953
        %v955 = vand.u32 %v617, 4294901760
        %v956 = vsub.f32 %v617, %v955
        %957 = vmatmul.f32.gmra.mxu0 %v956
        %v958 = vpop.f32.mrf.mxu0
        %v959 = vadd.f32 %v861, %v958
        %v960 = vand.u32 %v620, 4294901760
        %v961 = vsub.f32 %v620, %v960
        %962 = vmatmul.f32.gmra.mxu0 %v961
        %v963 = vpop.f32.mrf.mxu0
        %v964 = vadd.f32 %v865, %v963
        %965 = vdwg.mxu0
        %966 = vmatpush.msra.mxu0 0.0
        %967 = vmatpush.msra.mxu0 0.0
        %968 = vmatpush.msra.mxu0 0.0
        %969 = vmatpush.msra.mxu0 0.0
        %970 = vmatpush.msra.mxu0 0.0
        %971 = vmatpush.msra.mxu0 0.0
        %972 = vmatpush.msra.mxu0 0.0
        %973 = vmatpush.msra.mxu0 0.0
        %974 = vmatpush.msra.mxu0 0.0
        %975 = vmatpush.msra.mxu0 0.0
        %976 = vmatpush.msra.mxu0 0.0
        %977 = vmatpush.msra.mxu0 0.0
        %978 = vmatpush.msra.mxu0 0.0
        %979 = vmatpush.msra.mxu0 0.0
        %980 = vmatpush.msra.mxu0 0.0
        %v981 = vand.u32 %v624, 4294901760
        %982 = vmatpush.msra.mxu0 %v981
        %v983 = vand.u32 %v575, 4294901760
        %v984 = vsub.f32 %v575, %v983
        %v985 = vand.u32 %v984, 4294901760
        %986 = vmatmul.f32.gmra.mxu0 %v985
        %v987 = vpop.f32.mrf.mxu0
        %v988 = vadd.f32 %v889, %v987
        %v989 = vand.u32 %v578, 4294901760
        %v990 = vsub.f32 %v578, %v989
        %v991 = vand.u32 %v990, 4294901760
        %992 = vmatmul.f32.gmra.mxu0 %v991
        %v993 = vpop.f32.mrf.mxu0
        %v994 = vadd.f32 %v894, %v993
        %v995 = vand.u32 %v581, 4294901760
        %v996 = vsub.f32 %v581, %v995
        %v997 = vand.u32 %v996, 4294901760
        %998 = vmatmul.f32.gmra.mxu0 %v997
        %v999 = vpop.f32.mrf.mxu0
        %v1000 = vadd.f32 %v899, %v999
        %v1001 = vand.u32 %v584, 4294901760
        %v1002 = vsub.f32 %v584, %v1001
        %v1003 = vand.u32 %v1002, 4294901760
        %1004 = vmatmul.f32.gmra.mxu0 %v1003
        %v1005 = vpop.f32.mrf.mxu0
        %v1006 = vadd.f32 %v904, %v1005
        %v1007 = vand.u32 %v587, 4294901760
        %v1008 = vsub.f32 %v587, %v1007
        %v1009 = vand.u32 %v1008, 4294901760
        %1010 = vmatmul.f32.gmra.mxu0 %v1009
        %v1011 = vpop.f32.mrf.mxu0
        %v1012 = vadd.f32 %v909, %v1011
        %v1013 = vand.u32 %v590, 4294901760
        %v1014 = vsub.f32 %v590, %v1013
        %v1015 = vand.u32 %v1014, 4294901760
        %1016 = vmatmul.f32.gmra.mxu0 %v1015
        %v1017 = vpop.f32.mrf.mxu0
        %v1018 = vadd.f32 %v914, %v1017
        %v1019 = vand.u32 %v593, 4294901760
        %v1020 = vsub.f32 %v593, %v1019
        %v1021 = vand.u32 %v1020, 4294901760
        %1022 = vmatmul.f32.gmra.mxu0 %v1021
        %v1023 = vpop.f32.mrf.mxu0
        %v1024 = vadd.f32 %v919, %v1023
        %v1025 = vand.u32 %v596, 4294901760
        %v1026 = vsub.f32 %v596, %v1025
        %v1027 = vand.u32 %v1026, 4294901760
        %1028 = vmatmul.f32.gmra.mxu0 %v1027
        %v1029 = vpop.f32.mrf.mxu0
        %v1030 = vadd.f32 %v924, %v1029
        %v1031 = vand.u32 %v599, 4294901760
        %v1032 = vsub.f32 %v599, %v1031
        %v1033 = vand.u32 %v1032, 4294901760
        %1034 = vmatmul.f32.gmra.mxu0 %v1033
        %v1035 = vpop.f32.mrf.mxu0
        %v1036 = vadd.f32 %v929, %v1035
        %v1037 = vand.u32 %v602, 4294901760
        %v1038 = vsub.f32 %v602, %v1037
        %v1039 = vand.u32 %v1038, 4294901760
        %1040 = vmatmul.f32.gmra.mxu0 %v1039
        %v1041 = vpop.f32.mrf.mxu0
        %v1042 = vadd.f32 %v934, %v1041
        %v1043 = vand.u32 %v605, 4294901760
        %v1044 = vsub.f32 %v605, %v1043
        %v1045 = vand.u32 %v1044, 4294901760
        %1046 = vmatmul.f32.gmra.mxu0 %v1045
        %v1047 = vpop.f32.mrf.mxu0
        %v1048 = vadd.f32 %v939, %v1047
        %v1049 = vand.u32 %v608, 4294901760
        %v1050 = vsub.f32 %v608, %v1049
        %v1051 = vand.u32 %v1050, 4294901760
        %1052 = vmatmul.f32.gmra.mxu0 %v1051
        %v1053 = vpop.f32.mrf.mxu0
        %v1054 = vadd.f32 %v944, %v1053
        %v1055 = vand.u32 %v611, 4294901760
        %v1056 = vsub.f32 %v611, %v1055
        %v1057 = vand.u32 %v1056, 4294901760
        %1058 = vmatmul.f32.gmra.mxu0 %v1057
        %v1059 = vpop.f32.mrf.mxu0
        %v1060 = vadd.f32 %v949, %v1059
        %v1061 = vand.u32 %v614, 4294901760
        %v1062 = vsub.f32 %v614, %v1061
        %v1063 = vand.u32 %v1062, 4294901760
        %1064 = vmatmul.f32.gmra.mxu0 %v1063
        %v1065 = vpop.f32.mrf.mxu0
        %v1066 = vadd.f32 %v954, %v1065
        %v1067 = vand.u32 %v617, 4294901760
        %v1068 = vsub.f32 %v617, %v1067
        %v1069 = vand.u32 %v1068, 4294901760
        %1070 = vmatmul.f32.gmra.mxu0 %v1069
        %v1071 = vpop.f32.mrf.mxu0
        %v1072 = vadd.f32 %v959, %v1071
        %v1073 = vand.u32 %v620, 4294901760
        %v1074 = vsub.f32 %v620, %v1073
        %v1075 = vand.u32 %v1074, 4294901760
        %1076 = vmatmul.f32.gmra.mxu0 %v1075
        %v1077 = vpop.f32.mrf.mxu0
        %v1078 = vadd.f32 %v964, %v1077
        %1079 = vdwg.mxu0
        %1080 = vmatpush.msra.mxu0 0.0
        %1081 = vmatpush.msra.mxu0 0.0
        %1082 = vmatpush.msra.mxu0 0.0
        %1083 = vmatpush.msra.mxu0 0.0
        %1084 = vmatpush.msra.mxu0 0.0
        %1085 = vmatpush.msra.mxu0 0.0
        %1086 = vmatpush.msra.mxu0 0.0
        %1087 = vmatpush.msra.mxu0 0.0
        %1088 = vmatpush.msra.mxu0 0.0
        %1089 = vmatpush.msra.mxu0 0.0
        %1090 = vmatpush.msra.mxu0 0.0
        %1091 = vmatpush.msra.mxu0 0.0
        %1092 = vmatpush.msra.mxu0 0.0
        %1093 = vmatpush.msra.mxu0 0.0
        %1094 = vmatpush.msra.mxu0 0.0
        %v1095 = vand.u32 %v624, 4294901760
        %v1096 = vsub.f32 %v624, %v1095
        %v1097 = vand.u32 %v1096, 4294901760
        %1098 = vmatpush.msra.mxu0 %v1097
        %v1099 = vand.u32 %v575, 4294901760
        %1100 = vmatmul.f32.gmra.mxu0 %v1099
        %v1101 = vpop.f32.mrf.mxu0
        %v1102 = vadd.f32 %v988, %v1101
        %v1103 = vand.u32 %v578, 4294901760
        %1104 = vmatmul.f32.gmra.mxu0 %v1103
        %v1105 = vpop.f32.mrf.mxu0
        %v1106 = vadd.f32 %v994, %v1105
        %v1107 = vand.u32 %v581, 4294901760
        %1108 = vmatmul.f32.gmra.mxu0 %v1107
        %v1109 = vpop.f32.mrf.mxu0
        %v1110 = vadd.f32 %v1000, %v1109
        %v1111 = vand.u32 %v584, 4294901760
        %1112 = vmatmul.f32.gmra.mxu0 %v1111
        %v1113 = vpop.f32.mrf.mxu0
        %v1114 = vadd.f32 %v1006, %v1113
        %v1115 = vand.u32 %v587, 4294901760
        %1116 = vmatmul.f32.gmra.mxu0 %v1115
        %v1117 = vpop.f32.mrf.mxu0
        %v1118 = vadd.f32 %v1012, %v1117
        %v1119 = vand.u32 %v590, 4294901760
        %1120 = vmatmul.f32.gmra.mxu0 %v1119
        %v1121 = vpop.f32.mrf.mxu0
        %v1122 = vadd.f32 %v1018, %v1121
        %v1123 = vand.u32 %v593, 4294901760
        %1124 = vmatmul.f32.gmra.mxu0 %v1123
        %v1125 = vpop.f32.mrf.mxu0
        %v1126 = vadd.f32 %v1024, %v1125
        %v1127 = vand.u32 %v596, 4294901760
        %1128 = vmatmul.f32.gmra.mxu0 %v1127
        %v1129 = vpop.f32.mrf.mxu0
        %v1130 = vadd.f32 %v1030, %v1129
        %v1131 = vand.u32 %v599, 4294901760
        %1132 = vmatmul.f32.gmra.mxu0 %v1131
        %v1133 = vpop.f32.mrf.mxu0
        %v1134 = vadd.f32 %v1036, %v1133
        %v1135 = vand.u32 %v602, 4294901760
        %1136 = vmatmul.f32.gmra.mxu0 %v1135
        %v1137 = vpop.f32.mrf.mxu0
        %v1138 = vadd.f32 %v1042, %v1137
        %v1139 = vand.u32 %v605, 4294901760
        %1140 = vmatmul.f32.gmra.mxu0 %v1139
        %v1141 = vpop.f32.mrf.mxu0
        %v1142 = vadd.f32 %v1048, %v1141
        %v1143 = vand.u32 %v608, 4294901760
        %1144 = vmatmul.f32.gmra.mxu0 %v1143
        %v1145 = vpop.f32.mrf.mxu0
        %v1146 = vadd.f32 %v1054, %v1145
        %v1147 = vand.u32 %v611, 4294901760
        %1148 = vmatmul.f32.gmra.mxu0 %v1147
        %v1149 = vpop.f32.mrf.mxu0
        %v1150 = vadd.f32 %v1060, %v1149
        %v1151 = vand.u32 %v614, 4294901760
        %1152 = vmatmul.f32.gmra.mxu0 %v1151
        %v1153 = vpop.f32.mrf.mxu0
        %v1154 = vadd.f32 %v1066, %v1153
        %v1155 = vand.u32 %v617, 4294901760
        %1156 = vmatmul.f32.gmra.mxu0 %v1155
        %v1157 = vpop.f32.mrf.mxu0
        %v1158 = vadd.f32 %v1072, %v1157
        %v1159 = vand.u32 %v620, 4294901760
        %1160 = vmatmul.f32.gmra.mxu0 %v1159
        %v1161 = vpop.f32.mrf.mxu0
        %v1162 = vadd.f32 %v1078, %v1161
        %1163 = vdwg.mxu0
        %1164 = vmatpush.msra.mxu0 0.0
        %1165 = vmatpush.msra.mxu0 0.0
        %1166 = vmatpush.msra.mxu0 0.0
        %1167 = vmatpush.msra.mxu0 0.0
        %1168 = vmatpush.msra.mxu0 0.0
        %1169 = vmatpush.msra.mxu0 0.0
        %1170 = vmatpush.msra.mxu0 0.0
        %1171 = vmatpush.msra.mxu0 0.0
        %1172 = vmatpush.msra.mxu0 0.0
        %1173 = vmatpush.msra.mxu0 0.0
        %1174 = vmatpush.msra.mxu0 0.0
        %1175 = vmatpush.msra.mxu0 0.0
        %1176 = vmatpush.msra.mxu0 0.0
        %1177 = vmatpush.msra.mxu0 0.0
        %1178 = vmatpush.msra.mxu0 0.0
        %v1179 = vand.u32 %v624, 4294901760
        %1180 = vmatpush.msra.mxu0 %v1179
        %v1181 = vand.u32 %v575, 4294901760
        %1182 = vmatmul.f32.gmra.mxu0 %v1181
        %v1183 = vpop.f32.mrf.mxu0
        %v1184 = vadd.f32 %v1102, %v1183
        %v1185 = vand.u32 %v578, 4294901760
        %1186 = vmatmul.f32.gmra.mxu0 %v1185
        %v1187 = vpop.f32.mrf.mxu0
        %v1188 = vadd.f32 %v1106, %v1187
        %v1189 = vand.u32 %v581, 4294901760
        %1190 = vmatmul.f32.gmra.mxu0 %v1189
        %v1191 = vpop.f32.mrf.mxu0
        %v1192 = vadd.f32 %v1110, %v1191
        %v1193 = vand.u32 %v584, 4294901760
        %1194 = vmatmul.f32.gmra.mxu0 %v1193
        %v1195 = vpop.f32.mrf.mxu0
        %v1196 = vadd.f32 %v1114, %v1195
        %v1197 = vand.u32 %v587, 4294901760
        %1198 = vmatmul.f32.gmra.mxu0 %v1197
        %v1199 = vpop.f32.mrf.mxu0
        %v1200 = vadd.f32 %v1118, %v1199
        %v1201 = vand.u32 %v590, 4294901760
        %1202 = vmatmul.f32.gmra.mxu0 %v1201
        %v1203 = vpop.f32.mrf.mxu0
        %v1204 = vadd.f32 %v1122, %v1203
        %v1205 = vand.u32 %v593, 4294901760
        %1206 = vmatmul.f32.gmra.mxu0 %v1205
        %v1207 = vpop.f32.mrf.mxu0
        %v1208 = vadd.f32 %v1126, %v1207
        %v1209 = vand.u32 %v596, 4294901760
        %1210 = vmatmul.f32.gmra.mxu0 %v1209
        %v1211 = vpop.f32.mrf.mxu0
        %v1212 = vadd.f32 %v1130, %v1211
        %v1213 = vand.u32 %v599, 4294901760
        %1214 = vmatmul.f32.gmra.mxu0 %v1213
        %v1215 = vpop.f32.mrf.mxu0
        %v1216 = vadd.f32 %v1134, %v1215
        %v1217 = vand.u32 %v602, 4294901760
        %1218 = vmatmul.f32.gmra.mxu0 %v1217
        %v1219 = vpop.f32.mrf.mxu0
        %v1220 = vadd.f32 %v1138, %v1219
        %v1221 = vand.u32 %v605, 4294901760
        %1222 = vmatmul.f32.gmra.mxu0 %v1221
        %v1223 = vpop.f32.mrf.mxu0
        %v1224 = vadd.f32 %v1142, %v1223
        %v1225 = vand.u32 %v608, 4294901760
        %1226 = vmatmul.f32.gmra.mxu0 %v1225
        %v1227 = vpop.f32.mrf.mxu0
        %v1228 = vadd.f32 %v1146, %v1227
        %v1229 = vand.u32 %v611, 4294901760
        %1230 = vmatmul.f32.gmra.mxu0 %v1229
        %v1231 = vpop.f32.mrf.mxu0
        %v1232 = vadd.f32 %v1150, %v1231
        %v1233 = vand.u32 %v614, 4294901760
        %1234 = vmatmul.f32.gmra.mxu0 %v1233
        %v1235 = vpop.f32.mrf.mxu0
        %v1236 = vadd.f32 %v1154, %v1235
        %v1237 = vand.u32 %v617, 4294901760
        %1238 = vmatmul.f32.gmra.mxu0 %v1237
        %v1239 = vpop.f32.mrf.mxu0
        %v1240 = vadd.f32 %v1158, %v1239
        %v1241 = vand.u32 %v620, 4294901760
        %1242 = vmatmul.f32.gmra.mxu0 %v1241
        %v1243 = vpop.f32.mrf.mxu0
        %v1244 = vadd.f32 %v1162, %v1243
        %1245 = vdwg.mxu0
        %1246 = vmatpush.msra.mxu0 0.0
        %1247 = vmatpush.msra.mxu0 0.0
        %1248 = vmatpush.msra.mxu0 0.0
        %1249 = vmatpush.msra.mxu0 0.0
        %1250 = vmatpush.msra.mxu0 0.0
        %1251 = vmatpush.msra.mxu0 0.0
        %1252 = vmatpush.msra.mxu0 0.0
        %1253 = vmatpush.msra.mxu0 0.0
        %1254 = vmatpush.msra.mxu0 0.0
        %1255 = vmatpush.msra.mxu0 0.0
        %1256 = vmatpush.msra.mxu0 0.0
        %1257 = vmatpush.msra.mxu0 0.0
        %1258 = vmatpush.msra.mxu0 0.0
        %1259 = vmatpush.msra.mxu0 0.0
        %1260 = vmatpush.msra.mxu0 0.0
        %v1261 = vand.u32 %v627, 4294901760
        %1262 = vmatpush.msra.mxu0 %v1261
        %v1263 = vand.u32 %v575, 4294901760
        %v1264 = vsub.f32 %v575, %v1263
        %v1265 = vand.u32 %v1264, 4294901760
        %v1266 = vsub.f32 %v1264, %v1265
        %v1267 = vand.u32 %v1266, 4294901760
        %1268 = vmatmul.f32.gmra.mxu0 %v1267
        %v1269 = vpop.f32.mrf.mxu0
        %v1270 = vadd.f32 0.0, %v1269
        %v1271 = vand.u32 %v578, 4294901760
        %v1272 = vsub.f32 %v578, %v1271
        %v1273 = vand.u32 %v1272, 4294901760
        %v1274 = vsub.f32 %v1272, %v1273
        %v1275 = vand.u32 %v1274, 4294901760
        %1276 = vmatmul.f32.gmra.mxu0 %v1275
        %v1277 = vpop.f32.mrf.mxu0
        %v1278 = vadd.f32 0.0, %v1277
        %v1279 = vand.u32 %v581, 4294901760
        %v1280 = vsub.f32 %v581, %v1279
        %v1281 = vand.u32 %v1280, 4294901760
        %v1282 = vsub.f32 %v1280, %v1281
        %v1283 = vand.u32 %v1282, 4294901760
        %1284 = vmatmul.f32.gmra.mxu0 %v1283
        %v1285 = vpop.f32.mrf.mxu0
        %v1286 = vadd.f32 0.0, %v1285
        %v1287 = vand.u32 %v584, 4294901760
        %v1288 = vsub.f32 %v584, %v1287
        %v1289 = vand.u32 %v1288, 4294901760
        %v1290 = vsub.f32 %v1288, %v1289
        %v1291 = vand.u32 %v1290, 4294901760
        %1292 = vmatmul.f32.gmra.mxu0 %v1291
        %v1293 = vpop.f32.mrf.mxu0
        %v1294 = vadd.f32 0.0, %v1293
        %v1295 = vand.u32 %v587, 4294901760
        %v1296 = vsub.f32 %v587, %v1295
        %v1297 = vand.u32 %v1296, 4294901760
        %v1298 = vsub.f32 %v1296, %v1297
        %v1299 = vand.u32 %v1298, 4294901760
        %1300 = vmatmul.f32.gmra.mxu0 %v1299
        %v1301 = vpop.f32.mrf.mxu0
        %v1302 = vadd.f32 0.0, %v1301
        %v1303 = vand.u32 %v590, 4294901760
        %v1304 = vsub.f32 %v590, %v1303
        %v1305 = vand.u32 %v1304, 4294901760
        %v1306 = vsub.f32 %v1304, %v1305
        %v1307 = vand.u32 %v1306, 4294901760
        %1308 = vmatmul.f32.gmra.mxu0 %v1307
        %v1309 = vpop.f32.mrf.mxu0
        %v1310 = vadd.f32 0.0, %v1309
        %v1311 = vand.u32 %v593, 4294901760
        %v1312 = vsub.f32 %v593, %v1311
        %v1313 = vand.u32 %v1312, 4294901760
        %v1314 = vsub.f32 %v1312, %v1313
        %v1315 = vand.u32 %v1314, 4294901760
        %1316 = vmatmul.f32.gmra.mxu0 %v1315
        %v1317 = vpop.f32.mrf.mxu0
        %v1318 = vadd.f32 0.0, %v1317
        %v1319 = vand.u32 %v596, 4294901760
        %v1320 = vsub.f32 %v596, %v1319
        %v1321 = vand.u32 %v1320, 4294901760
        %v1322 = vsub.f32 %v1320, %v1321
        %v1323 = vand.u32 %v1322, 4294901760
        %1324 = vmatmul.f32.gmra.mxu0 %v1323
        %v1325 = vpop.f32.mrf.mxu0
        %v1326 = vadd.f32 0.0, %v1325
        %v1327 = vand.u32 %v599, 4294901760
        %v1328 = vsub.f32 %v599, %v1327
        %v1329 = vand.u32 %v1328, 4294901760
        %v1330 = vsub.f32 %v1328, %v1329
        %v1331 = vand.u32 %v1330, 4294901760
        %1332 = vmatmul.f32.gmra.mxu0 %v1331
        %v1333 = vpop.f32.mrf.mxu0
        %v1334 = vadd.f32 0.0, %v1333
        %v1335 = vand.u32 %v602, 4294901760
        %v1336 = vsub.f32 %v602, %v1335
        %v1337 = vand.u32 %v1336, 4294901760
        %v1338 = vsub.f32 %v1336, %v1337
        %v1339 = vand.u32 %v1338, 4294901760
        %1340 = vmatmul.f32.gmra.mxu0 %v1339
        %v1341 = vpop.f32.mrf.mxu0
        %v1342 = vadd.f32 0.0, %v1341
        %v1343 = vand.u32 %v605, 4294901760
        %v1344 = vsub.f32 %v605, %v1343
        %v1345 = vand.u32 %v1344, 4294901760
        %v1346 = vsub.f32 %v1344, %v1345
        %v1347 = vand.u32 %v1346, 4294901760
        %1348 = vmatmul.f32.gmra.mxu0 %v1347
        %v1349 = vpop.f32.mrf.mxu0
        %v1350 = vadd.f32 0.0, %v1349
        %v1351 = vand.u32 %v608, 4294901760
        %v1352 = vsub.f32 %v608, %v1351
        %v1353 = vand.u32 %v1352, 4294901760
        %v1354 = vsub.f32 %v1352, %v1353
        %v1355 = vand.u32 %v1354, 4294901760
        %1356 = vmatmul.f32.gmra.mxu0 %v1355
        %v1357 = vpop.f32.mrf.mxu0
        %v1358 = vadd.f32 0.0, %v1357
        %v1359 = vand.u32 %v611, 4294901760
        %v1360 = vsub.f32 %v611, %v1359
        %v1361 = vand.u32 %v1360, 4294901760
        %v1362 = vsub.f32 %v1360, %v1361
        %v1363 = vand.u32 %v1362, 4294901760
        %1364 = vmatmul.f32.gmra.mxu0 %v1363
        %v1365 = vpop.f32.mrf.mxu0
        %v1366 = vadd.f32 0.0, %v1365
        %v1367 = vand.u32 %v614, 4294901760
        %v1368 = vsub.f32 %v614, %v1367
        %v1369 = vand.u32 %v1368, 4294901760
        %v1370 = vsub.f32 %v1368, %v1369
        %v1371 = vand.u32 %v1370, 4294901760
        %1372 = vmatmul.f32.gmra.mxu0 %v1371
        %v1373 = vpop.f32.mrf.mxu0
        %v1374 = vadd.f32 0.0, %v1373
        %v1375 = vand.u32 %v617, 4294901760
        %v1376 = vsub.f32 %v617, %v1375
        %v1377 = vand.u32 %v1376, 4294901760
        %v1378 = vsub.f32 %v1376, %v1377
        %v1379 = vand.u32 %v1378, 4294901760
        %1380 = vmatmul.f32.gmra.mxu0 %v1379
        %v1381 = vpop.f32.mrf.mxu0
        %v1382 = vadd.f32 0.0, %v1381
        %v1383 = vand.u32 %v620, 4294901760
        %v1384 = vsub.f32 %v620, %v1383
        %v1385 = vand.u32 %v1384, 4294901760
        %v1386 = vsub.f32 %v1384, %v1385
        %v1387 = vand.u32 %v1386, 4294901760
        %1388 = vmatmul.f32.gmra.mxu0 %v1387
        %v1389 = vpop.f32.mrf.mxu0
        %v1390 = vadd.f32 0.0, %v1389
        %1391 = vdwg.mxu0
        %1392 = vmatpush.msra.mxu0 0.0
        %1393 = vmatpush.msra.mxu0 0.0
        %1394 = vmatpush.msra.mxu0 0.0
        %1395 = vmatpush.msra.mxu0 0.0
        %1396 = vmatpush.msra.mxu0 0.0
        %1397 = vmatpush.msra.mxu0 0.0
        %1398 = vmatpush.msra.mxu0 0.0
        %1399 = vmatpush.msra.mxu0 0.0
        %1400 = vmatpush.msra.mxu0 0.0
        %1401 = vmatpush.msra.mxu0 0.0
        %1402 = vmatpush.msra.mxu0 0.0
        %1403 = vmatpush.msra.mxu0 0.0
        %1404 = vmatpush.msra.mxu0 0.0
        %1405 = vmatpush.msra.mxu0 0.0
        %1406 = vmatpush.msra.mxu0 0.0
        %v1407 = vand.u32 %v627, 4294901760
        %v1408 = vsub.f32 %v627, %v1407
        %v1409 = vand.u32 %v1408, 4294901760
        %v1410 = vsub.f32 %v1408, %v1409
        %v1411 = vand.u32 %v1410, 4294901760
        %1412 = vmatpush.msra.mxu0 %v1411
        %v1413 = vand.u32 %v575, 4294901760
        %1414 = vmatmul.f32.gmra.mxu0 %v1413
        %v1415 = vpop.f32.mrf.mxu0
        %v1416 = vadd.f32 %v1270, %v1415
        %v1417 = vand.u32 %v578, 4294901760
        %1418 = vmatmul.f32.gmra.mxu0 %v1417
        %v1419 = vpop.f32.mrf.mxu0
        %v1420 = vadd.f32 %v1278, %v1419
        %v1421 = vand.u32 %v581, 4294901760
        %1422 = vmatmul.f32.gmra.mxu0 %v1421
        %v1423 = vpop.f32.mrf.mxu0
        %v1424 = vadd.f32 %v1286, %v1423
        %v1425 = vand.u32 %v584, 4294901760
        %1426 = vmatmul.f32.gmra.mxu0 %v1425
        %v1427 = vpop.f32.mrf.mxu0
        %v1428 = vadd.f32 %v1294, %v1427
        %v1429 = vand.u32 %v587, 4294901760
        %1430 = vmatmul.f32.gmra.mxu0 %v1429
        %v1431 = vpop.f32.mrf.mxu0
        %v1432 = vadd.f32 %v1302, %v1431
        %v1433 = vand.u32 %v590, 4294901760
        %1434 = vmatmul.f32.gmra.mxu0 %v1433
        %v1435 = vpop.f32.mrf.mxu0
        %v1436 = vadd.f32 %v1310, %v1435
        %v1437 = vand.u32 %v593, 4294901760
        %1438 = vmatmul.f32.gmra.mxu0 %v1437
        %v1439 = vpop.f32.mrf.mxu0
        %v1440 = vadd.f32 %v1318, %v1439
        %v1441 = vand.u32 %v596, 4294901760
        %1442 = vmatmul.f32.gmra.mxu0 %v1441
        %v1443 = vpop.f32.mrf.mxu0
        %v1444 = vadd.f32 %v1326, %v1443
        %v1445 = vand.u32 %v599, 4294901760
        %1446 = vmatmul.f32.gmra.mxu0 %v1445
        %v1447 = vpop.f32.mrf.mxu0
        %v1448 = vadd.f32 %v1334, %v1447
        %v1449 = vand.u32 %v602, 4294901760
        %1450 = vmatmul.f32.gmra.mxu0 %v1449
        %v1451 = vpop.f32.mrf.mxu0
        %v1452 = vadd.f32 %v1342, %v1451
        %v1453 = vand.u32 %v605, 4294901760
        %1454 = vmatmul.f32.gmra.mxu0 %v1453
        %v1455 = vpop.f32.mrf.mxu0
        %v1456 = vadd.f32 %v1350, %v1455
        %v1457 = vand.u32 %v608, 4294901760
        %1458 = vmatmul.f32.gmra.mxu0 %v1457
        %v1459 = vpop.f32.mrf.mxu0
        %v1460 = vadd.f32 %v1358, %v1459
        %v1461 = vand.u32 %v611, 4294901760
        %1462 = vmatmul.f32.gmra.mxu0 %v1461
        %v1463 = vpop.f32.mrf.mxu0
        %v1464 = vadd.f32 %v1366, %v1463
        %v1465 = vand.u32 %v614, 4294901760
        %1466 = vmatmul.f32.gmra.mxu0 %v1465
        %v1467 = vpop.f32.mrf.mxu0
        %v1468 = vadd.f32 %v1374, %v1467
        %v1469 = vand.u32 %v617, 4294901760
        %1470 = vmatmul.f32.gmra.mxu0 %v1469
        %v1471 = vpop.f32.mrf.mxu0
        %v1472 = vadd.f32 %v1382, %v1471
        %v1473 = vand.u32 %v620, 4294901760
        %1474 = vmatmul.f32.gmra.mxu0 %v1473
        %v1475 = vpop.f32.mrf.mxu0
        %v1476 = vadd.f32 %v1390, %v1475
        %1477 = vdwg.mxu0
        %1478 = vmatpush.msra.mxu0 0.0
        %1479 = vmatpush.msra.mxu0 0.0
        %1480 = vmatpush.msra.mxu0 0.0
        %1481 = vmatpush.msra.mxu0 0.0
        %1482 = vmatpush.msra.mxu0 0.0
        %1483 = vmatpush.msra.mxu0 0.0
        %1484 = vmatpush.msra.mxu0 0.0
        %1485 = vmatpush.msra.mxu0 0.0
        %1486 = vmatpush.msra.mxu0 0.0
        %1487 = vmatpush.msra.mxu0 0.0
        %1488 = vmatpush.msra.mxu0 0.0
        %1489 = vmatpush.msra.mxu0 0.0
        %1490 = vmatpush.msra.mxu0 0.0
        %1491 = vmatpush.msra.mxu0 0.0
        %1492 = vmatpush.msra.mxu0 0.0
        %v1493 = vand.u32 %v627, 4294901760
        %v1494 = vsub.f32 %v627, %v1493
        %1495 = vmatpush.msra.mxu0 %v1494
        %v1496 = vand.u32 %v575, 4294901760
        %v1497 = vsub.f32 %v575, %v1496
        %1498 = vmatmul.f32.gmra.mxu0 %v1497
        %v1499 = vpop.f32.mrf.mxu0
        %v1500 = vadd.f32 %v1416, %v1499
        %v1501 = vand.u32 %v578, 4294901760
        %v1502 = vsub.f32 %v578, %v1501
        %1503 = vmatmul.f32.gmra.mxu0 %v1502
        %v1504 = vpop.f32.mrf.mxu0
        %v1505 = vadd.f32 %v1420, %v1504
        %v1506 = vand.u32 %v581, 4294901760
        %v1507 = vsub.f32 %v581, %v1506
        %1508 = vmatmul.f32.gmra.mxu0 %v1507
        %v1509 = vpop.f32.mrf.mxu0
        %v1510 = vadd.f32 %v1424, %v1509
        %v1511 = vand.u32 %v584, 4294901760
        %v1512 = vsub.f32 %v584, %v1511
        %1513 = vmatmul.f32.gmra.mxu0 %v1512
        %v1514 = vpop.f32.mrf.mxu0
        %v1515 = vadd.f32 %v1428, %v1514
        %v1516 = vand.u32 %v587, 4294901760
        %v1517 = vsub.f32 %v587, %v1516
        %1518 = vmatmul.f32.gmra.mxu0 %v1517
        %v1519 = vpop.f32.mrf.mxu0
        %v1520 = vadd.f32 %v1432, %v1519
        %v1521 = vand.u32 %v590, 4294901760
        %v1522 = vsub.f32 %v590, %v1521
        %1523 = vmatmul.f32.gmra.mxu0 %v1522
        %v1524 = vpop.f32.mrf.mxu0
        %v1525 = vadd.f32 %v1436, %v1524
        %v1526 = vand.u32 %v593, 4294901760
        %v1527 = vsub.f32 %v593, %v1526
        %1528 = vmatmul.f32.gmra.mxu0 %v1527
        %v1529 = vpop.f32.mrf.mxu0
        %v1530 = vadd.f32 %v1440, %v1529
        %v1531 = vand.u32 %v596, 4294901760
        %v1532 = vsub.f32 %v596, %v1531
        %1533 = vmatmul.f32.gmra.mxu0 %v1532
        %v1534 = vpop.f32.mrf.mxu0
        %v1535 = vadd.f32 %v1444, %v1534
        %v1536 = vand.u32 %v599, 4294901760
        %v1537 = vsub.f32 %v599, %v1536
        %1538 = vmatmul.f32.gmra.mxu0 %v1537
        %v1539 = vpop.f32.mrf.mxu0
        %v1540 = vadd.f32 %v1448, %v1539
        %v1541 = vand.u32 %v602, 4294901760
        %v1542 = vsub.f32 %v602, %v1541
        %1543 = vmatmul.f32.gmra.mxu0 %v1542
        %v1544 = vpop.f32.mrf.mxu0
        %v1545 = vadd.f32 %v1452, %v1544
        %v1546 = vand.u32 %v605, 4294901760
        %v1547 = vsub.f32 %v605, %v1546
        %1548 = vmatmul.f32.gmra.mxu0 %v1547
        %v1549 = vpop.f32.mrf.mxu0
        %v1550 = vadd.f32 %v1456, %v1549
        %v1551 = vand.u32 %v608, 4294901760
        %v1552 = vsub.f32 %v608, %v1551
        %1553 = vmatmul.f32.gmra.mxu0 %v1552
        %v1554 = vpop.f32.mrf.mxu0
        %v1555 = vadd.f32 %v1460, %v1554
        %v1556 = vand.u32 %v611, 4294901760
        %v1557 = vsub.f32 %v611, %v1556
        %1558 = vmatmul.f32.gmra.mxu0 %v1557
        %v1559 = vpop.f32.mrf.mxu0
        %v1560 = vadd.f32 %v1464, %v1559
        %v1561 = vand.u32 %v614, 4294901760
        %v1562 = vsub.f32 %v614, %v1561
        %1563 = vmatmul.f32.gmra.mxu0 %v1562
        %v1564 = vpop.f32.mrf.mxu0
        %v1565 = vadd.f32 %v1468, %v1564
        %v1566 = vand.u32 %v617, 4294901760
        %v1567 = vsub.f32 %v617, %v1566
        %1568 = vmatmul.f32.gmra.mxu0 %v1567
        %v1569 = vpop.f32.mrf.mxu0
        %v1570 = vadd.f32 %v1472, %v1569
        %v1571 = vand.u32 %v620, 4294901760
        %v1572 = vsub.f32 %v620, %v1571
        %1573 = vmatmul.f32.gmra.mxu0 %v1572
        %v1574 = vpop.f32.mrf.mxu0
        %v1575 = vadd.f32 %v1476, %v1574
        %1576 = vdwg.mxu0
        %1577 = vmatpush.msra.mxu0 0.0
        %1578 = vmatpush.msra.mxu0 0.0
        %1579 = vmatpush.msra.mxu0 0.0
        %1580 = vmatpush.msra.mxu0 0.0
        %1581 = vmatpush.msra.mxu0 0.0
        %1582 = vmatpush.msra.mxu0 0.0
        %1583 = vmatpush.msra.mxu0 0.0
        %1584 = vmatpush.msra.mxu0 0.0
        %1585 = vmatpush.msra.mxu0 0.0
        %1586 = vmatpush.msra.mxu0 0.0
        %1587 = vmatpush.msra.mxu0 0.0
        %1588 = vmatpush.msra.mxu0 0.0
        %1589 = vmatpush.msra.mxu0 0.0
        %1590 = vmatpush.msra.mxu0 0.0
        %1591 = vmatpush.msra.mxu0 0.0
        %v1592 = vand.u32 %v627, 4294901760
        %1593 = vmatpush.msra.mxu0 %v1592
        %v1594 = vand.u32 %v575, 4294901760
        %v1595 = vsub.f32 %v575, %v1594
        %v1596 = vand.u32 %v1595, 4294901760
        %1597 = vmatmul.f32.gmra.mxu0 %v1596
        %v1598 = vpop.f32.mrf.mxu0
        %v1599 = vadd.f32 %v1500, %v1598
        %v1600 = vand.u32 %v578, 4294901760
        %v1601 = vsub.f32 %v578, %v1600
        %v1602 = vand.u32 %v1601, 4294901760
        %1603 = vmatmul.f32.gmra.mxu0 %v1602
        %v1604 = vpop.f32.mrf.mxu0
        %v1605 = vadd.f32 %v1505, %v1604
        %v1606 = vand.u32 %v581, 4294901760
        %v1607 = vsub.f32 %v581, %v1606
        %v1608 = vand.u32 %v1607, 4294901760
        %1609 = vmatmul.f32.gmra.mxu0 %v1608
        %v1610 = vpop.f32.mrf.mxu0
        %v1611 = vadd.f32 %v1510, %v1610
        %v1612 = vand.u32 %v584, 4294901760
        %v1613 = vsub.f32 %v584, %v1612
        %v1614 = vand.u32 %v1613, 4294901760
        %1615 = vmatmul.f32.gmra.mxu0 %v1614
        %v1616 = vpop.f32.mrf.mxu0
        %v1617 = vadd.f32 %v1515, %v1616
        %v1618 = vand.u32 %v587, 4294901760
        %v1619 = vsub.f32 %v587, %v1618
        %v1620 = vand.u32 %v1619, 4294901760
        %1621 = vmatmul.f32.gmra.mxu0 %v1620
        %v1622 = vpop.f32.mrf.mxu0
        %v1623 = vadd.f32 %v1520, %v1622
        %v1624 = vand.u32 %v590, 4294901760
        %v1625 = vsub.f32 %v590, %v1624
        %v1626 = vand.u32 %v1625, 4294901760
        %1627 = vmatmul.f32.gmra.mxu0 %v1626
        %v1628 = vpop.f32.mrf.mxu0
        %v1629 = vadd.f32 %v1525, %v1628
        %v1630 = vand.u32 %v593, 4294901760
        %v1631 = vsub.f32 %v593, %v1630
        %v1632 = vand.u32 %v1631, 4294901760
        %1633 = vmatmul.f32.gmra.mxu0 %v1632
        %v1634 = vpop.f32.mrf.mxu0
        %v1635 = vadd.f32 %v1530, %v1634
        %v1636 = vand.u32 %v596, 4294901760
        %v1637 = vsub.f32 %v596, %v1636
        %v1638 = vand.u32 %v1637, 4294901760
        %1639 = vmatmul.f32.gmra.mxu0 %v1638
        %v1640 = vpop.f32.mrf.mxu0
        %v1641 = vadd.f32 %v1535, %v1640
        %v1642 = vand.u32 %v599, 4294901760
        %v1643 = vsub.f32 %v599, %v1642
        %v1644 = vand.u32 %v1643, 4294901760
        %1645 = vmatmul.f32.gmra.mxu0 %v1644
        %v1646 = vpop.f32.mrf.mxu0
        %v1647 = vadd.f32 %v1540, %v1646
        %v1648 = vand.u32 %v602, 4294901760
        %v1649 = vsub.f32 %v602, %v1648
        %v1650 = vand.u32 %v1649, 4294901760
        %1651 = vmatmul.f32.gmra.mxu0 %v1650
        %v1652 = vpop.f32.mrf.mxu0
        %v1653 = vadd.f32 %v1545, %v1652
        %v1654 = vand.u32 %v605, 4294901760
        %v1655 = vsub.f32 %v605, %v1654
        %v1656 = vand.u32 %v1655, 4294901760
        %1657 = vmatmul.f32.gmra.mxu0 %v1656
        %v1658 = vpop.f32.mrf.mxu0
        %v1659 = vadd.f32 %v1550, %v1658
        %v1660 = vand.u32 %v608, 4294901760
        %v1661 = vsub.f32 %v608, %v1660
        %v1662 = vand.u32 %v1661, 4294901760
        %1663 = vmatmul.f32.gmra.mxu0 %v1662
        %v1664 = vpop.f32.mrf.mxu0
        %v1665 = vadd.f32 %v1555, %v1664
        %v1666 = vand.u32 %v611, 4294901760
        %v1667 = vsub.f32 %v611, %v1666
        %v1668 = vand.u32 %v1667, 4294901760
        %1669 = vmatmul.f32.gmra.mxu0 %v1668
        %v1670 = vpop.f32.mrf.mxu0
        %v1671 = vadd.f32 %v1560, %v1670
        %v1672 = vand.u32 %v614, 4294901760
        %v1673 = vsub.f32 %v614, %v1672
        %v1674 = vand.u32 %v1673, 4294901760
        %1675 = vmatmul.f32.gmra.mxu0 %v1674
        %v1676 = vpop.f32.mrf.mxu0
        %v1677 = vadd.f32 %v1565, %v1676
        %v1678 = vand.u32 %v617, 4294901760
        %v1679 = vsub.f32 %v617, %v1678
        %v1680 = vand.u32 %v1679, 4294901760
        %1681 = vmatmul.f32.gmra.mxu0 %v1680
        %v1682 = vpop.f32.mrf.mxu0
        %v1683 = vadd.f32 %v1570, %v1682
        %v1684 = vand.u32 %v620, 4294901760
        %v1685 = vsub.f32 %v620, %v1684
        %v1686 = vand.u32 %v1685, 4294901760
        %1687 = vmatmul.f32.gmra.mxu0 %v1686
        %v1688 = vpop.f32.mrf.mxu0
        %v1689 = vadd.f32 %v1575, %v1688
        %1690 = vdwg.mxu0
        %1691 = vmatpush.msra.mxu0 0.0
        %1692 = vmatpush.msra.mxu0 0.0
        %1693 = vmatpush.msra.mxu0 0.0
        %1694 = vmatpush.msra.mxu0 0.0
        %1695 = vmatpush.msra.mxu0 0.0
        %1696 = vmatpush.msra.mxu0 0.0
        %1697 = vmatpush.msra.mxu0 0.0
        %1698 = vmatpush.msra.mxu0 0.0
        %1699 = vmatpush.msra.mxu0 0.0
        %1700 = vmatpush.msra.mxu0 0.0
        %1701 = vmatpush.msra.mxu0 0.0
        %1702 = vmatpush.msra.mxu0 0.0
        %1703 = vmatpush.msra.mxu0 0.0
        %1704 = vmatpush.msra.mxu0 0.0
        %1705 = vmatpush.msra.mxu0 0.0
        %v1706 = vand.u32 %v627, 4294901760
        %v1707 = vsub.f32 %v627, %v1706
        %v1708 = vand.u32 %v1707, 4294901760
        %1709 = vmatpush.msra.mxu0 %v1708
        %v1710 = vand.u32 %v575, 4294901760
        %1711 = vmatmul.f32.gmra.mxu0 %v1710
        %v1712 = vpop.f32.mrf.mxu0
        %v1713 = vadd.f32 %v1599, %v1712
        %v1714 = vand.u32 %v578, 4294901760
        %1715 = vmatmul.f32.gmra.mxu0 %v1714
        %v1716 = vpop.f32.mrf.mxu0
        %v1717 = vadd.f32 %v1605, %v1716
        %v1718 = vand.u32 %v581, 4294901760
        %1719 = vmatmul.f32.gmra.mxu0 %v1718
        %v1720 = vpop.f32.mrf.mxu0
        %v1721 = vadd.f32 %v1611, %v1720
        %v1722 = vand.u32 %v584, 4294901760
        %1723 = vmatmul.f32.gmra.mxu0 %v1722
        %v1724 = vpop.f32.mrf.mxu0
        %v1725 = vadd.f32 %v1617, %v1724
        %v1726 = vand.u32 %v587, 4294901760
        %1727 = vmatmul.f32.gmra.mxu0 %v1726
        %v1728 = vpop.f32.mrf.mxu0
        %v1729 = vadd.f32 %v1623, %v1728
        %v1730 = vand.u32 %v590, 4294901760
        %1731 = vmatmul.f32.gmra.mxu0 %v1730
        %v1732 = vpop.f32.mrf.mxu0
        %v1733 = vadd.f32 %v1629, %v1732
        %v1734 = vand.u32 %v593, 4294901760
        %1735 = vmatmul.f32.gmra.mxu0 %v1734
        %v1736 = vpop.f32.mrf.mxu0
        %v1737 = vadd.f32 %v1635, %v1736
        %v1738 = vand.u32 %v596, 4294901760
        %1739 = vmatmul.f32.gmra.mxu0 %v1738
        %v1740 = vpop.f32.mrf.mxu0
        %v1741 = vadd.f32 %v1641, %v1740
        %v1742 = vand.u32 %v599, 4294901760
        %1743 = vmatmul.f32.gmra.mxu0 %v1742
        %v1744 = vpop.f32.mrf.mxu0
        %v1745 = vadd.f32 %v1647, %v1744
        %v1746 = vand.u32 %v602, 4294901760
        %1747 = vmatmul.f32.gmra.mxu0 %v1746
        %v1748 = vpop.f32.mrf.mxu0
        %v1749 = vadd.f32 %v1653, %v1748
        %v1750 = vand.u32 %v605, 4294901760
        %1751 = vmatmul.f32.gmra.mxu0 %v1750
        %v1752 = vpop.f32.mrf.mxu0
        %v1753 = vadd.f32 %v1659, %v1752
        %v1754 = vand.u32 %v608, 4294901760
        %1755 = vmatmul.f32.gmra.mxu0 %v1754
        %v1756 = vpop.f32.mrf.mxu0
        %v1757 = vadd.f32 %v1665, %v1756
        %v1758 = vand.u32 %v611, 4294901760
        %1759 = vmatmul.f32.gmra.mxu0 %v1758
        %v1760 = vpop.f32.mrf.mxu0
        %v1761 = vadd.f32 %v1671, %v1760
        %v1762 = vand.u32 %v614, 4294901760
        %1763 = vmatmul.f32.gmra.mxu0 %v1762
        %v1764 = vpop.f32.mrf.mxu0
        %v1765 = vadd.f32 %v1677, %v1764
        %v1766 = vand.u32 %v617, 4294901760
        %1767 = vmatmul.f32.gmra.mxu0 %v1766
        %v1768 = vpop.f32.mrf.mxu0
        %v1769 = vadd.f32 %v1683, %v1768
        %v1770 = vand.u32 %v620, 4294901760
        %1771 = vmatmul.f32.gmra.mxu0 %v1770
        %v1772 = vpop.f32.mrf.mxu0
        %v1773 = vadd.f32 %v1689, %v1772
        %1774 = vdwg.mxu0
        %1775 = vmatpush.msra.mxu0 0.0
        %1776 = vmatpush.msra.mxu0 0.0
        %1777 = vmatpush.msra.mxu0 0.0
        %1778 = vmatpush.msra.mxu0 0.0
        %1779 = vmatpush.msra.mxu0 0.0
        %1780 = vmatpush.msra.mxu0 0.0
        %1781 = vmatpush.msra.mxu0 0.0
        %1782 = vmatpush.msra.mxu0 0.0
        %1783 = vmatpush.msra.mxu0 0.0
        %1784 = vmatpush.msra.mxu0 0.0
        %1785 = vmatpush.msra.mxu0 0.0
        %1786 = vmatpush.msra.mxu0 0.0
        %1787 = vmatpush.msra.mxu0 0.0
        %1788 = vmatpush.msra.mxu0 0.0
        %1789 = vmatpush.msra.mxu0 0.0
        %v1790 = vand.u32 %v627, 4294901760
        %1791 = vmatpush.msra.mxu0 %v1790
        %v1792 = vand.u32 %v575, 4294901760
        %1793 = vmatmul.f32.gmra.mxu0 %v1792
        %v1794 = vpop.f32.mrf.mxu0
        %v1795 = vadd.f32 %v1713, %v1794
        %v1796 = vand.u32 %v578, 4294901760
        %1797 = vmatmul.f32.gmra.mxu0 %v1796
        %v1798 = vpop.f32.mrf.mxu0
        %v1799 = vadd.f32 %v1717, %v1798
        %v1800 = vand.u32 %v581, 4294901760
        %1801 = vmatmul.f32.gmra.mxu0 %v1800
        %v1802 = vpop.f32.mrf.mxu0
        %v1803 = vadd.f32 %v1721, %v1802
        %v1804 = vand.u32 %v584, 4294901760
        %1805 = vmatmul.f32.gmra.mxu0 %v1804
        %v1806 = vpop.f32.mrf.mxu0
        %v1807 = vadd.f32 %v1725, %v1806
        %v1808 = vand.u32 %v587, 4294901760
        %1809 = vmatmul.f32.gmra.mxu0 %v1808
        %v1810 = vpop.f32.mrf.mxu0
        %v1811 = vadd.f32 %v1729, %v1810
        %v1812 = vand.u32 %v590, 4294901760
        %1813 = vmatmul.f32.gmra.mxu0 %v1812
        %v1814 = vpop.f32.mrf.mxu0
        %v1815 = vadd.f32 %v1733, %v1814
        %v1816 = vand.u32 %v593, 4294901760
        %1817 = vmatmul.f32.gmra.mxu0 %v1816
        %v1818 = vpop.f32.mrf.mxu0
        %v1819 = vadd.f32 %v1737, %v1818
        %v1820 = vand.u32 %v596, 4294901760
        %1821 = vmatmul.f32.gmra.mxu0 %v1820
        %v1822 = vpop.f32.mrf.mxu0
        %v1823 = vadd.f32 %v1741, %v1822
        %v1824 = vand.u32 %v599, 4294901760
        %1825 = vmatmul.f32.gmra.mxu0 %v1824
        %v1826 = vpop.f32.mrf.mxu0
        %v1827 = vadd.f32 %v1745, %v1826
        %v1828 = vand.u32 %v602, 4294901760
        %1829 = vmatmul.f32.gmra.mxu0 %v1828
        %v1830 = vpop.f32.mrf.mxu0
        %v1831 = vadd.f32 %v1749, %v1830
        %v1832 = vand.u32 %v605, 4294901760
        %1833 = vmatmul.f32.gmra.mxu0 %v1832
        %v1834 = vpop.f32.mrf.mxu0
        %v1835 = vadd.f32 %v1753, %v1834
        %v1836 = vand.u32 %v608, 4294901760
        %1837 = vmatmul.f32.gmra.mxu0 %v1836
        %v1838 = vpop.f32.mrf.mxu0
        %v1839 = vadd.f32 %v1757, %v1838
        %v1840 = vand.u32 %v611, 4294901760
        %1841 = vmatmul.f32.gmra.mxu0 %v1840
        %v1842 = vpop.f32.mrf.mxu0
        %v1843 = vadd.f32 %v1761, %v1842
        %v1844 = vand.u32 %v614, 4294901760
        %1845 = vmatmul.f32.gmra.mxu0 %v1844
        %v1846 = vpop.f32.mrf.mxu0
        %v1847 = vadd.f32 %v1765, %v1846
        %v1848 = vand.u32 %v617, 4294901760
        %1849 = vmatmul.f32.gmra.mxu0 %v1848
        %v1850 = vpop.f32.mrf.mxu0
        %v1851 = vadd.f32 %v1769, %v1850
        %v1852 = vand.u32 %v620, 4294901760
        %1853 = vmatmul.f32.gmra.mxu0 %v1852
        %v1854 = vpop.f32.mrf.mxu0
        %v1855 = vadd.f32 %v1773, %v1854
        %1856 = vdwg.mxu0
        %1857 = vmatpush.msra.mxu0 0.0
        %1858 = vmatpush.msra.mxu0 0.0
        %1859 = vmatpush.msra.mxu0 0.0
        %1860 = vmatpush.msra.mxu0 0.0
        %1861 = vmatpush.msra.mxu0 0.0
        %1862 = vmatpush.msra.mxu0 0.0
        %1863 = vmatpush.msra.mxu0 0.0
        %1864 = vmatpush.msra.mxu0 0.0
        %1865 = vmatpush.msra.mxu0 0.0
        %1866 = vmatpush.msra.mxu0 0.0
        %1867 = vmatpush.msra.mxu0 0.0
        %1868 = vmatpush.msra.mxu0 0.0
        %1869 = vmatpush.msra.mxu0 0.0
        %1870 = vmatpush.msra.mxu0 0.0
        %1871 = vmatpush.msra.mxu0 0.0
        %v1872 = vand.u32 %v630, 4294901760
        %1873 = vmatpush.msra.mxu0 %v1872
        %v1874 = vand.u32 %v575, 4294901760
        %v1875 = vsub.f32 %v575, %v1874
        %v1876 = vand.u32 %v1875, 4294901760
        %v1877 = vsub.f32 %v1875, %v1876
        %v1878 = vand.u32 %v1877, 4294901760
        %1879 = vmatmul.f32.gmra.mxu0 %v1878
        %v1880 = vpop.f32.mrf.mxu0
        %v1881 = vadd.f32 0.0, %v1880
        %v1882 = vand.u32 %v578, 4294901760
        %v1883 = vsub.f32 %v578, %v1882
        %v1884 = vand.u32 %v1883, 4294901760
        %v1885 = vsub.f32 %v1883, %v1884
        %v1886 = vand.u32 %v1885, 4294901760
        %1887 = vmatmul.f32.gmra.mxu0 %v1886
        %v1888 = vpop.f32.mrf.mxu0
        %v1889 = vadd.f32 0.0, %v1888
        %v1890 = vand.u32 %v581, 4294901760
        %v1891 = vsub.f32 %v581, %v1890
        %v1892 = vand.u32 %v1891, 4294901760
        %v1893 = vsub.f32 %v1891, %v1892
        %v1894 = vand.u32 %v1893, 4294901760
        %1895 = vmatmul.f32.gmra.mxu0 %v1894
        %v1896 = vpop.f32.mrf.mxu0
        %v1897 = vadd.f32 0.0, %v1896
        %v1898 = vand.u32 %v584, 4294901760
        %v1899 = vsub.f32 %v584, %v1898
        %v1900 = vand.u32 %v1899, 4294901760
        %v1901 = vsub.f32 %v1899, %v1900
        %v1902 = vand.u32 %v1901, 4294901760
        %1903 = vmatmul.f32.gmra.mxu0 %v1902
        %v1904 = vpop.f32.mrf.mxu0
        %v1905 = vadd.f32 0.0, %v1904
        %v1906 = vand.u32 %v587, 4294901760
        %v1907 = vsub.f32 %v587, %v1906
        %v1908 = vand.u32 %v1907, 4294901760
        %v1909 = vsub.f32 %v1907, %v1908
        %v1910 = vand.u32 %v1909, 4294901760
        %1911 = vmatmul.f32.gmra.mxu0 %v1910
        %v1912 = vpop.f32.mrf.mxu0
        %v1913 = vadd.f32 0.0, %v1912
        %v1914 = vand.u32 %v590, 4294901760
        %v1915 = vsub.f32 %v590, %v1914
        %v1916 = vand.u32 %v1915, 4294901760
        %v1917 = vsub.f32 %v1915, %v1916
        %v1918 = vand.u32 %v1917, 4294901760
        %1919 = vmatmul.f32.gmra.mxu0 %v1918
        %v1920 = vpop.f32.mrf.mxu0
        %v1921 = vadd.f32 0.0, %v1920
        %v1922 = vand.u32 %v593, 4294901760
        %v1923 = vsub.f32 %v593, %v1922
        %v1924 = vand.u32 %v1923, 4294901760
        %v1925 = vsub.f32 %v1923, %v1924
        %v1926 = vand.u32 %v1925, 4294901760
        %1927 = vmatmul.f32.gmra.mxu0 %v1926
        %v1928 = vpop.f32.mrf.mxu0
        %v1929 = vadd.f32 0.0, %v1928
        %v1930 = vand.u32 %v596, 4294901760
        %v1931 = vsub.f32 %v596, %v1930
        %v1932 = vand.u32 %v1931, 4294901760
        %v1933 = vsub.f32 %v1931, %v1932
        %v1934 = vand.u32 %v1933, 4294901760
        %1935 = vmatmul.f32.gmra.mxu0 %v1934
        %v1936 = vpop.f32.mrf.mxu0
        %v1937 = vadd.f32 0.0, %v1936
        %v1938 = vand.u32 %v599, 4294901760
        %v1939 = vsub.f32 %v599, %v1938
        %v1940 = vand.u32 %v1939, 4294901760
        %v1941 = vsub.f32 %v1939, %v1940
        %v1942 = vand.u32 %v1941, 4294901760
        %1943 = vmatmul.f32.gmra.mxu0 %v1942
        %v1944 = vpop.f32.mrf.mxu0
        %v1945 = vadd.f32 0.0, %v1944
        %v1946 = vand.u32 %v602, 4294901760
        %v1947 = vsub.f32 %v602, %v1946
        %v1948 = vand.u32 %v1947, 4294901760
        %v1949 = vsub.f32 %v1947, %v1948
        %v1950 = vand.u32 %v1949, 4294901760
        %1951 = vmatmul.f32.gmra.mxu0 %v1950
        %v1952 = vpop.f32.mrf.mxu0
        %v1953 = vadd.f32 0.0, %v1952
        %v1954 = vand.u32 %v605, 4294901760
        %v1955 = vsub.f32 %v605, %v1954
        %v1956 = vand.u32 %v1955, 4294901760
        %v1957 = vsub.f32 %v1955, %v1956
        %v1958 = vand.u32 %v1957, 4294901760
        %1959 = vmatmul.f32.gmra.mxu0 %v1958
        %v1960 = vpop.f32.mrf.mxu0
        %v1961 = vadd.f32 0.0, %v1960
        %v1962 = vand.u32 %v608, 4294901760
        %v1963 = vsub.f32 %v608, %v1962
        %v1964 = vand.u32 %v1963, 4294901760
        %v1965 = vsub.f32 %v1963, %v1964
        %v1966 = vand.u32 %v1965, 4294901760
        %1967 = vmatmul.f32.gmra.mxu0 %v1966
        %v1968 = vpop.f32.mrf.mxu0
        %v1969 = vadd.f32 0.0, %v1968
        %v1970 = vand.u32 %v611, 4294901760
        %v1971 = vsub.f32 %v611, %v1970
        %v1972 = vand.u32 %v1971, 4294901760
        %v1973 = vsub.f32 %v1971, %v1972
        %v1974 = vand.u32 %v1973, 4294901760
        %1975 = vmatmul.f32.gmra.mxu0 %v1974
        %v1976 = vpop.f32.mrf.mxu0
        %v1977 = vadd.f32 0.0, %v1976
        %v1978 = vand.u32 %v614, 4294901760
        %v1979 = vsub.f32 %v614, %v1978
        %v1980 = vand.u32 %v1979, 4294901760
        %v1981 = vsub.f32 %v1979, %v1980
        %v1982 = vand.u32 %v1981, 4294901760
        %1983 = vmatmul.f32.gmra.mxu0 %v1982
        %v1984 = vpop.f32.mrf.mxu0
        %v1985 = vadd.f32 0.0, %v1984
        %v1986 = vand.u32 %v617, 4294901760
        %v1987 = vsub.f32 %v617, %v1986
        %v1988 = vand.u32 %v1987, 4294901760
        %v1989 = vsub.f32 %v1987, %v1988
        %v1990 = vand.u32 %v1989, 4294901760
        %1991 = vmatmul.f32.gmra.mxu0 %v1990
        %v1992 = vpop.f32.mrf.mxu0
        %v1993 = vadd.f32 0.0, %v1992
        %v1994 = vand.u32 %v620, 4294901760
        %v1995 = vsub.f32 %v620, %v1994
        %v1996 = vand.u32 %v1995, 4294901760
        %v1997 = vsub.f32 %v1995, %v1996
        %v1998 = vand.u32 %v1997, 4294901760
        %1999 = vmatmul.f32.gmra.mxu0 %v1998
        %v2000 = vpop.f32.mrf.mxu0
        %v2001 = vadd.f32 0.0, %v2000
        %2002 = vdwg.mxu0
        %2003 = vmatpush.msra.mxu0 0.0
        %2004 = vmatpush.msra.mxu0 0.0
        %2005 = vmatpush.msra.mxu0 0.0
        %2006 = vmatpush.msra.mxu0 0.0
        %2007 = vmatpush.msra.mxu0 0.0
        %2008 = vmatpush.msra.mxu0 0.0
        %2009 = vmatpush.msra.mxu0 0.0
        %2010 = vmatpush.msra.mxu0 0.0
        %2011 = vmatpush.msra.mxu0 0.0
        %2012 = vmatpush.msra.mxu0 0.0
        %2013 = vmatpush.msra.mxu0 0.0
        %2014 = vmatpush.msra.mxu0 0.0
        %2015 = vmatpush.msra.mxu0 0.0
        %2016 = vmatpush.msra.mxu0 0.0
        %2017 = vmatpush.msra.mxu0 0.0
        %v2018 = vand.u32 %v630, 4294901760
        %v2019 = vsub.f32 %v630, %v2018
        %v2020 = vand.u32 %v2019, 4294901760
        %v2021 = vsub.f32 %v2019, %v2020
        %v2022 = vand.u32 %v2021, 4294901760
        %2023 = vmatpush.msra.mxu0 %v2022
        %v2024 = vand.u32 %v575, 4294901760
        %2025 = vmatmul.f32.gmra.mxu0 %v2024
        %v2026 = vpop.f32.mrf.mxu0
        %v2027 = vadd.f32 %v1881, %v2026
        %v2028 = vand.u32 %v578, 4294901760
        %2029 = vmatmul.f32.gmra.mxu0 %v2028
        %v2030 = vpop.f32.mrf.mxu0
        %v2031 = vadd.f32 %v1889, %v2030
        %v2032 = vand.u32 %v581, 4294901760
        %2033 = vmatmul.f32.gmra.mxu0 %v2032
        %v2034 = vpop.f32.mrf.mxu0
        %v2035 = vadd.f32 %v1897, %v2034
        %v2036 = vand.u32 %v584, 4294901760
        %2037 = vmatmul.f32.gmra.mxu0 %v2036
        %v2038 = vpop.f32.mrf.mxu0
        %v2039 = vadd.f32 %v1905, %v2038
        %v2040 = vand.u32 %v587, 4294901760
        %2041 = vmatmul.f32.gmra.mxu0 %v2040
        %v2042 = vpop.f32.mrf.mxu0
        %v2043 = vadd.f32 %v1913, %v2042
        %v2044 = vand.u32 %v590, 4294901760
        %2045 = vmatmul.f32.gmra.mxu0 %v2044
        %v2046 = vpop.f32.mrf.mxu0
        %v2047 = vadd.f32 %v1921, %v2046
        %v2048 = vand.u32 %v593, 4294901760
        %2049 = vmatmul.f32.gmra.mxu0 %v2048
        %v2050 = vpop.f32.mrf.mxu0
        %v2051 = vadd.f32 %v1929, %v2050
        %v2052 = vand.u32 %v596, 4294901760
        %2053 = vmatmul.f32.gmra.mxu0 %v2052
        %v2054 = vpop.f32.mrf.mxu0
        %v2055 = vadd.f32 %v1937, %v2054
        %v2056 = vand.u32 %v599, 4294901760
        %2057 = vmatmul.f32.gmra.mxu0 %v2056
        %v2058 = vpop.f32.mrf.mxu0
        %v2059 = vadd.f32 %v1945, %v2058
        %v2060 = vand.u32 %v602, 4294901760
        %2061 = vmatmul.f32.gmra.mxu0 %v2060
        %v2062 = vpop.f32.mrf.mxu0
        %v2063 = vadd.f32 %v1953, %v2062
        %v2064 = vand.u32 %v605, 4294901760
        %2065 = vmatmul.f32.gmra.mxu0 %v2064
        %v2066 = vpop.f32.mrf.mxu0
        %v2067 = vadd.f32 %v1961, %v2066
        %v2068 = vand.u32 %v608, 4294901760
        %2069 = vmatmul.f32.gmra.mxu0 %v2068
        %v2070 = vpop.f32.mrf.mxu0
        %v2071 = vadd.f32 %v1969, %v2070
        %v2072 = vand.u32 %v611, 4294901760
        %2073 = vmatmul.f32.gmra.mxu0 %v2072
        %v2074 = vpop.f32.mrf.mxu0
        %v2075 = vadd.f32 %v1977, %v2074
        %v2076 = vand.u32 %v614, 4294901760
        %2077 = vmatmul.f32.gmra.mxu0 %v2076
        %v2078 = vpop.f32.mrf.mxu0
        %v2079 = vadd.f32 %v1985, %v2078
        %v2080 = vand.u32 %v617, 4294901760
        %2081 = vmatmul.f32.gmra.mxu0 %v2080
        %v2082 = vpop.f32.mrf.mxu0
        %v2083 = vadd.f32 %v1993, %v2082
        %v2084 = vand.u32 %v620, 4294901760
        %2085 = vmatmul.f32.gmra.mxu0 %v2084
        %v2086 = vpop.f32.mrf.mxu0
        %v2087 = vadd.f32 %v2001, %v2086
        %2088 = vdwg.mxu0
        %2089 = vmatpush.msra.mxu0 0.0
        %2090 = vmatpush.msra.mxu0 0.0
        %2091 = vmatpush.msra.mxu0 0.0
        %2092 = vmatpush.msra.mxu0 0.0
        %2093 = vmatpush.msra.mxu0 0.0
        %2094 = vmatpush.msra.mxu0 0.0
        %2095 = vmatpush.msra.mxu0 0.0
        %2096 = vmatpush.msra.mxu0 0.0
        %2097 = vmatpush.msra.mxu0 0.0
        %2098 = vmatpush.msra.mxu0 0.0
        %2099 = vmatpush.msra.mxu0 0.0
        %2100 = vmatpush.msra.mxu0 0.0
        %2101 = vmatpush.msra.mxu0 0.0
        %2102 = vmatpush.msra.mxu0 0.0
        %2103 = vmatpush.msra.mxu0 0.0
        %v2104 = vand.u32 %v630, 4294901760
        %v2105 = vsub.f32 %v630, %v2104
        %2106 = vmatpush.msra.mxu0 %v2105
        %v2107 = vand.u32 %v575, 4294901760
        %v2108 = vsub.f32 %v575, %v2107
        %2109 = vmatmul.f32.gmra.mxu0 %v2108
        %v2110 = vpop.f32.mrf.mxu0
        %v2111 = vadd.f32 %v2027, %v2110
        %v2112 = vand.u32 %v578, 4294901760
        %v2113 = vsub.f32 %v578, %v2112
        %2114 = vmatmul.f32.gmra.mxu0 %v2113
        %v2115 = vpop.f32.mrf.mxu0
        %v2116 = vadd.f32 %v2031, %v2115
        %v2117 = vand.u32 %v581, 4294901760
        %v2118 = vsub.f32 %v581, %v2117
        %2119 = vmatmul.f32.gmra.mxu0 %v2118
        %v2120 = vpop.f32.mrf.mxu0
        %v2121 = vadd.f32 %v2035, %v2120
        %v2122 = vand.u32 %v584, 4294901760
        %v2123 = vsub.f32 %v584, %v2122
        %2124 = vmatmul.f32.gmra.mxu0 %v2123
        %v2125 = vpop.f32.mrf.mxu0
        %v2126 = vadd.f32 %v2039, %v2125
        %v2127 = vand.u32 %v587, 4294901760
        %v2128 = vsub.f32 %v587, %v2127
        %2129 = vmatmul.f32.gmra.mxu0 %v2128
        %v2130 = vpop.f32.mrf.mxu0
        %v2131 = vadd.f32 %v2043, %v2130
        %v2132 = vand.u32 %v590, 4294901760
        %v2133 = vsub.f32 %v590, %v2132
        %2134 = vmatmul.f32.gmra.mxu0 %v2133
        %v2135 = vpop.f32.mrf.mxu0
        %v2136 = vadd.f32 %v2047, %v2135
        %v2137 = vand.u32 %v593, 4294901760
        %v2138 = vsub.f32 %v593, %v2137
        %2139 = vmatmul.f32.gmra.mxu0 %v2138
        %v2140 = vpop.f32.mrf.mxu0
        %v2141 = vadd.f32 %v2051, %v2140
        %v2142 = vand.u32 %v596, 4294901760
        %v2143 = vsub.f32 %v596, %v2142
        %2144 = vmatmul.f32.gmra.mxu0 %v2143
        %v2145 = vpop.f32.mrf.mxu0
        %v2146 = vadd.f32 %v2055, %v2145
        %v2147 = vand.u32 %v599, 4294901760
        %v2148 = vsub.f32 %v599, %v2147
        %2149 = vmatmul.f32.gmra.mxu0 %v2148
        %v2150 = vpop.f32.mrf.mxu0
        %v2151 = vadd.f32 %v2059, %v2150
        %v2152 = vand.u32 %v602, 4294901760
        %v2153 = vsub.f32 %v602, %v2152
        %2154 = vmatmul.f32.gmra.mxu0 %v2153
        %v2155 = vpop.f32.mrf.mxu0
        %v2156 = vadd.f32 %v2063, %v2155
        %v2157 = vand.u32 %v605, 4294901760
        %v2158 = vsub.f32 %v605, %v2157
        %2159 = vmatmul.f32.gmra.mxu0 %v2158
        %v2160 = vpop.f32.mrf.mxu0
        %v2161 = vadd.f32 %v2067, %v2160
        %v2162 = vand.u32 %v608, 4294901760
        %v2163 = vsub.f32 %v608, %v2162
        %2164 = vmatmul.f32.gmra.mxu0 %v2163
        %v2165 = vpop.f32.mrf.mxu0
        %v2166 = vadd.f32 %v2071, %v2165
        %v2167 = vand.u32 %v611, 4294901760
        %v2168 = vsub.f32 %v611, %v2167
        %2169 = vmatmul.f32.gmra.mxu0 %v2168
        %v2170 = vpop.f32.mrf.mxu0
        %v2171 = vadd.f32 %v2075, %v2170
        %v2172 = vand.u32 %v614, 4294901760
        %v2173 = vsub.f32 %v614, %v2172
        %2174 = vmatmul.f32.gmra.mxu0 %v2173
        %v2175 = vpop.f32.mrf.mxu0
        %v2176 = vadd.f32 %v2079, %v2175
        %v2177 = vand.u32 %v617, 4294901760
        %v2178 = vsub.f32 %v617, %v2177
        %2179 = vmatmul.f32.gmra.mxu0 %v2178
        %v2180 = vpop.f32.mrf.mxu0
        %v2181 = vadd.f32 %v2083, %v2180
        %v2182 = vand.u32 %v620, 4294901760
        %v2183 = vsub.f32 %v620, %v2182
        %2184 = vmatmul.f32.gmra.mxu0 %v2183
        %v2185 = vpop.f32.mrf.mxu0
        %v2186 = vadd.f32 %v2087, %v2185
        %2187 = vdwg.mxu0
        %2188 = vmatpush.msra.mxu0 0.0
        %2189 = vmatpush.msra.mxu0 0.0
        %2190 = vmatpush.msra.mxu0 0.0
        %2191 = vmatpush.msra.mxu0 0.0
        %2192 = vmatpush.msra.mxu0 0.0
        %2193 = vmatpush.msra.mxu0 0.0
        %2194 = vmatpush.msra.mxu0 0.0
        %2195 = vmatpush.msra.mxu0 0.0
        %2196 = vmatpush.msra.mxu0 0.0
        %2197 = vmatpush.msra.mxu0 0.0
        %2198 = vmatpush.msra.mxu0 0.0
        %2199 = vmatpush.msra.mxu0 0.0
        %2200 = vmatpush.msra.mxu0 0.0
        %2201 = vmatpush.msra.mxu0 0.0
        %2202 = vmatpush.msra.mxu0 0.0
        %v2203 = vand.u32 %v630, 4294901760
        %2204 = vmatpush.msra.mxu0 %v2203
        %v2205 = vand.u32 %v575, 4294901760
        %v2206 = vsub.f32 %v575, %v2205
        %v2207 = vand.u32 %v2206, 4294901760
        %2208 = vmatmul.f32.gmra.mxu0 %v2207
        %v2209 = vpop.f32.mrf.mxu0
        %v2210 = vadd.f32 %v2111, %v2209
        %v2211 = vand.u32 %v578, 4294901760
        %v2212 = vsub.f32 %v578, %v2211
        %v2213 = vand.u32 %v2212, 4294901760
        %2214 = vmatmul.f32.gmra.mxu0 %v2213
        %v2215 = vpop.f32.mrf.mxu0
        %v2216 = vadd.f32 %v2116, %v2215
        %v2217 = vand.u32 %v581, 4294901760
        %v2218 = vsub.f32 %v581, %v2217
        %v2219 = vand.u32 %v2218, 4294901760
        %2220 = vmatmul.f32.gmra.mxu0 %v2219
        %v2221 = vpop.f32.mrf.mxu0
        %v2222 = vadd.f32 %v2121, %v2221
        %v2223 = vand.u32 %v584, 4294901760
        %v2224 = vsub.f32 %v584, %v2223
        %v2225 = vand.u32 %v2224, 4294901760
        %2226 = vmatmul.f32.gmra.mxu0 %v2225
        %v2227 = vpop.f32.mrf.mxu0
        %v2228 = vadd.f32 %v2126, %v2227
        %v2229 = vand.u32 %v587, 4294901760
        %v2230 = vsub.f32 %v587, %v2229
        %v2231 = vand.u32 %v2230, 4294901760
        %2232 = vmatmul.f32.gmra.mxu0 %v2231
        %v2233 = vpop.f32.mrf.mxu0
        %v2234 = vadd.f32 %v2131, %v2233
        %v2235 = vand.u32 %v590, 4294901760
        %v2236 = vsub.f32 %v590, %v2235
        %v2237 = vand.u32 %v2236, 4294901760
        %2238 = vmatmul.f32.gmra.mxu0 %v2237
        %v2239 = vpop.f32.mrf.mxu0
        %v2240 = vadd.f32 %v2136, %v2239
        %v2241 = vand.u32 %v593, 4294901760
        %v2242 = vsub.f32 %v593, %v2241
        %v2243 = vand.u32 %v2242, 4294901760
        %2244 = vmatmul.f32.gmra.mxu0 %v2243
        %v2245 = vpop.f32.mrf.mxu0
        %v2246 = vadd.f32 %v2141, %v2245
        %v2247 = vand.u32 %v596, 4294901760
        %v2248 = vsub.f32 %v596, %v2247
        %v2249 = vand.u32 %v2248, 4294901760
        %2250 = vmatmul.f32.gmra.mxu0 %v2249
        %v2251 = vpop.f32.mrf.mxu0
        %v2252 = vadd.f32 %v2146, %v2251
        %v2253 = vand.u32 %v599, 4294901760
        %v2254 = vsub.f32 %v599, %v2253
        %v2255 = vand.u32 %v2254, 4294901760
        %2256 = vmatmul.f32.gmra.mxu0 %v2255
        %v2257 = vpop.f32.mrf.mxu0
        %v2258 = vadd.f32 %v2151, %v2257
        %v2259 = vand.u32 %v602, 4294901760
        %v2260 = vsub.f32 %v602, %v2259
        %v2261 = vand.u32 %v2260, 4294901760
        %2262 = vmatmul.f32.gmra.mxu0 %v2261
        %v2263 = vpop.f32.mrf.mxu0
        %v2264 = vadd.f32 %v2156, %v2263
        %v2265 = vand.u32 %v605, 4294901760
        %v2266 = vsub.f32 %v605, %v2265
        %v2267 = vand.u32 %v2266, 4294901760
        %2268 = vmatmul.f32.gmra.mxu0 %v2267
        %v2269 = vpop.f32.mrf.mxu0
        %v2270 = vadd.f32 %v2161, %v2269
        %v2271 = vand.u32 %v608, 4294901760
        %v2272 = vsub.f32 %v608, %v2271
        %v2273 = vand.u32 %v2272, 4294901760
        %2274 = vmatmul.f32.gmra.mxu0 %v2273
        %v2275 = vpop.f32.mrf.mxu0
        %v2276 = vadd.f32 %v2166, %v2275
        %v2277 = vand.u32 %v611, 4294901760
        %v2278 = vsub.f32 %v611, %v2277
        %v2279 = vand.u32 %v2278, 4294901760
        %2280 = vmatmul.f32.gmra.mxu0 %v2279
        %v2281 = vpop.f32.mrf.mxu0
        %v2282 = vadd.f32 %v2171, %v2281
        %v2283 = vand.u32 %v614, 4294901760
        %v2284 = vsub.f32 %v614, %v2283
        %v2285 = vand.u32 %v2284, 4294901760
        %2286 = vmatmul.f32.gmra.mxu0 %v2285
        %v2287 = vpop.f32.mrf.mxu0
        %v2288 = vadd.f32 %v2176, %v2287
        %v2289 = vand.u32 %v617, 4294901760
        %v2290 = vsub.f32 %v617, %v2289
        %v2291 = vand.u32 %v2290, 4294901760
        %2292 = vmatmul.f32.gmra.mxu0 %v2291
        %v2293 = vpop.f32.mrf.mxu0
        %v2294 = vadd.f32 %v2181, %v2293
        %v2295 = vand.u32 %v620, 4294901760
        %v2296 = vsub.f32 %v620, %v2295
        %v2297 = vand.u32 %v2296, 4294901760
        %2298 = vmatmul.f32.gmra.mxu0 %v2297
        %v2299 = vpop.f32.mrf.mxu0
        %v2300 = vadd.f32 %v2186, %v2299
        %2301 = vdwg.mxu0
        %2302 = vmatpush.msra.mxu0 0.0
        %2303 = vmatpush.msra.mxu0 0.0
        %2304 = vmatpush.msra.mxu0 0.0
        %2305 = vmatpush.msra.mxu0 0.0
        %2306 = vmatpush.msra.mxu0 0.0
        %2307 = vmatpush.msra.mxu0 0.0
        %2308 = vmatpush.msra.mxu0 0.0
        %2309 = vmatpush.msra.mxu0 0.0
        %2310 = vmatpush.msra.mxu0 0.0
        %2311 = vmatpush.msra.mxu0 0.0
        %2312 = vmatpush.msra.mxu0 0.0
        %2313 = vmatpush.msra.mxu0 0.0
        %2314 = vmatpush.msra.mxu0 0.0
        %2315 = vmatpush.msra.mxu0 0.0
        %2316 = vmatpush.msra.mxu0 0.0
        %v2317 = vand.u32 %v630, 4294901760
        %v2318 = vsub.f32 %v630, %v2317
        %v2319 = vand.u32 %v2318, 4294901760
        %2320 = vmatpush.msra.mxu0 %v2319
        %v2321 = vand.u32 %v575, 4294901760
        %2322 = vmatmul.f32.gmra.mxu0 %v2321
        %v2323 = vpop.f32.mrf.mxu0
        %v2324 = vadd.f32 %v2210, %v2323
        %v2325 = vand.u32 %v578, 4294901760
        %2326 = vmatmul.f32.gmra.mxu0 %v2325
        %v2327 = vpop.f32.mrf.mxu0
        %v2328 = vadd.f32 %v2216, %v2327
        %v2329 = vand.u32 %v581, 4294901760
        %2330 = vmatmul.f32.gmra.mxu0 %v2329
        %v2331 = vpop.f32.mrf.mxu0
        %v2332 = vadd.f32 %v2222, %v2331
        %v2333 = vand.u32 %v584, 4294901760
        %2334 = vmatmul.f32.gmra.mxu0 %v2333
        %v2335 = vpop.f32.mrf.mxu0
        %v2336 = vadd.f32 %v2228, %v2335
        %v2337 = vand.u32 %v587, 4294901760
        %2338 = vmatmul.f32.gmra.mxu0 %v2337
        %v2339 = vpop.f32.mrf.mxu0
        %v2340 = vadd.f32 %v2234, %v2339
        %v2341 = vand.u32 %v590, 4294901760
        %2342 = vmatmul.f32.gmra.mxu0 %v2341
        %v2343 = vpop.f32.mrf.mxu0
        %v2344 = vadd.f32 %v2240, %v2343
        %v2345 = vand.u32 %v593, 4294901760
        %2346 = vmatmul.f32.gmra.mxu0 %v2345
        %v2347 = vpop.f32.mrf.mxu0
        %v2348 = vadd.f32 %v2246, %v2347
        %v2349 = vand.u32 %v596, 4294901760
        %2350 = vmatmul.f32.gmra.mxu0 %v2349
        %v2351 = vpop.f32.mrf.mxu0
        %v2352 = vadd.f32 %v2252, %v2351
        %v2353 = vand.u32 %v599, 4294901760
        %2354 = vmatmul.f32.gmra.mxu0 %v2353
        %v2355 = vpop.f32.mrf.mxu0
        %v2356 = vadd.f32 %v2258, %v2355
        %v2357 = vand.u32 %v602, 4294901760
        %2358 = vmatmul.f32.gmra.mxu0 %v2357
        %v2359 = vpop.f32.mrf.mxu0
        %v2360 = vadd.f32 %v2264, %v2359
        %v2361 = vand.u32 %v605, 4294901760
        %2362 = vmatmul.f32.gmra.mxu0 %v2361
        %v2363 = vpop.f32.mrf.mxu0
        %v2364 = vadd.f32 %v2270, %v2363
        %v2365 = vand.u32 %v608, 4294901760
        %2366 = vmatmul.f32.gmra.mxu0 %v2365
        %v2367 = vpop.f32.mrf.mxu0
        %v2368 = vadd.f32 %v2276, %v2367
        %v2369 = vand.u32 %v611, 4294901760
        %2370 = vmatmul.f32.gmra.mxu0 %v2369
        %v2371 = vpop.f32.mrf.mxu0
        %v2372 = vadd.f32 %v2282, %v2371
        %v2373 = vand.u32 %v614, 4294901760
        %2374 = vmatmul.f32.gmra.mxu0 %v2373
        %v2375 = vpop.f32.mrf.mxu0
        %v2376 = vadd.f32 %v2288, %v2375
        %v2377 = vand.u32 %v617, 4294901760
        %2378 = vmatmul.f32.gmra.mxu0 %v2377
        %v2379 = vpop.f32.mrf.mxu0
        %v2380 = vadd.f32 %v2294, %v2379
        %v2381 = vand.u32 %v620, 4294901760
        %2382 = vmatmul.f32.gmra.mxu0 %v2381
        %v2383 = vpop.f32.mrf.mxu0
        %v2384 = vadd.f32 %v2300, %v2383
        %2385 = vdwg.mxu0
        %2386 = vmatpush.msra.mxu0 0.0
        %2387 = vmatpush.msra.mxu0 0.0
        %2388 = vmatpush.msra.mxu0 0.0
        %2389 = vmatpush.msra.mxu0 0.0
        %2390 = vmatpush.msra.mxu0 0.0
        %2391 = vmatpush.msra.mxu0 0.0
        %2392 = vmatpush.msra.mxu0 0.0
        %2393 = vmatpush.msra.mxu0 0.0
        %2394 = vmatpush.msra.mxu0 0.0
        %2395 = vmatpush.msra.mxu0 0.0
        %2396 = vmatpush.msra.mxu0 0.0
        %2397 = vmatpush.msra.mxu0 0.0
        %2398 = vmatpush.msra.mxu0 0.0
        %2399 = vmatpush.msra.mxu0 0.0
        %2400 = vmatpush.msra.mxu0 0.0
        %v2401 = vand.u32 %v630, 4294901760
        %2402 = vmatpush.msra.mxu0 %v2401
        %v2403 = vand.u32 %v575, 4294901760
        %2404 = vmatmul.f32.gmra.mxu0 %v2403
        %v2405 = vpop.f32.mrf.mxu0
        %v2406 = vadd.f32 %v2324, %v2405
        %v2407 = vand.u32 %v578, 4294901760
        %2408 = vmatmul.f32.gmra.mxu0 %v2407
        %v2409 = vpop.f32.mrf.mxu0
        %v2410 = vadd.f32 %v2328, %v2409
        %v2411 = vand.u32 %v581, 4294901760
        %2412 = vmatmul.f32.gmra.mxu0 %v2411
        %v2413 = vpop.f32.mrf.mxu0
        %v2414 = vadd.f32 %v2332, %v2413
        %v2415 = vand.u32 %v584, 4294901760
        %2416 = vmatmul.f32.gmra.mxu0 %v2415
        %v2417 = vpop.f32.mrf.mxu0
        %v2418 = vadd.f32 %v2336, %v2417
        %v2419 = vand.u32 %v587, 4294901760
        %2420 = vmatmul.f32.gmra.mxu0 %v2419
        %v2421 = vpop.f32.mrf.mxu0
        %v2422 = vadd.f32 %v2340, %v2421
        %v2423 = vand.u32 %v590, 4294901760
        %2424 = vmatmul.f32.gmra.mxu0 %v2423
        %v2425 = vpop.f32.mrf.mxu0
        %v2426 = vadd.f32 %v2344, %v2425
        %v2427 = vand.u32 %v593, 4294901760
        %2428 = vmatmul.f32.gmra.mxu0 %v2427
        %v2429 = vpop.f32.mrf.mxu0
        %v2430 = vadd.f32 %v2348, %v2429
        %v2431 = vand.u32 %v596, 4294901760
        %2432 = vmatmul.f32.gmra.mxu0 %v2431
        %v2433 = vpop.f32.mrf.mxu0
        %v2434 = vadd.f32 %v2352, %v2433
        %v2435 = vand.u32 %v599, 4294901760
        %2436 = vmatmul.f32.gmra.mxu0 %v2435
        %v2437 = vpop.f32.mrf.mxu0
        %v2438 = vadd.f32 %v2356, %v2437
        %v2439 = vand.u32 %v602, 4294901760
        %2440 = vmatmul.f32.gmra.mxu0 %v2439
        %v2441 = vpop.f32.mrf.mxu0
        %v2442 = vadd.f32 %v2360, %v2441
        %v2443 = vand.u32 %v605, 4294901760
        %2444 = vmatmul.f32.gmra.mxu0 %v2443
        %v2445 = vpop.f32.mrf.mxu0
        %v2446 = vadd.f32 %v2364, %v2445
        %v2447 = vand.u32 %v608, 4294901760
        %2448 = vmatmul.f32.gmra.mxu0 %v2447
        %v2449 = vpop.f32.mrf.mxu0
        %v2450 = vadd.f32 %v2368, %v2449
        %v2451 = vand.u32 %v611, 4294901760
        %2452 = vmatmul.f32.gmra.mxu0 %v2451
        %v2453 = vpop.f32.mrf.mxu0
        %v2454 = vadd.f32 %v2372, %v2453
        %v2455 = vand.u32 %v614, 4294901760
        %2456 = vmatmul.f32.gmra.mxu0 %v2455
        %v2457 = vpop.f32.mrf.mxu0
        %v2458 = vadd.f32 %v2376, %v2457
        %v2459 = vand.u32 %v617, 4294901760
        %2460 = vmatmul.f32.gmra.mxu0 %v2459
        %v2461 = vpop.f32.mrf.mxu0
        %v2462 = vadd.f32 %v2380, %v2461
        %v2463 = vand.u32 %v620, 4294901760
        %2464 = vmatmul.f32.gmra.mxu0 %v2463
        %v2465 = vpop.f32.mrf.mxu0
        %v2466 = vadd.f32 %v2384, %v2465
        %2467 = vdwg.mxu0
        %2468 = vmatpush.msra.mxu0 0.0
        %2469 = vmatpush.msra.mxu0 0.0
        %2470 = vmatpush.msra.mxu0 0.0
        %2471 = vmatpush.msra.mxu0 0.0
        %2472 = vmatpush.msra.mxu0 0.0
        %2473 = vmatpush.msra.mxu0 0.0
        %2474 = vmatpush.msra.mxu0 0.0
        %2475 = vmatpush.msra.mxu0 0.0
        %2476 = vmatpush.msra.mxu0 0.0
        %2477 = vmatpush.msra.mxu0 0.0
        %2478 = vmatpush.msra.mxu0 0.0
        %2479 = vmatpush.msra.mxu0 0.0
        %2480 = vmatpush.msra.mxu0 0.0
        %2481 = vmatpush.msra.mxu0 0.0
        %2482 = vmatpush.msra.mxu0 0.0
        %v2483 = vand.u32 %v633, 4294901760
        %2484 = vmatpush.msra.mxu0 %v2483
        %v2485 = vand.u32 %v575, 4294901760
        %v2486 = vsub.f32 %v575, %v2485
        %v2487 = vand.u32 %v2486, 4294901760
        %v2488 = vsub.f32 %v2486, %v2487
        %v2489 = vand.u32 %v2488, 4294901760
        %2490 = vmatmul.f32.gmra.mxu0 %v2489
        %v2491 = vpop.f32.mrf.mxu0
        %v2492 = vadd.f32 0.0, %v2491
        %v2493 = vand.u32 %v578, 4294901760
        %v2494 = vsub.f32 %v578, %v2493
        %v2495 = vand.u32 %v2494, 4294901760
        %v2496 = vsub.f32 %v2494, %v2495
        %v2497 = vand.u32 %v2496, 4294901760
        %2498 = vmatmul.f32.gmra.mxu0 %v2497
        %v2499 = vpop.f32.mrf.mxu0
        %v2500 = vadd.f32 0.0, %v2499
        %v2501 = vand.u32 %v581, 4294901760
        %v2502 = vsub.f32 %v581, %v2501
        %v2503 = vand.u32 %v2502, 4294901760
        %v2504 = vsub.f32 %v2502, %v2503
        %v2505 = vand.u32 %v2504, 4294901760
        %2506 = vmatmul.f32.gmra.mxu0 %v2505
        %v2507 = vpop.f32.mrf.mxu0
        %v2508 = vadd.f32 0.0, %v2507
        %v2509 = vand.u32 %v584, 4294901760
        %v2510 = vsub.f32 %v584, %v2509
        %v2511 = vand.u32 %v2510, 4294901760
        %v2512 = vsub.f32 %v2510, %v2511
        %v2513 = vand.u32 %v2512, 4294901760
        %2514 = vmatmul.f32.gmra.mxu0 %v2513
        %v2515 = vpop.f32.mrf.mxu0
        %v2516 = vadd.f32 0.0, %v2515
        %v2517 = vand.u32 %v587, 4294901760
        %v2518 = vsub.f32 %v587, %v2517
        %v2519 = vand.u32 %v2518, 4294901760
        %v2520 = vsub.f32 %v2518, %v2519
        %v2521 = vand.u32 %v2520, 4294901760
        %2522 = vmatmul.f32.gmra.mxu0 %v2521
        %v2523 = vpop.f32.mrf.mxu0
        %v2524 = vadd.f32 0.0, %v2523
        %v2525 = vand.u32 %v590, 4294901760
        %v2526 = vsub.f32 %v590, %v2525
        %v2527 = vand.u32 %v2526, 4294901760
        %v2528 = vsub.f32 %v2526, %v2527
        %v2529 = vand.u32 %v2528, 4294901760
        %2530 = vmatmul.f32.gmra.mxu0 %v2529
        %v2531 = vpop.f32.mrf.mxu0
        %v2532 = vadd.f32 0.0, %v2531
        %v2533 = vand.u32 %v593, 4294901760
        %v2534 = vsub.f32 %v593, %v2533
        %v2535 = vand.u32 %v2534, 4294901760
        %v2536 = vsub.f32 %v2534, %v2535
        %v2537 = vand.u32 %v2536, 4294901760
        %2538 = vmatmul.f32.gmra.mxu0 %v2537
        %v2539 = vpop.f32.mrf.mxu0
        %v2540 = vadd.f32 0.0, %v2539
        %v2541 = vand.u32 %v596, 4294901760
        %v2542 = vsub.f32 %v596, %v2541
        %v2543 = vand.u32 %v2542, 4294901760
        %v2544 = vsub.f32 %v2542, %v2543
        %v2545 = vand.u32 %v2544, 4294901760
        %2546 = vmatmul.f32.gmra.mxu0 %v2545
        %v2547 = vpop.f32.mrf.mxu0
        %v2548 = vadd.f32 0.0, %v2547
        %v2549 = vand.u32 %v599, 4294901760
        %v2550 = vsub.f32 %v599, %v2549
        %v2551 = vand.u32 %v2550, 4294901760
        %v2552 = vsub.f32 %v2550, %v2551
        %v2553 = vand.u32 %v2552, 4294901760
        %2554 = vmatmul.f32.gmra.mxu0 %v2553
        %v2555 = vpop.f32.mrf.mxu0
        %v2556 = vadd.f32 0.0, %v2555
        %v2557 = vand.u32 %v602, 4294901760
        %v2558 = vsub.f32 %v602, %v2557
        %v2559 = vand.u32 %v2558, 4294901760
        %v2560 = vsub.f32 %v2558, %v2559
        %v2561 = vand.u32 %v2560, 4294901760
        %2562 = vmatmul.f32.gmra.mxu0 %v2561
        %v2563 = vpop.f32.mrf.mxu0
        %v2564 = vadd.f32 0.0, %v2563
        %v2565 = vand.u32 %v605, 4294901760
        %v2566 = vsub.f32 %v605, %v2565
        %v2567 = vand.u32 %v2566, 4294901760
        %v2568 = vsub.f32 %v2566, %v2567
        %v2569 = vand.u32 %v2568, 4294901760
        %2570 = vmatmul.f32.gmra.mxu0 %v2569
        %v2571 = vpop.f32.mrf.mxu0
        %v2572 = vadd.f32 0.0, %v2571
        %v2573 = vand.u32 %v608, 4294901760
        %v2574 = vsub.f32 %v608, %v2573
        %v2575 = vand.u32 %v2574, 4294901760
        %v2576 = vsub.f32 %v2574, %v2575
        %v2577 = vand.u32 %v2576, 4294901760
        %2578 = vmatmul.f32.gmra.mxu0 %v2577
        %v2579 = vpop.f32.mrf.mxu0
        %v2580 = vadd.f32 0.0, %v2579
        %v2581 = vand.u32 %v611, 4294901760
        %v2582 = vsub.f32 %v611, %v2581
        %v2583 = vand.u32 %v2582, 4294901760
        %v2584 = vsub.f32 %v2582, %v2583
        %v2585 = vand.u32 %v2584, 4294901760
        %2586 = vmatmul.f32.gmra.mxu0 %v2585
        %v2587 = vpop.f32.mrf.mxu0
        %v2588 = vadd.f32 0.0, %v2587
        %v2589 = vand.u32 %v614, 4294901760
        %v2590 = vsub.f32 %v614, %v2589
        %v2591 = vand.u32 %v2590, 4294901760
        %v2592 = vsub.f32 %v2590, %v2591
        %v2593 = vand.u32 %v2592, 4294901760
        %2594 = vmatmul.f32.gmra.mxu0 %v2593
        %v2595 = vpop.f32.mrf.mxu0
        %v2596 = vadd.f32 0.0, %v2595
        %v2597 = vand.u32 %v617, 4294901760
        %v2598 = vsub.f32 %v617, %v2597
        %v2599 = vand.u32 %v2598, 4294901760
        %v2600 = vsub.f32 %v2598, %v2599
        %v2601 = vand.u32 %v2600, 4294901760
        %2602 = vmatmul.f32.gmra.mxu0 %v2601
        %v2603 = vpop.f32.mrf.mxu0
        %v2604 = vadd.f32 0.0, %v2603
        %v2605 = vand.u32 %v620, 4294901760
        %v2606 = vsub.f32 %v620, %v2605
        %v2607 = vand.u32 %v2606, 4294901760
        %v2608 = vsub.f32 %v2606, %v2607
        %v2609 = vand.u32 %v2608, 4294901760
        %2610 = vmatmul.f32.gmra.mxu0 %v2609
        %v2611 = vpop.f32.mrf.mxu0
        %v2612 = vadd.f32 0.0, %v2611
        %2613 = vdwg.mxu0
        %2614 = vmatpush.msra.mxu0 0.0
        %2615 = vmatpush.msra.mxu0 0.0
        %2616 = vmatpush.msra.mxu0 0.0
        %2617 = vmatpush.msra.mxu0 0.0
        %2618 = vmatpush.msra.mxu0 0.0
        %2619 = vmatpush.msra.mxu0 0.0
        %2620 = vmatpush.msra.mxu0 0.0
        %2621 = vmatpush.msra.mxu0 0.0
        %2622 = vmatpush.msra.mxu0 0.0
        %2623 = vmatpush.msra.mxu0 0.0
        %2624 = vmatpush.msra.mxu0 0.0
        %2625 = vmatpush.msra.mxu0 0.0
        %2626 = vmatpush.msra.mxu0 0.0
        %2627 = vmatpush.msra.mxu0 0.0
        %2628 = vmatpush.msra.mxu0 0.0
        %v2629 = vand.u32 %v633, 4294901760
        %v2630 = vsub.f32 %v633, %v2629
        %v2631 = vand.u32 %v2630, 4294901760
        %v2632 = vsub.f32 %v2630, %v2631
        %v2633 = vand.u32 %v2632, 4294901760
        %2634 = vmatpush.msra.mxu0 %v2633
        %v2635 = vand.u32 %v575, 4294901760
        %2636 = vmatmul.f32.gmra.mxu0 %v2635
        %v2637 = vpop.f32.mrf.mxu0
        %v2638 = vadd.f32 %v2492, %v2637
        %v2639 = vand.u32 %v578, 4294901760
        %2640 = vmatmul.f32.gmra.mxu0 %v2639
        %v2641 = vpop.f32.mrf.mxu0
        %v2642 = vadd.f32 %v2500, %v2641
        %v2643 = vand.u32 %v581, 4294901760
        %2644 = vmatmul.f32.gmra.mxu0 %v2643
        %v2645 = vpop.f32.mrf.mxu0
        %v2646 = vadd.f32 %v2508, %v2645
        %v2647 = vand.u32 %v584, 4294901760
        %2648 = vmatmul.f32.gmra.mxu0 %v2647
        %v2649 = vpop.f32.mrf.mxu0
        %v2650 = vadd.f32 %v2516, %v2649
        %v2651 = vand.u32 %v587, 4294901760
        %2652 = vmatmul.f32.gmra.mxu0 %v2651
        %v2653 = vpop.f32.mrf.mxu0
        %v2654 = vadd.f32 %v2524, %v2653
        %v2655 = vand.u32 %v590, 4294901760
        %2656 = vmatmul.f32.gmra.mxu0 %v2655
        %v2657 = vpop.f32.mrf.mxu0
        %v2658 = vadd.f32 %v2532, %v2657
        %v2659 = vand.u32 %v593, 4294901760
        %2660 = vmatmul.f32.gmra.mxu0 %v2659
        %v2661 = vpop.f32.mrf.mxu0
        %v2662 = vadd.f32 %v2540, %v2661
        %v2663 = vand.u32 %v596, 4294901760
        %2664 = vmatmul.f32.gmra.mxu0 %v2663
        %v2665 = vpop.f32.mrf.mxu0
        %v2666 = vadd.f32 %v2548, %v2665
        %v2667 = vand.u32 %v599, 4294901760
        %2668 = vmatmul.f32.gmra.mxu0 %v2667
        %v2669 = vpop.f32.mrf.mxu0
        %v2670 = vadd.f32 %v2556, %v2669
        %v2671 = vand.u32 %v602, 4294901760
        %2672 = vmatmul.f32.gmra.mxu0 %v2671
        %v2673 = vpop.f32.mrf.mxu0
        %v2674 = vadd.f32 %v2564, %v2673
        %v2675 = vand.u32 %v605, 4294901760
        %2676 = vmatmul.f32.gmra.mxu0 %v2675
        %v2677 = vpop.f32.mrf.mxu0
        %v2678 = vadd.f32 %v2572, %v2677
        %v2679 = vand.u32 %v608, 4294901760
        %2680 = vmatmul.f32.gmra.mxu0 %v2679
        %v2681 = vpop.f32.mrf.mxu0
        %v2682 = vadd.f32 %v2580, %v2681
        %v2683 = vand.u32 %v611, 4294901760
        %2684 = vmatmul.f32.gmra.mxu0 %v2683
        %v2685 = vpop.f32.mrf.mxu0
        %v2686 = vadd.f32 %v2588, %v2685
        %v2687 = vand.u32 %v614, 4294901760
        %2688 = vmatmul.f32.gmra.mxu0 %v2687
        %v2689 = vpop.f32.mrf.mxu0
        %v2690 = vadd.f32 %v2596, %v2689
        %v2691 = vand.u32 %v617, 4294901760
        %2692 = vmatmul.f32.gmra.mxu0 %v2691
        %v2693 = vpop.f32.mrf.mxu0
        %v2694 = vadd.f32 %v2604, %v2693
        %v2695 = vand.u32 %v620, 4294901760
        %2696 = vmatmul.f32.gmra.mxu0 %v2695
        %v2697 = vpop.f32.mrf.mxu0
        %v2698 = vadd.f32 %v2612, %v2697
        %2699 = vdwg.mxu0
        %2700 = vmatpush.msra.mxu0 0.0
        %2701 = vmatpush.msra.mxu0 0.0
        %2702 = vmatpush.msra.mxu0 0.0
        %2703 = vmatpush.msra.mxu0 0.0
        %2704 = vmatpush.msra.mxu0 0.0
        %2705 = vmatpush.msra.mxu0 0.0
        %2706 = vmatpush.msra.mxu0 0.0
        %2707 = vmatpush.msra.mxu0 0.0
        %2708 = vmatpush.msra.mxu0 0.0
        %2709 = vmatpush.msra.mxu0 0.0
        %2710 = vmatpush.msra.mxu0 0.0
        %2711 = vmatpush.msra.mxu0 0.0
        %2712 = vmatpush.msra.mxu0 0.0
        %2713 = vmatpush.msra.mxu0 0.0
        %2714 = vmatpush.msra.mxu0 0.0
        %v2715 = vand.u32 %v633, 4294901760
        %v2716 = vsub.f32 %v633, %v2715
        %2717 = vmatpush.msra.mxu0 %v2716
        %v2718 = vand.u32 %v575, 4294901760
        %v2719 = vsub.f32 %v575, %v2718
        %2720 = vmatmul.f32.gmra.mxu0 %v2719
        %v2721 = vpop.f32.mrf.mxu0
        %v2722 = vadd.f32 %v2638, %v2721
        %v2723 = vand.u32 %v578, 4294901760
        %v2724 = vsub.f32 %v578, %v2723
        %2725 = vmatmul.f32.gmra.mxu0 %v2724
        %v2726 = vpop.f32.mrf.mxu0
        %v2727 = vadd.f32 %v2642, %v2726
        %v2728 = vand.u32 %v581, 4294901760
        %v2729 = vsub.f32 %v581, %v2728
        %2730 = vmatmul.f32.gmra.mxu0 %v2729
        %v2731 = vpop.f32.mrf.mxu0
        %v2732 = vadd.f32 %v2646, %v2731
        %v2733 = vand.u32 %v584, 4294901760
        %v2734 = vsub.f32 %v584, %v2733
        %2735 = vmatmul.f32.gmra.mxu0 %v2734
        %v2736 = vpop.f32.mrf.mxu0
        %v2737 = vadd.f32 %v2650, %v2736
        %v2738 = vand.u32 %v587, 4294901760
        %v2739 = vsub.f32 %v587, %v2738
        %2740 = vmatmul.f32.gmra.mxu0 %v2739
        %v2741 = vpop.f32.mrf.mxu0
        %v2742 = vadd.f32 %v2654, %v2741
        %v2743 = vand.u32 %v590, 4294901760
        %v2744 = vsub.f32 %v590, %v2743
        %2745 = vmatmul.f32.gmra.mxu0 %v2744
        %v2746 = vpop.f32.mrf.mxu0
        %v2747 = vadd.f32 %v2658, %v2746
        %v2748 = vand.u32 %v593, 4294901760
        %v2749 = vsub.f32 %v593, %v2748
        %2750 = vmatmul.f32.gmra.mxu0 %v2749
        %v2751 = vpop.f32.mrf.mxu0
        %v2752 = vadd.f32 %v2662, %v2751
        %v2753 = vand.u32 %v596, 4294901760
        %v2754 = vsub.f32 %v596, %v2753
        %2755 = vmatmul.f32.gmra.mxu0 %v2754
        %v2756 = vpop.f32.mrf.mxu0
        %v2757 = vadd.f32 %v2666, %v2756
        %v2758 = vand.u32 %v599, 4294901760
        %v2759 = vsub.f32 %v599, %v2758
        %2760 = vmatmul.f32.gmra.mxu0 %v2759
        %v2761 = vpop.f32.mrf.mxu0
        %v2762 = vadd.f32 %v2670, %v2761
        %v2763 = vand.u32 %v602, 4294901760
        %v2764 = vsub.f32 %v602, %v2763
        %2765 = vmatmul.f32.gmra.mxu0 %v2764
        %v2766 = vpop.f32.mrf.mxu0
        %v2767 = vadd.f32 %v2674, %v2766
        %v2768 = vand.u32 %v605, 4294901760
        %v2769 = vsub.f32 %v605, %v2768
        %2770 = vmatmul.f32.gmra.mxu0 %v2769
        %v2771 = vpop.f32.mrf.mxu0
        %v2772 = vadd.f32 %v2678, %v2771
        %v2773 = vand.u32 %v608, 4294901760
        %v2774 = vsub.f32 %v608, %v2773
        %2775 = vmatmul.f32.gmra.mxu0 %v2774
        %v2776 = vpop.f32.mrf.mxu0
        %v2777 = vadd.f32 %v2682, %v2776
        %v2778 = vand.u32 %v611, 4294901760
        %v2779 = vsub.f32 %v611, %v2778
        %2780 = vmatmul.f32.gmra.mxu0 %v2779
        %v2781 = vpop.f32.mrf.mxu0
        %v2782 = vadd.f32 %v2686, %v2781
        %v2783 = vand.u32 %v614, 4294901760
        %v2784 = vsub.f32 %v614, %v2783
        %2785 = vmatmul.f32.gmra.mxu0 %v2784
        %v2786 = vpop.f32.mrf.mxu0
        %v2787 = vadd.f32 %v2690, %v2786
        %v2788 = vand.u32 %v617, 4294901760
        %v2789 = vsub.f32 %v617, %v2788
        %2790 = vmatmul.f32.gmra.mxu0 %v2789
        %v2791 = vpop.f32.mrf.mxu0
        %v2792 = vadd.f32 %v2694, %v2791
        %v2793 = vand.u32 %v620, 4294901760
        %v2794 = vsub.f32 %v620, %v2793
        %2795 = vmatmul.f32.gmra.mxu0 %v2794
        %v2796 = vpop.f32.mrf.mxu0
        %v2797 = vadd.f32 %v2698, %v2796
        %2798 = vdwg.mxu0
        %2799 = vmatpush.msra.mxu0 0.0
        %2800 = vmatpush.msra.mxu0 0.0
        %2801 = vmatpush.msra.mxu0 0.0
        %2802 = vmatpush.msra.mxu0 0.0
        %2803 = vmatpush.msra.mxu0 0.0
        %2804 = vmatpush.msra.mxu0 0.0
        %2805 = vmatpush.msra.mxu0 0.0
        %2806 = vmatpush.msra.mxu0 0.0
        %2807 = vmatpush.msra.mxu0 0.0
        %2808 = vmatpush.msra.mxu0 0.0
        %2809 = vmatpush.msra.mxu0 0.0
        %2810 = vmatpush.msra.mxu0 0.0
        %2811 = vmatpush.msra.mxu0 0.0
        %2812 = vmatpush.msra.mxu0 0.0
        %2813 = vmatpush.msra.mxu0 0.0
        %v2814 = vand.u32 %v633, 4294901760
        %2815 = vmatpush.msra.mxu0 %v2814
        %v2816 = vand.u32 %v575, 4294901760
        %v2817 = vsub.f32 %v575, %v2816
        %v2818 = vand.u32 %v2817, 4294901760
        %2819 = vmatmul.f32.gmra.mxu0 %v2818
        %v2820 = vpop.f32.mrf.mxu0
        %v2821 = vadd.f32 %v2722, %v2820
        %v2822 = vand.u32 %v578, 4294901760
        %v2823 = vsub.f32 %v578, %v2822
        %v2824 = vand.u32 %v2823, 4294901760
        %2825 = vmatmul.f32.gmra.mxu0 %v2824
        %v2826 = vpop.f32.mrf.mxu0
        %v2827 = vadd.f32 %v2727, %v2826
        %v2828 = vand.u32 %v581, 4294901760
        %v2829 = vsub.f32 %v581, %v2828
        %v2830 = vand.u32 %v2829, 4294901760
        %2831 = vmatmul.f32.gmra.mxu0 %v2830
        %v2832 = vpop.f32.mrf.mxu0
        %v2833 = vadd.f32 %v2732, %v2832
        %v2834 = vand.u32 %v584, 4294901760
        %v2835 = vsub.f32 %v584, %v2834
        %v2836 = vand.u32 %v2835, 4294901760
        %2837 = vmatmul.f32.gmra.mxu0 %v2836
        %v2838 = vpop.f32.mrf.mxu0
        %v2839 = vadd.f32 %v2737, %v2838
        %v2840 = vand.u32 %v587, 4294901760
        %v2841 = vsub.f32 %v587, %v2840
        %v2842 = vand.u32 %v2841, 4294901760
        %2843 = vmatmul.f32.gmra.mxu0 %v2842
        %v2844 = vpop.f32.mrf.mxu0
        %v2845 = vadd.f32 %v2742, %v2844
        %v2846 = vand.u32 %v590, 4294901760
        %v2847 = vsub.f32 %v590, %v2846
        %v2848 = vand.u32 %v2847, 4294901760
        %2849 = vmatmul.f32.gmra.mxu0 %v2848
        %v2850 = vpop.f32.mrf.mxu0
        %v2851 = vadd.f32 %v2747, %v2850
        %v2852 = vand.u32 %v593, 4294901760
        %v2853 = vsub.f32 %v593, %v2852
        %v2854 = vand.u32 %v2853, 4294901760
        %2855 = vmatmul.f32.gmra.mxu0 %v2854
        %v2856 = vpop.f32.mrf.mxu0
        %v2857 = vadd.f32 %v2752, %v2856
        %v2858 = vand.u32 %v596, 4294901760
        %v2859 = vsub.f32 %v596, %v2858
        %v2860 = vand.u32 %v2859, 4294901760
        %2861 = vmatmul.f32.gmra.mxu0 %v2860
        %v2862 = vpop.f32.mrf.mxu0
        %v2863 = vadd.f32 %v2757, %v2862
        %v2864 = vand.u32 %v599, 4294901760
        %v2865 = vsub.f32 %v599, %v2864
        %v2866 = vand.u32 %v2865, 4294901760
        %2867 = vmatmul.f32.gmra.mxu0 %v2866
        %v2868 = vpop.f32.mrf.mxu0
        %v2869 = vadd.f32 %v2762, %v2868
        %v2870 = vand.u32 %v602, 4294901760
        %v2871 = vsub.f32 %v602, %v2870
        %v2872 = vand.u32 %v2871, 4294901760
        %2873 = vmatmul.f32.gmra.mxu0 %v2872
        %v2874 = vpop.f32.mrf.mxu0
        %v2875 = vadd.f32 %v2767, %v2874
        %v2876 = vand.u32 %v605, 4294901760
        %v2877 = vsub.f32 %v605, %v2876
        %v2878 = vand.u32 %v2877, 4294901760
        %2879 = vmatmul.f32.gmra.mxu0 %v2878
        %v2880 = vpop.f32.mrf.mxu0
        %v2881 = vadd.f32 %v2772, %v2880
        %v2882 = vand.u32 %v608, 4294901760
        %v2883 = vsub.f32 %v608, %v2882
        %v2884 = vand.u32 %v2883, 4294901760
        %2885 = vmatmul.f32.gmra.mxu0 %v2884
        %v2886 = vpop.f32.mrf.mxu0
        %v2887 = vadd.f32 %v2777, %v2886
        %v2888 = vand.u32 %v611, 4294901760
        %v2889 = vsub.f32 %v611, %v2888
        %v2890 = vand.u32 %v2889, 4294901760
        %2891 = vmatmul.f32.gmra.mxu0 %v2890
        %v2892 = vpop.f32.mrf.mxu0
        %v2893 = vadd.f32 %v2782, %v2892
        %v2894 = vand.u32 %v614, 4294901760
        %v2895 = vsub.f32 %v614, %v2894
        %v2896 = vand.u32 %v2895, 4294901760
        %2897 = vmatmul.f32.gmra.mxu0 %v2896
        %v2898 = vpop.f32.mrf.mxu0
        %v2899 = vadd.f32 %v2787, %v2898
        %v2900 = vand.u32 %v617, 4294901760
        %v2901 = vsub.f32 %v617, %v2900
        %v2902 = vand.u32 %v2901, 4294901760
        %2903 = vmatmul.f32.gmra.mxu0 %v2902
        %v2904 = vpop.f32.mrf.mxu0
        %v2905 = vadd.f32 %v2792, %v2904
        %v2906 = vand.u32 %v620, 4294901760
        %v2907 = vsub.f32 %v620, %v2906
        %v2908 = vand.u32 %v2907, 4294901760
        %2909 = vmatmul.f32.gmra.mxu0 %v2908
        %v2910 = vpop.f32.mrf.mxu0
        %v2911 = vadd.f32 %v2797, %v2910
        %2912 = vdwg.mxu0
        %2913 = vmatpush.msra.mxu0 0.0
        %2914 = vmatpush.msra.mxu0 0.0
        %2915 = vmatpush.msra.mxu0 0.0
        %2916 = vmatpush.msra.mxu0 0.0
        %2917 = vmatpush.msra.mxu0 0.0
        %2918 = vmatpush.msra.mxu0 0.0
        %2919 = vmatpush.msra.mxu0 0.0
        %2920 = vmatpush.msra.mxu0 0.0
        %2921 = vmatpush.msra.mxu0 0.0
        %2922 = vmatpush.msra.mxu0 0.0
        %2923 = vmatpush.msra.mxu0 0.0
        %2924 = vmatpush.msra.mxu0 0.0
        %2925 = vmatpush.msra.mxu0 0.0
        %2926 = vmatpush.msra.mxu0 0.0
        %2927 = vmatpush.msra.mxu0 0.0
        %v2928 = vand.u32 %v633, 4294901760
        %v2929 = vsub.f32 %v633, %v2928
        %v2930 = vand.u32 %v2929, 4294901760
        %2931 = vmatpush.msra.mxu0 %v2930
        %v2932 = vand.u32 %v575, 4294901760
        %2933 = vmatmul.f32.gmra.mxu0 %v2932
        %v2934 = vpop.f32.mrf.mxu0
        %v2935 = vadd.f32 %v2821, %v2934
        %v2936 = vand.u32 %v578, 4294901760
        %2937 = vmatmul.f32.gmra.mxu0 %v2936
        %v2938 = vpop.f32.mrf.mxu0
        %v2939 = vadd.f32 %v2827, %v2938
        %v2940 = vand.u32 %v581, 4294901760
        %2941 = vmatmul.f32.gmra.mxu0 %v2940
        %v2942 = vpop.f32.mrf.mxu0
        %v2943 = vadd.f32 %v2833, %v2942
        %v2944 = vand.u32 %v584, 4294901760
        %2945 = vmatmul.f32.gmra.mxu0 %v2944
        %v2946 = vpop.f32.mrf.mxu0
        %v2947 = vadd.f32 %v2839, %v2946
        %v2948 = vand.u32 %v587, 4294901760
        %2949 = vmatmul.f32.gmra.mxu0 %v2948
        %v2950 = vpop.f32.mrf.mxu0
        %v2951 = vadd.f32 %v2845, %v2950
        %v2952 = vand.u32 %v590, 4294901760
        %2953 = vmatmul.f32.gmra.mxu0 %v2952
        %v2954 = vpop.f32.mrf.mxu0
        %v2955 = vadd.f32 %v2851, %v2954
        %v2956 = vand.u32 %v593, 4294901760
        %2957 = vmatmul.f32.gmra.mxu0 %v2956
        %v2958 = vpop.f32.mrf.mxu0
        %v2959 = vadd.f32 %v2857, %v2958
        %v2960 = vand.u32 %v596, 4294901760
        %2961 = vmatmul.f32.gmra.mxu0 %v2960
        %v2962 = vpop.f32.mrf.mxu0
        %v2963 = vadd.f32 %v2863, %v2962
        %v2964 = vand.u32 %v599, 4294901760
        %2965 = vmatmul.f32.gmra.mxu0 %v2964
        %v2966 = vpop.f32.mrf.mxu0
        %v2967 = vadd.f32 %v2869, %v2966
        %v2968 = vand.u32 %v602, 4294901760
        %2969 = vmatmul.f32.gmra.mxu0 %v2968
        %v2970 = vpop.f32.mrf.mxu0
        %v2971 = vadd.f32 %v2875, %v2970
        %v2972 = vand.u32 %v605, 4294901760
        %2973 = vmatmul.f32.gmra.mxu0 %v2972
        %v2974 = vpop.f32.mrf.mxu0
        %v2975 = vadd.f32 %v2881, %v2974
        %v2976 = vand.u32 %v608, 4294901760
        %2977 = vmatmul.f32.gmra.mxu0 %v2976
        %v2978 = vpop.f32.mrf.mxu0
        %v2979 = vadd.f32 %v2887, %v2978
        %v2980 = vand.u32 %v611, 4294901760
        %2981 = vmatmul.f32.gmra.mxu0 %v2980
        %v2982 = vpop.f32.mrf.mxu0
        %v2983 = vadd.f32 %v2893, %v2982
        %v2984 = vand.u32 %v614, 4294901760
        %2985 = vmatmul.f32.gmra.mxu0 %v2984
        %v2986 = vpop.f32.mrf.mxu0
        %v2987 = vadd.f32 %v2899, %v2986
        %v2988 = vand.u32 %v617, 4294901760
        %2989 = vmatmul.f32.gmra.mxu0 %v2988
        %v2990 = vpop.f32.mrf.mxu0
        %v2991 = vadd.f32 %v2905, %v2990
        %v2992 = vand.u32 %v620, 4294901760
        %2993 = vmatmul.f32.gmra.mxu0 %v2992
        %v2994 = vpop.f32.mrf.mxu0
        %v2995 = vadd.f32 %v2911, %v2994
        %2996 = vdwg.mxu0
        %2997 = vmatpush.msra.mxu0 0.0
        %2998 = vmatpush.msra.mxu0 0.0
        %2999 = vmatpush.msra.mxu0 0.0
        %3000 = vmatpush.msra.mxu0 0.0
        %3001 = vmatpush.msra.mxu0 0.0
        %3002 = vmatpush.msra.mxu0 0.0
        %3003 = vmatpush.msra.mxu0 0.0
        %3004 = vmatpush.msra.mxu0 0.0
        %3005 = vmatpush.msra.mxu0 0.0
        %3006 = vmatpush.msra.mxu0 0.0
        %3007 = vmatpush.msra.mxu0 0.0
        %3008 = vmatpush.msra.mxu0 0.0
        %3009 = vmatpush.msra.mxu0 0.0
        %3010 = vmatpush.msra.mxu0 0.0
        %3011 = vmatpush.msra.mxu0 0.0
        %v3012 = vand.u32 %v633, 4294901760
        %3013 = vmatpush.msra.mxu0 %v3012
        %v3014 = vand.u32 %v575, 4294901760
        %3015 = vmatmul.f32.gmra.mxu0 %v3014
        %v3016 = vpop.f32.mrf.mxu0
        %v3017 = vadd.f32 %v2935, %v3016
        %v3018 = vand.u32 %v578, 4294901760
        %3019 = vmatmul.f32.gmra.mxu0 %v3018
        %v3020 = vpop.f32.mrf.mxu0
        %v3021 = vadd.f32 %v2939, %v3020
        %v3022 = vand.u32 %v581, 4294901760
        %3023 = vmatmul.f32.gmra.mxu0 %v3022
        %v3024 = vpop.f32.mrf.mxu0
        %v3025 = vadd.f32 %v2943, %v3024
        %v3026 = vand.u32 %v584, 4294901760
        %3027 = vmatmul.f32.gmra.mxu0 %v3026
        %v3028 = vpop.f32.mrf.mxu0
        %v3029 = vadd.f32 %v2947, %v3028
        %v3030 = vand.u32 %v587, 4294901760
        %3031 = vmatmul.f32.gmra.mxu0 %v3030
        %v3032 = vpop.f32.mrf.mxu0
        %v3033 = vadd.f32 %v2951, %v3032
        %v3034 = vand.u32 %v590, 4294901760
        %3035 = vmatmul.f32.gmra.mxu0 %v3034
        %v3036 = vpop.f32.mrf.mxu0
        %v3037 = vadd.f32 %v2955, %v3036
        %v3038 = vand.u32 %v593, 4294901760
        %3039 = vmatmul.f32.gmra.mxu0 %v3038
        %v3040 = vpop.f32.mrf.mxu0
        %v3041 = vadd.f32 %v2959, %v3040
        %v3042 = vand.u32 %v596, 4294901760
        %3043 = vmatmul.f32.gmra.mxu0 %v3042
        %v3044 = vpop.f32.mrf.mxu0
        %v3045 = vadd.f32 %v2963, %v3044
        %v3046 = vand.u32 %v599, 4294901760
        %3047 = vmatmul.f32.gmra.mxu0 %v3046
        %v3048 = vpop.f32.mrf.mxu0
        %v3049 = vadd.f32 %v2967, %v3048
        %v3050 = vand.u32 %v602, 4294901760
        %3051 = vmatmul.f32.gmra.mxu0 %v3050
        %v3052 = vpop.f32.mrf.mxu0
        %v3053 = vadd.f32 %v2971, %v3052
        %v3054 = vand.u32 %v605, 4294901760
        %3055 = vmatmul.f32.gmra.mxu0 %v3054
        %v3056 = vpop.f32.mrf.mxu0
        %v3057 = vadd.f32 %v2975, %v3056
        %v3058 = vand.u32 %v608, 4294901760
        %3059 = vmatmul.f32.gmra.mxu0 %v3058
        %v3060 = vpop.f32.mrf.mxu0
        %v3061 = vadd.f32 %v2979, %v3060
        %v3062 = vand.u32 %v611, 4294901760
        %3063 = vmatmul.f32.gmra.mxu0 %v3062
        %v3064 = vpop.f32.mrf.mxu0
        %v3065 = vadd.f32 %v2983, %v3064
        %v3066 = vand.u32 %v614, 4294901760
        %3067 = vmatmul.f32.gmra.mxu0 %v3066
        %v3068 = vpop.f32.mrf.mxu0
        %v3069 = vadd.f32 %v2987, %v3068
        %v3070 = vand.u32 %v617, 4294901760
        %3071 = vmatmul.f32.gmra.mxu0 %v3070
        %v3072 = vpop.f32.mrf.mxu0
        %v3073 = vadd.f32 %v2991, %v3072
        %v3074 = vand.u32 %v620, 4294901760
        %3075 = vmatmul.f32.gmra.mxu0 %v3074
        %v3076 = vpop.f32.mrf.mxu0
        %v3077 = vadd.f32 %v2995, %v3076
        %3078 = vdwg.mxu0
        %v3079 = vld [vmem:[#allocation2] sm:$0xff]
        %v3080 = vld [vmem:[#allocation2 + $0x8] sm:$0xff]
        %v3081 = vld [vmem:[#allocation2 + $0x10] sm:$0xff]
        %v3082 = vld [vmem:[#allocation2 + $0x18] sm:$0xff]
        %v3083 = vld [vmem:[#allocation2 + $0x20] sm:$0xff]
        %v3084 = vld [vmem:[#allocation2 + $0x28] sm:$0xff]
        %v3085 = vld [vmem:[#allocation2 + $0x30] sm:$0xff]
        %v3086 = vld [vmem:[#allocation2 + $0x38] sm:$0xff]
        %v3087 = vld [vmem:[#allocation2 + $0x40] sm:$0xff]
        %v3088 = vld [vmem:[#allocation2 + $0x48] sm:$0xff]
        %v3089 = vld [vmem:[#allocation2 + $0x50] sm:$0xff]
        %v3090 = vld [vmem:[#allocation2 + $0x58] sm:$0xff]
        %v3091 = vld [vmem:[#allocation2 + $0x60] sm:$0xff]
        %v3092 = vld [vmem:[#allocation2 + $0x68] sm:$0xff]
        %v3093 = vld [vmem:[#allocation2 + $0x70] sm:$0xff]
        %v3094 = vld [vmem:[#allocation2 + $0x78] sm:$0xff]
        %v3095 = vld [vmem:[#allocation2 + $0x80] sm:$0xff]
        %v3096 = vld [vmem:[#allocation2 + $0x88] sm:$0xff]
        %v3097 = vld [vmem:[#allocation2 + $0x90] sm:$0xff]
        %v3098 = vld [vmem:[#allocation2 + $0x98] sm:$0xff]
        %v3099 = vld [vmem:[#allocation2 + $0xa0] sm:$0xff]
        %v3100 = vld [vmem:[#allocation2 + $0xa8] sm:$0xff]
        %v3101 = vld [vmem:[#allocation2 + $0xb0] sm:$0xff]
        %v3102 = vld [vmem:[#allocation2 + $0xb8] sm:$0xff]
        %v3103 = vld [vmem:[#allocation2 + $0xc0] sm:$0xff]
        %v3104 = vld [vmem:[#allocation2 + $0xc8] sm:$0xff]
        %v3105 = vld [vmem:[#allocation2 + $0xd0] sm:$0xff]
        %v3106 = vld [vmem:[#allocation2 + $0xd8] sm:$0xff]
        %v3107 = vld [vmem:[#allocation2 + $0xe0] sm:$0xff]
        %v3108 = vld [vmem:[#allocation2 + $0xe8] sm:$0xff]
        %v3109 = vld [vmem:[#allocation2 + $0xf0] sm:$0xff]
        %v3110 = vld [vmem:[#allocation2 + $0xf8] sm:$0xff]
        %v3111 = vld [vmem:[#allocation2 + $0x100] sm:$0xff]
        %v3112 = vld [vmem:[#allocation2 + $0x108] sm:$0xff]
        %v3113 = vld [vmem:[#allocation2 + $0x110] sm:$0xff]
        %v3114 = vld [vmem:[#allocation2 + $0x118] sm:$0xff]
        %v3115 = vld [vmem:[#allocation2 + $0x120] sm:$0xff]
        %v3116 = vld [vmem:[#allocation2 + $0x128] sm:$0xff]
        %v3117 = vld [vmem:[#allocation2 + $0x130] sm:$0xff]
        %v3118 = vld [vmem:[#allocation2 + $0x138] sm:$0xff]
        %v3119 = vld [vmem:[#allocation2 + $0x140] sm:$0xff]
        %v3120 = vld [vmem:[#allocation2 + $0x148] sm:$0xff]
        %v3121 = vld [vmem:[#allocation2 + $0x150] sm:$0xff]
        %v3122 = vld [vmem:[#allocation2 + $0x158] sm:$0xff]
        %v3123 = vld [vmem:[#allocation2 + $0x160] sm:$0xff]
        %v3124 = vld [vmem:[#allocation2 + $0x168] sm:$0xff]
        %v3125 = vld [vmem:[#allocation2 + $0x170] sm:$0xff]
        %v3126 = vld [vmem:[#allocation2 + $0x178] sm:$0xff]
        %v3127 = vld [vmem:[#allocation2 + $0x180] sm:$0xff]
        %v3128 = vld [vmem:[#allocation2 + $0x188] sm:$0xff]
        %v3129 = vld [vmem:[#allocation2 + $0x190] sm:$0xff]
        %v3130 = vld [vmem:[#allocation2 + $0x198] sm:$0xff]
        %v3131 = vld [vmem:[#allocation2 + $0x1a0] sm:$0xff]
        %v3132 = vld [vmem:[#allocation2 + $0x1a8] sm:$0xff]
        %v3133 = vld [vmem:[#allocation2 + $0x1b0] sm:$0xff]
        %v3134 = vld [vmem:[#allocation2 + $0x1b8] sm:$0xff]
        %v3135 = vld [vmem:[#allocation2 + $0x1c0] sm:$0xff]
        %v3136 = vld [vmem:[#allocation2 + $0x1c8] sm:$0xff]
        %v3137 = vld [vmem:[#allocation2 + $0x1d0] sm:$0xff]
        %v3138 = vld [vmem:[#allocation2 + $0x1d8] sm:$0xff]
        %v3139 = vld [vmem:[#allocation2 + $0x1e0] sm:$0xff]
        %v3140 = vld [vmem:[#allocation2 + $0x1e8] sm:$0xff]
        %v3141 = vld [vmem:[#allocation2 + $0x1f0] sm:$0xff]
        %v3142 = vld [vmem:[#allocation2 + $0x1f8] sm:$0xff]
        %vm3143 = vcmp.gt.f32.partialorder %v1184, 0.0
        %vm3144 = vcmp.gt.f32.partialorder %v1795, 0.0
        %vm3145 = vcmp.gt.f32.partialorder %v2406, 0.0
        %vm3146 = vcmp.gt.f32.partialorder %v3017, 0.0
        %vm3147 = vcmp.gt.f32.partialorder %v1188, 0.0
        %vm3148 = vcmp.gt.f32.partialorder %v1799, 0.0
        %vm3149 = vcmp.gt.f32.partialorder %v2410, 0.0
        %vm3150 = vcmp.gt.f32.partialorder %v3021, 0.0
        %vm3151 = vcmp.gt.f32.partialorder %v1192, 0.0
        %vm3152 = vcmp.gt.f32.partialorder %v1803, 0.0
        %vm3153 = vcmp.gt.f32.partialorder %v2414, 0.0
        %vm3154 = vcmp.gt.f32.partialorder %v3025, 0.0
        %vm3155 = vcmp.gt.f32.partialorder %v1196, 0.0
        %vm3156 = vcmp.gt.f32.partialorder %v1807, 0.0
        %vm3157 = vcmp.gt.f32.partialorder %v2418, 0.0
        %vm3158 = vcmp.gt.f32.partialorder %v3029, 0.0
        %vm3159 = vcmp.gt.f32.partialorder %v1200, 0.0
        %vm3160 = vcmp.gt.f32.partialorder %v1811, 0.0
        %vm3161 = vcmp.gt.f32.partialorder %v2422, 0.0
        %vm3162 = vcmp.gt.f32.partialorder %v3033, 0.0
        %vm3163 = vcmp.gt.f32.partialorder %v1204, 0.0
        %vm3164 = vcmp.gt.f32.partialorder %v1815, 0.0
        %vm3165 = vcmp.gt.f32.partialorder %v2426, 0.0
        %vm3166 = vcmp.gt.f32.partialorder %v3037, 0.0
        %vm3167 = vcmp.gt.f32.partialorder %v1208, 0.0
        %vm3168 = vcmp.gt.f32.partialorder %v1819, 0.0
        %vm3169 = vcmp.gt.f32.partialorder %v2430, 0.0
        %vm3170 = vcmp.gt.f32.partialorder %v3041, 0.0
        %vm3171 = vcmp.gt.f32.partialorder %v1212, 0.0
        %vm3172 = vcmp.gt.f32.partialorder %v1823, 0.0
        %vm3173 = vcmp.gt.f32.partialorder %v2434, 0.0
        %vm3174 = vcmp.gt.f32.partialorder %v3045, 0.0
        %vm3175 = vcmp.gt.f32.partialorder %v1216, 0.0
        %vm3176 = vcmp.gt.f32.partialorder %v1827, 0.0
        %vm3177 = vcmp.gt.f32.partialorder %v2438, 0.0
        %vm3178 = vcmp.gt.f32.partialorder %v3049, 0.0
        %vm3179 = vcmp.gt.f32.partialorder %v1220, 0.0
        %vm3180 = vcmp.gt.f32.partialorder %v1831, 0.0
        %vm3181 = vcmp.gt.f32.partialorder %v2442, 0.0
        %vm3182 = vcmp.gt.f32.partialorder %v3053, 0.0
        %vm3183 = vcmp.gt.f32.partialorder %v1224, 0.0
        %vm3184 = vcmp.gt.f32.partialorder %v1835, 0.0
        %vm3185 = vcmp.gt.f32.partialorder %v2446, 0.0
        %vm3186 = vcmp.gt.f32.partialorder %v3057, 0.0
        %vm3187 = vcmp.gt.f32.partialorder %v1228, 0.0
        %vm3188 = vcmp.gt.f32.partialorder %v1839, 0.0
        %vm3189 = vcmp.gt.f32.partialorder %v2450, 0.0
        %vm3190 = vcmp.gt.f32.partialorder %v3061, 0.0
        %vm3191 = vcmp.gt.f32.partialorder %v1232, 0.0
        %vm3192 = vcmp.gt.f32.partialorder %v1843, 0.0
        %vm3193 = vcmp.gt.f32.partialorder %v2454, 0.0
        %vm3194 = vcmp.gt.f32.partialorder %v3065, 0.0
        %vm3195 = vcmp.gt.f32.partialorder %v1236, 0.0
        %vm3196 = vcmp.gt.f32.partialorder %v1847, 0.0
        %vm3197 = vcmp.gt.f32.partialorder %v2458, 0.0
        %vm3198 = vcmp.gt.f32.partialorder %v3069, 0.0
        %vm3199 = vcmp.gt.f32.partialorder %v1240, 0.0
        %vm3200 = vcmp.gt.f32.partialorder %v1851, 0.0
        %vm3201 = vcmp.gt.f32.partialorder %v2462, 0.0
        %vm3202 = vcmp.gt.f32.partialorder %v3073, 0.0
        %vm3203 = vcmp.gt.f32.partialorder %v1244, 0.0
        %vm3204 = vcmp.gt.f32.partialorder %v1855, 0.0
        %vm3205 = vcmp.gt.f32.partialorder %v2466, 0.0
        %vm3206 = vcmp.gt.f32.partialorder %v3077, 0.0
        %v3207 = vsel %vm3143, 1, 0
        %v3208 = vsel %vm3144, 1, 0
        %v3209 = vsel %vm3145, 1, 0
        %v3210 = vsel %vm3146, 1, 0
        %v3211 = vsel %vm3147, 1, 0
        %v3212 = vsel %vm3148, 1, 0
        %v3213 = vsel %vm3149, 1, 0
        %v3214 = vsel %vm3150, 1, 0
        %v3215 = vsel %vm3151, 1, 0
        %v3216 = vsel %vm3152, 1, 0
        %v3217 = vsel %vm3153, 1, 0
        %v3218 = vsel %vm3154, 1, 0
        %v3219 = vsel %vm3155, 1, 0
        %v3220 = vsel %vm3156, 1, 0
        %v3221 = vsel %vm3157, 1, 0
        %v3222 = vsel %vm3158, 1, 0
        %v3223 = vsel %vm3159, 1, 0
        %v3224 = vsel %vm3160, 1, 0
        %v3225 = vsel %vm3161, 1, 0
        %v3226 = vsel %vm3162, 1, 0
        %v3227 = vsel %vm3163, 1, 0
        %v3228 = vsel %vm3164, 1, 0
        %v3229 = vsel %vm3165, 1, 0
        %v3230 = vsel %vm3166, 1, 0
        %v3231 = vsel %vm3167, 1, 0
        %v3232 = vsel %vm3168, 1, 0
        %v3233 = vsel %vm3169, 1, 0
        %v3234 = vsel %vm3170, 1, 0
        %v3235 = vsel %vm3171, 1, 0
        %v3236 = vsel %vm3172, 1, 0
        %v3237 = vsel %vm3173, 1, 0
        %v3238 = vsel %vm3174, 1, 0
        %v3239 = vsel %vm3175, 1, 0
        %v3240 = vsel %vm3176, 1, 0
        %v3241 = vsel %vm3177, 1, 0
        %v3242 = vsel %vm3178, 1, 0
        %v3243 = vsel %vm3179, 1, 0
        %v3244 = vsel %vm3180, 1, 0
        %v3245 = vsel %vm3181, 1, 0
        %v3246 = vsel %vm3182, 1, 0
        %v3247 = vsel %vm3183, 1, 0
        %v3248 = vsel %vm3184, 1, 0
        %v3249 = vsel %vm3185, 1, 0
        %v3250 = vsel %vm3186, 1, 0
        %v3251 = vsel %vm3187, 1, 0
        %v3252 = vsel %vm3188, 1, 0
        %v3253 = vsel %vm3189, 1, 0
        %v3254 = vsel %vm3190, 1, 0
        %v3255 = vsel %vm3191, 1, 0
        %v3256 = vsel %vm3192, 1, 0
        %v3257 = vsel %vm3193, 1, 0
        %v3258 = vsel %vm3194, 1, 0
        %v3259 = vsel %vm3195, 1, 0
        %v3260 = vsel %vm3196, 1, 0
        %v3261 = vsel %vm3197, 1, 0
        %v3262 = vsel %vm3198, 1, 0
        %v3263 = vsel %vm3199, 1, 0
        %v3264 = vsel %vm3200, 1, 0
        %v3265 = vsel %vm3201, 1, 0
        %v3266 = vsel %vm3202, 1, 0
        %v3267 = vsel %vm3203, 1, 0
        %v3268 = vsel %vm3204, 1, 0
        %v3269 = vsel %vm3205, 1, 0
        %v3270 = vsel %vm3206, 1, 0
        %v3271 = vcvt.s32.f32 %v3207
        %v3272 = vcvt.s32.f32 %v3208
        %v3273 = vcvt.s32.f32 %v3209
        %v3274 = vcvt.s32.f32 %v3210
        %v3275 = vcvt.s32.f32 %v3211
        %v3276 = vcvt.s32.f32 %v3212
        %v3277 = vcvt.s32.f32 %v3213
        %v3278 = vcvt.s32.f32 %v3214
        %v3279 = vcvt.s32.f32 %v3215
        %v3280 = vcvt.s32.f32 %v3216
        %v3281 = vcvt.s32.f32 %v3217
        %v3282 = vcvt.s32.f32 %v3218
        %v3283 = vcvt.s32.f32 %v3219
        %v3284 = vcvt.s32.f32 %v3220
        %v3285 = vcvt.s32.f32 %v3221
        %v3286 = vcvt.s32.f32 %v3222
        %v3287 = vcvt.s32.f32 %v3223
        %v3288 = vcvt.s32.f32 %v3224
        %v3289 = vcvt.s32.f32 %v3225
        %v3290 = vcvt.s32.f32 %v3226
        %v3291 = vcvt.s32.f32 %v3227
        %v3292 = vcvt.s32.f32 %v3228
        %v3293 = vcvt.s32.f32 %v3229
        %v3294 = vcvt.s32.f32 %v3230
        %v3295 = vcvt.s32.f32 %v3231
        %v3296 = vcvt.s32.f32 %v3232
        %v3297 = vcvt.s32.f32 %v3233
        %v3298 = vcvt.s32.f32 %v3234
        %v3299 = vcvt.s32.f32 %v3235
        %v3300 = vcvt.s32.f32 %v3236
        %v3301 = vcvt.s32.f32 %v3237
        %v3302 = vcvt.s32.f32 %v3238
        %v3303 = vcvt.s32.f32 %v3239
        %v3304 = vcvt.s32.f32 %v3240
        %v3305 = vcvt.s32.f32 %v3241
        %v3306 = vcvt.s32.f32 %v3242
        %v3307 = vcvt.s32.f32 %v3243
        %v3308 = vcvt.s32.f32 %v3244
        %v3309 = vcvt.s32.f32 %v3245
        %v3310 = vcvt.s32.f32 %v3246
        %v3311 = vcvt.s32.f32 %v3247
        %v3312 = vcvt.s32.f32 %v3248
        %v3313 = vcvt.s32.f32 %v3249
        %v3314 = vcvt.s32.f32 %v3250
        %v3315 = vcvt.s32.f32 %v3251
        %v3316 = vcvt.s32.f32 %v3252
        %v3317 = vcvt.s32.f32 %v3253
        %v3318 = vcvt.s32.f32 %v3254
        %v3319 = vcvt.s32.f32 %v3255
        %v3320 = vcvt.s32.f32 %v3256
        %v3321 = vcvt.s32.f32 %v3257
        %v3322 = vcvt.s32.f32 %v3258
        %v3323 = vcvt.s32.f32 %v3259
        %v3324 = vcvt.s32.f32 %v3260
        %v3325 = vcvt.s32.f32 %v3261
        %v3326 = vcvt.s32.f32 %v3262
        %v3327 = vcvt.s32.f32 %v3263
        %v3328 = vcvt.s32.f32 %v3264
        %v3329 = vcvt.s32.f32 %v3265
        %v3330 = vcvt.s32.f32 %v3266
        %v3331 = vcvt.s32.f32 %v3267
        %v3332 = vcvt.s32.f32 %v3268
        %v3333 = vcvt.s32.f32 %v3269
        %v3334 = vcvt.s32.f32 %v3270
        %v3335 = vadd.f32 %v3079, %v3271
        %v3336 = vadd.f32 %v3080, %v3272
        %v3337 = vadd.f32 %v3081, %v3273
        %v3338 = vadd.f32 %v3082, %v3274
        %v3339 = vadd.f32 %v3083, %v3275
        %v3340 = vadd.f32 %v3084, %v3276
        %v3341 = vadd.f32 %v3085, %v3277
        %v3342 = vadd.f32 %v3086, %v3278
        %v3343 = vadd.f32 %v3087, %v3279
        %v3344 = vadd.f32 %v3088, %v3280
        %v3345 = vadd.f32 %v3089, %v3281
        %v3346 = vadd.f32 %v3090, %v3282
        %v3347 = vadd.f32 %v3091, %v3283
        %v3348 = vadd.f32 %v3092, %v3284
        %v3349 = vadd.f32 %v3093, %v3285
        %v3350 = vadd.f32 %v3094, %v3286
        %v3351 = vadd.f32 %v3095, %v3287
        %v3352 = vadd.f32 %v3096, %v3288
        %v3353 = vadd.f32 %v3097, %v3289
        %v3354 = vadd.f32 %v3098, %v3290
        %v3355 = vadd.f32 %v3099, %v3291
        %v3356 = vadd.f32 %v3100, %v3292
        %v3357 = vadd.f32 %v3101, %v3293
        %v3358 = vadd.f32 %v3102, %v3294
        %v3359 = vadd.f32 %v3103, %v3295
        %v3360 = vadd.f32 %v3104, %v3296
        %v3361 = vadd.f32 %v3105, %v3297
        %v3362 = vadd.f32 %v3106, %v3298
        %v3363 = vadd.f32 %v3107, %v3299
        %v3364 = vadd.f32 %v3108, %v3300
        %v3365 = vadd.f32 %v3109, %v3301
        %v3366 = vadd.f32 %v3110, %v3302
        %v3367 = vadd.f32 %v3111, %v3303
        %v3368 = vadd.f32 %v3112, %v3304
        %v3369 = vadd.f32 %v3113, %v3305
        %v3370 = vadd.f32 %v3114, %v3306
        %v3371 = vadd.f32 %v3115, %v3307
        %v3372 = vadd.f32 %v3116, %v3308
        %v3373 = vadd.f32 %v3117, %v3309
        %v3374 = vadd.f32 %v3118, %v3310
        %v3375 = vadd.f32 %v3119, %v3311
        %v3376 = vadd.f32 %v3120, %v3312
        %v3377 = vadd.f32 %v3121, %v3313
        %v3378 = vadd.f32 %v3122, %v3314
        %v3379 = vadd.f32 %v3123, %v3315
        %v3380 = vadd.f32 %v3124, %v3316
        %v3381 = vadd.f32 %v3125, %v3317
        %v3382 = vadd.f32 %v3126, %v3318
        %v3383 = vadd.f32 %v3127, %v3319
        %v3384 = vadd.f32 %v3128, %v3320
        %v3385 = vadd.f32 %v3129, %v3321
        %v3386 = vadd.f32 %v3130, %v3322
        %v3387 = vadd.f32 %v3131, %v3323
        %v3388 = vadd.f32 %v3132, %v3324
        %v3389 = vadd.f32 %v3133, %v3325
        %v3390 = vadd.f32 %v3134, %v3326
        %v3391 = vadd.f32 %v3135, %v3327
        %v3392 = vadd.f32 %v3136, %v3328
        %v3393 = vadd.f32 %v3137, %v3329
        %v3394 = vadd.f32 %v3138, %v3330
        %v3395 = vadd.f32 %v3139, %v3331
        %v3396 = vadd.f32 %v3140, %v3332
        %v3397 = vadd.f32 %v3141, %v3333
        %v3398 = vadd.f32 %v3142, %v3334
        %3399 = vst [vmem:[#allocation2] sm:$0xff] %v3335
        %3400 = vst [vmem:[#allocation2 + $0x8] sm:$0xff] %v3336
        %3401 = vst [vmem:[#allocation2 + $0x10] sm:$0xff] %v3337
        %3402 = vst [vmem:[#allocation2 + $0x18] sm:$0xff] %v3338
        %3403 = vst [vmem:[#allocation2 + $0x20] sm:$0xff] %v3339
        %3404 = vst [vmem:[#allocation2 + $0x28] sm:$0xff] %v3340
        %3405 = vst [vmem:[#allocation2 + $0x30] sm:$0xff] %v3341
        %3406 = vst [vmem:[#allocation2 + $0x38] sm:$0xff] %v3342
        %3407 = vst [vmem:[#allocation2 + $0x40] sm:$0xff] %v3343
        %3408 = vst [vmem:[#allocation2 + $0x48] sm:$0xff] %v3344
        %3409 = vst [vmem:[#allocation2 + $0x50] sm:$0xff] %v3345
        %3410 = vst [vmem:[#allocation2 + $0x58] sm:$0xff] %v3346
        %3411 = vst [vmem:[#allocation2 + $0x60] sm:$0xff] %v3347
        %3412 = vst [vmem:[#allocation2 + $0x68] sm:$0xff] %v3348
        %3413 = vst [vmem:[#allocation2 + $0x70] sm:$0xff] %v3349
        %3414 = vst [vmem:[#allocation2 + $0x78] sm:$0xff] %v3350
        %3415 = vst [vmem:[#allocation2 + $0x80] sm:$0xff] %v3351
        %3416 = vst [vmem:[#allocation2 + $0x88] sm:$0xff] %v3352
        %3417 = vst [vmem:[#allocation2 + $0x90] sm:$0xff] %v3353
        %3418 = vst [vmem:[#allocation2 + $0x98] sm:$0xff] %v3354
        %3419 = vst [vmem:[#allocation2 + $0xa0] sm:$0xff] %v3355
        %3420 = vst [vmem:[#allocation2 + $0xa8] sm:$0xff] %v3356
        %3421 = vst [vmem:[#allocation2 + $0xb0] sm:$0xff] %v3357
        %3422 = vst [vmem:[#allocation2 + $0xb8] sm:$0xff] %v3358
        %3423 = vst [vmem:[#allocation2 + $0xc0] sm:$0xff] %v3359
        %3424 = vst [vmem:[#allocation2 + $0xc8] sm:$0xff] %v3360
        %3425 = vst [vmem:[#allocation2 + $0xd0] sm:$0xff] %v3361
        %3426 = vst [vmem:[#allocation2 + $0xd8] sm:$0xff] %v3362
        %3427 = vst [vmem:[#allocation2 + $0xe0] sm:$0xff] %v3363
        %3428 = vst [vmem:[#allocation2 + $0xe8] sm:$0xff] %v3364
        %3429 = vst [vmem:[#allocation2 + $0xf0] sm:$0xff] %v3365
        %3430 = vst [vmem:[#allocation2 + $0xf8] sm:$0xff] %v3366
        %3431 = vst [vmem:[#allocation2 + $0x100] sm:$0xff] %v3367
        %3432 = vst [vmem:[#allocation2 + $0x108] sm:$0xff] %v3368
        %3433 = vst [vmem:[#allocation2 + $0x110] sm:$0xff] %v3369
        %3434 = vst [vmem:[#allocation2 + $0x118] sm:$0xff] %v3370
        %3435 = vst [vmem:[#allocation2 + $0x120] sm:$0xff] %v3371
        %3436 = vst [vmem:[#allocation2 + $0x128] sm:$0xff] %v3372
        %3437 = vst [vmem:[#allocation2 + $0x130] sm:$0xff] %v3373
        %3438 = vst [vmem:[#allocation2 + $0x138] sm:$0xff] %v3374
        %3439 = vst [vmem:[#allocation2 + $0x140] sm:$0xff] %v3375
        %3440 = vst [vmem:[#allocation2 + $0x148] sm:$0xff] %v3376
        %3441 = vst [vmem:[#allocation2 + $0x150] sm:$0xff] %v3377
        %3442 = vst [vmem:[#allocation2 + $0x158] sm:$0xff] %v3378
        %3443 = vst [vmem:[#allocation2 + $0x160] sm:$0xff] %v3379
        %3444 = vst [vmem:[#allocation2 + $0x168] sm:$0xff] %v3380
        %3445 = vst [vmem:[#allocation2 + $0x170] sm:$0xff] %v3381
        %3446 = vst [vmem:[#allocation2 + $0x178] sm:$0xff] %v3382
        %3447 = vst [vmem:[#allocation2 + $0x180] sm:$0xff] %v3383
        %3448 = vst [vmem:[#allocation2 + $0x188] sm:$0xff] %v3384
        %3449 = vst [vmem:[#allocation2 + $0x190] sm:$0xff] %v3385
        %3450 = vst [vmem:[#allocation2 + $0x198] sm:$0xff] %v3386
        %3451 = vst [vmem:[#allocation2 + $0x1a0] sm:$0xff] %v3387
        %3452 = vst [vmem:[#allocation2 + $0x1a8] sm:$0xff] %v3388
        %3453 = vst [vmem:[#allocation2 + $0x1b0] sm:$0xff] %v3389
        %3454 = vst [vmem:[#allocation2 + $0x1b8] sm:$0xff] %v3390
        %3455 = vst [vmem:[#allocation2 + $0x1c0] sm:$0xff] %v3391
        %3456 = vst [vmem:[#allocation2 + $0x1c8] sm:$0xff] %v3392
        %3457 = vst [vmem:[#allocation2 + $0x1d0] sm:$0xff] %v3393
        %3458 = vst [vmem:[#allocation2 + $0x1d8] sm:$0xff] %v3394
        %3459 = vst [vmem:[#allocation2 + $0x1e0] sm:$0xff] %v3395
        %3460 = vst [vmem:[#allocation2 + $0x1e8] sm:$0xff] %v3396
        %3461 = vst [vmem:[#allocation2 + $0x1f0] sm:$0xff] %v3397
        %3462 = vst [vmem:[#allocation2 + $0x1f8] sm:$0xff] %v3398
        %s3463 = scalar_lea.vmem %s300, 8
        %v3464 = vld [vmem:[%s3463] ss:$2 sm:$0xf]
        %s3465 = scalar_lea.vmem %s300, 9
        %v3466 = vld [vmem:[%s3465] ss:$2 sm:$0xf]
        %v3467 = vld [vmem:[%s316 + $0x4] sm:$0xf]
        %s3468 = sadd.s32 %s416, 512
        %v3469 = vstv %s3468
        %v3470 = vadd.s32 %v3469, %v422
        %v3471 = vadd.s32 %v3469, %v423
        %v3472 = vadd.s32 %v3469, %v424
        %v3473 = vadd.s32 %v3469, %v425
        %vm3474 = vcmp.lt.s32.totalorder %v3470, 1600
        %vm3475 = vcmp.lt.s32.totalorder %v3471, 1600
        %vm3476 = vcmp.lt.s32.totalorder %v3472, 1600
        %vm3477 = vcmp.lt.s32.totalorder %v3473, 1600
        %vm3478 = vcmp.gt.f32.partialorder %v3467, 0.5
        %v3479 = vsel %vm3478, 1, 0
        %v3480 = vperm.slane %v3479, 0
        %v3481 = vperm.slane %v3479, 1
        %v3482 = vperm.slane %v3479, 2
        %v3483 = vperm.slane %v3479, 3
        %vm3484 = vcmp.ne.s32.totalorder %v3480, 0
        %vm3485 = vcmp.ne.s32.totalorder %v3481, 0
        %vm3486 = vcmp.ne.s32.totalorder %v3482, 0
        %vm3487 = vcmp.ne.s32.totalorder %v3483, 0
        %vm3488 = vmand %vm3474, %vm3484
        %vm3489 = vmand %vm3475, %vm3485
        %vm3490 = vmand %vm3476, %vm3486
        %vm3491 = vmand %vm3477, %vm3487
        %v3493 = vperm.slane %v3464, 0
        %v3494 = vperm.slane %v3464, 1
        %v3495 = vperm.slane %v3464, 2
        %v3496 = vperm.slane %v3464, 3
        %v3501 = vsel %vm3488, %v3493, 0.0
        %v3502 = vsel %vm3489, %v3494, 0.0
        %v3503 = vsel %vm3490, %v3495, 0.0
        %v3504 = vsel %vm3491, %v3496, 0.0
        %v3506 = vperm.slane %v3466, 0
        %v3507 = vperm.slane %v3466, 1
        %v3508 = vperm.slane %v3466, 2
        %v3509 = vperm.slane %v3466, 3
        %v3514 = vsel %vm3488, %v3506, 0.0
        %v3515 = vsel %vm3489, %v3507, 0.0
        %v3516 = vsel %vm3490, %v3508, 0.0
        %v3517 = vsel %vm3491, %v3509, 0.0
        %v3518 = vcvt.s32.f32 %v3470
        %v3519 = vcvt.s32.f32 %v3471
        %v3520 = vcvt.s32.f32 %v3472
        %v3521 = vcvt.s32.f32 %v3473
        %v3522 = vadd.f32 %v3518, 0.5
        %v3523 = vadd.f32 %v3519, 0.5
        %v3524 = vadd.f32 %v3520, 0.5
        %v3525 = vadd.f32 %v3521, 0.5
        %v3526 = vmul.f32 %v3522, %v489
        %v3527 = vmul.f32 %v3523, %v489
        %v3528 = vmul.f32 %v3524, %v489
        %v3529 = vmul.f32 %v3525, %v489
        %v3530 = vfloor.f32 %v3526
        %v3531 = vfloor.f32 %v3527
        %v3532 = vfloor.f32 %v3528
        %v3533 = vfloor.f32 %v3529
        %v3534 = vmul.f32 %v3530, 40.0
        %v3535 = vmul.f32 %v3531, 40.0
        %v3536 = vmul.f32 %v3532, 40.0
        %v3537 = vmul.f32 %v3533, 40.0
        %v3538 = vsub.f32 %v3518, %v3534
        %v3539 = vsub.f32 %v3519, %v3535
        %v3540 = vsub.f32 %v3520, %v3536
        %v3541 = vsub.f32 %v3521, %v3537
        %v3542 = vsub.f32 %v3530, %v509
        %v3543 = vsub.f32 %v3531, %v509
        %v3544 = vsub.f32 %v3532, %v509
        %v3545 = vsub.f32 %v3533, %v509
        %v3546 = vmul.f32 %v3542, %v3501
        %v3547 = vmul.f32 %v3543, %v3502
        %v3548 = vmul.f32 %v3544, %v3503
        %v3549 = vmul.f32 %v3545, %v3504
        %v3550 = vsub.f32 %v3538, %v521
        %v3551 = vsub.f32 %v3539, %v521
        %v3552 = vsub.f32 %v3540, %v521
        %v3553 = vsub.f32 %v3541, %v521
        %v3554 = vmul.f32 %v3550, %v3514
        %v3555 = vmul.f32 %v3551, %v3515
        %v3556 = vmul.f32 %v3552, %v3516
        %v3557 = vmul.f32 %v3553, %v3517
        %v3558 = vadd.f32 %v3546, %v3554
        %v3559 = vadd.f32 %v3547, %v3555
        %v3560 = vadd.f32 %v3548, %v3556
        %v3561 = vadd.f32 %v3549, %v3557
        %v3562 = vsub.f32 0.0, %v3558
        %v3563 = vsub.f32 0.0, %v3559
        %v3564 = vsub.f32 0.0, %v3560
        %v3565 = vsub.f32 0.0, %v3561
        %v3570 = vrot.slane %v3514, 7
        %v3571 = vrot.slane %v3515, 7
        %v3572 = vrot.slane %v3516, 7
        %v3573 = vrot.slane %v3517, 7
        %v3582 = vrot.slane %v3562, 6
        %v3583 = vrot.slane %v3563, 6
        %v3584 = vrot.slane %v3564, 6
        %v3585 = vrot.slane %v3565, 6
        %v3590 = vsel %vm563, %v3501, %v3570
        %v3591 = vsel %vm563, %v3502, %v3571
        %v3592 = vsel %vm563, %v3503, %v3572
        %v3593 = vsel %vm563, %v3504, %v3573
        %v3594 = vsel %vm568, %v3590, %v3582
        %v3595 = vsel %vm568, %v3591, %v3583
        %v3596 = vsel %vm568, %v3592, %v3584
        %v3597 = vsel %vm568, %v3593, %v3585
        %v3599 = vsel %vm622, %v3594, 0
        %v3602 = vsel %vm622, %v3595, 0
        %v3605 = vsel %vm622, %v3596, 0
        %v3608 = vsel %vm622, %v3597, 0
        %3610 = vmatpush.msra.mxu0 0.0
        %3611 = vmatpush.msra.mxu0 0.0
        %3612 = vmatpush.msra.mxu0 0.0
        %3613 = vmatpush.msra.mxu0 0.0
        %3614 = vmatpush.msra.mxu0 0.0
        %3615 = vmatpush.msra.mxu0 0.0
        %3616 = vmatpush.msra.mxu0 0.0
        %3617 = vmatpush.msra.mxu0 0.0
        %3618 = vmatpush.msra.mxu0 0.0
        %3619 = vmatpush.msra.mxu0 0.0
        %3620 = vmatpush.msra.mxu0 0.0
        %3621 = vmatpush.msra.mxu0 0.0
        %3622 = vmatpush.msra.mxu0 0.0
        %3623 = vmatpush.msra.mxu0 0.0
        %3624 = vmatpush.msra.mxu0 0.0
        %v3625 = vand.u32 %v3599, 4294901760
        %3626 = vmatpush.msra.mxu0 %v3625
        %v3627 = vand.u32 %v575, 4294901760
        %v3628 = vsub.f32 %v575, %v3627
        %v3629 = vand.u32 %v3628, 4294901760
        %v3630 = vsub.f32 %v3628, %v3629
        %v3631 = vand.u32 %v3630, 4294901760
        %3632 = vmatmul.f32.gmra.mxu0 %v3631
        %v3633 = vpop.f32.mrf.mxu0
        %v3634 = vadd.f32 0.0, %v3633
        %v3635 = vand.u32 %v578, 4294901760
        %v3636 = vsub.f32 %v578, %v3635
        %v3637 = vand.u32 %v3636, 4294901760
        %v3638 = vsub.f32 %v3636, %v3637
        %v3639 = vand.u32 %v3638, 4294901760
        %3640 = vmatmul.f32.gmra.mxu0 %v3639
        %v3641 = vpop.f32.mrf.mxu0
        %v3642 = vadd.f32 0.0, %v3641
        %v3643 = vand.u32 %v581, 4294901760
        %v3644 = vsub.f32 %v581, %v3643
        %v3645 = vand.u32 %v3644, 4294901760
        %v3646 = vsub.f32 %v3644, %v3645
        %v3647 = vand.u32 %v3646, 4294901760
        %3648 = vmatmul.f32.gmra.mxu0 %v3647
        %v3649 = vpop.f32.mrf.mxu0
        %v3650 = vadd.f32 0.0, %v3649
        %v3651 = vand.u32 %v584, 4294901760
        %v3652 = vsub.f32 %v584, %v3651
        %v3653 = vand.u32 %v3652, 4294901760
        %v3654 = vsub.f32 %v3652, %v3653
        %v3655 = vand.u32 %v3654, 4294901760
        %3656 = vmatmul.f32.gmra.mxu0 %v3655
        %v3657 = vpop.f32.mrf.mxu0
        %v3658 = vadd.f32 0.0, %v3657
        %v3659 = vand.u32 %v587, 4294901760
        %v3660 = vsub.f32 %v587, %v3659
        %v3661 = vand.u32 %v3660, 4294901760
        %v3662 = vsub.f32 %v3660, %v3661
        %v3663 = vand.u32 %v3662, 4294901760
        %3664 = vmatmul.f32.gmra.mxu0 %v3663
        %v3665 = vpop.f32.mrf.mxu0
        %v3666 = vadd.f32 0.0, %v3665
        %v3667 = vand.u32 %v590, 4294901760
        %v3668 = vsub.f32 %v590, %v3667
        %v3669 = vand.u32 %v3668, 4294901760
        %v3670 = vsub.f32 %v3668, %v3669
        %v3671 = vand.u32 %v3670, 4294901760
        %3672 = vmatmul.f32.gmra.mxu0 %v3671
        %v3673 = vpop.f32.mrf.mxu0
        %v3674 = vadd.f32 0.0, %v3673
        %v3675 = vand.u32 %v593, 4294901760
        %v3676 = vsub.f32 %v593, %v3675
        %v3677 = vand.u32 %v3676, 4294901760
        %v3678 = vsub.f32 %v3676, %v3677
        %v3679 = vand.u32 %v3678, 4294901760
        %3680 = vmatmul.f32.gmra.mxu0 %v3679
        %v3681 = vpop.f32.mrf.mxu0
        %v3682 = vadd.f32 0.0, %v3681
        %v3683 = vand.u32 %v596, 4294901760
        %v3684 = vsub.f32 %v596, %v3683
        %v3685 = vand.u32 %v3684, 4294901760
        %v3686 = vsub.f32 %v3684, %v3685
        %v3687 = vand.u32 %v3686, 4294901760
        %3688 = vmatmul.f32.gmra.mxu0 %v3687
        %v3689 = vpop.f32.mrf.mxu0
        %v3690 = vadd.f32 0.0, %v3689
        %v3691 = vand.u32 %v599, 4294901760
        %v3692 = vsub.f32 %v599, %v3691
        %v3693 = vand.u32 %v3692, 4294901760
        %v3694 = vsub.f32 %v3692, %v3693
        %v3695 = vand.u32 %v3694, 4294901760
        %3696 = vmatmul.f32.gmra.mxu0 %v3695
        %v3697 = vpop.f32.mrf.mxu0
        %v3698 = vadd.f32 0.0, %v3697
        %v3699 = vand.u32 %v602, 4294901760
        %v3700 = vsub.f32 %v602, %v3699
        %v3701 = vand.u32 %v3700, 4294901760
        %v3702 = vsub.f32 %v3700, %v3701
        %v3703 = vand.u32 %v3702, 4294901760
        %3704 = vmatmul.f32.gmra.mxu0 %v3703
        %v3705 = vpop.f32.mrf.mxu0
        %v3706 = vadd.f32 0.0, %v3705
        %v3707 = vand.u32 %v605, 4294901760
        %v3708 = vsub.f32 %v605, %v3707
        %v3709 = vand.u32 %v3708, 4294901760
        %v3710 = vsub.f32 %v3708, %v3709
        %v3711 = vand.u32 %v3710, 4294901760
        %3712 = vmatmul.f32.gmra.mxu0 %v3711
        %v3713 = vpop.f32.mrf.mxu0
        %v3714 = vadd.f32 0.0, %v3713
        %v3715 = vand.u32 %v608, 4294901760
        %v3716 = vsub.f32 %v608, %v3715
        %v3717 = vand.u32 %v3716, 4294901760
        %v3718 = vsub.f32 %v3716, %v3717
        %v3719 = vand.u32 %v3718, 4294901760
        %3720 = vmatmul.f32.gmra.mxu0 %v3719
        %v3721 = vpop.f32.mrf.mxu0
        %v3722 = vadd.f32 0.0, %v3721
        %v3723 = vand.u32 %v611, 4294901760
        %v3724 = vsub.f32 %v611, %v3723
        %v3725 = vand.u32 %v3724, 4294901760
        %v3726 = vsub.f32 %v3724, %v3725
        %v3727 = vand.u32 %v3726, 4294901760
        %3728 = vmatmul.f32.gmra.mxu0 %v3727
        %v3729 = vpop.f32.mrf.mxu0
        %v3730 = vadd.f32 0.0, %v3729
        %v3731 = vand.u32 %v614, 4294901760
        %v3732 = vsub.f32 %v614, %v3731
        %v3733 = vand.u32 %v3732, 4294901760
        %v3734 = vsub.f32 %v3732, %v3733
        %v3735 = vand.u32 %v3734, 4294901760
        %3736 = vmatmul.f32.gmra.mxu0 %v3735
        %v3737 = vpop.f32.mrf.mxu0
        %v3738 = vadd.f32 0.0, %v3737
        %v3739 = vand.u32 %v617, 4294901760
        %v3740 = vsub.f32 %v617, %v3739
        %v3741 = vand.u32 %v3740, 4294901760
        %v3742 = vsub.f32 %v3740, %v3741
        %v3743 = vand.u32 %v3742, 4294901760
        %3744 = vmatmul.f32.gmra.mxu0 %v3743
        %v3745 = vpop.f32.mrf.mxu0
        %v3746 = vadd.f32 0.0, %v3745
        %v3747 = vand.u32 %v620, 4294901760
        %v3748 = vsub.f32 %v620, %v3747
        %v3749 = vand.u32 %v3748, 4294901760
        %v3750 = vsub.f32 %v3748, %v3749
        %v3751 = vand.u32 %v3750, 4294901760
        %3752 = vmatmul.f32.gmra.mxu0 %v3751
        %v3753 = vpop.f32.mrf.mxu0
        %v3754 = vadd.f32 0.0, %v3753
        %3755 = vdwg.mxu0
        %3756 = vmatpush.msra.mxu0 0.0
        %3757 = vmatpush.msra.mxu0 0.0
        %3758 = vmatpush.msra.mxu0 0.0
        %3759 = vmatpush.msra.mxu0 0.0
        %3760 = vmatpush.msra.mxu0 0.0
        %3761 = vmatpush.msra.mxu0 0.0
        %3762 = vmatpush.msra.mxu0 0.0
        %3763 = vmatpush.msra.mxu0 0.0
        %3764 = vmatpush.msra.mxu0 0.0
        %3765 = vmatpush.msra.mxu0 0.0
        %3766 = vmatpush.msra.mxu0 0.0
        %3767 = vmatpush.msra.mxu0 0.0
        %3768 = vmatpush.msra.mxu0 0.0
        %3769 = vmatpush.msra.mxu0 0.0
        %3770 = vmatpush.msra.mxu0 0.0
        %v3771 = vand.u32 %v3599, 4294901760
        %v3772 = vsub.f32 %v3599, %v3771
        %v3773 = vand.u32 %v3772, 4294901760
        %v3774 = vsub.f32 %v3772, %v3773
        %v3775 = vand.u32 %v3774, 4294901760
        %3776 = vmatpush.msra.mxu0 %v3775
        %v3777 = vand.u32 %v575, 4294901760
        %3778 = vmatmul.f32.gmra.mxu0 %v3777
        %v3779 = vpop.f32.mrf.mxu0
        %v3780 = vadd.f32 %v3634, %v3779
        %v3781 = vand.u32 %v578, 4294901760
        %3782 = vmatmul.f32.gmra.mxu0 %v3781
        %v3783 = vpop.f32.mrf.mxu0
        %v3784 = vadd.f32 %v3642, %v3783
        %v3785 = vand.u32 %v581, 4294901760
        %3786 = vmatmul.f32.gmra.mxu0 %v3785
        %v3787 = vpop.f32.mrf.mxu0
        %v3788 = vadd.f32 %v3650, %v3787
        %v3789 = vand.u32 %v584, 4294901760
        %3790 = vmatmul.f32.gmra.mxu0 %v3789
        %v3791 = vpop.f32.mrf.mxu0
        %v3792 = vadd.f32 %v3658, %v3791
        %v3793 = vand.u32 %v587, 4294901760
        %3794 = vmatmul.f32.gmra.mxu0 %v3793
        %v3795 = vpop.f32.mrf.mxu0
        %v3796 = vadd.f32 %v3666, %v3795
        %v3797 = vand.u32 %v590, 4294901760
        %3798 = vmatmul.f32.gmra.mxu0 %v3797
        %v3799 = vpop.f32.mrf.mxu0
        %v3800 = vadd.f32 %v3674, %v3799
        %v3801 = vand.u32 %v593, 4294901760
        %3802 = vmatmul.f32.gmra.mxu0 %v3801
        %v3803 = vpop.f32.mrf.mxu0
        %v3804 = vadd.f32 %v3682, %v3803
        %v3805 = vand.u32 %v596, 4294901760
        %3806 = vmatmul.f32.gmra.mxu0 %v3805
        %v3807 = vpop.f32.mrf.mxu0
        %v3808 = vadd.f32 %v3690, %v3807
        %v3809 = vand.u32 %v599, 4294901760
        %3810 = vmatmul.f32.gmra.mxu0 %v3809
        %v3811 = vpop.f32.mrf.mxu0
        %v3812 = vadd.f32 %v3698, %v3811
        %v3813 = vand.u32 %v602, 4294901760
        %3814 = vmatmul.f32.gmra.mxu0 %v3813
        %v3815 = vpop.f32.mrf.mxu0
        %v3816 = vadd.f32 %v3706, %v3815
        %v3817 = vand.u32 %v605, 4294901760
        %3818 = vmatmul.f32.gmra.mxu0 %v3817
        %v3819 = vpop.f32.mrf.mxu0
        %v3820 = vadd.f32 %v3714, %v3819
        %v3821 = vand.u32 %v608, 4294901760
        %3822 = vmatmul.f32.gmra.mxu0 %v3821
        %v3823 = vpop.f32.mrf.mxu0
        %v3824 = vadd.f32 %v3722, %v3823
        %v3825 = vand.u32 %v611, 4294901760
        %3826 = vmatmul.f32.gmra.mxu0 %v3825
        %v3827 = vpop.f32.mrf.mxu0
        %v3828 = vadd.f32 %v3730, %v3827
        %v3829 = vand.u32 %v614, 4294901760
        %3830 = vmatmul.f32.gmra.mxu0 %v3829
        %v3831 = vpop.f32.mrf.mxu0
        %v3832 = vadd.f32 %v3738, %v3831
        %v3833 = vand.u32 %v617, 4294901760
        %3834 = vmatmul.f32.gmra.mxu0 %v3833
        %v3835 = vpop.f32.mrf.mxu0
        %v3836 = vadd.f32 %v3746, %v3835
        %v3837 = vand.u32 %v620, 4294901760
        %3838 = vmatmul.f32.gmra.mxu0 %v3837
        %v3839 = vpop.f32.mrf.mxu0
        %v3840 = vadd.f32 %v3754, %v3839
        %3841 = vdwg.mxu0
        %3842 = vmatpush.msra.mxu0 0.0
        %3843 = vmatpush.msra.mxu0 0.0
        %3844 = vmatpush.msra.mxu0 0.0
        %3845 = vmatpush.msra.mxu0 0.0
        %3846 = vmatpush.msra.mxu0 0.0
        %3847 = vmatpush.msra.mxu0 0.0
        %3848 = vmatpush.msra.mxu0 0.0
        %3849 = vmatpush.msra.mxu0 0.0
        %3850 = vmatpush.msra.mxu0 0.0
        %3851 = vmatpush.msra.mxu0 0.0
        %3852 = vmatpush.msra.mxu0 0.0
        %3853 = vmatpush.msra.mxu0 0.0
        %3854 = vmatpush.msra.mxu0 0.0
        %3855 = vmatpush.msra.mxu0 0.0
        %3856 = vmatpush.msra.mxu0 0.0
        %v3857 = vand.u32 %v3599, 4294901760
        %v3858 = vsub.f32 %v3599, %v3857
        %3859 = vmatpush.msra.mxu0 %v3858
        %v3860 = vand.u32 %v575, 4294901760
        %v3861 = vsub.f32 %v575, %v3860
        %3862 = vmatmul.f32.gmra.mxu0 %v3861
        %v3863 = vpop.f32.mrf.mxu0
        %v3864 = vadd.f32 %v3780, %v3863
        %v3865 = vand.u32 %v578, 4294901760
        %v3866 = vsub.f32 %v578, %v3865
        %3867 = vmatmul.f32.gmra.mxu0 %v3866
        %v3868 = vpop.f32.mrf.mxu0
        %v3869 = vadd.f32 %v3784, %v3868
        %v3870 = vand.u32 %v581, 4294901760
        %v3871 = vsub.f32 %v581, %v3870
        %3872 = vmatmul.f32.gmra.mxu0 %v3871
        %v3873 = vpop.f32.mrf.mxu0
        %v3874 = vadd.f32 %v3788, %v3873
        %v3875 = vand.u32 %v584, 4294901760
        %v3876 = vsub.f32 %v584, %v3875
        %3877 = vmatmul.f32.gmra.mxu0 %v3876
        %v3878 = vpop.f32.mrf.mxu0
        %v3879 = vadd.f32 %v3792, %v3878
        %v3880 = vand.u32 %v587, 4294901760
        %v3881 = vsub.f32 %v587, %v3880
        %3882 = vmatmul.f32.gmra.mxu0 %v3881
        %v3883 = vpop.f32.mrf.mxu0
        %v3884 = vadd.f32 %v3796, %v3883
        %v3885 = vand.u32 %v590, 4294901760
        %v3886 = vsub.f32 %v590, %v3885
        %3887 = vmatmul.f32.gmra.mxu0 %v3886
        %v3888 = vpop.f32.mrf.mxu0
        %v3889 = vadd.f32 %v3800, %v3888
        %v3890 = vand.u32 %v593, 4294901760
        %v3891 = vsub.f32 %v593, %v3890
        %3892 = vmatmul.f32.gmra.mxu0 %v3891
        %v3893 = vpop.f32.mrf.mxu0
        %v3894 = vadd.f32 %v3804, %v3893
        %v3895 = vand.u32 %v596, 4294901760
        %v3896 = vsub.f32 %v596, %v3895
        %3897 = vmatmul.f32.gmra.mxu0 %v3896
        %v3898 = vpop.f32.mrf.mxu0
        %v3899 = vadd.f32 %v3808, %v3898
        %v3900 = vand.u32 %v599, 4294901760
        %v3901 = vsub.f32 %v599, %v3900
        %3902 = vmatmul.f32.gmra.mxu0 %v3901
        %v3903 = vpop.f32.mrf.mxu0
        %v3904 = vadd.f32 %v3812, %v3903
        %v3905 = vand.u32 %v602, 4294901760
        %v3906 = vsub.f32 %v602, %v3905
        %3907 = vmatmul.f32.gmra.mxu0 %v3906
        %v3908 = vpop.f32.mrf.mxu0
        %v3909 = vadd.f32 %v3816, %v3908
        %v3910 = vand.u32 %v605, 4294901760
        %v3911 = vsub.f32 %v605, %v3910
        %3912 = vmatmul.f32.gmra.mxu0 %v3911
        %v3913 = vpop.f32.mrf.mxu0
        %v3914 = vadd.f32 %v3820, %v3913
        %v3915 = vand.u32 %v608, 4294901760
        %v3916 = vsub.f32 %v608, %v3915
        %3917 = vmatmul.f32.gmra.mxu0 %v3916
        %v3918 = vpop.f32.mrf.mxu0
        %v3919 = vadd.f32 %v3824, %v3918
        %v3920 = vand.u32 %v611, 4294901760
        %v3921 = vsub.f32 %v611, %v3920
        %3922 = vmatmul.f32.gmra.mxu0 %v3921
        %v3923 = vpop.f32.mrf.mxu0
        %v3924 = vadd.f32 %v3828, %v3923
        %v3925 = vand.u32 %v614, 4294901760
        %v3926 = vsub.f32 %v614, %v3925
        %3927 = vmatmul.f32.gmra.mxu0 %v3926
        %v3928 = vpop.f32.mrf.mxu0
        %v3929 = vadd.f32 %v3832, %v3928
        %v3930 = vand.u32 %v617, 4294901760
        %v3931 = vsub.f32 %v617, %v3930
        %3932 = vmatmul.f32.gmra.mxu0 %v3931
        %v3933 = vpop.f32.mrf.mxu0
        %v3934 = vadd.f32 %v3836, %v3933
        %v3935 = vand.u32 %v620, 4294901760
        %v3936 = vsub.f32 %v620, %v3935
        %3937 = vmatmul.f32.gmra.mxu0 %v3936
        %v3938 = vpop.f32.mrf.mxu0
        %v3939 = vadd.f32 %v3840, %v3938
        %3940 = vdwg.mxu0
        %3941 = vmatpush.msra.mxu0 0.0
        %3942 = vmatpush.msra.mxu0 0.0
        %3943 = vmatpush.msra.mxu0 0.0
        %3944 = vmatpush.msra.mxu0 0.0
        %3945 = vmatpush.msra.mxu0 0.0
        %3946 = vmatpush.msra.mxu0 0.0
        %3947 = vmatpush.msra.mxu0 0.0
        %3948 = vmatpush.msra.mxu0 0.0
        %3949 = vmatpush.msra.mxu0 0.0
        %3950 = vmatpush.msra.mxu0 0.0
        %3951 = vmatpush.msra.mxu0 0.0
        %3952 = vmatpush.msra.mxu0 0.0
        %3953 = vmatpush.msra.mxu0 0.0
        %3954 = vmatpush.msra.mxu0 0.0
        %3955 = vmatpush.msra.mxu0 0.0
        %v3956 = vand.u32 %v3599, 4294901760
        %3957 = vmatpush.msra.mxu0 %v3956
        %v3958 = vand.u32 %v575, 4294901760
        %v3959 = vsub.f32 %v575, %v3958
        %v3960 = vand.u32 %v3959, 4294901760
        %3961 = vmatmul.f32.gmra.mxu0 %v3960
        %v3962 = vpop.f32.mrf.mxu0
        %v3963 = vadd.f32 %v3864, %v3962
        %v3964 = vand.u32 %v578, 4294901760
        %v3965 = vsub.f32 %v578, %v3964
        %v3966 = vand.u32 %v3965, 4294901760
        %3967 = vmatmul.f32.gmra.mxu0 %v3966
        %v3968 = vpop.f32.mrf.mxu0
        %v3969 = vadd.f32 %v3869, %v3968
        %v3970 = vand.u32 %v581, 4294901760
        %v3971 = vsub.f32 %v581, %v3970
        %v3972 = vand.u32 %v3971, 4294901760
        %3973 = vmatmul.f32.gmra.mxu0 %v3972
        %v3974 = vpop.f32.mrf.mxu0
        %v3975 = vadd.f32 %v3874, %v3974
        %v3976 = vand.u32 %v584, 4294901760
        %v3977 = vsub.f32 %v584, %v3976
        %v3978 = vand.u32 %v3977, 4294901760
        %3979 = vmatmul.f32.gmra.mxu0 %v3978
        %v3980 = vpop.f32.mrf.mxu0
        %v3981 = vadd.f32 %v3879, %v3980
        %v3982 = vand.u32 %v587, 4294901760
        %v3983 = vsub.f32 %v587, %v3982
        %v3984 = vand.u32 %v3983, 4294901760
        %3985 = vmatmul.f32.gmra.mxu0 %v3984
        %v3986 = vpop.f32.mrf.mxu0
        %v3987 = vadd.f32 %v3884, %v3986
        %v3988 = vand.u32 %v590, 4294901760
        %v3989 = vsub.f32 %v590, %v3988
        %v3990 = vand.u32 %v3989, 4294901760
        %3991 = vmatmul.f32.gmra.mxu0 %v3990
        %v3992 = vpop.f32.mrf.mxu0
        %v3993 = vadd.f32 %v3889, %v3992
        %v3994 = vand.u32 %v593, 4294901760
        %v3995 = vsub.f32 %v593, %v3994
        %v3996 = vand.u32 %v3995, 4294901760
        %3997 = vmatmul.f32.gmra.mxu0 %v3996
        %v3998 = vpop.f32.mrf.mxu0
        %v3999 = vadd.f32 %v3894, %v3998
        %v4000 = vand.u32 %v596, 4294901760
        %v4001 = vsub.f32 %v596, %v4000
        %v4002 = vand.u32 %v4001, 4294901760
        %4003 = vmatmul.f32.gmra.mxu0 %v4002
        %v4004 = vpop.f32.mrf.mxu0
        %v4005 = vadd.f32 %v3899, %v4004
        %v4006 = vand.u32 %v599, 4294901760
        %v4007 = vsub.f32 %v599, %v4006
        %v4008 = vand.u32 %v4007, 4294901760
        %4009 = vmatmul.f32.gmra.mxu0 %v4008
        %v4010 = vpop.f32.mrf.mxu0
        %v4011 = vadd.f32 %v3904, %v4010
        %v4012 = vand.u32 %v602, 4294901760
        %v4013 = vsub.f32 %v602, %v4012
        %v4014 = vand.u32 %v4013, 4294901760
        %4015 = vmatmul.f32.gmra.mxu0 %v4014
        %v4016 = vpop.f32.mrf.mxu0
        %v4017 = vadd.f32 %v3909, %v4016
        %v4018 = vand.u32 %v605, 4294901760
        %v4019 = vsub.f32 %v605, %v4018
        %v4020 = vand.u32 %v4019, 4294901760
        %4021 = vmatmul.f32.gmra.mxu0 %v4020
        %v4022 = vpop.f32.mrf.mxu0
        %v4023 = vadd.f32 %v3914, %v4022
        %v4024 = vand.u32 %v608, 4294901760
        %v4025 = vsub.f32 %v608, %v4024
        %v4026 = vand.u32 %v4025, 4294901760
        %4027 = vmatmul.f32.gmra.mxu0 %v4026
        %v4028 = vpop.f32.mrf.mxu0
        %v4029 = vadd.f32 %v3919, %v4028
        %v4030 = vand.u32 %v611, 4294901760
        %v4031 = vsub.f32 %v611, %v4030
        %v4032 = vand.u32 %v4031, 4294901760
        %4033 = vmatmul.f32.gmra.mxu0 %v4032
        %v4034 = vpop.f32.mrf.mxu0
        %v4035 = vadd.f32 %v3924, %v4034
        %v4036 = vand.u32 %v614, 4294901760
        %v4037 = vsub.f32 %v614, %v4036
        %v4038 = vand.u32 %v4037, 4294901760
        %4039 = vmatmul.f32.gmra.mxu0 %v4038
        %v4040 = vpop.f32.mrf.mxu0
        %v4041 = vadd.f32 %v3929, %v4040
        %v4042 = vand.u32 %v617, 4294901760
        %v4043 = vsub.f32 %v617, %v4042
        %v4044 = vand.u32 %v4043, 4294901760
        %4045 = vmatmul.f32.gmra.mxu0 %v4044
        %v4046 = vpop.f32.mrf.mxu0
        %v4047 = vadd.f32 %v3934, %v4046
        %v4048 = vand.u32 %v620, 4294901760
        %v4049 = vsub.f32 %v620, %v4048
        %v4050 = vand.u32 %v4049, 4294901760
        %4051 = vmatmul.f32.gmra.mxu0 %v4050
        %v4052 = vpop.f32.mrf.mxu0
        %v4053 = vadd.f32 %v3939, %v4052
        %4054 = vdwg.mxu0
        %4055 = vmatpush.msra.mxu0 0.0
        %4056 = vmatpush.msra.mxu0 0.0
        %4057 = vmatpush.msra.mxu0 0.0
        %4058 = vmatpush.msra.mxu0 0.0
        %4059 = vmatpush.msra.mxu0 0.0
        %4060 = vmatpush.msra.mxu0 0.0
        %4061 = vmatpush.msra.mxu0 0.0
        %4062 = vmatpush.msra.mxu0 0.0
        %4063 = vmatpush.msra.mxu0 0.0
        %4064 = vmatpush.msra.mxu0 0.0
        %4065 = vmatpush.msra.mxu0 0.0
        %4066 = vmatpush.msra.mxu0 0.0
        %4067 = vmatpush.msra.mxu0 0.0
        %4068 = vmatpush.msra.mxu0 0.0
        %4069 = vmatpush.msra.mxu0 0.0
        %v4070 = vand.u32 %v3599, 4294901760
        %v4071 = vsub.f32 %v3599, %v4070
        %v4072 = vand.u32 %v4071, 4294901760
        %4073 = vmatpush.msra.mxu0 %v4072
        %v4074 = vand.u32 %v575, 4294901760
        %4075 = vmatmul.f32.gmra.mxu0 %v4074
        %v4076 = vpop.f32.mrf.mxu0
        %v4077 = vadd.f32 %v3963, %v4076
        %v4078 = vand.u32 %v578, 4294901760
        %4079 = vmatmul.f32.gmra.mxu0 %v4078
        %v4080 = vpop.f32.mrf.mxu0
        %v4081 = vadd.f32 %v3969, %v4080
        %v4082 = vand.u32 %v581, 4294901760
        %4083 = vmatmul.f32.gmra.mxu0 %v4082
        %v4084 = vpop.f32.mrf.mxu0
        %v4085 = vadd.f32 %v3975, %v4084
        %v4086 = vand.u32 %v584, 4294901760
        %4087 = vmatmul.f32.gmra.mxu0 %v4086
        %v4088 = vpop.f32.mrf.mxu0
        %v4089 = vadd.f32 %v3981, %v4088
        %v4090 = vand.u32 %v587, 4294901760
        %4091 = vmatmul.f32.gmra.mxu0 %v4090
        %v4092 = vpop.f32.mrf.mxu0
        %v4093 = vadd.f32 %v3987, %v4092
        %v4094 = vand.u32 %v590, 4294901760
        %4095 = vmatmul.f32.gmra.mxu0 %v4094
        %v4096 = vpop.f32.mrf.mxu0
        %v4097 = vadd.f32 %v3993, %v4096
        %v4098 = vand.u32 %v593, 4294901760
        %4099 = vmatmul.f32.gmra.mxu0 %v4098
        %v4100 = vpop.f32.mrf.mxu0
        %v4101 = vadd.f32 %v3999, %v4100
        %v4102 = vand.u32 %v596, 4294901760
        %4103 = vmatmul.f32.gmra.mxu0 %v4102
        %v4104 = vpop.f32.mrf.mxu0
        %v4105 = vadd.f32 %v4005, %v4104
        %v4106 = vand.u32 %v599, 4294901760
        %4107 = vmatmul.f32.gmra.mxu0 %v4106
        %v4108 = vpop.f32.mrf.mxu0
        %v4109 = vadd.f32 %v4011, %v4108
        %v4110 = vand.u32 %v602, 4294901760
        %4111 = vmatmul.f32.gmra.mxu0 %v4110
        %v4112 = vpop.f32.mrf.mxu0
        %v4113 = vadd.f32 %v4017, %v4112
        %v4114 = vand.u32 %v605, 4294901760
        %4115 = vmatmul.f32.gmra.mxu0 %v4114
        %v4116 = vpop.f32.mrf.mxu0
        %v4117 = vadd.f32 %v4023, %v4116
        %v4118 = vand.u32 %v608, 4294901760
        %4119 = vmatmul.f32.gmra.mxu0 %v4118
        %v4120 = vpop.f32.mrf.mxu0
        %v4121 = vadd.f32 %v4029, %v4120
        %v4122 = vand.u32 %v611, 4294901760
        %4123 = vmatmul.f32.gmra.mxu0 %v4122
        %v4124 = vpop.f32.mrf.mxu0
        %v4125 = vadd.f32 %v4035, %v4124
        %v4126 = vand.u32 %v614, 4294901760
        %4127 = vmatmul.f32.gmra.mxu0 %v4126
        %v4128 = vpop.f32.mrf.mxu0
        %v4129 = vadd.f32 %v4041, %v4128
        %v4130 = vand.u32 %v617, 4294901760
        %4131 = vmatmul.f32.gmra.mxu0 %v4130
        %v4132 = vpop.f32.mrf.mxu0
        %v4133 = vadd.f32 %v4047, %v4132
        %v4134 = vand.u32 %v620, 4294901760
        %4135 = vmatmul.f32.gmra.mxu0 %v4134
        %v4136 = vpop.f32.mrf.mxu0
        %v4137 = vadd.f32 %v4053, %v4136
        %4138 = vdwg.mxu0
        %4139 = vmatpush.msra.mxu0 0.0
        %4140 = vmatpush.msra.mxu0 0.0
        %4141 = vmatpush.msra.mxu0 0.0
        %4142 = vmatpush.msra.mxu0 0.0
        %4143 = vmatpush.msra.mxu0 0.0
        %4144 = vmatpush.msra.mxu0 0.0
        %4145 = vmatpush.msra.mxu0 0.0
        %4146 = vmatpush.msra.mxu0 0.0
        %4147 = vmatpush.msra.mxu0 0.0
        %4148 = vmatpush.msra.mxu0 0.0
        %4149 = vmatpush.msra.mxu0 0.0
        %4150 = vmatpush.msra.mxu0 0.0
        %4151 = vmatpush.msra.mxu0 0.0
        %4152 = vmatpush.msra.mxu0 0.0
        %4153 = vmatpush.msra.mxu0 0.0
        %v4154 = vand.u32 %v3599, 4294901760
        %4155 = vmatpush.msra.mxu0 %v4154
        %v4156 = vand.u32 %v575, 4294901760
        %4157 = vmatmul.f32.gmra.mxu0 %v4156
        %v4158 = vpop.f32.mrf.mxu0
        %v4159 = vadd.f32 %v4077, %v4158
        %v4160 = vand.u32 %v578, 4294901760
        %4161 = vmatmul.f32.gmra.mxu0 %v4160
        %v4162 = vpop.f32.mrf.mxu0
        %v4163 = vadd.f32 %v4081, %v4162
        %v4164 = vand.u32 %v581, 4294901760
        %4165 = vmatmul.f32.gmra.mxu0 %v4164
        %v4166 = vpop.f32.mrf.mxu0
        %v4167 = vadd.f32 %v4085, %v4166
        %v4168 = vand.u32 %v584, 4294901760
        %4169 = vmatmul.f32.gmra.mxu0 %v4168
        %v4170 = vpop.f32.mrf.mxu0
        %v4171 = vadd.f32 %v4089, %v4170
        %v4172 = vand.u32 %v587, 4294901760
        %4173 = vmatmul.f32.gmra.mxu0 %v4172
        %v4174 = vpop.f32.mrf.mxu0
        %v4175 = vadd.f32 %v4093, %v4174
        %v4176 = vand.u32 %v590, 4294901760
        %4177 = vmatmul.f32.gmra.mxu0 %v4176
        %v4178 = vpop.f32.mrf.mxu0
        %v4179 = vadd.f32 %v4097, %v4178
        %v4180 = vand.u32 %v593, 4294901760
        %4181 = vmatmul.f32.gmra.mxu0 %v4180
        %v4182 = vpop.f32.mrf.mxu0
        %v4183 = vadd.f32 %v4101, %v4182
        %v4184 = vand.u32 %v596, 4294901760
        %4185 = vmatmul.f32.gmra.mxu0 %v4184
        %v4186 = vpop.f32.mrf.mxu0
        %v4187 = vadd.f32 %v4105, %v4186
        %v4188 = vand.u32 %v599, 4294901760
        %4189 = vmatmul.f32.gmra.mxu0 %v4188
        %v4190 = vpop.f32.mrf.mxu0
        %v4191 = vadd.f32 %v4109, %v4190
        %v4192 = vand.u32 %v602, 4294901760
        %4193 = vmatmul.f32.gmra.mxu0 %v4192
        %v4194 = vpop.f32.mrf.mxu0
        %v4195 = vadd.f32 %v4113, %v4194
        %v4196 = vand.u32 %v605, 4294901760
        %4197 = vmatmul.f32.gmra.mxu0 %v4196
        %v4198 = vpop.f32.mrf.mxu0
        %v4199 = vadd.f32 %v4117, %v4198
        %v4200 = vand.u32 %v608, 4294901760
        %4201 = vmatmul.f32.gmra.mxu0 %v4200
        %v4202 = vpop.f32.mrf.mxu0
        %v4203 = vadd.f32 %v4121, %v4202
        %v4204 = vand.u32 %v611, 4294901760
        %4205 = vmatmul.f32.gmra.mxu0 %v4204
        %v4206 = vpop.f32.mrf.mxu0
        %v4207 = vadd.f32 %v4125, %v4206
        %v4208 = vand.u32 %v614, 4294901760
        %4209 = vmatmul.f32.gmra.mxu0 %v4208
        %v4210 = vpop.f32.mrf.mxu0
        %v4211 = vadd.f32 %v4129, %v4210
        %v4212 = vand.u32 %v617, 4294901760
        %4213 = vmatmul.f32.gmra.mxu0 %v4212
        %v4214 = vpop.f32.mrf.mxu0
        %v4215 = vadd.f32 %v4133, %v4214
        %v4216 = vand.u32 %v620, 4294901760
        %4217 = vmatmul.f32.gmra.mxu0 %v4216
        %v4218 = vpop.f32.mrf.mxu0
        %v4219 = vadd.f32 %v4137, %v4218
        %4220 = vdwg.mxu0
        %4221 = vmatpush.msra.mxu0 0.0
        %4222 = vmatpush.msra.mxu0 0.0
        %4223 = vmatpush.msra.mxu0 0.0
        %4224 = vmatpush.msra.mxu0 0.0
        %4225 = vmatpush.msra.mxu0 0.0
        %4226 = vmatpush.msra.mxu0 0.0
        %4227 = vmatpush.msra.mxu0 0.0
        %4228 = vmatpush.msra.mxu0 0.0
        %4229 = vmatpush.msra.mxu0 0.0
        %4230 = vmatpush.msra.mxu0 0.0
        %4231 = vmatpush.msra.mxu0 0.0
        %4232 = vmatpush.msra.mxu0 0.0
        %4233 = vmatpush.msra.mxu0 0.0
        %4234 = vmatpush.msra.mxu0 0.0
        %4235 = vmatpush.msra.mxu0 0.0
        %v4236 = vand.u32 %v3602, 4294901760
        %4237 = vmatpush.msra.mxu0 %v4236
        %v4238 = vand.u32 %v575, 4294901760
        %v4239 = vsub.f32 %v575, %v4238
        %v4240 = vand.u32 %v4239, 4294901760
        %v4241 = vsub.f32 %v4239, %v4240
        %v4242 = vand.u32 %v4241, 4294901760
        %4243 = vmatmul.f32.gmra.mxu0 %v4242
        %v4244 = vpop.f32.mrf.mxu0
        %v4245 = vadd.f32 0.0, %v4244
        %v4246 = vand.u32 %v578, 4294901760
        %v4247 = vsub.f32 %v578, %v4246
        %v4248 = vand.u32 %v4247, 4294901760
        %v4249 = vsub.f32 %v4247, %v4248
        %v4250 = vand.u32 %v4249, 4294901760
        %4251 = vmatmul.f32.gmra.mxu0 %v4250
        %v4252 = vpop.f32.mrf.mxu0
        %v4253 = vadd.f32 0.0, %v4252
        %v4254 = vand.u32 %v581, 4294901760
        %v4255 = vsub.f32 %v581, %v4254
        %v4256 = vand.u32 %v4255, 4294901760
        %v4257 = vsub.f32 %v4255, %v4256
        %v4258 = vand.u32 %v4257, 4294901760
        %4259 = vmatmul.f32.gmra.mxu0 %v4258
        %v4260 = vpop.f32.mrf.mxu0
        %v4261 = vadd.f32 0.0, %v4260
        %v4262 = vand.u32 %v584, 4294901760
        %v4263 = vsub.f32 %v584, %v4262
        %v4264 = vand.u32 %v4263, 4294901760
        %v4265 = vsub.f32 %v4263, %v4264
        %v4266 = vand.u32 %v4265, 4294901760
        %4267 = vmatmul.f32.gmra.mxu0 %v4266
        %v4268 = vpop.f32.mrf.mxu0
        %v4269 = vadd.f32 0.0, %v4268
        %v4270 = vand.u32 %v587, 4294901760
        %v4271 = vsub.f32 %v587, %v4270
        %v4272 = vand.u32 %v4271, 4294901760
        %v4273 = vsub.f32 %v4271, %v4272
        %v4274 = vand.u32 %v4273, 4294901760
        %4275 = vmatmul.f32.gmra.mxu0 %v4274
        %v4276 = vpop.f32.mrf.mxu0
        %v4277 = vadd.f32 0.0, %v4276
        %v4278 = vand.u32 %v590, 4294901760
        %v4279 = vsub.f32 %v590, %v4278
        %v4280 = vand.u32 %v4279, 4294901760
        %v4281 = vsub.f32 %v4279, %v4280
        %v4282 = vand.u32 %v4281, 4294901760
        %4283 = vmatmul.f32.gmra.mxu0 %v4282
        %v4284 = vpop.f32.mrf.mxu0
        %v4285 = vadd.f32 0.0, %v4284
        %v4286 = vand.u32 %v593, 4294901760
        %v4287 = vsub.f32 %v593, %v4286
        %v4288 = vand.u32 %v4287, 4294901760
        %v4289 = vsub.f32 %v4287, %v4288
        %v4290 = vand.u32 %v4289, 4294901760
        %4291 = vmatmul.f32.gmra.mxu0 %v4290
        %v4292 = vpop.f32.mrf.mxu0
        %v4293 = vadd.f32 0.0, %v4292
        %v4294 = vand.u32 %v596, 4294901760
        %v4295 = vsub.f32 %v596, %v4294
        %v4296 = vand.u32 %v4295, 4294901760
        %v4297 = vsub.f32 %v4295, %v4296
        %v4298 = vand.u32 %v4297, 4294901760
        %4299 = vmatmul.f32.gmra.mxu0 %v4298
        %v4300 = vpop.f32.mrf.mxu0
        %v4301 = vadd.f32 0.0, %v4300
        %v4302 = vand.u32 %v599, 4294901760
        %v4303 = vsub.f32 %v599, %v4302
        %v4304 = vand.u32 %v4303, 4294901760
        %v4305 = vsub.f32 %v4303, %v4304
        %v4306 = vand.u32 %v4305, 4294901760
        %4307 = vmatmul.f32.gmra.mxu0 %v4306
        %v4308 = vpop.f32.mrf.mxu0
        %v4309 = vadd.f32 0.0, %v4308
        %v4310 = vand.u32 %v602, 4294901760
        %v4311 = vsub.f32 %v602, %v4310
        %v4312 = vand.u32 %v4311, 4294901760
        %v4313 = vsub.f32 %v4311, %v4312
        %v4314 = vand.u32 %v4313, 4294901760
        %4315 = vmatmul.f32.gmra.mxu0 %v4314
        %v4316 = vpop.f32.mrf.mxu0
        %v4317 = vadd.f32 0.0, %v4316
        %v4318 = vand.u32 %v605, 4294901760
        %v4319 = vsub.f32 %v605, %v4318
        %v4320 = vand.u32 %v4319, 4294901760
        %v4321 = vsub.f32 %v4319, %v4320
        %v4322 = vand.u32 %v4321, 4294901760
        %4323 = vmatmul.f32.gmra.mxu0 %v4322
        %v4324 = vpop.f32.mrf.mxu0
        %v4325 = vadd.f32 0.0, %v4324
        %v4326 = vand.u32 %v608, 4294901760
        %v4327 = vsub.f32 %v608, %v4326
        %v4328 = vand.u32 %v4327, 4294901760
        %v4329 = vsub.f32 %v4327, %v4328
        %v4330 = vand.u32 %v4329, 4294901760
        %4331 = vmatmul.f32.gmra.mxu0 %v4330
        %v4332 = vpop.f32.mrf.mxu0
        %v4333 = vadd.f32 0.0, %v4332
        %v4334 = vand.u32 %v611, 4294901760
        %v4335 = vsub.f32 %v611, %v4334
        %v4336 = vand.u32 %v4335, 4294901760
        %v4337 = vsub.f32 %v4335, %v4336
        %v4338 = vand.u32 %v4337, 4294901760
        %4339 = vmatmul.f32.gmra.mxu0 %v4338
        %v4340 = vpop.f32.mrf.mxu0
        %v4341 = vadd.f32 0.0, %v4340
        %v4342 = vand.u32 %v614, 4294901760
        %v4343 = vsub.f32 %v614, %v4342
        %v4344 = vand.u32 %v4343, 4294901760
        %v4345 = vsub.f32 %v4343, %v4344
        %v4346 = vand.u32 %v4345, 4294901760
        %4347 = vmatmul.f32.gmra.mxu0 %v4346
        %v4348 = vpop.f32.mrf.mxu0
        %v4349 = vadd.f32 0.0, %v4348
        %v4350 = vand.u32 %v617, 4294901760
        %v4351 = vsub.f32 %v617, %v4350
        %v4352 = vand.u32 %v4351, 4294901760
        %v4353 = vsub.f32 %v4351, %v4352
        %v4354 = vand.u32 %v4353, 4294901760
        %4355 = vmatmul.f32.gmra.mxu0 %v4354
        %v4356 = vpop.f32.mrf.mxu0
        %v4357 = vadd.f32 0.0, %v4356
        %v4358 = vand.u32 %v620, 4294901760
        %v4359 = vsub.f32 %v620, %v4358
        %v4360 = vand.u32 %v4359, 4294901760
        %v4361 = vsub.f32 %v4359, %v4360
        %v4362 = vand.u32 %v4361, 4294901760
        %4363 = vmatmul.f32.gmra.mxu0 %v4362
        %v4364 = vpop.f32.mrf.mxu0
        %v4365 = vadd.f32 0.0, %v4364
        %4366 = vdwg.mxu0
        %4367 = vmatpush.msra.mxu0 0.0
        %4368 = vmatpush.msra.mxu0 0.0
        %4369 = vmatpush.msra.mxu0 0.0
        %4370 = vmatpush.msra.mxu0 0.0
        %4371 = vmatpush.msra.mxu0 0.0
        %4372 = vmatpush.msra.mxu0 0.0
        %4373 = vmatpush.msra.mxu0 0.0
        %4374 = vmatpush.msra.mxu0 0.0
        %4375 = vmatpush.msra.mxu0 0.0
        %4376 = vmatpush.msra.mxu0 0.0
        %4377 = vmatpush.msra.mxu0 0.0
        %4378 = vmatpush.msra.mxu0 0.0
        %4379 = vmatpush.msra.mxu0 0.0
        %4380 = vmatpush.msra.mxu0 0.0
        %4381 = vmatpush.msra.mxu0 0.0
        %v4382 = vand.u32 %v3602, 4294901760
        %v4383 = vsub.f32 %v3602, %v4382
        %v4384 = vand.u32 %v4383, 4294901760
        %v4385 = vsub.f32 %v4383, %v4384
        %v4386 = vand.u32 %v4385, 4294901760
        %4387 = vmatpush.msra.mxu0 %v4386
        %v4388 = vand.u32 %v575, 4294901760
        %4389 = vmatmul.f32.gmra.mxu0 %v4388
        %v4390 = vpop.f32.mrf.mxu0
        %v4391 = vadd.f32 %v4245, %v4390
        %v4392 = vand.u32 %v578, 4294901760
        %4393 = vmatmul.f32.gmra.mxu0 %v4392
        %v4394 = vpop.f32.mrf.mxu0
        %v4395 = vadd.f32 %v4253, %v4394
        %v4396 = vand.u32 %v581, 4294901760
        %4397 = vmatmul.f32.gmra.mxu0 %v4396
        %v4398 = vpop.f32.mrf.mxu0
        %v4399 = vadd.f32 %v4261, %v4398
        %v4400 = vand.u32 %v584, 4294901760
        %4401 = vmatmul.f32.gmra.mxu0 %v4400
        %v4402 = vpop.f32.mrf.mxu0
        %v4403 = vadd.f32 %v4269, %v4402
        %v4404 = vand.u32 %v587, 4294901760
        %4405 = vmatmul.f32.gmra.mxu0 %v4404
        %v4406 = vpop.f32.mrf.mxu0
        %v4407 = vadd.f32 %v4277, %v4406
        %v4408 = vand.u32 %v590, 4294901760
        %4409 = vmatmul.f32.gmra.mxu0 %v4408
        %v4410 = vpop.f32.mrf.mxu0
        %v4411 = vadd.f32 %v4285, %v4410
        %v4412 = vand.u32 %v593, 4294901760
        %4413 = vmatmul.f32.gmra.mxu0 %v4412
        %v4414 = vpop.f32.mrf.mxu0
        %v4415 = vadd.f32 %v4293, %v4414
        %v4416 = vand.u32 %v596, 4294901760
        %4417 = vmatmul.f32.gmra.mxu0 %v4416
        %v4418 = vpop.f32.mrf.mxu0
        %v4419 = vadd.f32 %v4301, %v4418
        %v4420 = vand.u32 %v599, 4294901760
        %4421 = vmatmul.f32.gmra.mxu0 %v4420
        %v4422 = vpop.f32.mrf.mxu0
        %v4423 = vadd.f32 %v4309, %v4422
        %v4424 = vand.u32 %v602, 4294901760
        %4425 = vmatmul.f32.gmra.mxu0 %v4424
        %v4426 = vpop.f32.mrf.mxu0
        %v4427 = vadd.f32 %v4317, %v4426
        %v4428 = vand.u32 %v605, 4294901760
        %4429 = vmatmul.f32.gmra.mxu0 %v4428
        %v4430 = vpop.f32.mrf.mxu0
        %v4431 = vadd.f32 %v4325, %v4430
        %v4432 = vand.u32 %v608, 4294901760
        %4433 = vmatmul.f32.gmra.mxu0 %v4432
        %v4434 = vpop.f32.mrf.mxu0
        %v4435 = vadd.f32 %v4333, %v4434
        %v4436 = vand.u32 %v611, 4294901760
        %4437 = vmatmul.f32.gmra.mxu0 %v4436
        %v4438 = vpop.f32.mrf.mxu0
        %v4439 = vadd.f32 %v4341, %v4438
        %v4440 = vand.u32 %v614, 4294901760
        %4441 = vmatmul.f32.gmra.mxu0 %v4440
        %v4442 = vpop.f32.mrf.mxu0
        %v4443 = vadd.f32 %v4349, %v4442
        %v4444 = vand.u32 %v617, 4294901760
        %4445 = vmatmul.f32.gmra.mxu0 %v4444
        %v4446 = vpop.f32.mrf.mxu0
        %v4447 = vadd.f32 %v4357, %v4446
        %v4448 = vand.u32 %v620, 4294901760
        %4449 = vmatmul.f32.gmra.mxu0 %v4448
        %v4450 = vpop.f32.mrf.mxu0
        %v4451 = vadd.f32 %v4365, %v4450
        %4452 = vdwg.mxu0
        %4453 = vmatpush.msra.mxu0 0.0
        %4454 = vmatpush.msra.mxu0 0.0
        %4455 = vmatpush.msra.mxu0 0.0
        %4456 = vmatpush.msra.mxu0 0.0
        %4457 = vmatpush.msra.mxu0 0.0
        %4458 = vmatpush.msra.mxu0 0.0
        %4459 = vmatpush.msra.mxu0 0.0
        %4460 = vmatpush.msra.mxu0 0.0
        %4461 = vmatpush.msra.mxu0 0.0
        %4462 = vmatpush.msra.mxu0 0.0
        %4463 = vmatpush.msra.mxu0 0.0
        %4464 = vmatpush.msra.mxu0 0.0
        %4465 = vmatpush.msra.mxu0 0.0
        %4466 = vmatpush.msra.mxu0 0.0
        %4467 = vmatpush.msra.mxu0 0.0
        %v4468 = vand.u32 %v3602, 4294901760
        %v4469 = vsub.f32 %v3602, %v4468
        %4470 = vmatpush.msra.mxu0 %v4469
        %v4471 = vand.u32 %v575, 4294901760
        %v4472 = vsub.f32 %v575, %v4471
        %4473 = vmatmul.f32.gmra.mxu0 %v4472
        %v4474 = vpop.f32.mrf.mxu0
        %v4475 = vadd.f32 %v4391, %v4474
        %v4476 = vand.u32 %v578, 4294901760
        %v4477 = vsub.f32 %v578, %v4476
        %4478 = vmatmul.f32.gmra.mxu0 %v4477
        %v4479 = vpop.f32.mrf.mxu0
        %v4480 = vadd.f32 %v4395, %v4479
        %v4481 = vand.u32 %v581, 4294901760
        %v4482 = vsub.f32 %v581, %v4481
        %4483 = vmatmul.f32.gmra.mxu0 %v4482
        %v4484 = vpop.f32.mrf.mxu0
        %v4485 = vadd.f32 %v4399, %v4484
        %v4486 = vand.u32 %v584, 4294901760
        %v4487 = vsub.f32 %v584, %v4486
        %4488 = vmatmul.f32.gmra.mxu0 %v4487
        %v4489 = vpop.f32.mrf.mxu0
        %v4490 = vadd.f32 %v4403, %v4489
        %v4491 = vand.u32 %v587, 4294901760
        %v4492 = vsub.f32 %v587, %v4491
        %4493 = vmatmul.f32.gmra.mxu0 %v4492
        %v4494 = vpop.f32.mrf.mxu0
        %v4495 = vadd.f32 %v4407, %v4494
        %v4496 = vand.u32 %v590, 4294901760
        %v4497 = vsub.f32 %v590, %v4496
        %4498 = vmatmul.f32.gmra.mxu0 %v4497
        %v4499 = vpop.f32.mrf.mxu0
        %v4500 = vadd.f32 %v4411, %v4499
        %v4501 = vand.u32 %v593, 4294901760
        %v4502 = vsub.f32 %v593, %v4501
        %4503 = vmatmul.f32.gmra.mxu0 %v4502
        %v4504 = vpop.f32.mrf.mxu0
        %v4505 = vadd.f32 %v4415, %v4504
        %v4506 = vand.u32 %v596, 4294901760
        %v4507 = vsub.f32 %v596, %v4506
        %4508 = vmatmul.f32.gmra.mxu0 %v4507
        %v4509 = vpop.f32.mrf.mxu0
        %v4510 = vadd.f32 %v4419, %v4509
        %v4511 = vand.u32 %v599, 4294901760
        %v4512 = vsub.f32 %v599, %v4511
        %4513 = vmatmul.f32.gmra.mxu0 %v4512
        %v4514 = vpop.f32.mrf.mxu0
        %v4515 = vadd.f32 %v4423, %v4514
        %v4516 = vand.u32 %v602, 4294901760
        %v4517 = vsub.f32 %v602, %v4516
        %4518 = vmatmul.f32.gmra.mxu0 %v4517
        %v4519 = vpop.f32.mrf.mxu0
        %v4520 = vadd.f32 %v4427, %v4519
        %v4521 = vand.u32 %v605, 4294901760
        %v4522 = vsub.f32 %v605, %v4521
        %4523 = vmatmul.f32.gmra.mxu0 %v4522
        %v4524 = vpop.f32.mrf.mxu0
        %v4525 = vadd.f32 %v4431, %v4524
        %v4526 = vand.u32 %v608, 4294901760
        %v4527 = vsub.f32 %v608, %v4526
        %4528 = vmatmul.f32.gmra.mxu0 %v4527
        %v4529 = vpop.f32.mrf.mxu0
        %v4530 = vadd.f32 %v4435, %v4529
        %v4531 = vand.u32 %v611, 4294901760
        %v4532 = vsub.f32 %v611, %v4531
        %4533 = vmatmul.f32.gmra.mxu0 %v4532
        %v4534 = vpop.f32.mrf.mxu0
        %v4535 = vadd.f32 %v4439, %v4534
        %v4536 = vand.u32 %v614, 4294901760
        %v4537 = vsub.f32 %v614, %v4536
        %4538 = vmatmul.f32.gmra.mxu0 %v4537
        %v4539 = vpop.f32.mrf.mxu0
        %v4540 = vadd.f32 %v4443, %v4539
        %v4541 = vand.u32 %v617, 4294901760
        %v4542 = vsub.f32 %v617, %v4541
        %4543 = vmatmul.f32.gmra.mxu0 %v4542
        %v4544 = vpop.f32.mrf.mxu0
        %v4545 = vadd.f32 %v4447, %v4544
        %v4546 = vand.u32 %v620, 4294901760
        %v4547 = vsub.f32 %v620, %v4546
        %4548 = vmatmul.f32.gmra.mxu0 %v4547
        %v4549 = vpop.f32.mrf.mxu0
        %v4550 = vadd.f32 %v4451, %v4549
        %4551 = vdwg.mxu0
        %4552 = vmatpush.msra.mxu0 0.0
        %4553 = vmatpush.msra.mxu0 0.0
        %4554 = vmatpush.msra.mxu0 0.0
        %4555 = vmatpush.msra.mxu0 0.0
        %4556 = vmatpush.msra.mxu0 0.0
        %4557 = vmatpush.msra.mxu0 0.0
        %4558 = vmatpush.msra.mxu0 0.0
        %4559 = vmatpush.msra.mxu0 0.0
        %4560 = vmatpush.msra.mxu0 0.0
        %4561 = vmatpush.msra.mxu0 0.0
        %4562 = vmatpush.msra.mxu0 0.0
        %4563 = vmatpush.msra.mxu0 0.0
        %4564 = vmatpush.msra.mxu0 0.0
        %4565 = vmatpush.msra.mxu0 0.0
        %4566 = vmatpush.msra.mxu0 0.0
        %v4567 = vand.u32 %v3602, 4294901760
        %4568 = vmatpush.msra.mxu0 %v4567
        %v4569 = vand.u32 %v575, 4294901760
        %v4570 = vsub.f32 %v575, %v4569
        %v4571 = vand.u32 %v4570, 4294901760
        %4572 = vmatmul.f32.gmra.mxu0 %v4571
        %v4573 = vpop.f32.mrf.mxu0
        %v4574 = vadd.f32 %v4475, %v4573
        %v4575 = vand.u32 %v578, 4294901760
        %v4576 = vsub.f32 %v578, %v4575
        %v4577 = vand.u32 %v4576, 4294901760
        %4578 = vmatmul.f32.gmra.mxu0 %v4577
        %v4579 = vpop.f32.mrf.mxu0
        %v4580 = vadd.f32 %v4480, %v4579
        %v4581 = vand.u32 %v581, 4294901760
        %v4582 = vsub.f32 %v581, %v4581
        %v4583 = vand.u32 %v4582, 4294901760
        %4584 = vmatmul.f32.gmra.mxu0 %v4583
        %v4585 = vpop.f32.mrf.mxu0
        %v4586 = vadd.f32 %v4485, %v4585
        %v4587 = vand.u32 %v584, 4294901760
        %v4588 = vsub.f32 %v584, %v4587
        %v4589 = vand.u32 %v4588, 4294901760
        %4590 = vmatmul.f32.gmra.mxu0 %v4589
        %v4591 = vpop.f32.mrf.mxu0
        %v4592 = vadd.f32 %v4490, %v4591
        %v4593 = vand.u32 %v587, 4294901760
        %v4594 = vsub.f32 %v587, %v4593
        %v4595 = vand.u32 %v4594, 4294901760
        %4596 = vmatmul.f32.gmra.mxu0 %v4595
        %v4597 = vpop.f32.mrf.mxu0
        %v4598 = vadd.f32 %v4495, %v4597
        %v4599 = vand.u32 %v590, 4294901760
        %v4600 = vsub.f32 %v590, %v4599
        %v4601 = vand.u32 %v4600, 4294901760
        %4602 = vmatmul.f32.gmra.mxu0 %v4601
        %v4603 = vpop.f32.mrf.mxu0
        %v4604 = vadd.f32 %v4500, %v4603
        %v4605 = vand.u32 %v593, 4294901760
        %v4606 = vsub.f32 %v593, %v4605
        %v4607 = vand.u32 %v4606, 4294901760
        %4608 = vmatmul.f32.gmra.mxu0 %v4607
        %v4609 = vpop.f32.mrf.mxu0
        %v4610 = vadd.f32 %v4505, %v4609
        %v4611 = vand.u32 %v596, 4294901760
        %v4612 = vsub.f32 %v596, %v4611
        %v4613 = vand.u32 %v4612, 4294901760
        %4614 = vmatmul.f32.gmra.mxu0 %v4613
        %v4615 = vpop.f32.mrf.mxu0
        %v4616 = vadd.f32 %v4510, %v4615
        %v4617 = vand.u32 %v599, 4294901760
        %v4618 = vsub.f32 %v599, %v4617
        %v4619 = vand.u32 %v4618, 4294901760
        %4620 = vmatmul.f32.gmra.mxu0 %v4619
        %v4621 = vpop.f32.mrf.mxu0
        %v4622 = vadd.f32 %v4515, %v4621
        %v4623 = vand.u32 %v602, 4294901760
        %v4624 = vsub.f32 %v602, %v4623
        %v4625 = vand.u32 %v4624, 4294901760
        %4626 = vmatmul.f32.gmra.mxu0 %v4625
        %v4627 = vpop.f32.mrf.mxu0
        %v4628 = vadd.f32 %v4520, %v4627
        %v4629 = vand.u32 %v605, 4294901760
        %v4630 = vsub.f32 %v605, %v4629
        %v4631 = vand.u32 %v4630, 4294901760
        %4632 = vmatmul.f32.gmra.mxu0 %v4631
        %v4633 = vpop.f32.mrf.mxu0
        %v4634 = vadd.f32 %v4525, %v4633
        %v4635 = vand.u32 %v608, 4294901760
        %v4636 = vsub.f32 %v608, %v4635
        %v4637 = vand.u32 %v4636, 4294901760
        %4638 = vmatmul.f32.gmra.mxu0 %v4637
        %v4639 = vpop.f32.mrf.mxu0
        %v4640 = vadd.f32 %v4530, %v4639
        %v4641 = vand.u32 %v611, 4294901760
        %v4642 = vsub.f32 %v611, %v4641
        %v4643 = vand.u32 %v4642, 4294901760
        %4644 = vmatmul.f32.gmra.mxu0 %v4643
        %v4645 = vpop.f32.mrf.mxu0
        %v4646 = vadd.f32 %v4535, %v4645
        %v4647 = vand.u32 %v614, 4294901760
        %v4648 = vsub.f32 %v614, %v4647
        %v4649 = vand.u32 %v4648, 4294901760
        %4650 = vmatmul.f32.gmra.mxu0 %v4649
        %v4651 = vpop.f32.mrf.mxu0
        %v4652 = vadd.f32 %v4540, %v4651
        %v4653 = vand.u32 %v617, 4294901760
        %v4654 = vsub.f32 %v617, %v4653
        %v4655 = vand.u32 %v4654, 4294901760
        %4656 = vmatmul.f32.gmra.mxu0 %v4655
        %v4657 = vpop.f32.mrf.mxu0
        %v4658 = vadd.f32 %v4545, %v4657
        %v4659 = vand.u32 %v620, 4294901760
        %v4660 = vsub.f32 %v620, %v4659
        %v4661 = vand.u32 %v4660, 4294901760
        %4662 = vmatmul.f32.gmra.mxu0 %v4661
        %v4663 = vpop.f32.mrf.mxu0
        %v4664 = vadd.f32 %v4550, %v4663
        %4665 = vdwg.mxu0
        %4666 = vmatpush.msra.mxu0 0.0
        %4667 = vmatpush.msra.mxu0 0.0
        %4668 = vmatpush.msra.mxu0 0.0
        %4669 = vmatpush.msra.mxu0 0.0
        %4670 = vmatpush.msra.mxu0 0.0
        %4671 = vmatpush.msra.mxu0 0.0
        %4672 = vmatpush.msra.mxu0 0.0
        %4673 = vmatpush.msra.mxu0 0.0
        %4674 = vmatpush.msra.mxu0 0.0
        %4675 = vmatpush.msra.mxu0 0.0
        %4676 = vmatpush.msra.mxu0 0.0
        %4677 = vmatpush.msra.mxu0 0.0
        %4678 = vmatpush.msra.mxu0 0.0
        %4679 = vmatpush.msra.mxu0 0.0
        %4680 = vmatpush.msra.mxu0 0.0
        %v4681 = vand.u32 %v3602, 4294901760
        %v4682 = vsub.f32 %v3602, %v4681
        %v4683 = vand.u32 %v4682, 4294901760
        %4684 = vmatpush.msra.mxu0 %v4683
        %v4685 = vand.u32 %v575, 4294901760
        %4686 = vmatmul.f32.gmra.mxu0 %v4685
        %v4687 = vpop.f32.mrf.mxu0
        %v4688 = vadd.f32 %v4574, %v4687
        %v4689 = vand.u32 %v578, 4294901760
        %4690 = vmatmul.f32.gmra.mxu0 %v4689
        %v4691 = vpop.f32.mrf.mxu0
        %v4692 = vadd.f32 %v4580, %v4691
        %v4693 = vand.u32 %v581, 4294901760
        %4694 = vmatmul.f32.gmra.mxu0 %v4693
        %v4695 = vpop.f32.mrf.mxu0
        %v4696 = vadd.f32 %v4586, %v4695
        %v4697 = vand.u32 %v584, 4294901760
        %4698 = vmatmul.f32.gmra.mxu0 %v4697
        %v4699 = vpop.f32.mrf.mxu0
        %v4700 = vadd.f32 %v4592, %v4699
        %v4701 = vand.u32 %v587, 4294901760
        %4702 = vmatmul.f32.gmra.mxu0 %v4701
        %v4703 = vpop.f32.mrf.mxu0
        %v4704 = vadd.f32 %v4598, %v4703
        %v4705 = vand.u32 %v590, 4294901760
        %4706 = vmatmul.f32.gmra.mxu0 %v4705
        %v4707 = vpop.f32.mrf.mxu0
        %v4708 = vadd.f32 %v4604, %v4707
        %v4709 = vand.u32 %v593, 4294901760
        %4710 = vmatmul.f32.gmra.mxu0 %v4709
        %v4711 = vpop.f32.mrf.mxu0
        %v4712 = vadd.f32 %v4610, %v4711
        %v4713 = vand.u32 %v596, 4294901760
        %4714 = vmatmul.f32.gmra.mxu0 %v4713
        %v4715 = vpop.f32.mrf.mxu0
        %v4716 = vadd.f32 %v4616, %v4715
        %v4717 = vand.u32 %v599, 4294901760
        %4718 = vmatmul.f32.gmra.mxu0 %v4717
        %v4719 = vpop.f32.mrf.mxu0
        %v4720 = vadd.f32 %v4622, %v4719
        %v4721 = vand.u32 %v602, 4294901760
        %4722 = vmatmul.f32.gmra.mxu0 %v4721
        %v4723 = vpop.f32.mrf.mxu0
        %v4724 = vadd.f32 %v4628, %v4723
        %v4725 = vand.u32 %v605, 4294901760
        %4726 = vmatmul.f32.gmra.mxu0 %v4725
        %v4727 = vpop.f32.mrf.mxu0
        %v4728 = vadd.f32 %v4634, %v4727
        %v4729 = vand.u32 %v608, 4294901760
        %4730 = vmatmul.f32.gmra.mxu0 %v4729
        %v4731 = vpop.f32.mrf.mxu0
        %v4732 = vadd.f32 %v4640, %v4731
        %v4733 = vand.u32 %v611, 4294901760
        %4734 = vmatmul.f32.gmra.mxu0 %v4733
        %v4735 = vpop.f32.mrf.mxu0
        %v4736 = vadd.f32 %v4646, %v4735
        %v4737 = vand.u32 %v614, 4294901760
        %4738 = vmatmul.f32.gmra.mxu0 %v4737
        %v4739 = vpop.f32.mrf.mxu0
        %v4740 = vadd.f32 %v4652, %v4739
        %v4741 = vand.u32 %v617, 4294901760
        %4742 = vmatmul.f32.gmra.mxu0 %v4741
        %v4743 = vpop.f32.mrf.mxu0
        %v4744 = vadd.f32 %v4658, %v4743
        %v4745 = vand.u32 %v620, 4294901760
        %4746 = vmatmul.f32.gmra.mxu0 %v4745
        %v4747 = vpop.f32.mrf.mxu0
        %v4748 = vadd.f32 %v4664, %v4747
        %4749 = vdwg.mxu0
        %4750 = vmatpush.msra.mxu0 0.0
        %4751 = vmatpush.msra.mxu0 0.0
        %4752 = vmatpush.msra.mxu0 0.0
        %4753 = vmatpush.msra.mxu0 0.0
        %4754 = vmatpush.msra.mxu0 0.0
        %4755 = vmatpush.msra.mxu0 0.0
        %4756 = vmatpush.msra.mxu0 0.0
        %4757 = vmatpush.msra.mxu0 0.0
        %4758 = vmatpush.msra.mxu0 0.0
        %4759 = vmatpush.msra.mxu0 0.0
        %4760 = vmatpush.msra.mxu0 0.0
        %4761 = vmatpush.msra.mxu0 0.0
        %4762 = vmatpush.msra.mxu0 0.0
        %4763 = vmatpush.msra.mxu0 0.0
        %4764 = vmatpush.msra.mxu0 0.0
        %v4765 = vand.u32 %v3602, 4294901760
        %4766 = vmatpush.msra.mxu0 %v4765
        %v4767 = vand.u32 %v575, 4294901760
        %4768 = vmatmul.f32.gmra.mxu0 %v4767
        %v4769 = vpop.f32.mrf.mxu0
        %v4770 = vadd.f32 %v4688, %v4769
        %v4771 = vand.u32 %v578, 4294901760
        %4772 = vmatmul.f32.gmra.mxu0 %v4771
        %v4773 = vpop.f32.mrf.mxu0
        %v4774 = vadd.f32 %v4692, %v4773
        %v4775 = vand.u32 %v581, 4294901760
        %4776 = vmatmul.f32.gmra.mxu0 %v4775
        %v4777 = vpop.f32.mrf.mxu0
        %v4778 = vadd.f32 %v4696, %v4777
        %v4779 = vand.u32 %v584, 4294901760
        %4780 = vmatmul.f32.gmra.mxu0 %v4779
        %v4781 = vpop.f32.mrf.mxu0
        %v4782 = vadd.f32 %v4700, %v4781
        %v4783 = vand.u32 %v587, 4294901760
        %4784 = vmatmul.f32.gmra.mxu0 %v4783
        %v4785 = vpop.f32.mrf.mxu0
        %v4786 = vadd.f32 %v4704, %v4785
        %v4787 = vand.u32 %v590, 4294901760
        %4788 = vmatmul.f32.gmra.mxu0 %v4787
        %v4789 = vpop.f32.mrf.mxu0
        %v4790 = vadd.f32 %v4708, %v4789
        %v4791 = vand.u32 %v593, 4294901760
        %4792 = vmatmul.f32.gmra.mxu0 %v4791
        %v4793 = vpop.f32.mrf.mxu0
        %v4794 = vadd.f32 %v4712, %v4793
        %v4795 = vand.u32 %v596, 4294901760
        %4796 = vmatmul.f32.gmra.mxu0 %v4795
        %v4797 = vpop.f32.mrf.mxu0
        %v4798 = vadd.f32 %v4716, %v4797
        %v4799 = vand.u32 %v599, 4294901760
        %4800 = vmatmul.f32.gmra.mxu0 %v4799
        %v4801 = vpop.f32.mrf.mxu0
        %v4802 = vadd.f32 %v4720, %v4801
        %v4803 = vand.u32 %v602, 4294901760
        %4804 = vmatmul.f32.gmra.mxu0 %v4803
        %v4805 = vpop.f32.mrf.mxu0
        %v4806 = vadd.f32 %v4724, %v4805
        %v4807 = vand.u32 %v605, 4294901760
        %4808 = vmatmul.f32.gmra.mxu0 %v4807
        %v4809 = vpop.f32.mrf.mxu0
        %v4810 = vadd.f32 %v4728, %v4809
        %v4811 = vand.u32 %v608, 4294901760
        %4812 = vmatmul.f32.gmra.mxu0 %v4811
        %v4813 = vpop.f32.mrf.mxu0
        %v4814 = vadd.f32 %v4732, %v4813
        %v4815 = vand.u32 %v611, 4294901760
        %4816 = vmatmul.f32.gmra.mxu0 %v4815
        %v4817 = vpop.f32.mrf.mxu0
        %v4818 = vadd.f32 %v4736, %v4817
        %v4819 = vand.u32 %v614, 4294901760
        %4820 = vmatmul.f32.gmra.mxu0 %v4819
        %v4821 = vpop.f32.mrf.mxu0
        %v4822 = vadd.f32 %v4740, %v4821
        %v4823 = vand.u32 %v617, 4294901760
        %4824 = vmatmul.f32.gmra.mxu0 %v4823
        %v4825 = vpop.f32.mrf.mxu0
        %v4826 = vadd.f32 %v4744, %v4825
        %v4827 = vand.u32 %v620, 4294901760
        %4828 = vmatmul.f32.gmra.mxu0 %v4827
        %v4829 = vpop.f32.mrf.mxu0
        %v4830 = vadd.f32 %v4748, %v4829
        %4831 = vdwg.mxu0
        %4832 = vmatpush.msra.mxu0 0.0
        %4833 = vmatpush.msra.mxu0 0.0
        %4834 = vmatpush.msra.mxu0 0.0
        %4835 = vmatpush.msra.mxu0 0.0
        %4836 = vmatpush.msra.mxu0 0.0
        %4837 = vmatpush.msra.mxu0 0.0
        %4838 = vmatpush.msra.mxu0 0.0
        %4839 = vmatpush.msra.mxu0 0.0
        %4840 = vmatpush.msra.mxu0 0.0
        %4841 = vmatpush.msra.mxu0 0.0
        %4842 = vmatpush.msra.mxu0 0.0
        %4843 = vmatpush.msra.mxu0 0.0
        %4844 = vmatpush.msra.mxu0 0.0
        %4845 = vmatpush.msra.mxu0 0.0
        %4846 = vmatpush.msra.mxu0 0.0
        %v4847 = vand.u32 %v3605, 4294901760
        %4848 = vmatpush.msra.mxu0 %v4847
        %v4849 = vand.u32 %v575, 4294901760
        %v4850 = vsub.f32 %v575, %v4849
        %v4851 = vand.u32 %v4850, 4294901760
        %v4852 = vsub.f32 %v4850, %v4851
        %v4853 = vand.u32 %v4852, 4294901760
        %4854 = vmatmul.f32.gmra.mxu0 %v4853
        %v4855 = vpop.f32.mrf.mxu0
        %v4856 = vadd.f32 0.0, %v4855
        %v4857 = vand.u32 %v578, 4294901760
        %v4858 = vsub.f32 %v578, %v4857
        %v4859 = vand.u32 %v4858, 4294901760
        %v4860 = vsub.f32 %v4858, %v4859
        %v4861 = vand.u32 %v4860, 4294901760
        %4862 = vmatmul.f32.gmra.mxu0 %v4861
        %v4863 = vpop.f32.mrf.mxu0
        %v4864 = vadd.f32 0.0, %v4863
        %v4865 = vand.u32 %v581, 4294901760
        %v4866 = vsub.f32 %v581, %v4865
        %v4867 = vand.u32 %v4866, 4294901760
        %v4868 = vsub.f32 %v4866, %v4867
        %v4869 = vand.u32 %v4868, 4294901760
        %4870 = vmatmul.f32.gmra.mxu0 %v4869
        %v4871 = vpop.f32.mrf.mxu0
        %v4872 = vadd.f32 0.0, %v4871
        %v4873 = vand.u32 %v584, 4294901760
        %v4874 = vsub.f32 %v584, %v4873
        %v4875 = vand.u32 %v4874, 4294901760
        %v4876 = vsub.f32 %v4874, %v4875
        %v4877 = vand.u32 %v4876, 4294901760
        %4878 = vmatmul.f32.gmra.mxu0 %v4877
        %v4879 = vpop.f32.mrf.mxu0
        %v4880 = vadd.f32 0.0, %v4879
        %v4881 = vand.u32 %v587, 4294901760
        %v4882 = vsub.f32 %v587, %v4881
        %v4883 = vand.u32 %v4882, 4294901760
        %v4884 = vsub.f32 %v4882, %v4883
        %v4885 = vand.u32 %v4884, 4294901760
        %4886 = vmatmul.f32.gmra.mxu0 %v4885
        %v4887 = vpop.f32.mrf.mxu0
        %v4888 = vadd.f32 0.0, %v4887
        %v4889 = vand.u32 %v590, 4294901760
        %v4890 = vsub.f32 %v590, %v4889
        %v4891 = vand.u32 %v4890, 4294901760
        %v4892 = vsub.f32 %v4890, %v4891
        %v4893 = vand.u32 %v4892, 4294901760
        %4894 = vmatmul.f32.gmra.mxu0 %v4893
        %v4895 = vpop.f32.mrf.mxu0
        %v4896 = vadd.f32 0.0, %v4895
        %v4897 = vand.u32 %v593, 4294901760
        %v4898 = vsub.f32 %v593, %v4897
        %v4899 = vand.u32 %v4898, 4294901760
        %v4900 = vsub.f32 %v4898, %v4899
        %v4901 = vand.u32 %v4900, 4294901760
        %4902 = vmatmul.f32.gmra.mxu0 %v4901
        %v4903 = vpop.f32.mrf.mxu0
        %v4904 = vadd.f32 0.0, %v4903
        %v4905 = vand.u32 %v596, 4294901760
        %v4906 = vsub.f32 %v596, %v4905
        %v4907 = vand.u32 %v4906, 4294901760
        %v4908 = vsub.f32 %v4906, %v4907
        %v4909 = vand.u32 %v4908, 4294901760
        %4910 = vmatmul.f32.gmra.mxu0 %v4909
        %v4911 = vpop.f32.mrf.mxu0
        %v4912 = vadd.f32 0.0, %v4911
        %v4913 = vand.u32 %v599, 4294901760
        %v4914 = vsub.f32 %v599, %v4913
        %v4915 = vand.u32 %v4914, 4294901760
        %v4916 = vsub.f32 %v4914, %v4915
        %v4917 = vand.u32 %v4916, 4294901760
        %4918 = vmatmul.f32.gmra.mxu0 %v4917
        %v4919 = vpop.f32.mrf.mxu0
        %v4920 = vadd.f32 0.0, %v4919
        %v4921 = vand.u32 %v602, 4294901760
        %v4922 = vsub.f32 %v602, %v4921
        %v4923 = vand.u32 %v4922, 4294901760
        %v4924 = vsub.f32 %v4922, %v4923
        %v4925 = vand.u32 %v4924, 4294901760
        %4926 = vmatmul.f32.gmra.mxu0 %v4925
        %v4927 = vpop.f32.mrf.mxu0
        %v4928 = vadd.f32 0.0, %v4927
        %v4929 = vand.u32 %v605, 4294901760
        %v4930 = vsub.f32 %v605, %v4929
        %v4931 = vand.u32 %v4930, 4294901760
        %v4932 = vsub.f32 %v4930, %v4931
        %v4933 = vand.u32 %v4932, 4294901760
        %4934 = vmatmul.f32.gmra.mxu0 %v4933
        %v4935 = vpop.f32.mrf.mxu0
        %v4936 = vadd.f32 0.0, %v4935
        %v4937 = vand.u32 %v608, 4294901760
        %v4938 = vsub.f32 %v608, %v4937
        %v4939 = vand.u32 %v4938, 4294901760
        %v4940 = vsub.f32 %v4938, %v4939
        %v4941 = vand.u32 %v4940, 4294901760
        %4942 = vmatmul.f32.gmra.mxu0 %v4941
        %v4943 = vpop.f32.mrf.mxu0
        %v4944 = vadd.f32 0.0, %v4943
        %v4945 = vand.u32 %v611, 4294901760
        %v4946 = vsub.f32 %v611, %v4945
        %v4947 = vand.u32 %v4946, 4294901760
        %v4948 = vsub.f32 %v4946, %v4947
        %v4949 = vand.u32 %v4948, 4294901760
        %4950 = vmatmul.f32.gmra.mxu0 %v4949
        %v4951 = vpop.f32.mrf.mxu0
        %v4952 = vadd.f32 0.0, %v4951
        %v4953 = vand.u32 %v614, 4294901760
        %v4954 = vsub.f32 %v614, %v4953
        %v4955 = vand.u32 %v4954, 4294901760
        %v4956 = vsub.f32 %v4954, %v4955
        %v4957 = vand.u32 %v4956, 4294901760
        %4958 = vmatmul.f32.gmra.mxu0 %v4957
        %v4959 = vpop.f32.mrf.mxu0
        %v4960 = vadd.f32 0.0, %v4959
        %v4961 = vand.u32 %v617, 4294901760
        %v4962 = vsub.f32 %v617, %v4961
        %v4963 = vand.u32 %v4962, 4294901760
        %v4964 = vsub.f32 %v4962, %v4963
        %v4965 = vand.u32 %v4964, 4294901760
        %4966 = vmatmul.f32.gmra.mxu0 %v4965
        %v4967 = vpop.f32.mrf.mxu0
        %v4968 = vadd.f32 0.0, %v4967
        %v4969 = vand.u32 %v620, 4294901760
        %v4970 = vsub.f32 %v620, %v4969
        %v4971 = vand.u32 %v4970, 4294901760
        %v4972 = vsub.f32 %v4970, %v4971
        %v4973 = vand.u32 %v4972, 4294901760
        %4974 = vmatmul.f32.gmra.mxu0 %v4973
        %v4975 = vpop.f32.mrf.mxu0
        %v4976 = vadd.f32 0.0, %v4975
        %4977 = vdwg.mxu0
        %4978 = vmatpush.msra.mxu0 0.0
        %4979 = vmatpush.msra.mxu0 0.0
        %4980 = vmatpush.msra.mxu0 0.0
        %4981 = vmatpush.msra.mxu0 0.0
        %4982 = vmatpush.msra.mxu0 0.0
        %4983 = vmatpush.msra.mxu0 0.0
        %4984 = vmatpush.msra.mxu0 0.0
        %4985 = vmatpush.msra.mxu0 0.0
        %4986 = vmatpush.msra.mxu0 0.0
        %4987 = vmatpush.msra.mxu0 0.0
        %4988 = vmatpush.msra.mxu0 0.0
        %4989 = vmatpush.msra.mxu0 0.0
        %4990 = vmatpush.msra.mxu0 0.0
        %4991 = vmatpush.msra.mxu0 0.0
        %4992 = vmatpush.msra.mxu0 0.0
        %v4993 = vand.u32 %v3605, 4294901760
        %v4994 = vsub.f32 %v3605, %v4993
        %v4995 = vand.u32 %v4994, 4294901760
        %v4996 = vsub.f32 %v4994, %v4995
        %v4997 = vand.u32 %v4996, 4294901760
        %4998 = vmatpush.msra.mxu0 %v4997
        %v4999 = vand.u32 %v575, 4294901760
        %5000 = vmatmul.f32.gmra.mxu0 %v4999
        %v5001 = vpop.f32.mrf.mxu0
        %v5002 = vadd.f32 %v4856, %v5001
        %v5003 = vand.u32 %v578, 4294901760
        %5004 = vmatmul.f32.gmra.mxu0 %v5003
        %v5005 = vpop.f32.mrf.mxu0
        %v5006 = vadd.f32 %v4864, %v5005
        %v5007 = vand.u32 %v581, 4294901760
        %5008 = vmatmul.f32.gmra.mxu0 %v5007
        %v5009 = vpop.f32.mrf.mxu0
        %v5010 = vadd.f32 %v4872, %v5009
        %v5011 = vand.u32 %v584, 4294901760
        %5012 = vmatmul.f32.gmra.mxu0 %v5011
        %v5013 = vpop.f32.mrf.mxu0
        %v5014 = vadd.f32 %v4880, %v5013
        %v5015 = vand.u32 %v587, 4294901760
        %5016 = vmatmul.f32.gmra.mxu0 %v5015
        %v5017 = vpop.f32.mrf.mxu0
        %v5018 = vadd.f32 %v4888, %v5017
        %v5019 = vand.u32 %v590, 4294901760
        %5020 = vmatmul.f32.gmra.mxu0 %v5019
        %v5021 = vpop.f32.mrf.mxu0
        %v5022 = vadd.f32 %v4896, %v5021
        %v5023 = vand.u32 %v593, 4294901760
        %5024 = vmatmul.f32.gmra.mxu0 %v5023
        %v5025 = vpop.f32.mrf.mxu0
        %v5026 = vadd.f32 %v4904, %v5025
        %v5027 = vand.u32 %v596, 4294901760
        %5028 = vmatmul.f32.gmra.mxu0 %v5027
        %v5029 = vpop.f32.mrf.mxu0
        %v5030 = vadd.f32 %v4912, %v5029
        %v5031 = vand.u32 %v599, 4294901760
        %5032 = vmatmul.f32.gmra.mxu0 %v5031
        %v5033 = vpop.f32.mrf.mxu0
        %v5034 = vadd.f32 %v4920, %v5033
        %v5035 = vand.u32 %v602, 4294901760
        %5036 = vmatmul.f32.gmra.mxu0 %v5035
        %v5037 = vpop.f32.mrf.mxu0
        %v5038 = vadd.f32 %v4928, %v5037
        %v5039 = vand.u32 %v605, 4294901760
        %5040 = vmatmul.f32.gmra.mxu0 %v5039
        %v5041 = vpop.f32.mrf.mxu0
        %v5042 = vadd.f32 %v4936, %v5041
        %v5043 = vand.u32 %v608, 4294901760
        %5044 = vmatmul.f32.gmra.mxu0 %v5043
        %v5045 = vpop.f32.mrf.mxu0
        %v5046 = vadd.f32 %v4944, %v5045
        %v5047 = vand.u32 %v611, 4294901760
        %5048 = vmatmul.f32.gmra.mxu0 %v5047
        %v5049 = vpop.f32.mrf.mxu0
        %v5050 = vadd.f32 %v4952, %v5049
        %v5051 = vand.u32 %v614, 4294901760
        %5052 = vmatmul.f32.gmra.mxu0 %v5051
        %v5053 = vpop.f32.mrf.mxu0
        %v5054 = vadd.f32 %v4960, %v5053
        %v5055 = vand.u32 %v617, 4294901760
        %5056 = vmatmul.f32.gmra.mxu0 %v5055
        %v5057 = vpop.f32.mrf.mxu0
        %v5058 = vadd.f32 %v4968, %v5057
        %v5059 = vand.u32 %v620, 4294901760
        %5060 = vmatmul.f32.gmra.mxu0 %v5059
        %v5061 = vpop.f32.mrf.mxu0
        %v5062 = vadd.f32 %v4976, %v5061
        %5063 = vdwg.mxu0
        %5064 = vmatpush.msra.mxu0 0.0
        %5065 = vmatpush.msra.mxu0 0.0
        %5066 = vmatpush.msra.mxu0 0.0
        %5067 = vmatpush.msra.mxu0 0.0
        %5068 = vmatpush.msra.mxu0 0.0
        %5069 = vmatpush.msra.mxu0 0.0
        %5070 = vmatpush.msra.mxu0 0.0
        %5071 = vmatpush.msra.mxu0 0.0
        %5072 = vmatpush.msra.mxu0 0.0
        %5073 = vmatpush.msra.mxu0 0.0
        %5074 = vmatpush.msra.mxu0 0.0
        %5075 = vmatpush.msra.mxu0 0.0
        %5076 = vmatpush.msra.mxu0 0.0
        %5077 = vmatpush.msra.mxu0 0.0
        %5078 = vmatpush.msra.mxu0 0.0
        %v5079 = vand.u32 %v3605, 4294901760
        %v5080 = vsub.f32 %v3605, %v5079
        %5081 = vmatpush.msra.mxu0 %v5080
        %v5082 = vand.u32 %v575, 4294901760
        %v5083 = vsub.f32 %v575, %v5082
        %5084 = vmatmul.f32.gmra.mxu0 %v5083
        %v5085 = vpop.f32.mrf.mxu0
        %v5086 = vadd.f32 %v5002, %v5085
        %v5087 = vand.u32 %v578, 4294901760
        %v5088 = vsub.f32 %v578, %v5087
        %5089 = vmatmul.f32.gmra.mxu0 %v5088
        %v5090 = vpop.f32.mrf.mxu0
        %v5091 = vadd.f32 %v5006, %v5090
        %v5092 = vand.u32 %v581, 4294901760
        %v5093 = vsub.f32 %v581, %v5092
        %5094 = vmatmul.f32.gmra.mxu0 %v5093
        %v5095 = vpop.f32.mrf.mxu0
        %v5096 = vadd.f32 %v5010, %v5095
        %v5097 = vand.u32 %v584, 4294901760
        %v5098 = vsub.f32 %v584, %v5097
        %5099 = vmatmul.f32.gmra.mxu0 %v5098
        %v5100 = vpop.f32.mrf.mxu0
        %v5101 = vadd.f32 %v5014, %v5100
        %v5102 = vand.u32 %v587, 4294901760
        %v5103 = vsub.f32 %v587, %v5102
        %5104 = vmatmul.f32.gmra.mxu0 %v5103
        %v5105 = vpop.f32.mrf.mxu0
        %v5106 = vadd.f32 %v5018, %v5105
        %v5107 = vand.u32 %v590, 4294901760
        %v5108 = vsub.f32 %v590, %v5107
        %5109 = vmatmul.f32.gmra.mxu0 %v5108
        %v5110 = vpop.f32.mrf.mxu0
        %v5111 = vadd.f32 %v5022, %v5110
        %v5112 = vand.u32 %v593, 4294901760
        %v5113 = vsub.f32 %v593, %v5112
        %5114 = vmatmul.f32.gmra.mxu0 %v5113
        %v5115 = vpop.f32.mrf.mxu0
        %v5116 = vadd.f32 %v5026, %v5115
        %v5117 = vand.u32 %v596, 4294901760
        %v5118 = vsub.f32 %v596, %v5117
        %5119 = vmatmul.f32.gmra.mxu0 %v5118
        %v5120 = vpop.f32.mrf.mxu0
        %v5121 = vadd.f32 %v5030, %v5120
        %v5122 = vand.u32 %v599, 4294901760
        %v5123 = vsub.f32 %v599, %v5122
        %5124 = vmatmul.f32.gmra.mxu0 %v5123
        %v5125 = vpop.f32.mrf.mxu0
        %v5126 = vadd.f32 %v5034, %v5125
        %v5127 = vand.u32 %v602, 4294901760
        %v5128 = vsub.f32 %v602, %v5127
        %5129 = vmatmul.f32.gmra.mxu0 %v5128
        %v5130 = vpop.f32.mrf.mxu0
        %v5131 = vadd.f32 %v5038, %v5130
        %v5132 = vand.u32 %v605, 4294901760
        %v5133 = vsub.f32 %v605, %v5132
        %5134 = vmatmul.f32.gmra.mxu0 %v5133
        %v5135 = vpop.f32.mrf.mxu0
        %v5136 = vadd.f32 %v5042, %v5135
        %v5137 = vand.u32 %v608, 4294901760
        %v5138 = vsub.f32 %v608, %v5137
        %5139 = vmatmul.f32.gmra.mxu0 %v5138
        %v5140 = vpop.f32.mrf.mxu0
        %v5141 = vadd.f32 %v5046, %v5140
        %v5142 = vand.u32 %v611, 4294901760
        %v5143 = vsub.f32 %v611, %v5142
        %5144 = vmatmul.f32.gmra.mxu0 %v5143
        %v5145 = vpop.f32.mrf.mxu0
        %v5146 = vadd.f32 %v5050, %v5145
        %v5147 = vand.u32 %v614, 4294901760
        %v5148 = vsub.f32 %v614, %v5147
        %5149 = vmatmul.f32.gmra.mxu0 %v5148
        %v5150 = vpop.f32.mrf.mxu0
        %v5151 = vadd.f32 %v5054, %v5150
        %v5152 = vand.u32 %v617, 4294901760
        %v5153 = vsub.f32 %v617, %v5152
        %5154 = vmatmul.f32.gmra.mxu0 %v5153
        %v5155 = vpop.f32.mrf.mxu0
        %v5156 = vadd.f32 %v5058, %v5155
        %v5157 = vand.u32 %v620, 4294901760
        %v5158 = vsub.f32 %v620, %v5157
        %5159 = vmatmul.f32.gmra.mxu0 %v5158
        %v5160 = vpop.f32.mrf.mxu0
        %v5161 = vadd.f32 %v5062, %v5160
        %5162 = vdwg.mxu0
        %5163 = vmatpush.msra.mxu0 0.0
        %5164 = vmatpush.msra.mxu0 0.0
        %5165 = vmatpush.msra.mxu0 0.0
        %5166 = vmatpush.msra.mxu0 0.0
        %5167 = vmatpush.msra.mxu0 0.0
        %5168 = vmatpush.msra.mxu0 0.0
        %5169 = vmatpush.msra.mxu0 0.0
        %5170 = vmatpush.msra.mxu0 0.0
        %5171 = vmatpush.msra.mxu0 0.0
        %5172 = vmatpush.msra.mxu0 0.0
        %5173 = vmatpush.msra.mxu0 0.0
        %5174 = vmatpush.msra.mxu0 0.0
        %5175 = vmatpush.msra.mxu0 0.0
        %5176 = vmatpush.msra.mxu0 0.0
        %5177 = vmatpush.msra.mxu0 0.0
        %v5178 = vand.u32 %v3605, 4294901760
        %5179 = vmatpush.msra.mxu0 %v5178
        %v5180 = vand.u32 %v575, 4294901760
        %v5181 = vsub.f32 %v575, %v5180
        %v5182 = vand.u32 %v5181, 4294901760
        %5183 = vmatmul.f32.gmra.mxu0 %v5182
        %v5184 = vpop.f32.mrf.mxu0
        %v5185 = vadd.f32 %v5086, %v5184
        %v5186 = vand.u32 %v578, 4294901760
        %v5187 = vsub.f32 %v578, %v5186
        %v5188 = vand.u32 %v5187, 4294901760
        %5189 = vmatmul.f32.gmra.mxu0 %v5188
        %v5190 = vpop.f32.mrf.mxu0
        %v5191 = vadd.f32 %v5091, %v5190
        %v5192 = vand.u32 %v581, 4294901760
        %v5193 = vsub.f32 %v581, %v5192
        %v5194 = vand.u32 %v5193, 4294901760
        %5195 = vmatmul.f32.gmra.mxu0 %v5194
        %v5196 = vpop.f32.mrf.mxu0
        %v5197 = vadd.f32 %v5096, %v5196
        %v5198 = vand.u32 %v584, 4294901760
        %v5199 = vsub.f32 %v584, %v5198
        %v5200 = vand.u32 %v5199, 4294901760
        %5201 = vmatmul.f32.gmra.mxu0 %v5200
        %v5202 = vpop.f32.mrf.mxu0
        %v5203 = vadd.f32 %v5101, %v5202
        %v5204 = vand.u32 %v587, 4294901760
        %v5205 = vsub.f32 %v587, %v5204
        %v5206 = vand.u32 %v5205, 4294901760
        %5207 = vmatmul.f32.gmra.mxu0 %v5206
        %v5208 = vpop.f32.mrf.mxu0
        %v5209 = vadd.f32 %v5106, %v5208
        %v5210 = vand.u32 %v590, 4294901760
        %v5211 = vsub.f32 %v590, %v5210
        %v5212 = vand.u32 %v5211, 4294901760
        %5213 = vmatmul.f32.gmra.mxu0 %v5212
        %v5214 = vpop.f32.mrf.mxu0
        %v5215 = vadd.f32 %v5111, %v5214
        %v5216 = vand.u32 %v593, 4294901760
        %v5217 = vsub.f32 %v593, %v5216
        %v5218 = vand.u32 %v5217, 4294901760
        %5219 = vmatmul.f32.gmra.mxu0 %v5218
        %v5220 = vpop.f32.mrf.mxu0
        %v5221 = vadd.f32 %v5116, %v5220
        %v5222 = vand.u32 %v596, 4294901760
        %v5223 = vsub.f32 %v596, %v5222
        %v5224 = vand.u32 %v5223, 4294901760
        %5225 = vmatmul.f32.gmra.mxu0 %v5224
        %v5226 = vpop.f32.mrf.mxu0
        %v5227 = vadd.f32 %v5121, %v5226
        %v5228 = vand.u32 %v599, 4294901760
        %v5229 = vsub.f32 %v599, %v5228
        %v5230 = vand.u32 %v5229, 4294901760
        %5231 = vmatmul.f32.gmra.mxu0 %v5230
        %v5232 = vpop.f32.mrf.mxu0
        %v5233 = vadd.f32 %v5126, %v5232
        %v5234 = vand.u32 %v602, 4294901760
        %v5235 = vsub.f32 %v602, %v5234
        %v5236 = vand.u32 %v5235, 4294901760
        %5237 = vmatmul.f32.gmra.mxu0 %v5236
        %v5238 = vpop.f32.mrf.mxu0
        %v5239 = vadd.f32 %v5131, %v5238
        %v5240 = vand.u32 %v605, 4294901760
        %v5241 = vsub.f32 %v605, %v5240
        %v5242 = vand.u32 %v5241, 4294901760
        %5243 = vmatmul.f32.gmra.mxu0 %v5242
        %v5244 = vpop.f32.mrf.mxu0
        %v5245 = vadd.f32 %v5136, %v5244
        %v5246 = vand.u32 %v608, 4294901760
        %v5247 = vsub.f32 %v608, %v5246
        %v5248 = vand.u32 %v5247, 4294901760
        %5249 = vmatmul.f32.gmra.mxu0 %v5248
        %v5250 = vpop.f32.mrf.mxu0
        %v5251 = vadd.f32 %v5141, %v5250
        %v5252 = vand.u32 %v611, 4294901760
        %v5253 = vsub.f32 %v611, %v5252
        %v5254 = vand.u32 %v5253, 4294901760
        %5255 = vmatmul.f32.gmra.mxu0 %v5254
        %v5256 = vpop.f32.mrf.mxu0
        %v5257 = vadd.f32 %v5146, %v5256
        %v5258 = vand.u32 %v614, 4294901760
        %v5259 = vsub.f32 %v614, %v5258
        %v5260 = vand.u32 %v5259, 4294901760
        %5261 = vmatmul.f32.gmra.mxu0 %v5260
        %v5262 = vpop.f32.mrf.mxu0
        %v5263 = vadd.f32 %v5151, %v5262
        %v5264 = vand.u32 %v617, 4294901760
        %v5265 = vsub.f32 %v617, %v5264
        %v5266 = vand.u32 %v5265, 4294901760
        %5267 = vmatmul.f32.gmra.mxu0 %v5266
        %v5268 = vpop.f32.mrf.mxu0
        %v5269 = vadd.f32 %v5156, %v5268
        %v5270 = vand.u32 %v620, 4294901760
        %v5271 = vsub.f32 %v620, %v5270
        %v5272 = vand.u32 %v5271, 4294901760
        %5273 = vmatmul.f32.gmra.mxu0 %v5272
        %v5274 = vpop.f32.mrf.mxu0
        %v5275 = vadd.f32 %v5161, %v5274
        %5276 = vdwg.mxu0
        %5277 = vmatpush.msra.mxu0 0.0
        %5278 = vmatpush.msra.mxu0 0.0
        %5279 = vmatpush.msra.mxu0 0.0
        %5280 = vmatpush.msra.mxu0 0.0
        %5281 = vmatpush.msra.mxu0 0.0
        %5282 = vmatpush.msra.mxu0 0.0
        %5283 = vmatpush.msra.mxu0 0.0
        %5284 = vmatpush.msra.mxu0 0.0
        %5285 = vmatpush.msra.mxu0 0.0
        %5286 = vmatpush.msra.mxu0 0.0
        %5287 = vmatpush.msra.mxu0 0.0
        %5288 = vmatpush.msra.mxu0 0.0
        %5289 = vmatpush.msra.mxu0 0.0
        %5290 = vmatpush.msra.mxu0 0.0
        %5291 = vmatpush.msra.mxu0 0.0
        %v5292 = vand.u32 %v3605, 4294901760
        %v5293 = vsub.f32 %v3605, %v5292
        %v5294 = vand.u32 %v5293, 4294901760
        %5295 = vmatpush.msra.mxu0 %v5294
        %v5296 = vand.u32 %v575, 4294901760
        %5297 = vmatmul.f32.gmra.mxu0 %v5296
        %v5298 = vpop.f32.mrf.mxu0
        %v5299 = vadd.f32 %v5185, %v5298
        %v5300 = vand.u32 %v578, 4294901760
        %5301 = vmatmul.f32.gmra.mxu0 %v5300
        %v5302 = vpop.f32.mrf.mxu0
        %v5303 = vadd.f32 %v5191, %v5302
        %v5304 = vand.u32 %v581, 4294901760
        %5305 = vmatmul.f32.gmra.mxu0 %v5304
        %v5306 = vpop.f32.mrf.mxu0
        %v5307 = vadd.f32 %v5197, %v5306
        %v5308 = vand.u32 %v584, 4294901760
        %5309 = vmatmul.f32.gmra.mxu0 %v5308
        %v5310 = vpop.f32.mrf.mxu0
        %v5311 = vadd.f32 %v5203, %v5310
        %v5312 = vand.u32 %v587, 4294901760
        %5313 = vmatmul.f32.gmra.mxu0 %v5312
        %v5314 = vpop.f32.mrf.mxu0
        %v5315 = vadd.f32 %v5209, %v5314
        %v5316 = vand.u32 %v590, 4294901760
        %5317 = vmatmul.f32.gmra.mxu0 %v5316
        %v5318 = vpop.f32.mrf.mxu0
        %v5319 = vadd.f32 %v5215, %v5318
        %v5320 = vand.u32 %v593, 4294901760
        %5321 = vmatmul.f32.gmra.mxu0 %v5320
        %v5322 = vpop.f32.mrf.mxu0
        %v5323 = vadd.f32 %v5221, %v5322
        %v5324 = vand.u32 %v596, 4294901760
        %5325 = vmatmul.f32.gmra.mxu0 %v5324
        %v5326 = vpop.f32.mrf.mxu0
        %v5327 = vadd.f32 %v5227, %v5326
        %v5328 = vand.u32 %v599, 4294901760
        %5329 = vmatmul.f32.gmra.mxu0 %v5328
        %v5330 = vpop.f32.mrf.mxu0
        %v5331 = vadd.f32 %v5233, %v5330
        %v5332 = vand.u32 %v602, 4294901760
        %5333 = vmatmul.f32.gmra.mxu0 %v5332
        %v5334 = vpop.f32.mrf.mxu0
        %v5335 = vadd.f32 %v5239, %v5334
        %v5336 = vand.u32 %v605, 4294901760
        %5337 = vmatmul.f32.gmra.mxu0 %v5336
        %v5338 = vpop.f32.mrf.mxu0
        %v5339 = vadd.f32 %v5245, %v5338
        %v5340 = vand.u32 %v608, 4294901760
        %5341 = vmatmul.f32.gmra.mxu0 %v5340
        %v5342 = vpop.f32.mrf.mxu0
        %v5343 = vadd.f32 %v5251, %v5342
        %v5344 = vand.u32 %v611, 4294901760
        %5345 = vmatmul.f32.gmra.mxu0 %v5344
        %v5346 = vpop.f32.mrf.mxu0
        %v5347 = vadd.f32 %v5257, %v5346
        %v5348 = vand.u32 %v614, 4294901760
        %5349 = vmatmul.f32.gmra.mxu0 %v5348
        %v5350 = vpop.f32.mrf.mxu0
        %v5351 = vadd.f32 %v5263, %v5350
        %v5352 = vand.u32 %v617, 4294901760
        %5353 = vmatmul.f32.gmra.mxu0 %v5352
        %v5354 = vpop.f32.mrf.mxu0
        %v5355 = vadd.f32 %v5269, %v5354
        %v5356 = vand.u32 %v620, 4294901760
        %5357 = vmatmul.f32.gmra.mxu0 %v5356
        %v5358 = vpop.f32.mrf.mxu0
        %v5359 = vadd.f32 %v5275, %v5358
        %5360 = vdwg.mxu0
        %5361 = vmatpush.msra.mxu0 0.0
        %5362 = vmatpush.msra.mxu0 0.0
        %5363 = vmatpush.msra.mxu0 0.0
        %5364 = vmatpush.msra.mxu0 0.0
        %5365 = vmatpush.msra.mxu0 0.0
        %5366 = vmatpush.msra.mxu0 0.0
        %5367 = vmatpush.msra.mxu0 0.0
        %5368 = vmatpush.msra.mxu0 0.0
        %5369 = vmatpush.msra.mxu0 0.0
        %5370 = vmatpush.msra.mxu0 0.0
        %5371 = vmatpush.msra.mxu0 0.0
        %5372 = vmatpush.msra.mxu0 0.0
        %5373 = vmatpush.msra.mxu0 0.0
        %5374 = vmatpush.msra.mxu0 0.0
        %5375 = vmatpush.msra.mxu0 0.0
        %v5376 = vand.u32 %v3605, 4294901760
        %5377 = vmatpush.msra.mxu0 %v5376
        %v5378 = vand.u32 %v575, 4294901760
        %5379 = vmatmul.f32.gmra.mxu0 %v5378
        %v5380 = vpop.f32.mrf.mxu0
        %v5381 = vadd.f32 %v5299, %v5380
        %v5382 = vand.u32 %v578, 4294901760
        %5383 = vmatmul.f32.gmra.mxu0 %v5382
        %v5384 = vpop.f32.mrf.mxu0
        %v5385 = vadd.f32 %v5303, %v5384
        %v5386 = vand.u32 %v581, 4294901760
        %5387 = vmatmul.f32.gmra.mxu0 %v5386
        %v5388 = vpop.f32.mrf.mxu0
        %v5389 = vadd.f32 %v5307, %v5388
        %v5390 = vand.u32 %v584, 4294901760
        %5391 = vmatmul.f32.gmra.mxu0 %v5390
        %v5392 = vpop.f32.mrf.mxu0
        %v5393 = vadd.f32 %v5311, %v5392
        %v5394 = vand.u32 %v587, 4294901760
        %5395 = vmatmul.f32.gmra.mxu0 %v5394
        %v5396 = vpop.f32.mrf.mxu0
        %v5397 = vadd.f32 %v5315, %v5396
        %v5398 = vand.u32 %v590, 4294901760
        %5399 = vmatmul.f32.gmra.mxu0 %v5398
        %v5400 = vpop.f32.mrf.mxu0
        %v5401 = vadd.f32 %v5319, %v5400
        %v5402 = vand.u32 %v593, 4294901760
        %5403 = vmatmul.f32.gmra.mxu0 %v5402
        %v5404 = vpop.f32.mrf.mxu0
        %v5405 = vadd.f32 %v5323, %v5404
        %v5406 = vand.u32 %v596, 4294901760
        %5407 = vmatmul.f32.gmra.mxu0 %v5406
        %v5408 = vpop.f32.mrf.mxu0
        %v5409 = vadd.f32 %v5327, %v5408
        %v5410 = vand.u32 %v599, 4294901760
        %5411 = vmatmul.f32.gmra.mxu0 %v5410
        %v5412 = vpop.f32.mrf.mxu0
        %v5413 = vadd.f32 %v5331, %v5412
        %v5414 = vand.u32 %v602, 4294901760
        %5415 = vmatmul.f32.gmra.mxu0 %v5414
        %v5416 = vpop.f32.mrf.mxu0
        %v5417 = vadd.f32 %v5335, %v5416
        %v5418 = vand.u32 %v605, 4294901760
        %5419 = vmatmul.f32.gmra.mxu0 %v5418
        %v5420 = vpop.f32.mrf.mxu0
        %v5421 = vadd.f32 %v5339, %v5420
        %v5422 = vand.u32 %v608, 4294901760
        %5423 = vmatmul.f32.gmra.mxu0 %v5422
        %v5424 = vpop.f32.mrf.mxu0
        %v5425 = vadd.f32 %v5343, %v5424
        %v5426 = vand.u32 %v611, 4294901760
        %5427 = vmatmul.f32.gmra.mxu0 %v5426
        %v5428 = vpop.f32.mrf.mxu0
        %v5429 = vadd.f32 %v5347, %v5428
        %v5430 = vand.u32 %v614, 4294901760
        %5431 = vmatmul.f32.gmra.mxu0 %v5430
        %v5432 = vpop.f32.mrf.mxu0
        %v5433 = vadd.f32 %v5351, %v5432
        %v5434 = vand.u32 %v617, 4294901760
        %5435 = vmatmul.f32.gmra.mxu0 %v5434
        %v5436 = vpop.f32.mrf.mxu0
        %v5437 = vadd.f32 %v5355, %v5436
        %v5438 = vand.u32 %v620, 4294901760
        %5439 = vmatmul.f32.gmra.mxu0 %v5438
        %v5440 = vpop.f32.mrf.mxu0
        %v5441 = vadd.f32 %v5359, %v5440
        %5442 = vdwg.mxu0
        %5443 = vmatpush.msra.mxu0 0.0
        %5444 = vmatpush.msra.mxu0 0.0
        %5445 = vmatpush.msra.mxu0 0.0
        %5446 = vmatpush.msra.mxu0 0.0
        %5447 = vmatpush.msra.mxu0 0.0
        %5448 = vmatpush.msra.mxu0 0.0
        %5449 = vmatpush.msra.mxu0 0.0
        %5450 = vmatpush.msra.mxu0 0.0
        %5451 = vmatpush.msra.mxu0 0.0
        %5452 = vmatpush.msra.mxu0 0.0
        %5453 = vmatpush.msra.mxu0 0.0
        %5454 = vmatpush.msra.mxu0 0.0
        %5455 = vmatpush.msra.mxu0 0.0
        %5456 = vmatpush.msra.mxu0 0.0
        %5457 = vmatpush.msra.mxu0 0.0
        %v5458 = vand.u32 %v3608, 4294901760
        %5459 = vmatpush.msra.mxu0 %v5458
        %v5460 = vand.u32 %v575, 4294901760
        %v5461 = vsub.f32 %v575, %v5460
        %v5462 = vand.u32 %v5461, 4294901760
        %v5463 = vsub.f32 %v5461, %v5462
        %v5464 = vand.u32 %v5463, 4294901760
        %5465 = vmatmul.f32.gmra.mxu0 %v5464
        %v5466 = vpop.f32.mrf.mxu0
        %v5467 = vadd.f32 0.0, %v5466
        %v5468 = vand.u32 %v578, 4294901760
        %v5469 = vsub.f32 %v578, %v5468
        %v5470 = vand.u32 %v5469, 4294901760
        %v5471 = vsub.f32 %v5469, %v5470
        %v5472 = vand.u32 %v5471, 4294901760
        %5473 = vmatmul.f32.gmra.mxu0 %v5472
        %v5474 = vpop.f32.mrf.mxu0
        %v5475 = vadd.f32 0.0, %v5474
        %v5476 = vand.u32 %v581, 4294901760
        %v5477 = vsub.f32 %v581, %v5476
        %v5478 = vand.u32 %v5477, 4294901760
        %v5479 = vsub.f32 %v5477, %v5478
        %v5480 = vand.u32 %v5479, 4294901760
        %5481 = vmatmul.f32.gmra.mxu0 %v5480
        %v5482 = vpop.f32.mrf.mxu0
        %v5483 = vadd.f32 0.0, %v5482
        %v5484 = vand.u32 %v584, 4294901760
        %v5485 = vsub.f32 %v584, %v5484
        %v5486 = vand.u32 %v5485, 4294901760
        %v5487 = vsub.f32 %v5485, %v5486
        %v5488 = vand.u32 %v5487, 4294901760
        %5489 = vmatmul.f32.gmra.mxu0 %v5488
        %v5490 = vpop.f32.mrf.mxu0
        %v5491 = vadd.f32 0.0, %v5490
        %v5492 = vand.u32 %v587, 4294901760
        %v5493 = vsub.f32 %v587, %v5492
        %v5494 = vand.u32 %v5493, 4294901760
        %v5495 = vsub.f32 %v5493, %v5494
        %v5496 = vand.u32 %v5495, 4294901760
        %5497 = vmatmul.f32.gmra.mxu0 %v5496
        %v5498 = vpop.f32.mrf.mxu0
        %v5499 = vadd.f32 0.0, %v5498
        %v5500 = vand.u32 %v590, 4294901760
        %v5501 = vsub.f32 %v590, %v5500
        %v5502 = vand.u32 %v5501, 4294901760
        %v5503 = vsub.f32 %v5501, %v5502
        %v5504 = vand.u32 %v5503, 4294901760
        %5505 = vmatmul.f32.gmra.mxu0 %v5504
        %v5506 = vpop.f32.mrf.mxu0
        %v5507 = vadd.f32 0.0, %v5506
        %v5508 = vand.u32 %v593, 4294901760
        %v5509 = vsub.f32 %v593, %v5508
        %v5510 = vand.u32 %v5509, 4294901760
        %v5511 = vsub.f32 %v5509, %v5510
        %v5512 = vand.u32 %v5511, 4294901760
        %5513 = vmatmul.f32.gmra.mxu0 %v5512
        %v5514 = vpop.f32.mrf.mxu0
        %v5515 = vadd.f32 0.0, %v5514
        %v5516 = vand.u32 %v596, 4294901760
        %v5517 = vsub.f32 %v596, %v5516
        %v5518 = vand.u32 %v5517, 4294901760
        %v5519 = vsub.f32 %v5517, %v5518
        %v5520 = vand.u32 %v5519, 4294901760
        %5521 = vmatmul.f32.gmra.mxu0 %v5520
        %v5522 = vpop.f32.mrf.mxu0
        %v5523 = vadd.f32 0.0, %v5522
        %v5524 = vand.u32 %v599, 4294901760
        %v5525 = vsub.f32 %v599, %v5524
        %v5526 = vand.u32 %v5525, 4294901760
        %v5527 = vsub.f32 %v5525, %v5526
        %v5528 = vand.u32 %v5527, 4294901760
        %5529 = vmatmul.f32.gmra.mxu0 %v5528
        %v5530 = vpop.f32.mrf.mxu0
        %v5531 = vadd.f32 0.0, %v5530
        %v5532 = vand.u32 %v602, 4294901760
        %v5533 = vsub.f32 %v602, %v5532
        %v5534 = vand.u32 %v5533, 4294901760
        %v5535 = vsub.f32 %v5533, %v5534
        %v5536 = vand.u32 %v5535, 4294901760
        %5537 = vmatmul.f32.gmra.mxu0 %v5536
        %v5538 = vpop.f32.mrf.mxu0
        %v5539 = vadd.f32 0.0, %v5538
        %v5540 = vand.u32 %v605, 4294901760
        %v5541 = vsub.f32 %v605, %v5540
        %v5542 = vand.u32 %v5541, 4294901760
        %v5543 = vsub.f32 %v5541, %v5542
        %v5544 = vand.u32 %v5543, 4294901760
        %5545 = vmatmul.f32.gmra.mxu0 %v5544
        %v5546 = vpop.f32.mrf.mxu0
        %v5547 = vadd.f32 0.0, %v5546
        %v5548 = vand.u32 %v608, 4294901760
        %v5549 = vsub.f32 %v608, %v5548
        %v5550 = vand.u32 %v5549, 4294901760
        %v5551 = vsub.f32 %v5549, %v5550
        %v5552 = vand.u32 %v5551, 4294901760
        %5553 = vmatmul.f32.gmra.mxu0 %v5552
        %v5554 = vpop.f32.mrf.mxu0
        %v5555 = vadd.f32 0.0, %v5554
        %v5556 = vand.u32 %v611, 4294901760
        %v5557 = vsub.f32 %v611, %v5556
        %v5558 = vand.u32 %v5557, 4294901760
        %v5559 = vsub.f32 %v5557, %v5558
        %v5560 = vand.u32 %v5559, 4294901760
        %5561 = vmatmul.f32.gmra.mxu0 %v5560
        %v5562 = vpop.f32.mrf.mxu0
        %v5563 = vadd.f32 0.0, %v5562
        %v5564 = vand.u32 %v614, 4294901760
        %v5565 = vsub.f32 %v614, %v5564
        %v5566 = vand.u32 %v5565, 4294901760
        %v5567 = vsub.f32 %v5565, %v5566
        %v5568 = vand.u32 %v5567, 4294901760
        %5569 = vmatmul.f32.gmra.mxu0 %v5568
        %v5570 = vpop.f32.mrf.mxu0
        %v5571 = vadd.f32 0.0, %v5570
        %v5572 = vand.u32 %v617, 4294901760
        %v5573 = vsub.f32 %v617, %v5572
        %v5574 = vand.u32 %v5573, 4294901760
        %v5575 = vsub.f32 %v5573, %v5574
        %v5576 = vand.u32 %v5575, 4294901760
        %5577 = vmatmul.f32.gmra.mxu0 %v5576
        %v5578 = vpop.f32.mrf.mxu0
        %v5579 = vadd.f32 0.0, %v5578
        %v5580 = vand.u32 %v620, 4294901760
        %v5581 = vsub.f32 %v620, %v5580
        %v5582 = vand.u32 %v5581, 4294901760
        %v5583 = vsub.f32 %v5581, %v5582
        %v5584 = vand.u32 %v5583, 4294901760
        %5585 = vmatmul.f32.gmra.mxu0 %v5584
        %v5586 = vpop.f32.mrf.mxu0
        %v5587 = vadd.f32 0.0, %v5586
        %5588 = vdwg.mxu0
        %5589 = vmatpush.msra.mxu0 0.0
        %5590 = vmatpush.msra.mxu0 0.0
        %5591 = vmatpush.msra.mxu0 0.0
        %5592 = vmatpush.msra.mxu0 0.0
        %5593 = vmatpush.msra.mxu0 0.0
        %5594 = vmatpush.msra.mxu0 0.0
        %5595 = vmatpush.msra.mxu0 0.0
        %5596 = vmatpush.msra.mxu0 0.0
        %5597 = vmatpush.msra.mxu0 0.0
        %5598 = vmatpush.msra.mxu0 0.0
        %5599 = vmatpush.msra.mxu0 0.0
        %5600 = vmatpush.msra.mxu0 0.0
        %5601 = vmatpush.msra.mxu0 0.0
        %5602 = vmatpush.msra.mxu0 0.0
        %5603 = vmatpush.msra.mxu0 0.0
        %v5604 = vand.u32 %v3608, 4294901760
        %v5605 = vsub.f32 %v3608, %v5604
        %v5606 = vand.u32 %v5605, 4294901760
        %v5607 = vsub.f32 %v5605, %v5606
        %v5608 = vand.u32 %v5607, 4294901760
        %5609 = vmatpush.msra.mxu0 %v5608
        %v5610 = vand.u32 %v575, 4294901760
        %5611 = vmatmul.f32.gmra.mxu0 %v5610
        %v5612 = vpop.f32.mrf.mxu0
        %v5613 = vadd.f32 %v5467, %v5612
        %v5614 = vand.u32 %v578, 4294901760
        %5615 = vmatmul.f32.gmra.mxu0 %v5614
        %v5616 = vpop.f32.mrf.mxu0
        %v5617 = vadd.f32 %v5475, %v5616
        %v5618 = vand.u32 %v581, 4294901760
        %5619 = vmatmul.f32.gmra.mxu0 %v5618
        %v5620 = vpop.f32.mrf.mxu0
        %v5621 = vadd.f32 %v5483, %v5620
        %v5622 = vand.u32 %v584, 4294901760
        %5623 = vmatmul.f32.gmra.mxu0 %v5622
        %v5624 = vpop.f32.mrf.mxu0
        %v5625 = vadd.f32 %v5491, %v5624
        %v5626 = vand.u32 %v587, 4294901760
        %5627 = vmatmul.f32.gmra.mxu0 %v5626
        %v5628 = vpop.f32.mrf.mxu0
        %v5629 = vadd.f32 %v5499, %v5628
        %v5630 = vand.u32 %v590, 4294901760
        %5631 = vmatmul.f32.gmra.mxu0 %v5630
        %v5632 = vpop.f32.mrf.mxu0
        %v5633 = vadd.f32 %v5507, %v5632
        %v5634 = vand.u32 %v593, 4294901760
        %5635 = vmatmul.f32.gmra.mxu0 %v5634
        %v5636 = vpop.f32.mrf.mxu0
        %v5637 = vadd.f32 %v5515, %v5636
        %v5638 = vand.u32 %v596, 4294901760
        %5639 = vmatmul.f32.gmra.mxu0 %v5638
        %v5640 = vpop.f32.mrf.mxu0
        %v5641 = vadd.f32 %v5523, %v5640
        %v5642 = vand.u32 %v599, 4294901760
        %5643 = vmatmul.f32.gmra.mxu0 %v5642
        %v5644 = vpop.f32.mrf.mxu0
        %v5645 = vadd.f32 %v5531, %v5644
        %v5646 = vand.u32 %v602, 4294901760
        %5647 = vmatmul.f32.gmra.mxu0 %v5646
        %v5648 = vpop.f32.mrf.mxu0
        %v5649 = vadd.f32 %v5539, %v5648
        %v5650 = vand.u32 %v605, 4294901760
        %5651 = vmatmul.f32.gmra.mxu0 %v5650
        %v5652 = vpop.f32.mrf.mxu0
        %v5653 = vadd.f32 %v5547, %v5652
        %v5654 = vand.u32 %v608, 4294901760
        %5655 = vmatmul.f32.gmra.mxu0 %v5654
        %v5656 = vpop.f32.mrf.mxu0
        %v5657 = vadd.f32 %v5555, %v5656
        %v5658 = vand.u32 %v611, 4294901760
        %5659 = vmatmul.f32.gmra.mxu0 %v5658
        %v5660 = vpop.f32.mrf.mxu0
        %v5661 = vadd.f32 %v5563, %v5660
        %v5662 = vand.u32 %v614, 4294901760
        %5663 = vmatmul.f32.gmra.mxu0 %v5662
        %v5664 = vpop.f32.mrf.mxu0
        %v5665 = vadd.f32 %v5571, %v5664
        %v5666 = vand.u32 %v617, 4294901760
        %5667 = vmatmul.f32.gmra.mxu0 %v5666
        %v5668 = vpop.f32.mrf.mxu0
        %v5669 = vadd.f32 %v5579, %v5668
        %v5670 = vand.u32 %v620, 4294901760
        %5671 = vmatmul.f32.gmra.mxu0 %v5670
        %v5672 = vpop.f32.mrf.mxu0
        %v5673 = vadd.f32 %v5587, %v5672
        %5674 = vdwg.mxu0
        %5675 = vmatpush.msra.mxu0 0.0
        %5676 = vmatpush.msra.mxu0 0.0
        %5677 = vmatpush.msra.mxu0 0.0
        %5678 = vmatpush.msra.mxu0 0.0
        %5679 = vmatpush.msra.mxu0 0.0
        %5680 = vmatpush.msra.mxu0 0.0
        %5681 = vmatpush.msra.mxu0 0.0
        %5682 = vmatpush.msra.mxu0 0.0
        %5683 = vmatpush.msra.mxu0 0.0
        %5684 = vmatpush.msra.mxu0 0.0
        %5685 = vmatpush.msra.mxu0 0.0
        %5686 = vmatpush.msra.mxu0 0.0
        %5687 = vmatpush.msra.mxu0 0.0
        %5688 = vmatpush.msra.mxu0 0.0
        %5689 = vmatpush.msra.mxu0 0.0
        %v5690 = vand.u32 %v3608, 4294901760
        %v5691 = vsub.f32 %v3608, %v5690
        %5692 = vmatpush.msra.mxu0 %v5691
        %v5693 = vand.u32 %v575, 4294901760
        %v5694 = vsub.f32 %v575, %v5693
        %5695 = vmatmul.f32.gmra.mxu0 %v5694
        %v5696 = vpop.f32.mrf.mxu0
        %v5697 = vadd.f32 %v5613, %v5696
        %v5698 = vand.u32 %v578, 4294901760
        %v5699 = vsub.f32 %v578, %v5698
        %5700 = vmatmul.f32.gmra.mxu0 %v5699
        %v5701 = vpop.f32.mrf.mxu0
        %v5702 = vadd.f32 %v5617, %v5701
        %v5703 = vand.u32 %v581, 4294901760
        %v5704 = vsub.f32 %v581, %v5703
        %5705 = vmatmul.f32.gmra.mxu0 %v5704
        %v5706 = vpop.f32.mrf.mxu0
        %v5707 = vadd.f32 %v5621, %v5706
        %v5708 = vand.u32 %v584, 4294901760
        %v5709 = vsub.f32 %v584, %v5708
        %5710 = vmatmul.f32.gmra.mxu0 %v5709
        %v5711 = vpop.f32.mrf.mxu0
        %v5712 = vadd.f32 %v5625, %v5711
        %v5713 = vand.u32 %v587, 4294901760
        %v5714 = vsub.f32 %v587, %v5713
        %5715 = vmatmul.f32.gmra.mxu0 %v5714
        %v5716 = vpop.f32.mrf.mxu0
        %v5717 = vadd.f32 %v5629, %v5716
        %v5718 = vand.u32 %v590, 4294901760
        %v5719 = vsub.f32 %v590, %v5718
        %5720 = vmatmul.f32.gmra.mxu0 %v5719
        %v5721 = vpop.f32.mrf.mxu0
        %v5722 = vadd.f32 %v5633, %v5721
        %v5723 = vand.u32 %v593, 4294901760
        %v5724 = vsub.f32 %v593, %v5723
        %5725 = vmatmul.f32.gmra.mxu0 %v5724
        %v5726 = vpop.f32.mrf.mxu0
        %v5727 = vadd.f32 %v5637, %v5726
        %v5728 = vand.u32 %v596, 4294901760
        %v5729 = vsub.f32 %v596, %v5728
        %5730 = vmatmul.f32.gmra.mxu0 %v5729
        %v5731 = vpop.f32.mrf.mxu0
        %v5732 = vadd.f32 %v5641, %v5731
        %v5733 = vand.u32 %v599, 4294901760
        %v5734 = vsub.f32 %v599, %v5733
        %5735 = vmatmul.f32.gmra.mxu0 %v5734
        %v5736 = vpop.f32.mrf.mxu0
        %v5737 = vadd.f32 %v5645, %v5736
        %v5738 = vand.u32 %v602, 4294901760
        %v5739 = vsub.f32 %v602, %v5738
        %5740 = vmatmul.f32.gmra.mxu0 %v5739
        %v5741 = vpop.f32.mrf.mxu0
        %v5742 = vadd.f32 %v5649, %v5741
        %v5743 = vand.u32 %v605, 4294901760
        %v5744 = vsub.f32 %v605, %v5743
        %5745 = vmatmul.f32.gmra.mxu0 %v5744
        %v5746 = vpop.f32.mrf.mxu0
        %v5747 = vadd.f32 %v5653, %v5746
        %v5748 = vand.u32 %v608, 4294901760
        %v5749 = vsub.f32 %v608, %v5748
        %5750 = vmatmul.f32.gmra.mxu0 %v5749
        %v5751 = vpop.f32.mrf.mxu0
        %v5752 = vadd.f32 %v5657, %v5751
        %v5753 = vand.u32 %v611, 4294901760
        %v5754 = vsub.f32 %v611, %v5753
        %5755 = vmatmul.f32.gmra.mxu0 %v5754
        %v5756 = vpop.f32.mrf.mxu0
        %v5757 = vadd.f32 %v5661, %v5756
        %v5758 = vand.u32 %v614, 4294901760
        %v5759 = vsub.f32 %v614, %v5758
        %5760 = vmatmul.f32.gmra.mxu0 %v5759
        %v5761 = vpop.f32.mrf.mxu0
        %v5762 = vadd.f32 %v5665, %v5761
        %v5763 = vand.u32 %v617, 4294901760
        %v5764 = vsub.f32 %v617, %v5763
        %5765 = vmatmul.f32.gmra.mxu0 %v5764
        %v5766 = vpop.f32.mrf.mxu0
        %v5767 = vadd.f32 %v5669, %v5766
        %v5768 = vand.u32 %v620, 4294901760
        %v5769 = vsub.f32 %v620, %v5768
        %5770 = vmatmul.f32.gmra.mxu0 %v5769
        %v5771 = vpop.f32.mrf.mxu0
        %v5772 = vadd.f32 %v5673, %v5771
        %5773 = vdwg.mxu0
        %5774 = vmatpush.msra.mxu0 0.0
        %5775 = vmatpush.msra.mxu0 0.0
        %5776 = vmatpush.msra.mxu0 0.0
        %5777 = vmatpush.msra.mxu0 0.0
        %5778 = vmatpush.msra.mxu0 0.0
        %5779 = vmatpush.msra.mxu0 0.0
        %5780 = vmatpush.msra.mxu0 0.0
        %5781 = vmatpush.msra.mxu0 0.0
        %5782 = vmatpush.msra.mxu0 0.0
        %5783 = vmatpush.msra.mxu0 0.0
        %5784 = vmatpush.msra.mxu0 0.0
        %5785 = vmatpush.msra.mxu0 0.0
        %5786 = vmatpush.msra.mxu0 0.0
        %5787 = vmatpush.msra.mxu0 0.0
        %5788 = vmatpush.msra.mxu0 0.0
        %v5789 = vand.u32 %v3608, 4294901760
        %5790 = vmatpush.msra.mxu0 %v5789
        %v5791 = vand.u32 %v575, 4294901760
        %v5792 = vsub.f32 %v575, %v5791
        %v5793 = vand.u32 %v5792, 4294901760
        %5794 = vmatmul.f32.gmra.mxu0 %v5793
        %v5795 = vpop.f32.mrf.mxu0
        %v5796 = vadd.f32 %v5697, %v5795
        %v5797 = vand.u32 %v578, 4294901760
        %v5798 = vsub.f32 %v578, %v5797
        %v5799 = vand.u32 %v5798, 4294901760
        %5800 = vmatmul.f32.gmra.mxu0 %v5799
        %v5801 = vpop.f32.mrf.mxu0
        %v5802 = vadd.f32 %v5702, %v5801
        %v5803 = vand.u32 %v581, 4294901760
        %v5804 = vsub.f32 %v581, %v5803
        %v5805 = vand.u32 %v5804, 4294901760
        %5806 = vmatmul.f32.gmra.mxu0 %v5805
        %v5807 = vpop.f32.mrf.mxu0
        %v5808 = vadd.f32 %v5707, %v5807
        %v5809 = vand.u32 %v584, 4294901760
        %v5810 = vsub.f32 %v584, %v5809
        %v5811 = vand.u32 %v5810, 4294901760
        %5812 = vmatmul.f32.gmra.mxu0 %v5811
        %v5813 = vpop.f32.mrf.mxu0
        %v5814 = vadd.f32 %v5712, %v5813
        %v5815 = vand.u32 %v587, 4294901760
        %v5816 = vsub.f32 %v587, %v5815
        %v5817 = vand.u32 %v5816, 4294901760
        %5818 = vmatmul.f32.gmra.mxu0 %v5817
        %v5819 = vpop.f32.mrf.mxu0
        %v5820 = vadd.f32 %v5717, %v5819
        %v5821 = vand.u32 %v590, 4294901760
        %v5822 = vsub.f32 %v590, %v5821
        %v5823 = vand.u32 %v5822, 4294901760
        %5824 = vmatmul.f32.gmra.mxu0 %v5823
        %v5825 = vpop.f32.mrf.mxu0
        %v5826 = vadd.f32 %v5722, %v5825
        %v5827 = vand.u32 %v593, 4294901760
        %v5828 = vsub.f32 %v593, %v5827
        %v5829 = vand.u32 %v5828, 4294901760
        %5830 = vmatmul.f32.gmra.mxu0 %v5829
        %v5831 = vpop.f32.mrf.mxu0
        %v5832 = vadd.f32 %v5727, %v5831
        %v5833 = vand.u32 %v596, 4294901760
        %v5834 = vsub.f32 %v596, %v5833
        %v5835 = vand.u32 %v5834, 4294901760
        %5836 = vmatmul.f32.gmra.mxu0 %v5835
        %v5837 = vpop.f32.mrf.mxu0
        %v5838 = vadd.f32 %v5732, %v5837
        %v5839 = vand.u32 %v599, 4294901760
        %v5840 = vsub.f32 %v599, %v5839
        %v5841 = vand.u32 %v5840, 4294901760
        %5842 = vmatmul.f32.gmra.mxu0 %v5841
        %v5843 = vpop.f32.mrf.mxu0
        %v5844 = vadd.f32 %v5737, %v5843
        %v5845 = vand.u32 %v602, 4294901760
        %v5846 = vsub.f32 %v602, %v5845
        %v5847 = vand.u32 %v5846, 4294901760
        %5848 = vmatmul.f32.gmra.mxu0 %v5847
        %v5849 = vpop.f32.mrf.mxu0
        %v5850 = vadd.f32 %v5742, %v5849
        %v5851 = vand.u32 %v605, 4294901760
        %v5852 = vsub.f32 %v605, %v5851
        %v5853 = vand.u32 %v5852, 4294901760
        %5854 = vmatmul.f32.gmra.mxu0 %v5853
        %v5855 = vpop.f32.mrf.mxu0
        %v5856 = vadd.f32 %v5747, %v5855
        %v5857 = vand.u32 %v608, 4294901760
        %v5858 = vsub.f32 %v608, %v5857
        %v5859 = vand.u32 %v5858, 4294901760
        %5860 = vmatmul.f32.gmra.mxu0 %v5859
        %v5861 = vpop.f32.mrf.mxu0
        %v5862 = vadd.f32 %v5752, %v5861
        %v5863 = vand.u32 %v611, 4294901760
        %v5864 = vsub.f32 %v611, %v5863
        %v5865 = vand.u32 %v5864, 4294901760
        %5866 = vmatmul.f32.gmra.mxu0 %v5865
        %v5867 = vpop.f32.mrf.mxu0
        %v5868 = vadd.f32 %v5757, %v5867
        %v5869 = vand.u32 %v614, 4294901760
        %v5870 = vsub.f32 %v614, %v5869
        %v5871 = vand.u32 %v5870, 4294901760
        %5872 = vmatmul.f32.gmra.mxu0 %v5871
        %v5873 = vpop.f32.mrf.mxu0
        %v5874 = vadd.f32 %v5762, %v5873
        %v5875 = vand.u32 %v617, 4294901760
        %v5876 = vsub.f32 %v617, %v5875
        %v5877 = vand.u32 %v5876, 4294901760
        %5878 = vmatmul.f32.gmra.mxu0 %v5877
        %v5879 = vpop.f32.mrf.mxu0
        %v5880 = vadd.f32 %v5767, %v5879
        %v5881 = vand.u32 %v620, 4294901760
        %v5882 = vsub.f32 %v620, %v5881
        %v5883 = vand.u32 %v5882, 4294901760
        %5884 = vmatmul.f32.gmra.mxu0 %v5883
        %v5885 = vpop.f32.mrf.mxu0
        %v5886 = vadd.f32 %v5772, %v5885
        %5887 = vdwg.mxu0
        %5888 = vmatpush.msra.mxu0 0.0
        %5889 = vmatpush.msra.mxu0 0.0
        %5890 = vmatpush.msra.mxu0 0.0
        %5891 = vmatpush.msra.mxu0 0.0
        %5892 = vmatpush.msra.mxu0 0.0
        %5893 = vmatpush.msra.mxu0 0.0
        %5894 = vmatpush.msra.mxu0 0.0
        %5895 = vmatpush.msra.mxu0 0.0
        %5896 = vmatpush.msra.mxu0 0.0
        %5897 = vmatpush.msra.mxu0 0.0
        %5898 = vmatpush.msra.mxu0 0.0
        %5899 = vmatpush.msra.mxu0 0.0
        %5900 = vmatpush.msra.mxu0 0.0
        %5901 = vmatpush.msra.mxu0 0.0
        %5902 = vmatpush.msra.mxu0 0.0
        %v5903 = vand.u32 %v3608, 4294901760
        %v5904 = vsub.f32 %v3608, %v5903
        %v5905 = vand.u32 %v5904, 4294901760
        %5906 = vmatpush.msra.mxu0 %v5905
        %v5907 = vand.u32 %v575, 4294901760
        %5908 = vmatmul.f32.gmra.mxu0 %v5907
        %v5909 = vpop.f32.mrf.mxu0
        %v5910 = vadd.f32 %v5796, %v5909
        %v5911 = vand.u32 %v578, 4294901760
        %5912 = vmatmul.f32.gmra.mxu0 %v5911
        %v5913 = vpop.f32.mrf.mxu0
        %v5914 = vadd.f32 %v5802, %v5913
        %v5915 = vand.u32 %v581, 4294901760
        %5916 = vmatmul.f32.gmra.mxu0 %v5915
        %v5917 = vpop.f32.mrf.mxu0
        %v5918 = vadd.f32 %v5808, %v5917
        %v5919 = vand.u32 %v584, 4294901760
        %5920 = vmatmul.f32.gmra.mxu0 %v5919
        %v5921 = vpop.f32.mrf.mxu0
        %v5922 = vadd.f32 %v5814, %v5921
        %v5923 = vand.u32 %v587, 4294901760
        %5924 = vmatmul.f32.gmra.mxu0 %v5923
        %v5925 = vpop.f32.mrf.mxu0
        %v5926 = vadd.f32 %v5820, %v5925
        %v5927 = vand.u32 %v590, 4294901760
        %5928 = vmatmul.f32.gmra.mxu0 %v5927
        %v5929 = vpop.f32.mrf.mxu0
        %v5930 = vadd.f32 %v5826, %v5929
        %v5931 = vand.u32 %v593, 4294901760
        %5932 = vmatmul.f32.gmra.mxu0 %v5931
        %v5933 = vpop.f32.mrf.mxu0
        %v5934 = vadd.f32 %v5832, %v5933
        %v5935 = vand.u32 %v596, 4294901760
        %5936 = vmatmul.f32.gmra.mxu0 %v5935
        %v5937 = vpop.f32.mrf.mxu0
        %v5938 = vadd.f32 %v5838, %v5937
        %v5939 = vand.u32 %v599, 4294901760
        %5940 = vmatmul.f32.gmra.mxu0 %v5939
        %v5941 = vpop.f32.mrf.mxu0
        %v5942 = vadd.f32 %v5844, %v5941
        %v5943 = vand.u32 %v602, 4294901760
        %5944 = vmatmul.f32.gmra.mxu0 %v5943
        %v5945 = vpop.f32.mrf.mxu0
        %v5946 = vadd.f32 %v5850, %v5945
        %v5947 = vand.u32 %v605, 4294901760
        %5948 = vmatmul.f32.gmra.mxu0 %v5947
        %v5949 = vpop.f32.mrf.mxu0
        %v5950 = vadd.f32 %v5856, %v5949
        %v5951 = vand.u32 %v608, 4294901760
        %5952 = vmatmul.f32.gmra.mxu0 %v5951
        %v5953 = vpop.f32.mrf.mxu0
        %v5954 = vadd.f32 %v5862, %v5953
        %v5955 = vand.u32 %v611, 4294901760
        %5956 = vmatmul.f32.gmra.mxu0 %v5955
        %v5957 = vpop.f32.mrf.mxu0
        %v5958 = vadd.f32 %v5868, %v5957
        %v5959 = vand.u32 %v614, 4294901760
        %5960 = vmatmul.f32.gmra.mxu0 %v5959
        %v5961 = vpop.f32.mrf.mxu0
        %v5962 = vadd.f32 %v5874, %v5961
        %v5963 = vand.u32 %v617, 4294901760
        %5964 = vmatmul.f32.gmra.mxu0 %v5963
        %v5965 = vpop.f32.mrf.mxu0
        %v5966 = vadd.f32 %v5880, %v5965
        %v5967 = vand.u32 %v620, 4294901760
        %5968 = vmatmul.f32.gmra.mxu0 %v5967
        %v5969 = vpop.f32.mrf.mxu0
        %v5970 = vadd.f32 %v5886, %v5969
        %5971 = vdwg.mxu0
        %5972 = vmatpush.msra.mxu0 0.0
        %5973 = vmatpush.msra.mxu0 0.0
        %5974 = vmatpush.msra.mxu0 0.0
        %5975 = vmatpush.msra.mxu0 0.0
        %5976 = vmatpush.msra.mxu0 0.0
        %5977 = vmatpush.msra.mxu0 0.0
        %5978 = vmatpush.msra.mxu0 0.0
        %5979 = vmatpush.msra.mxu0 0.0
        %5980 = vmatpush.msra.mxu0 0.0
        %5981 = vmatpush.msra.mxu0 0.0
        %5982 = vmatpush.msra.mxu0 0.0
        %5983 = vmatpush.msra.mxu0 0.0
        %5984 = vmatpush.msra.mxu0 0.0
        %5985 = vmatpush.msra.mxu0 0.0
        %5986 = vmatpush.msra.mxu0 0.0
        %v5987 = vand.u32 %v3608, 4294901760
        %5988 = vmatpush.msra.mxu0 %v5987
        %v5989 = vand.u32 %v575, 4294901760
        %5990 = vmatmul.f32.gmra.mxu0 %v5989
        %v5991 = vpop.f32.mrf.mxu0
        %v5992 = vadd.f32 %v5910, %v5991
        %v5993 = vand.u32 %v578, 4294901760
        %5994 = vmatmul.f32.gmra.mxu0 %v5993
        %v5995 = vpop.f32.mrf.mxu0
        %v5996 = vadd.f32 %v5914, %v5995
        %v5997 = vand.u32 %v581, 4294901760
        %5998 = vmatmul.f32.gmra.mxu0 %v5997
        %v5999 = vpop.f32.mrf.mxu0
        %v6000 = vadd.f32 %v5918, %v5999
        %v6001 = vand.u32 %v584, 4294901760
        %6002 = vmatmul.f32.gmra.mxu0 %v6001
        %v6003 = vpop.f32.mrf.mxu0
        %v6004 = vadd.f32 %v5922, %v6003
        %v6005 = vand.u32 %v587, 4294901760
        %6006 = vmatmul.f32.gmra.mxu0 %v6005
        %v6007 = vpop.f32.mrf.mxu0
        %v6008 = vadd.f32 %v5926, %v6007
        %v6009 = vand.u32 %v590, 4294901760
        %6010 = vmatmul.f32.gmra.mxu0 %v6009
        %v6011 = vpop.f32.mrf.mxu0
        %v6012 = vadd.f32 %v5930, %v6011
        %v6013 = vand.u32 %v593, 4294901760
        %6014 = vmatmul.f32.gmra.mxu0 %v6013
        %v6015 = vpop.f32.mrf.mxu0
        %v6016 = vadd.f32 %v5934, %v6015
        %v6017 = vand.u32 %v596, 4294901760
        %6018 = vmatmul.f32.gmra.mxu0 %v6017
        %v6019 = vpop.f32.mrf.mxu0
        %v6020 = vadd.f32 %v5938, %v6019
        %v6021 = vand.u32 %v599, 4294901760
        %6022 = vmatmul.f32.gmra.mxu0 %v6021
        %v6023 = vpop.f32.mrf.mxu0
        %v6024 = vadd.f32 %v5942, %v6023
        %v6025 = vand.u32 %v602, 4294901760
        %6026 = vmatmul.f32.gmra.mxu0 %v6025
        %v6027 = vpop.f32.mrf.mxu0
        %v6028 = vadd.f32 %v5946, %v6027
        %v6029 = vand.u32 %v605, 4294901760
        %6030 = vmatmul.f32.gmra.mxu0 %v6029
        %v6031 = vpop.f32.mrf.mxu0
        %v6032 = vadd.f32 %v5950, %v6031
        %v6033 = vand.u32 %v608, 4294901760
        %6034 = vmatmul.f32.gmra.mxu0 %v6033
        %v6035 = vpop.f32.mrf.mxu0
        %v6036 = vadd.f32 %v5954, %v6035
        %v6037 = vand.u32 %v611, 4294901760
        %6038 = vmatmul.f32.gmra.mxu0 %v6037
        %v6039 = vpop.f32.mrf.mxu0
        %v6040 = vadd.f32 %v5958, %v6039
        %v6041 = vand.u32 %v614, 4294901760
        %6042 = vmatmul.f32.gmra.mxu0 %v6041
        %v6043 = vpop.f32.mrf.mxu0
        %v6044 = vadd.f32 %v5962, %v6043
        %v6045 = vand.u32 %v617, 4294901760
        %6046 = vmatmul.f32.gmra.mxu0 %v6045
        %v6047 = vpop.f32.mrf.mxu0
        %v6048 = vadd.f32 %v5966, %v6047
        %v6049 = vand.u32 %v620, 4294901760
        %6050 = vmatmul.f32.gmra.mxu0 %v6049
        %v6051 = vpop.f32.mrf.mxu0
        %v6052 = vadd.f32 %v5970, %v6051
        %6053 = vdwg.mxu0
        %v6054 = vld [vmem:[#allocation2] sm:$0xff]
        %v6055 = vld [vmem:[#allocation2 + $0x8] sm:$0xff]
        %v6056 = vld [vmem:[#allocation2 + $0x10] sm:$0xff]
        %v6057 = vld [vmem:[#allocation2 + $0x18] sm:$0xff]
        %v6058 = vld [vmem:[#allocation2 + $0x20] sm:$0xff]
        %v6059 = vld [vmem:[#allocation2 + $0x28] sm:$0xff]
        %v6060 = vld [vmem:[#allocation2 + $0x30] sm:$0xff]
        %v6061 = vld [vmem:[#allocation2 + $0x38] sm:$0xff]
        %v6062 = vld [vmem:[#allocation2 + $0x40] sm:$0xff]
        %v6063 = vld [vmem:[#allocation2 + $0x48] sm:$0xff]
        %v6064 = vld [vmem:[#allocation2 + $0x50] sm:$0xff]
        %v6065 = vld [vmem:[#allocation2 + $0x58] sm:$0xff]
        %v6066 = vld [vmem:[#allocation2 + $0x60] sm:$0xff]
        %v6067 = vld [vmem:[#allocation2 + $0x68] sm:$0xff]
        %v6068 = vld [vmem:[#allocation2 + $0x70] sm:$0xff]
        %v6069 = vld [vmem:[#allocation2 + $0x78] sm:$0xff]
        %v6070 = vld [vmem:[#allocation2 + $0x80] sm:$0xff]
        %v6071 = vld [vmem:[#allocation2 + $0x88] sm:$0xff]
        %v6072 = vld [vmem:[#allocation2 + $0x90] sm:$0xff]
        %v6073 = vld [vmem:[#allocation2 + $0x98] sm:$0xff]
        %v6074 = vld [vmem:[#allocation2 + $0xa0] sm:$0xff]
        %v6075 = vld [vmem:[#allocation2 + $0xa8] sm:$0xff]
        %v6076 = vld [vmem:[#allocation2 + $0xb0] sm:$0xff]
        %v6077 = vld [vmem:[#allocation2 + $0xb8] sm:$0xff]
        %v6078 = vld [vmem:[#allocation2 + $0xc0] sm:$0xff]
        %v6079 = vld [vmem:[#allocation2 + $0xc8] sm:$0xff]
        %v6080 = vld [vmem:[#allocation2 + $0xd0] sm:$0xff]
        %v6081 = vld [vmem:[#allocation2 + $0xd8] sm:$0xff]
        %v6082 = vld [vmem:[#allocation2 + $0xe0] sm:$0xff]
        %v6083 = vld [vmem:[#allocation2 + $0xe8] sm:$0xff]
        %v6084 = vld [vmem:[#allocation2 + $0xf0] sm:$0xff]
        %v6085 = vld [vmem:[#allocation2 + $0xf8] sm:$0xff]
        %v6086 = vld [vmem:[#allocation2 + $0x100] sm:$0xff]
        %v6087 = vld [vmem:[#allocation2 + $0x108] sm:$0xff]
        %v6088 = vld [vmem:[#allocation2 + $0x110] sm:$0xff]
        %v6089 = vld [vmem:[#allocation2 + $0x118] sm:$0xff]
        %v6090 = vld [vmem:[#allocation2 + $0x120] sm:$0xff]
        %v6091 = vld [vmem:[#allocation2 + $0x128] sm:$0xff]
        %v6092 = vld [vmem:[#allocation2 + $0x130] sm:$0xff]
        %v6093 = vld [vmem:[#allocation2 + $0x138] sm:$0xff]
        %v6094 = vld [vmem:[#allocation2 + $0x140] sm:$0xff]
        %v6095 = vld [vmem:[#allocation2 + $0x148] sm:$0xff]
        %v6096 = vld [vmem:[#allocation2 + $0x150] sm:$0xff]
        %v6097 = vld [vmem:[#allocation2 + $0x158] sm:$0xff]
        %v6098 = vld [vmem:[#allocation2 + $0x160] sm:$0xff]
        %v6099 = vld [vmem:[#allocation2 + $0x168] sm:$0xff]
        %v6100 = vld [vmem:[#allocation2 + $0x170] sm:$0xff]
        %v6101 = vld [vmem:[#allocation2 + $0x178] sm:$0xff]
        %v6102 = vld [vmem:[#allocation2 + $0x180] sm:$0xff]
        %v6103 = vld [vmem:[#allocation2 + $0x188] sm:$0xff]
        %v6104 = vld [vmem:[#allocation2 + $0x190] sm:$0xff]
        %v6105 = vld [vmem:[#allocation2 + $0x198] sm:$0xff]
        %v6106 = vld [vmem:[#allocation2 + $0x1a0] sm:$0xff]
        %v6107 = vld [vmem:[#allocation2 + $0x1a8] sm:$0xff]
        %v6108 = vld [vmem:[#allocation2 + $0x1b0] sm:$0xff]
        %v6109 = vld [vmem:[#allocation2 + $0x1b8] sm:$0xff]
        %v6110 = vld [vmem:[#allocation2 + $0x1c0] sm:$0xff]
        %v6111 = vld [vmem:[#allocation2 + $0x1c8] sm:$0xff]
        %v6112 = vld [vmem:[#allocation2 + $0x1d0] sm:$0xff]
        %v6113 = vld [vmem:[#allocation2 + $0x1d8] sm:$0xff]
        %v6114 = vld [vmem:[#allocation2 + $0x1e0] sm:$0xff]
        %v6115 = vld [vmem:[#allocation2 + $0x1e8] sm:$0xff]
        %v6116 = vld [vmem:[#allocation2 + $0x1f0] sm:$0xff]
        %v6117 = vld [vmem:[#allocation2 + $0x1f8] sm:$0xff]
        %vm6118 = vcmp.gt.f32.partialorder %v4159, 0.0
        %vm6119 = vcmp.gt.f32.partialorder %v4770, 0.0
        %vm6120 = vcmp.gt.f32.partialorder %v5381, 0.0
        %vm6121 = vcmp.gt.f32.partialorder %v5992, 0.0
        %vm6122 = vcmp.gt.f32.partialorder %v4163, 0.0
        %vm6123 = vcmp.gt.f32.partialorder %v4774, 0.0
        %vm6124 = vcmp.gt.f32.partialorder %v5385, 0.0
        %vm6125 = vcmp.gt.f32.partialorder %v5996, 0.0
        %vm6126 = vcmp.gt.f32.partialorder %v4167, 0.0
        %vm6127 = vcmp.gt.f32.partialorder %v4778, 0.0
        %vm6128 = vcmp.gt.f32.partialorder %v5389, 0.0
        %vm6129 = vcmp.gt.f32.partialorder %v6000, 0.0
        %vm6130 = vcmp.gt.f32.partialorder %v4171, 0.0
        %vm6131 = vcmp.gt.f32.partialorder %v4782, 0.0
        %vm6132 = vcmp.gt.f32.partialorder %v5393, 0.0
        %vm6133 = vcmp.gt.f32.partialorder %v6004, 0.0
        %vm6134 = vcmp.gt.f32.partialorder %v4175, 0.0
        %vm6135 = vcmp.gt.f32.partialorder %v4786, 0.0
        %vm6136 = vcmp.gt.f32.partialorder %v5397, 0.0
        %vm6137 = vcmp.gt.f32.partialorder %v6008, 0.0
        %vm6138 = vcmp.gt.f32.partialorder %v4179, 0.0
        %vm6139 = vcmp.gt.f32.partialorder %v4790, 0.0
        %vm6140 = vcmp.gt.f32.partialorder %v5401, 0.0
        %vm6141 = vcmp.gt.f32.partialorder %v6012, 0.0
        %vm6142 = vcmp.gt.f32.partialorder %v4183, 0.0
        %vm6143 = vcmp.gt.f32.partialorder %v4794, 0.0
        %vm6144 = vcmp.gt.f32.partialorder %v5405, 0.0
        %vm6145 = vcmp.gt.f32.partialorder %v6016, 0.0
        %vm6146 = vcmp.gt.f32.partialorder %v4187, 0.0
        %vm6147 = vcmp.gt.f32.partialorder %v4798, 0.0
        %vm6148 = vcmp.gt.f32.partialorder %v5409, 0.0
        %vm6149 = vcmp.gt.f32.partialorder %v6020, 0.0
        %vm6150 = vcmp.gt.f32.partialorder %v4191, 0.0
        %vm6151 = vcmp.gt.f32.partialorder %v4802, 0.0
        %vm6152 = vcmp.gt.f32.partialorder %v5413, 0.0
        %vm6153 = vcmp.gt.f32.partialorder %v6024, 0.0
        %vm6154 = vcmp.gt.f32.partialorder %v4195, 0.0
        %vm6155 = vcmp.gt.f32.partialorder %v4806, 0.0
        %vm6156 = vcmp.gt.f32.partialorder %v5417, 0.0
        %vm6157 = vcmp.gt.f32.partialorder %v6028, 0.0
        %vm6158 = vcmp.gt.f32.partialorder %v4199, 0.0
        %vm6159 = vcmp.gt.f32.partialorder %v4810, 0.0
        %vm6160 = vcmp.gt.f32.partialorder %v5421, 0.0
        %vm6161 = vcmp.gt.f32.partialorder %v6032, 0.0
        %vm6162 = vcmp.gt.f32.partialorder %v4203, 0.0
        %vm6163 = vcmp.gt.f32.partialorder %v4814, 0.0
        %vm6164 = vcmp.gt.f32.partialorder %v5425, 0.0
        %vm6165 = vcmp.gt.f32.partialorder %v6036, 0.0
        %vm6166 = vcmp.gt.f32.partialorder %v4207, 0.0
        %vm6167 = vcmp.gt.f32.partialorder %v4818, 0.0
        %vm6168 = vcmp.gt.f32.partialorder %v5429, 0.0
        %vm6169 = vcmp.gt.f32.partialorder %v6040, 0.0
        %vm6170 = vcmp.gt.f32.partialorder %v4211, 0.0
        %vm6171 = vcmp.gt.f32.partialorder %v4822, 0.0
        %vm6172 = vcmp.gt.f32.partialorder %v5433, 0.0
        %vm6173 = vcmp.gt.f32.partialorder %v6044, 0.0
        %vm6174 = vcmp.gt.f32.partialorder %v4215, 0.0
        %vm6175 = vcmp.gt.f32.partialorder %v4826, 0.0
        %vm6176 = vcmp.gt.f32.partialorder %v5437, 0.0
        %vm6177 = vcmp.gt.f32.partialorder %v6048, 0.0
        %vm6178 = vcmp.gt.f32.partialorder %v4219, 0.0
        %vm6179 = vcmp.gt.f32.partialorder %v4830, 0.0
        %vm6180 = vcmp.gt.f32.partialorder %v5441, 0.0
        %vm6181 = vcmp.gt.f32.partialorder %v6052, 0.0
        %v6182 = vsel %vm6118, 1, 0
        %v6183 = vsel %vm6119, 1, 0
        %v6184 = vsel %vm6120, 1, 0
        %v6185 = vsel %vm6121, 1, 0
        %v6186 = vsel %vm6122, 1, 0
        %v6187 = vsel %vm6123, 1, 0
        %v6188 = vsel %vm6124, 1, 0
        %v6189 = vsel %vm6125, 1, 0
        %v6190 = vsel %vm6126, 1, 0
        %v6191 = vsel %vm6127, 1, 0
        %v6192 = vsel %vm6128, 1, 0
        %v6193 = vsel %vm6129, 1, 0
        %v6194 = vsel %vm6130, 1, 0
        %v6195 = vsel %vm6131, 1, 0
        %v6196 = vsel %vm6132, 1, 0
        %v6197 = vsel %vm6133, 1, 0
        %v6198 = vsel %vm6134, 1, 0
        %v6199 = vsel %vm6135, 1, 0
        %v6200 = vsel %vm6136, 1, 0
        %v6201 = vsel %vm6137, 1, 0
        %v6202 = vsel %vm6138, 1, 0
        %v6203 = vsel %vm6139, 1, 0
        %v6204 = vsel %vm6140, 1, 0
        %v6205 = vsel %vm6141, 1, 0
        %v6206 = vsel %vm6142, 1, 0
        %v6207 = vsel %vm6143, 1, 0
        %v6208 = vsel %vm6144, 1, 0
        %v6209 = vsel %vm6145, 1, 0
        %v6210 = vsel %vm6146, 1, 0
        %v6211 = vsel %vm6147, 1, 0
        %v6212 = vsel %vm6148, 1, 0
        %v6213 = vsel %vm6149, 1, 0
        %v6214 = vsel %vm6150, 1, 0
        %v6215 = vsel %vm6151, 1, 0
        %v6216 = vsel %vm6152, 1, 0
        %v6217 = vsel %vm6153, 1, 0
        %v6218 = vsel %vm6154, 1, 0
        %v6219 = vsel %vm6155, 1, 0
        %v6220 = vsel %vm6156, 1, 0
        %v6221 = vsel %vm6157, 1, 0
        %v6222 = vsel %vm6158, 1, 0
        %v6223 = vsel %vm6159, 1, 0
        %v6224 = vsel %vm6160, 1, 0
        %v6225 = vsel %vm6161, 1, 0
        %v6226 = vsel %vm6162, 1, 0
        %v6227 = vsel %vm6163, 1, 0
        %v6228 = vsel %vm6164, 1, 0
        %v6229 = vsel %vm6165, 1, 0
        %v6230 = vsel %vm6166, 1, 0
        %v6231 = vsel %vm6167, 1, 0
        %v6232 = vsel %vm6168, 1, 0
        %v6233 = vsel %vm6169, 1, 0
        %v6234 = vsel %vm6170, 1, 0
        %v6235 = vsel %vm6171, 1, 0
        %v6236 = vsel %vm6172, 1, 0
        %v6237 = vsel %vm6173, 1, 0
        %v6238 = vsel %vm6174, 1, 0
        %v6239 = vsel %vm6175, 1, 0
        %v6240 = vsel %vm6176, 1, 0
        %v6241 = vsel %vm6177, 1, 0
        %v6242 = vsel %vm6178, 1, 0
        %v6243 = vsel %vm6179, 1, 0
        %v6244 = vsel %vm6180, 1, 0
        %v6245 = vsel %vm6181, 1, 0
        %v6246 = vcvt.s32.f32 %v6182
        %v6247 = vcvt.s32.f32 %v6183
        %v6248 = vcvt.s32.f32 %v6184
        %v6249 = vcvt.s32.f32 %v6185
        %v6250 = vcvt.s32.f32 %v6186
        %v6251 = vcvt.s32.f32 %v6187
        %v6252 = vcvt.s32.f32 %v6188
        %v6253 = vcvt.s32.f32 %v6189
        %v6254 = vcvt.s32.f32 %v6190
        %v6255 = vcvt.s32.f32 %v6191
        %v6256 = vcvt.s32.f32 %v6192
        %v6257 = vcvt.s32.f32 %v6193
        %v6258 = vcvt.s32.f32 %v6194
        %v6259 = vcvt.s32.f32 %v6195
        %v6260 = vcvt.s32.f32 %v6196
        %v6261 = vcvt.s32.f32 %v6197
        %v6262 = vcvt.s32.f32 %v6198
        %v6263 = vcvt.s32.f32 %v6199
        %v6264 = vcvt.s32.f32 %v6200
        %v6265 = vcvt.s32.f32 %v6201
        %v6266 = vcvt.s32.f32 %v6202
        %v6267 = vcvt.s32.f32 %v6203
        %v6268 = vcvt.s32.f32 %v6204
        %v6269 = vcvt.s32.f32 %v6205
        %v6270 = vcvt.s32.f32 %v6206
        %v6271 = vcvt.s32.f32 %v6207
        %v6272 = vcvt.s32.f32 %v6208
        %v6273 = vcvt.s32.f32 %v6209
        %v6274 = vcvt.s32.f32 %v6210
        %v6275 = vcvt.s32.f32 %v6211
        %v6276 = vcvt.s32.f32 %v6212
        %v6277 = vcvt.s32.f32 %v6213
        %v6278 = vcvt.s32.f32 %v6214
        %v6279 = vcvt.s32.f32 %v6215
        %v6280 = vcvt.s32.f32 %v6216
        %v6281 = vcvt.s32.f32 %v6217
        %v6282 = vcvt.s32.f32 %v6218
        %v6283 = vcvt.s32.f32 %v6219
        %v6284 = vcvt.s32.f32 %v6220
        %v6285 = vcvt.s32.f32 %v6221
        %v6286 = vcvt.s32.f32 %v6222
        %v6287 = vcvt.s32.f32 %v6223
        %v6288 = vcvt.s32.f32 %v6224
        %v6289 = vcvt.s32.f32 %v6225
        %v6290 = vcvt.s32.f32 %v6226
        %v6291 = vcvt.s32.f32 %v6227
        %v6292 = vcvt.s32.f32 %v6228
        %v6293 = vcvt.s32.f32 %v6229
        %v6294 = vcvt.s32.f32 %v6230
        %v6295 = vcvt.s32.f32 %v6231
        %v6296 = vcvt.s32.f32 %v6232
        %v6297 = vcvt.s32.f32 %v6233
        %v6298 = vcvt.s32.f32 %v6234
        %v6299 = vcvt.s32.f32 %v6235
        %v6300 = vcvt.s32.f32 %v6236
        %v6301 = vcvt.s32.f32 %v6237
        %v6302 = vcvt.s32.f32 %v6238
        %v6303 = vcvt.s32.f32 %v6239
        %v6304 = vcvt.s32.f32 %v6240
        %v6305 = vcvt.s32.f32 %v6241
        %v6306 = vcvt.s32.f32 %v6242
        %v6307 = vcvt.s32.f32 %v6243
        %v6308 = vcvt.s32.f32 %v6244
        %v6309 = vcvt.s32.f32 %v6245
        %v6310 = vadd.f32 %v6054, %v6246
        %v6311 = vadd.f32 %v6055, %v6247
        %v6312 = vadd.f32 %v6056, %v6248
        %v6313 = vadd.f32 %v6057, %v6249
        %v6314 = vadd.f32 %v6058, %v6250
        %v6315 = vadd.f32 %v6059, %v6251
        %v6316 = vadd.f32 %v6060, %v6252
        %v6317 = vadd.f32 %v6061, %v6253
        %v6318 = vadd.f32 %v6062, %v6254
        %v6319 = vadd.f32 %v6063, %v6255
        %v6320 = vadd.f32 %v6064, %v6256
        %v6321 = vadd.f32 %v6065, %v6257
        %v6322 = vadd.f32 %v6066, %v6258
        %v6323 = vadd.f32 %v6067, %v6259
        %v6324 = vadd.f32 %v6068, %v6260
        %v6325 = vadd.f32 %v6069, %v6261
        %v6326 = vadd.f32 %v6070, %v6262
        %v6327 = vadd.f32 %v6071, %v6263
        %v6328 = vadd.f32 %v6072, %v6264
        %v6329 = vadd.f32 %v6073, %v6265
        %v6330 = vadd.f32 %v6074, %v6266
        %v6331 = vadd.f32 %v6075, %v6267
        %v6332 = vadd.f32 %v6076, %v6268
        %v6333 = vadd.f32 %v6077, %v6269
        %v6334 = vadd.f32 %v6078, %v6270
        %v6335 = vadd.f32 %v6079, %v6271
        %v6336 = vadd.f32 %v6080, %v6272
        %v6337 = vadd.f32 %v6081, %v6273
        %v6338 = vadd.f32 %v6082, %v6274
        %v6339 = vadd.f32 %v6083, %v6275
        %v6340 = vadd.f32 %v6084, %v6276
        %v6341 = vadd.f32 %v6085, %v6277
        %v6342 = vadd.f32 %v6086, %v6278
        %v6343 = vadd.f32 %v6087, %v6279
        %v6344 = vadd.f32 %v6088, %v6280
        %v6345 = vadd.f32 %v6089, %v6281
        %v6346 = vadd.f32 %v6090, %v6282
        %v6347 = vadd.f32 %v6091, %v6283
        %v6348 = vadd.f32 %v6092, %v6284
        %v6349 = vadd.f32 %v6093, %v6285
        %v6350 = vadd.f32 %v6094, %v6286
        %v6351 = vadd.f32 %v6095, %v6287
        %v6352 = vadd.f32 %v6096, %v6288
        %v6353 = vadd.f32 %v6097, %v6289
        %v6354 = vadd.f32 %v6098, %v6290
        %v6355 = vadd.f32 %v6099, %v6291
        %v6356 = vadd.f32 %v6100, %v6292
        %v6357 = vadd.f32 %v6101, %v6293
        %v6358 = vadd.f32 %v6102, %v6294
        %v6359 = vadd.f32 %v6103, %v6295
        %v6360 = vadd.f32 %v6104, %v6296
        %v6361 = vadd.f32 %v6105, %v6297
        %v6362 = vadd.f32 %v6106, %v6298
        %v6363 = vadd.f32 %v6107, %v6299
        %v6364 = vadd.f32 %v6108, %v6300
        %v6365 = vadd.f32 %v6109, %v6301
        %v6366 = vadd.f32 %v6110, %v6302
        %v6367 = vadd.f32 %v6111, %v6303
        %v6368 = vadd.f32 %v6112, %v6304
        %v6369 = vadd.f32 %v6113, %v6305
        %v6370 = vadd.f32 %v6114, %v6306
        %v6371 = vadd.f32 %v6115, %v6307
        %v6372 = vadd.f32 %v6116, %v6308
        %v6373 = vadd.f32 %v6117, %v6309
        %6374 = vst [vmem:[#allocation2] sm:$0xff] %v6310
        %6375 = vst [vmem:[#allocation2 + $0x8] sm:$0xff] %v6311
        %6376 = vst [vmem:[#allocation2 + $0x10] sm:$0xff] %v6312
        %6377 = vst [vmem:[#allocation2 + $0x18] sm:$0xff] %v6313
        %6378 = vst [vmem:[#allocation2 + $0x20] sm:$0xff] %v6314
        %6379 = vst [vmem:[#allocation2 + $0x28] sm:$0xff] %v6315
        %6380 = vst [vmem:[#allocation2 + $0x30] sm:$0xff] %v6316
        %6381 = vst [vmem:[#allocation2 + $0x38] sm:$0xff] %v6317
        %6382 = vst [vmem:[#allocation2 + $0x40] sm:$0xff] %v6318
        %6383 = vst [vmem:[#allocation2 + $0x48] sm:$0xff] %v6319
        %6384 = vst [vmem:[#allocation2 + $0x50] sm:$0xff] %v6320
        %6385 = vst [vmem:[#allocation2 + $0x58] sm:$0xff] %v6321
        %6386 = vst [vmem:[#allocation2 + $0x60] sm:$0xff] %v6322
        %6387 = vst [vmem:[#allocation2 + $0x68] sm:$0xff] %v6323
        %6388 = vst [vmem:[#allocation2 + $0x70] sm:$0xff] %v6324
        %6389 = vst [vmem:[#allocation2 + $0x78] sm:$0xff] %v6325
        %6390 = vst [vmem:[#allocation2 + $0x80] sm:$0xff] %v6326
        %6391 = vst [vmem:[#allocation2 + $0x88] sm:$0xff] %v6327
        %6392 = vst [vmem:[#allocation2 + $0x90] sm:$0xff] %v6328
        %6393 = vst [vmem:[#allocation2 + $0x98] sm:$0xff] %v6329
        %6394 = vst [vmem:[#allocation2 + $0xa0] sm:$0xff] %v6330
        %6395 = vst [vmem:[#allocation2 + $0xa8] sm:$0xff] %v6331
        %6396 = vst [vmem:[#allocation2 + $0xb0] sm:$0xff] %v6332
        %6397 = vst [vmem:[#allocation2 + $0xb8] sm:$0xff] %v6333
        %6398 = vst [vmem:[#allocation2 + $0xc0] sm:$0xff] %v6334
        %6399 = vst [vmem:[#allocation2 + $0xc8] sm:$0xff] %v6335
        %6400 = vst [vmem:[#allocation2 + $0xd0] sm:$0xff] %v6336
        %6401 = vst [vmem:[#allocation2 + $0xd8] sm:$0xff] %v6337
        %6402 = vst [vmem:[#allocation2 + $0xe0] sm:$0xff] %v6338
        %6403 = vst [vmem:[#allocation2 + $0xe8] sm:$0xff] %v6339
        %6404 = vst [vmem:[#allocation2 + $0xf0] sm:$0xff] %v6340
        %6405 = vst [vmem:[#allocation2 + $0xf8] sm:$0xff] %v6341
        %6406 = vst [vmem:[#allocation2 + $0x100] sm:$0xff] %v6342
        %6407 = vst [vmem:[#allocation2 + $0x108] sm:$0xff] %v6343
        %6408 = vst [vmem:[#allocation2 + $0x110] sm:$0xff] %v6344
        %6409 = vst [vmem:[#allocation2 + $0x118] sm:$0xff] %v6345
        %6410 = vst [vmem:[#allocation2 + $0x120] sm:$0xff] %v6346
        %6411 = vst [vmem:[#allocation2 + $0x128] sm:$0xff] %v6347
        %6412 = vst [vmem:[#allocation2 + $0x130] sm:$0xff] %v6348
        %6413 = vst [vmem:[#allocation2 + $0x138] sm:$0xff] %v6349
        %6414 = vst [vmem:[#allocation2 + $0x140] sm:$0xff] %v6350
        %6415 = vst [vmem:[#allocation2 + $0x148] sm:$0xff] %v6351
        %6416 = vst [vmem:[#allocation2 + $0x150] sm:$0xff] %v6352
        %6417 = vst [vmem:[#allocation2 + $0x158] sm:$0xff] %v6353
        %6418 = vst [vmem:[#allocation2 + $0x160] sm:$0xff] %v6354
        %6419 = vst [vmem:[#allocation2 + $0x168] sm:$0xff] %v6355
        %6420 = vst [vmem:[#allocation2 + $0x170] sm:$0xff] %v6356
        %6421 = vst [vmem:[#allocation2 + $0x178] sm:$0xff] %v6357
        %6422 = vst [vmem:[#allocation2 + $0x180] sm:$0xff] %v6358
        %6423 = vst [vmem:[#allocation2 + $0x188] sm:$0xff] %v6359
        %6424 = vst [vmem:[#allocation2 + $0x190] sm:$0xff] %v6360
        %6425 = vst [vmem:[#allocation2 + $0x198] sm:$0xff] %v6361
        %6426 = vst [vmem:[#allocation2 + $0x1a0] sm:$0xff] %v6362
        %6427 = vst [vmem:[#allocation2 + $0x1a8] sm:$0xff] %v6363
        %6428 = vst [vmem:[#allocation2 + $0x1b0] sm:$0xff] %v6364
        %6429 = vst [vmem:[#allocation2 + $0x1b8] sm:$0xff] %v6365
        %6430 = vst [vmem:[#allocation2 + $0x1c0] sm:$0xff] %v6366
        %6431 = vst [vmem:[#allocation2 + $0x1c8] sm:$0xff] %v6367
        %6432 = vst [vmem:[#allocation2 + $0x1d0] sm:$0xff] %v6368
        %6433 = vst [vmem:[#allocation2 + $0x1d8] sm:$0xff] %v6369
        %6434 = vst [vmem:[#allocation2 + $0x1e0] sm:$0xff] %v6370
        %6435 = vst [vmem:[#allocation2 + $0x1e8] sm:$0xff] %v6371
        %6436 = vst [vmem:[#allocation2 + $0x1f0] sm:$0xff] %v6372
        %6437 = vst [vmem:[#allocation2 + $0x1f8] sm:$0xff] %v6373
        %p6438 = scmp.eq.s32.totalorder %s23, 1
        // Predicated region
        $region41: #{_hough_voting_impl.1} parent=35 // pred_check
          %p6439 = pneg %p6438
        $region42: #{_hough_voting_impl.1} parent=35 // pred_check_branch
          %6441 = sbr.rel (%p6439) target = $region44
        $region43: #{_hough_voting_impl.1} parent=35 // pred_region
          %v6442 = vld [vmem:[#allocation2] sm:$0xff]
          %v6443 = vld [vmem:[#allocation2 + $0x8] sm:$0xff]
          %v6444 = vld [vmem:[#allocation2 + $0x10] sm:$0xff]
          %v6445 = vld [vmem:[#allocation2 + $0x18] sm:$0xff]
          %v6446 = vld [vmem:[#allocation2 + $0x20] sm:$0xff]
          %v6447 = vld [vmem:[#allocation2 + $0x28] sm:$0xff]
          %v6448 = vld [vmem:[#allocation2 + $0x30] sm:$0xff]
          %v6449 = vld [vmem:[#allocation2 + $0x38] sm:$0xff]
          %v6450 = vld [vmem:[#allocation2 + $0x40] sm:$0xff]
          %v6451 = vld [vmem:[#allocation2 + $0x48] sm:$0xff]
          %v6452 = vld [vmem:[#allocation2 + $0x50] sm:$0xff]
          %v6453 = vld [vmem:[#allocation2 + $0x58] sm:$0xff]
          %v6454 = vld [vmem:[#allocation2 + $0x60] sm:$0xff]
          %v6455 = vld [vmem:[#allocation2 + $0x68] sm:$0xff]
          %v6456 = vld [vmem:[#allocation2 + $0x70] sm:$0xff]
          %v6457 = vld [vmem:[#allocation2 + $0x78] sm:$0xff]
          %v6458 = vld [vmem:[#allocation2 + $0x80] sm:$0xff]
          %v6459 = vld [vmem:[#allocation2 + $0x88] sm:$0xff]
          %v6460 = vld [vmem:[#allocation2 + $0x90] sm:$0xff]
          %v6461 = vld [vmem:[#allocation2 + $0x98] sm:$0xff]
          %v6462 = vld [vmem:[#allocation2 + $0xa0] sm:$0xff]
          %v6463 = vld [vmem:[#allocation2 + $0xa8] sm:$0xff]
          %v6464 = vld [vmem:[#allocation2 + $0xb0] sm:$0xff]
          %v6465 = vld [vmem:[#allocation2 + $0xb8] sm:$0xff]
          %v6466 = vld [vmem:[#allocation2 + $0xc0] sm:$0xff]
          %v6467 = vld [vmem:[#allocation2 + $0xc8] sm:$0xff]
          %v6468 = vld [vmem:[#allocation2 + $0xd0] sm:$0xff]
          %v6469 = vld [vmem:[#allocation2 + $0xd8] sm:$0xff]
          %v6470 = vld [vmem:[#allocation2 + $0xe0] sm:$0xff]
          %v6471 = vld [vmem:[#allocation2 + $0xe8] sm:$0xff]
          %v6472 = vld [vmem:[#allocation2 + $0xf0] sm:$0xff]
          %v6473 = vld [vmem:[#allocation2 + $0xf8] sm:$0xff]
          %v6474 = vld [vmem:[#allocation2 + $0x100] sm:$0xff]
          %v6475 = vld [vmem:[#allocation2 + $0x108] sm:$0xff]
          %v6476 = vld [vmem:[#allocation2 + $0x110] sm:$0xff]
          %v6477 = vld [vmem:[#allocation2 + $0x118] sm:$0xff]
          %v6478 = vld [vmem:[#allocation2 + $0x120] sm:$0xff]
          %v6479 = vld [vmem:[#allocation2 + $0x128] sm:$0xff]
          %v6480 = vld [vmem:[#allocation2 + $0x130] sm:$0xff]
          %v6481 = vld [vmem:[#allocation2 + $0x138] sm:$0xff]
          %v6482 = vld [vmem:[#allocation2 + $0x140] sm:$0xff]
          %v6483 = vld [vmem:[#allocation2 + $0x148] sm:$0xff]
          %v6484 = vld [vmem:[#allocation2 + $0x150] sm:$0xff]
          %v6485 = vld [vmem:[#allocation2 + $0x158] sm:$0xff]
          %v6486 = vld [vmem:[#allocation2 + $0x160] sm:$0xff]
          %v6487 = vld [vmem:[#allocation2 + $0x168] sm:$0xff]
          %v6488 = vld [vmem:[#allocation2 + $0x170] sm:$0xff]
          %v6489 = vld [vmem:[#allocation2 + $0x178] sm:$0xff]
          %v6490 = vld [vmem:[#allocation2 + $0x180] sm:$0xff]
          %v6491 = vld [vmem:[#allocation2 + $0x188] sm:$0xff]
          %v6492 = vld [vmem:[#allocation2 + $0x190] sm:$0xff]
          %v6493 = vld [vmem:[#allocation2 + $0x198] sm:$0xff]
          %v6494 = vld [vmem:[#allocation2 + $0x1a0] sm:$0xff]
          %v6495 = vld [vmem:[#allocation2 + $0x1a8] sm:$0xff]
          %v6496 = vld [vmem:[#allocation2 + $0x1b0] sm:$0xff]
          %v6497 = vld [vmem:[#allocation2 + $0x1b8] sm:$0xff]
          %v6498 = vld [vmem:[#allocation2 + $0x1c0] sm:$0xff]
          %v6499 = vld [vmem:[#allocation2 + $0x1c8] sm:$0xff]
          %v6500 = vld [vmem:[#allocation2 + $0x1d0] sm:$0xff]
          %v6501 = vld [vmem:[#allocation2 + $0x1d8] sm:$0xff]
          %v6502 = vld [vmem:[#allocation2 + $0x1e0] sm:$0xff]
          %v6503 = vld [vmem:[#allocation2 + $0x1e8] sm:$0xff]
          %v6504 = vld [vmem:[#allocation2 + $0x1f0] sm:$0xff]
          %v6505 = vld [vmem:[#allocation2 + $0x1f8] sm:$0xff]
          %v6506 = vadd.f32 %v6442, %v6443
          %v6507 = vadd.f32 %v6506, %v6444
          %v6508 = vadd.f32 %v6507, %v6445
          %6509 = vadd.xlane.f32.xlu0 %v6508
          %v6510 = vpop.xlane.xlu0 %6509
          %v6511 = vadd.f32 %v6446, %v6447
          %v6512 = vadd.f32 %v6511, %v6448
          %v6513 = vadd.f32 %v6512, %v6449
          %6514 = vadd.xlane.f32.xlu0 %v6513
          %v6515 = vpop.xlane.xlu0 %6514
          %v6516 = vadd.f32 %v6450, %v6451
          %v6517 = vadd.f32 %v6516, %v6452
          %v6518 = vadd.f32 %v6517, %v6453
          %6519 = vadd.xlane.f32.xlu0 %v6518
          %v6520 = vpop.xlane.xlu0 %6519
          %v6521 = vadd.f32 %v6454, %v6455
          %v6522 = vadd.f32 %v6521, %v6456
          %v6523 = vadd.f32 %v6522, %v6457
          %6524 = vadd.xlane.f32.xlu0 %v6523
          %v6525 = vpop.xlane.xlu0 %6524
          %v6526 = vadd.f32 %v6458, %v6459
          %v6527 = vadd.f32 %v6526, %v6460
          %v6528 = vadd.f32 %v6527, %v6461
          %6529 = vadd.xlane.f32.xlu0 %v6528
          %v6530 = vpop.xlane.xlu0 %6529
          %v6531 = vadd.f32 %v6462, %v6463
          %v6532 = vadd.f32 %v6531, %v6464
          %v6533 = vadd.f32 %v6532, %v6465
          %6534 = vadd.xlane.f32.xlu0 %v6533
          %v6535 = vpop.xlane.xlu0 %6534
          %v6536 = vadd.f32 %v6466, %v6467
          %v6537 = vadd.f32 %v6536, %v6468
          %v6538 = vadd.f32 %v6537, %v6469
          %6539 = vadd.xlane.f32.xlu0 %v6538
          %v6540 = vpop.xlane.xlu0 %6539
          %v6541 = vadd.f32 %v6470, %v6471
          %v6542 = vadd.f32 %v6541, %v6472
          %v6543 = vadd.f32 %v6542, %v6473
          %6544 = vadd.xlane.f32.xlu0 %v6543
          %v6545 = vpop.xlane.xlu0 %6544
          %v6546 = vadd.f32 %v6474, %v6475
          %v6547 = vadd.f32 %v6546, %v6476
          %v6548 = vadd.f32 %v6547, %v6477
          %6549 = vadd.xlane.f32.xlu0 %v6548
          %v6550 = vpop.xlane.xlu0 %6549
          %v6551 = vadd.f32 %v6478, %v6479
          %v6552 = vadd.f32 %v6551, %v6480
          %v6553 = vadd.f32 %v6552, %v6481
          %6554 = vadd.xlane.f32.xlu0 %v6553
          %v6555 = vpop.xlane.xlu0 %6554
          %v6556 = vadd.f32 %v6482, %v6483
          %v6557 = vadd.f32 %v6556, %v6484
          %v6558 = vadd.f32 %v6557, %v6485
          %6559 = vadd.xlane.f32.xlu0 %v6558
          %v6560 = vpop.xlane.xlu0 %6559
          %v6561 = vadd.f32 %v6486, %v6487
          %v6562 = vadd.f32 %v6561, %v6488
          %v6563 = vadd.f32 %v6562, %v6489
          %6564 = vadd.xlane.f32.xlu0 %v6563
          %v6565 = vpop.xlane.xlu0 %6564
          %v6566 = vadd.f32 %v6490, %v6491
          %v6567 = vadd.f32 %v6566, %v6492
          %v6568 = vadd.f32 %v6567, %v6493
          %6569 = vadd.xlane.f32.xlu0 %v6568
          %v6570 = vpop.xlane.xlu0 %6569
          %v6571 = vadd.f32 %v6494, %v6495
          %v6572 = vadd.f32 %v6571, %v6496
          %v6573 = vadd.f32 %v6572, %v6497
          %6574 = vadd.xlane.f32.xlu0 %v6573
          %v6575 = vpop.xlane.xlu0 %6574
          %v6576 = vadd.f32 %v6498, %v6499
          %v6577 = vadd.f32 %v6576, %v6500
          %v6578 = vadd.f32 %v6577, %v6501
          %6579 = vadd.xlane.f32.xlu0 %v6578
          %v6580 = vpop.xlane.xlu0 %6579
          %v6581 = vadd.f32 %v6502, %v6503
          %v6582 = vadd.f32 %v6581, %v6504
          %v6583 = vadd.f32 %v6582, %v6505
          %6584 = vadd.xlane.f32.xlu0 %v6583
          %v6585 = vpop.xlane.xlu0 %6584
          %v6586 = vld [vmem:[%s330] sm:$0xff]
          %v6587 = vld [vmem:[%s330 + $0x8] sm:$0xff]
          %v6588 = vld [vmem:[%s330 + $0x10] sm:$0xff]
          %v6589 = vld [vmem:[%s330 + $0x18] sm:$0xff]
          %v6590 = vld [vmem:[%s330 + $0x20] sm:$0xff]
          %v6591 = vld [vmem:[%s330 + $0x28] sm:$0xff]
          %v6592 = vld [vmem:[%s330 + $0x30] sm:$0xff]
          %v6593 = vld [vmem:[%s330 + $0x38] sm:$0xff]
          %v6594 = vld [vmem:[%s330 + $0x40] sm:$0xff]
          %v6595 = vld [vmem:[%s330 + $0x48] sm:$0xff]
          %v6596 = vld [vmem:[%s330 + $0x50] sm:$0xff]
          %v6597 = vld [vmem:[%s330 + $0x58] sm:$0xff]
          %v6598 = vld [vmem:[%s330 + $0x60] sm:$0xff]
          %v6599 = vld [vmem:[%s330 + $0x68] sm:$0xff]
          %v6600 = vld [vmem:[%s330 + $0x70] sm:$0xff]
          %v6601 = vld [vmem:[%s330 + $0x78] sm:$0xff]
          %v6602 = vmul.f32 %v6586, %v6510
          %v6603 = vmul.f32 %v6587, %v6515
          %v6604 = vmul.f32 %v6588, %v6520
          %v6605 = vmul.f32 %v6589, %v6525
          %v6606 = vmul.f32 %v6590, %v6530
          %v6607 = vmul.f32 %v6591, %v6535
          %v6608 = vmul.f32 %v6592, %v6540
          %v6609 = vmul.f32 %v6593, %v6545
          %v6610 = vmul.f32 %v6594, %v6550
          %v6611 = vmul.f32 %v6595, %v6555
          %v6612 = vmul.f32 %v6596, %v6560
          %v6613 = vmul.f32 %v6597, %v6565
          %v6614 = vmul.f32 %v6598, %v6570
          %v6615 = vmul.f32 %v6599, %v6575
          %v6616 = vmul.f32 %v6600, %v6580
          %v6617 = vmul.f32 %v6601, %v6585
          %vm6618 = vcmask 7168
          %v6619 = vsel %vm6618, %v6602, 0.0
          %v6620 = vsel %vm6618, %v6603, 0.0
          %v6621 = vadd.f32 %v6619, %v6620
          %v6622 = vsel %vm6618, %v6604, 0.0
          %v6623 = vadd.f32 %v6621, %v6622
          %v6624 = vsel %vm6618, %v6605, 0.0
          %v6625 = vadd.f32 %v6623, %v6624
          %v6626 = vsel %vm6618, %v6606, 0.0
          %v6627 = vadd.f32 %v6625, %v6626
          %v6628 = vsel %vm6618, %v6607, 0.0
          %v6629 = vadd.f32 %v6627, %v6628
          %v6630 = vsel %vm6618, %v6608, 0.0
          %v6631 = vadd.f32 %v6629, %v6630
          %v6632 = vsel %vm6618, %v6609, 0.0
          %v6633 = vadd.f32 %v6631, %v6632
          %v6634 = vsel %vm6618, %v6610, 0.0
          %v6635 = vadd.f32 %v6633, %v6634
          %v6636 = vsel %vm6618, %v6611, 0.0
          %v6637 = vadd.f32 %v6635, %v6636
          %v6638 = vsel %vm6618, %v6612, 0.0
          %v6639 = vadd.f32 %v6637, %v6638
          %v6640 = vsel %vm6618, %v6613, 0.0
          %v6641 = vadd.f32 %v6639, %v6640
          %v6642 = vsel %vm6618, %v6614, 0.0
          %v6643 = vadd.f32 %v6641, %v6642
          %v6644 = vsel %vm6618, %v6615, 0.0
          %v6645 = vadd.f32 %v6643, %v6644
          %v6646 = vsel %vm6618, %v6616, 0.0
          %v6647 = vadd.f32 %v6645, %v6646
          %v6648 = vsel %vm6618, %v6617, 0.0
          %v6649 = vadd.f32 %v6647, %v6648
          %v6650 = vrot.slane %v6649, 4
          %v6651 = vadd.f32 %v6649, %v6650
          %v6652 = vrot.slane %v6651, 2
          %v6653 = vadd.f32 %v6651, %v6652
          %v6654 = vrot.slane %v6653, 1
          %v6655 = vadd.f32 %v6653, %v6654
          %v6656 = vmax.f32 %v6655, 1.0
          %v6657 = vrcp.pop %v6656
          %v6658 = vmul.f32 %v6656, %v6657
          %v6659 = vsub.f32 1.0, %v6658
          %v6660 = vmul.f32 %v6657, %v6659
          %v6661 = vadd.f32 %v6657, %v6660
          %vm6662 = vweird.f32 %v6656
          %vm6663 = vweird.f32 %v6657
          %vm6664 = vmor %vm6662, %vm6663
          %v6665 = vsel %vm6664, %v6657, %v6661
          %v6666 = vand.u32 2147483647, %v6656
          %vm6667 = vcmp.eq.f32.partialorder %v6666, 8.507059e+37
          %v6668 = vand.u32 %v6656, 2147483648
          %v6669 = vor.u32 1.1754944e-38, %v6668
          %v6670 = vsel %vm6667, %v6669, %v6665
          %v6671 = vmul.f32 %v6602, %v6670
          %v6672 = vmul.f32 %v6603, %v6670
          %v6673 = vmul.f32 %v6604, %v6670
          %v6674 = vmul.f32 %v6605, %v6670
          %v6675 = vmul.f32 %v6606, %v6670
          %v6676 = vmul.f32 %v6607, %v6670
          %v6677 = vmul.f32 %v6608, %v6670
          %v6678 = vmul.f32 %v6609, %v6670
          %v6679 = vmul.f32 %v6610, %v6670
          %v6680 = vmul.f32 %v6611, %v6670
          %v6681 = vmul.f32 %v6612, %v6670
          %v6682 = vmul.f32 %v6613, %v6670
          %v6683 = vmul.f32 %v6614, %v6670
          %v6684 = vmul.f32 %v6615, %v6670
          %v6685 = vmul.f32 %v6616, %v6670
          %v6686 = vmul.f32 %v6617, %v6670
          %6703 = vrot.lane.b32.xlu0 %v6671, 2
          %v6704 = vpop.permute.xlu0 %6703
          %6705 = vrot.lane.b32.xlu0 %v6672, 2
          %v6706 = vpop.permute.xlu0 %6705
          %6707 = vrot.lane.b32.xlu0 %v6673, 2
          %v6708 = vpop.permute.xlu0 %6707
          %6709 = vrot.lane.b32.xlu0 %v6674, 2
          %v6710 = vpop.permute.xlu0 %6709
          %6711 = vrot.lane.b32.xlu0 %v6675, 2
          %v6712 = vpop.permute.xlu0 %6711
          %6713 = vrot.lane.b32.xlu0 %v6676, 2
          %v6714 = vpop.permute.xlu0 %6713
          %6715 = vrot.lane.b32.xlu0 %v6677, 2
          %v6716 = vpop.permute.xlu0 %6715
          %6717 = vrot.lane.b32.xlu0 %v6678, 2
          %v6718 = vpop.permute.xlu0 %6717
          %6719 = vrot.lane.b32.xlu0 %v6679, 2
          %v6720 = vpop.permute.xlu0 %6719
          %6721 = vrot.lane.b32.xlu0 %v6680, 2
          %v6722 = vpop.permute.xlu0 %6721
          %6723 = vrot.lane.b32.xlu0 %v6681, 2
          %v6724 = vpop.permute.xlu0 %6723
          %6725 = vrot.lane.b32.xlu0 %v6682, 2
          %v6726 = vpop.permute.xlu0 %6725
          %6727 = vrot.lane.b32.xlu0 %v6683, 2
          %v6728 = vpop.permute.xlu0 %6727
          %6729 = vrot.lane.b32.xlu0 %v6684, 2
          %v6730 = vpop.permute.xlu0 %6729
          %6731 = vrot.lane.b32.xlu0 %v6685, 2
          %v6732 = vpop.permute.xlu0 %6731
          %6733 = vrot.lane.b32.xlu0 %v6686, 2
          %v6734 = vpop.permute.xlu0 %6733
          %v6751 = vmul.f32 %v6586, %v6704
          %v6752 = vmul.f32 %v6587, %v6706
          %v6753 = vmul.f32 %v6588, %v6708
          %v6754 = vmul.f32 %v6589, %v6710
          %v6755 = vmul.f32 %v6590, %v6712
          %v6756 = vmul.f32 %v6591, %v6714
          %v6757 = vmul.f32 %v6592, %v6716
          %v6758 = vmul.f32 %v6593, %v6718
          %v6759 = vmul.f32 %v6594, %v6720
          %v6760 = vmul.f32 %v6595, %v6722
          %v6761 = vmul.f32 %v6596, %v6724
          %v6762 = vmul.f32 %v6597, %v6726
          %v6763 = vmul.f32 %v6598, %v6728
          %v6764 = vmul.f32 %v6599, %v6730
          %v6765 = vmul.f32 %v6600, %v6732
          %v6766 = vmul.f32 %v6601, %v6734
          %vm6767 = vcmask 23568
          %v6768 = vsel %vm6767, %v6751, 0.0
          %v6769 = vsel %vm6767, %v6752, 0.0
          %v6770 = vadd.f32 %v6768, %v6769
          %v6771 = vsel %vm6767, %v6753, 0.0
          %v6772 = vadd.f32 %v6770, %v6771
          %v6773 = vsel %vm6767, %v6754, 0.0
          %v6774 = vadd.f32 %v6772, %v6773
          %v6775 = vsel %vm6767, %v6755, 0.0
          %v6776 = vadd.f32 %v6774, %v6775
          %v6777 = vsel %vm6767, %v6756, 0.0
          %v6778 = vadd.f32 %v6776, %v6777
          %v6779 = vsel %vm6767, %v6757, 0.0
          %v6780 = vadd.f32 %v6778, %v6779
          %v6781 = vsel %vm6767, %v6758, 0.0
          %v6782 = vadd.f32 %v6780, %v6781
          %v6783 = vsel %vm6767, %v6759, 0.0
          %v6784 = vadd.f32 %v6782, %v6783
          %v6785 = vsel %vm6767, %v6760, 0.0
          %v6786 = vadd.f32 %v6784, %v6785
          %v6787 = vsel %vm6767, %v6761, 0.0
          %v6788 = vadd.f32 %v6786, %v6787
          %v6789 = vsel %vm6767, %v6762, 0.0
          %v6790 = vadd.f32 %v6788, %v6789
          %v6791 = vsel %vm6767, %v6763, 0.0
          %v6792 = vadd.f32 %v6790, %v6791
          %v6793 = vsel %vm6767, %v6764, 0.0
          %v6794 = vadd.f32 %v6792, %v6793
          %v6795 = vsel %vm6767, %v6765, 0.0
          %v6796 = vadd.f32 %v6794, %v6795
          %v6797 = vsel %vm6767, %v6766, 0.0
          %v6798 = vadd.f32 %v6796, %v6797
          %v6799 = vrot.slane %v6798, 4
          %v6800 = vadd.f32 %v6798, %v6799
          %v6801 = vrot.slane %v6800, 2
          %v6802 = vadd.f32 %v6800, %v6801
          %v6803 = vrot.slane %v6802, 1
          %v6804 = vadd.f32 %v6802, %v6803
          %6805 = vrot.lane.b32.xlu0 %v6671, 1
          %v6806 = vpop.permute.xlu0 %6805
          %6807 = vrot.lane.b32.xlu0 %v6672, 1
          %v6808 = vpop.permute.xlu0 %6807
          %6809 = vrot.lane.b32.xlu0 %v6673, 1
          %v6810 = vpop.permute.xlu0 %6809
          %6811 = vrot.lane.b32.xlu0 %v6674, 1
          %v6812 = vpop.permute.xlu0 %6811
          %6813 = vrot.lane.b32.xlu0 %v6675, 1
          %v6814 = vpop.permute.xlu0 %6813
          %6815 = vrot.lane.b32.xlu0 %v6676, 1
          %v6816 = vpop.permute.xlu0 %6815
          %6817 = vrot.lane.b32.xlu0 %v6677, 1
          %v6818 = vpop.permute.xlu0 %6817
          %6819 = vrot.lane.b32.xlu0 %v6678, 1
          %v6820 = vpop.permute.xlu0 %6819
          %6821 = vrot.lane.b32.xlu0 %v6679, 1
          %v6822 = vpop.permute.xlu0 %6821
          %6823 = vrot.lane.b32.xlu0 %v6680, 1
          %v6824 = vpop.permute.xlu0 %6823
          %6825 = vrot.lane.b32.xlu0 %v6681, 1
          %v6826 = vpop.permute.xlu0 %6825
          %6827 = vrot.lane.b32.xlu0 %v6682, 1
          %v6828 = vpop.permute.xlu0 %6827
          %6829 = vrot.lane.b32.xlu0 %v6683, 1
          %v6830 = vpop.permute.xlu0 %6829
          %6831 = vrot.lane.b32.xlu0 %v6684, 1
          %v6832 = vpop.permute.xlu0 %6831
          %6833 = vrot.lane.b32.xlu0 %v6685, 1
          %v6834 = vpop.permute.xlu0 %6833
          %6835 = vrot.lane.b32.xlu0 %v6686, 1
          %v6836 = vpop.permute.xlu0 %6835
          %v6853 = vmul.f32 %v6586, %v6806
          %v6854 = vmul.f32 %v6587, %v6808
          %v6855 = vmul.f32 %v6588, %v6810
          %v6856 = vmul.f32 %v6589, %v6812
          %v6857 = vmul.f32 %v6590, %v6814
          %v6858 = vmul.f32 %v6591, %v6816
          %v6859 = vmul.f32 %v6592, %v6818
          %v6860 = vmul.f32 %v6593, %v6820
          %v6861 = vmul.f32 %v6594, %v6822
          %v6862 = vmul.f32 %v6595, %v6824
          %v6863 = vmul.f32 %v6596, %v6826
          %v6864 = vmul.f32 %v6597, %v6828
          %v6865 = vmul.f32 %v6598, %v6830
          %v6866 = vmul.f32 %v6599, %v6832
          %v6867 = vmul.f32 %v6600, %v6834
          %v6868 = vmul.f32 %v6601, %v6836
          %vm6869 = vcmask 15368
          %v6870 = vsel %vm6869, %v6853, 0.0
          %v6871 = vsel %vm6869, %v6854, 0.0
          %v6872 = vadd.f32 %v6870, %v6871
          %v6873 = vsel %vm6869, %v6855, 0.0
          %v6874 = vadd.f32 %v6872, %v6873
          %v6875 = vsel %vm6869, %v6856, 0.0
          %v6876 = vadd.f32 %v6874, %v6875
          %v6877 = vsel %vm6869, %v6857, 0.0
          %v6878 = vadd.f32 %v6876, %v6877
          %v6879 = vsel %vm6869, %v6858, 0.0
          %v6880 = vadd.f32 %v6878, %v6879
          %v6881 = vsel %vm6869, %v6859, 0.0
          %v6882 = vadd.f32 %v6880, %v6881
          %v6883 = vsel %vm6869, %v6860, 0.0
          %v6884 = vadd.f32 %v6882, %v6883
          %v6885 = vsel %vm6869, %v6861, 0.0
          %v6886 = vadd.f32 %v6884, %v6885
          %v6887 = vsel %vm6869, %v6862, 0.0
          %v6888 = vadd.f32 %v6886, %v6887
          %v6889 = vsel %vm6869, %v6863, 0.0
          %v6890 = vadd.f32 %v6888, %v6889
          %v6891 = vsel %vm6869, %v6864, 0.0
          %v6892 = vadd.f32 %v6890, %v6891
          %v6893 = vsel %vm6869, %v6865, 0.0
          %v6894 = vadd.f32 %v6892, %v6893
          %v6895 = vsel %vm6869, %v6866, 0.0
          %v6896 = vadd.f32 %v6894, %v6895
          %v6897 = vsel %vm6869, %v6867, 0.0
          %v6898 = vadd.f32 %v6896, %v6897
          %v6899 = vsel %vm6869, %v6868, 0.0
          %v6900 = vadd.f32 %v6898, %v6899
          %v6901 = vrot.slane %v6900, 4
          %v6902 = vadd.f32 %v6900, %v6901
          %v6903 = vrot.slane %v6902, 2
          %v6904 = vadd.f32 %v6902, %v6903
          %v6905 = vrot.slane %v6904, 1
          %v6906 = vadd.f32 %v6904, %v6905
          %6908 = vrot.lane.b32.xlu0 %v6804, 126
          %v6909 = vpop.permute.xlu0 %6908
          %v6911 = vsel %vm6618, %v6909, %v6906
          %vm6912 = vcmask 8192
          %6913 = vst.msk [vmem:[%s287] sm:$0x1] %vm6912, %v6911
        $region44: #{_hough_voting_impl.1} parent=35 // pred_fallthru
          _
        %s6914 = sand.u32 %s146, 1
        %s6915 = scalar_lea.sflag [#allocation4], %s6914
        %s6916 = sand.u32 %s146, 1
        %s6917 = scalar_lea.vmem [#allocation3], %s6916
        // Predicated region
        $region45: #{_hough_voting_impl.1} parent=35 // pred_check
          %p6918 = pneg %p156
        $region46: #{_hough_voting_impl.1} parent=35 // pred_check_branch
          %6920 = sbr.rel (%p6918) target = $region48
        $region47: #{_hough_voting_impl.1} parent=35 // pred_region
          %6922 = vsyncadd %s6915, 0
          %s6923 = scalar_lea.hbm %s4, %s22
          %s6925 = sshll.u32 %s6917, 4
          %s6926 = int_to_ptr.vmem [resolvable:$true] %s6925
          %s6927 = sshll.u32 %s6923, 4
          %s6928 = int_to_ptr.hbm [resolvable:$true] %s6927
          %6930 = dma.vmem_to_hbm [thread:$0]  %s6926, 16, %s6928, %s6915
        $region48: #{_hough_voting_impl.1} parent=35 // pred_fallthru
          _
      $region36: #{_hough_voting_impl.1} parent=5 // pred_fallthru
        _
      %p6931 = scmp.le.s32.totalorder 2, %s13
      // Predicated region
      $region49: #{_hough_voting_impl.1} parent=5 // pred_check
        %p6932 = pneg %p6931
      $region50: #{_hough_voting_impl.1} parent=5 // pred_check_branch
        %6934 = sbr.rel (%p6932) target = $region52
      $region51: #{_hough_voting_impl.1} parent=5 // pred_region
        %s6935 = ssub.s32 %s13, 2
        // Predicated region
        $region53: #{_hough_voting_impl.1} parent=51 // pred_check
          %p6936 = pneg %p162
        $region54: #{_hough_voting_impl.1} parent=51 // pred_check_branch
          %6938 = sbr.rel (%p6936) target = $region56
        $region55: #{_hough_voting_impl.1} parent=51 // pred_region
          %s6939 = sand.u32 %s147, 1
          %s6940 = scalar_lea.sflag [#allocation4], %s6939
          %s6941 = sand.u32 %s147, 1
          %s6942 = scalar_lea.vmem [#allocation3], %s6941
          %6944 = dma.done %s6940, 16
        $region56: #{_hough_voting_impl.1} parent=51 // pred_fallthru
          _
      $region52: #{_hough_voting_impl.1} parent=5 // pred_fallthru
        _
    $region6: #{_hough_voting_impl.1} parent=1 // loop_footer
      %s17 = sadd.s32 1, %s13
    $region7: #{_hough_voting_impl.1} parent=1 // loop_footer_branch
      %12 = sbr.rel target = $region3
    $region8: #{_hough_voting_impl.1} parent=1 // loop_exit
      _
    %6945 = vsyncpa [#allocation4], 1
    %s6946 = scalar_lea.sflag [#allocation4], 1
    %6947 = vsyncpa %s6946, 1

</llo_original>
